<compile_context>
chip_gen: v5e
topology: v5e:2x2
jax: 0.10.0
libtpu: 0.0.40
codegen_flags: <defaults>
</compile_context>

<pallas_src>
import functools

import jax
import jax.numpy as jnp
from jax.experimental import pallas as pl
from jax.experimental.pallas import tpu as pltpu

LATENT_DIM = 128
IN_DIM = 3 * 1024     # 3072
H1 = 512
H2 = 256
ML = 2 * LATENT_DIM   # fused mu||logvar head width = 256
MAX_TB = 512          # max batch-tile rows (VMEM-safe on v5e/v6e/v7x)


def _round_up(n, m):
    return ((n + m - 1) // m) * m


def _vae_kernel(
    x_ref, eps_ref,
    w1_ref, b1_ref,      # encoder layer 0: 3072 -> 512   (w bf16, b f32)
    w2_ref, b2_ref,      # encoder layer 2: 512  -> 256
    wml_ref, bml_ref,    # fused fc_mu || fc_logvar: 256 -> 256
    wd1_ref, bd1_ref,    # decoder layer 0: 128 -> 256
    wd2_ref, bd2_ref,    # decoder layer 2: 256 -> 3072
    recon_ref, mu_ref, logvar_ref,
):
    def mxu(a, w_ref):
        # bf16 operands, f32 accumulation on the MXU.
        return jnp.dot(a.astype(jnp.bfloat16), w_ref[...],
                       preferred_element_type=jnp.float32)

    x = x_ref[...]                                        # (TB, 3072)

    # ---- encoder ----
    h = jnp.maximum(mxu(x, w1_ref) + b1_ref[...], 0.0)    # (TB, 512)
    h = jnp.maximum(mxu(h, w2_ref) + b2_ref[...], 0.0)    # (TB, 256)

    # ---- fused latent heads (mu || logvar) ----
    y = mxu(h, wml_ref) + bml_ref[...]                    # (TB, 256)
    mu = y[:, :LATENT_DIM]
    logvar = y[:, LATENT_DIM:]

    # ---- reparameterization:  z = mu + exp(0.5*logvar) * eps  (VPU/EUP, f32)
    std = jnp.exp(0.5 * logvar)
    z = mu + std * eps_ref[...]                           # (TB, 128)

    # ---- decoder ----
    d = jnp.maximum(mxu(z, wd1_ref) + bd1_ref[...], 0.0)  # (TB, 256)
    recon = mxu(d, wd2_ref) + bd2_ref[...]                # (TB, 3072) f32 acc

    # bf16 store halves the dominant HBM writeback stream; cast is hidden
    # under the wd2 matmul.
    recon_ref[...] = recon.astype(recon_ref.dtype)
    mu_ref[...] = mu
    logvar_ref[...] = logvar


def init_vae_params(key, latent_dim=LATENT_DIM):
    """Init mimicking nn.Linear's U(-1/sqrt(fan_in), 1/sqrt(fan_in)).

    Weights stored bf16 in lane-dense (in, out) layout; biases f32.
    fc_mu / fc_logvar are initialized separately and concatenated into one head.
    """
    def linear(key, fan_in, fan_out):
        kw, kb = jax.random.split(key)
        bound = 1.0 / jnp.sqrt(fan_in)
        w = jax.random.uniform(kw, (fan_in, fan_out), jnp.float32, -bound, bound)
        b = jax.random.uniform(kb, (1, fan_out), jnp.float32, -bound, bound)
        return w, b

    keys = jax.random.split(key, 6)
    w1, b1 = linear(keys[0], IN_DIM, H1)
    w2, b2 = linear(keys[1], H1, H2)
    wmu, bmu = linear(keys[2], H2, latent_dim)
    wlv, blv = linear(keys[3], H2, latent_dim)
    wd1, bd1 = linear(keys[4], latent_dim, H2)
    wd2, bd2 = linear(keys[5], H2, IN_DIM)

    return {
        "w1": w1.astype(jnp.bfloat16), "b1": b1,
        "w2": w2.astype(jnp.bfloat16), "b2": b2,
        # fused mu||logvar head
        "wml": jnp.concatenate([wmu, wlv], axis=1).astype(jnp.bfloat16),
        "bml": jnp.concatenate([bmu, blv], axis=1),
        "wd1": wd1.astype(jnp.bfloat16), "bd1": bd1,
        "wd2": wd2.astype(jnp.bfloat16), "bd2": bd2,
    }


@functools.partial(jax.jit, static_argnames=("recon_dtype",))
def vae_forward(x, eps, params, recon_dtype=jnp.bfloat16):
    """x: (B, 1024, 3) f32 or bf16; eps: (B, latent_dim) f32.

    Returns (recon[B,1024,3] in recon_dtype, mu[B,128] f32, logvar[B,128] f32).
    """
    B = x.shape[0]
    x_flat = x.reshape(B, -1)                              # (B, 3072)

    # Batch tiling: n_steps tiles of TB rows each; TB multiple of 8 (f32
    # sublane), TB <= 512. Padding is at most a few rows (no B_pad doubling).
    n_steps = pl.cdiv(B, MAX_TB)
    TB = _round_up(pl.cdiv(B, n_steps), 8)
    B_pad = TB * n_steps
    if B_pad != B:
        x_flat = jnp.pad(x_flat, ((0, B_pad - B), (0, 0)))
        eps_p = jnp.pad(eps, ((0, B_pad - B), (0, 0)))
    else:
        eps_p = eps
    grid = (n_steps,)

    # Batched inputs/outputs tiled over the grid; weights/biases are resident
    # in VMEM: constant index_map + single buffer (no pointless double-buffer).
    def batched(feat):
        return pl.BlockSpec((TB, feat), lambda b: (b, 0))

    def resident(arr):
        return pl.BlockSpec(arr.shape, lambda b: (0, 0),
                            pipeline_mode=pl.Buffered(1))

    in_specs = [
        batched(IN_DIM),                 # x
        batched(LATENT_DIM),             # eps
        resident(params["w1"]), resident(params["b1"]),
        resident(params["w2"]), resident(params["b2"]),
        resident(params["wml"]), resident(params["bml"]),
        resident(params["wd1"]), resident(params["bd1"]),
        resident(params["wd2"]), resident(params["bd2"]),
    ]
    out_specs = (batched(IN_DIM), batched(LATENT_DIM), batched(LATENT_DIM))

    # Tiny grids: don't shard across v7x TensorCores (each core would re-DMA
    # the full 5.2 MB weight set for almost no compute).
    semantics = ("parallel",) if n_steps > 2 else ("arbitrary",)

    # Advisory cost estimate so XLA can schedule around the custom call.
    flops = 2 * B_pad * (IN_DIM * H1 + H1 * H2 + H2 * ML
                         + LATENT_DIM * H2 + H2 * IN_DIM)
    weight_bytes = sum(int(params[k].size) * params[k].dtype.itemsize
                       for k in params)
    recon_itemsize = jnp.dtype(recon_dtype).itemsize
    bytes_accessed = (weight_bytes
                      + B_pad * IN_DIM * x_flat.dtype.itemsize       # x read
                      + B_pad * IN_DIM * recon_itemsize              # recon write
                      + B_pad * LATENT_DIM * 4 * 3)                  # eps, mu, logvar
    cost = pl.CostEstimate(flops=flops,
                           transcendentals=B_pad * LATENT_DIM,
                           bytes_accessed=bytes_accessed)

    recon_flat, mu, logvar = pl.pallas_call(
        _vae_kernel,
        grid=grid,
        out_shape=(
            jax.ShapeDtypeStruct((B_pad, IN_DIM), recon_dtype),
            jax.ShapeDtypeStruct((B_pad, LATENT_DIM), jnp.float32),
            jax.ShapeDtypeStruct((B_pad, LATENT_DIM), jnp.float32),
        ),
        in_specs=in_specs,
        out_specs=out_specs,
        compiler_params=pltpu.CompilerParams(
            dimension_semantics=semantics,
            # ~12 MiB x tiles + ~6 MiB bf16 recon tiles + ~5 MiB resident
            # weights + small heads/intermediates at TB=512 — well under the
            # 48 MiB scoped limit and v7x's 64 MiB physical VMEM.
            vmem_limit_bytes=48 << 20,
        ),
        cost_estimate=cost,
    )(
        x_flat, eps_p,
        params["w1"], params["b1"],
        params["w2"], params["b2"],
        params["wml"], params["bml"],
        params["wd1"], params["bd1"],
        params["wd2"], params["bd2"],
    )

    recon = recon_flat[:B].reshape(B, 1024, 3)             # matches .view(B, 1024, 3)
    return recon, mu[:B], logvar[:B]


def _reference_forward(x, eps, params):
    """Pure-JAX reference mirroring kernel precision (bf16 operands, f32 acc)."""
    B = x.shape[0]
    xf = x.reshape(B, -1)

    def dot(a, w):
        return jnp.dot(a.astype(jnp.bfloat16), w, preferred_element_type=jnp.float32)

    h = jnp.maximum(dot(xf, params["w1"]) + params["b1"], 0.0)
    h = jnp.maximum(dot(h, params["w2"]) + params["b2"], 0.0)
    y = dot(h, params["wml"]) + params["bml"]
    mu, logvar = y[:, :LATENT_DIM], y[:, LATENT_DIM:]
    z = mu + jnp.exp(0.5 * logvar) * eps
    d = jnp.maximum(dot(z, params["wd1"]) + params["bd1"], 0.0)
    recon = (dot(d, params["wd2"]) + params["bd2"]).reshape(B, 1024, 3)
    return recon, mu, logvar


if __name__ == "__main__":
    key = jax.random.PRNGKey(0)
    k_param, k_x, k_eps = jax.random.split(key, 3)

    B = 2
    params = init_vae_params(k_param)
    x = jax.random.normal(k_x, (B, 1024, 3), jnp.float32)
    eps = jax.random.normal(k_eps, (B, LATENT_DIM), jnp.float32)

    recon, mu, logvar = vae_forward(x, eps, params)
    jax.block_until_ready((recon, mu, logvar))

    # sanity: shapes + numerics vs pure-JAX reference (bf16-weight precision)
    assert recon.shape == (B, 1024, 3)
    assert mu.shape == (B, LATENT_DIM)
    assert logvar.shape == (B, LATENT_DIM)
    r_ref, m_ref, lv_ref = _reference_forward(x, eps, params)
    assert jnp.allclose(recon.astype(jnp.float32), r_ref, atol=5e-2, rtol=5e-2)
    assert jnp.allclose(mu, m_ref, atol=2e-2, rtol=2e-2)
    assert jnp.allclose(logvar, lv_ref, atol=2e-2, rtol=2e-2)

    print("KERNEL_OK")
</pallas_src>

<mosaic_0001>
module attributes {stable_mosaic.version = 11 : i64} {
  func.func @_vae_kernel(%arg0: i32, %arg1: memref<8x3072xf32, #tpu.memory_space<vmem>>, %arg2: memref<8x128xf32, #tpu.memory_space<vmem>>, %arg3: memref<3072x512xbf16, #tpu.memory_space<vmem>>, %arg4: memref<1x512xf32, #tpu.memory_space<vmem>>, %arg5: memref<512x256xbf16, #tpu.memory_space<vmem>>, %arg6: memref<1x256xf32, #tpu.memory_space<vmem>>, %arg7: memref<256x256xbf16, #tpu.memory_space<vmem>>, %arg8: memref<1x256xf32, #tpu.memory_space<vmem>>, %arg9: memref<128x256xbf16, #tpu.memory_space<vmem>>, %arg10: memref<1x256xf32, #tpu.memory_space<vmem>>, %arg11: memref<256x3072xbf16, #tpu.memory_space<vmem>>, %arg12: memref<1x3072xf32, #tpu.memory_space<vmem>>, %arg13: memref<8x3072xbf16, #tpu.memory_space<vmem>>, %arg14: memref<8x128xf32, #tpu.memory_space<vmem>>, %arg15: memref<8x128xf32, #tpu.memory_space<vmem>>) attributes {dimension_semantics = [#tpu.dimension_semantics<arbitrary>], iteration_bounds = array<i64: 1>, scalar_prefetch = 0 : i64, scratch_operands = 0 : i64, tpu.core_type = #tpu.core_type<tc>, window_params = [{transform_indices = @transform_0, window_bounds = array<i64: 8, 3072>}, {transform_indices = @transform_1, window_bounds = array<i64: 8, 128>}, {pipeline_mode = #tpu.pipeline_mode<synchronous>, transform_indices = @transform_2, window_bounds = array<i64: 3072, 512>}, {pipeline_mode = #tpu.pipeline_mode<synchronous>, transform_indices = @transform_3, window_bounds = array<i64: 1, 512>}, {pipeline_mode = #tpu.pipeline_mode<synchronous>, transform_indices = @transform_4, window_bounds = array<i64: 512, 256>}, {pipeline_mode = #tpu.pipeline_mode<synchronous>, transform_indices = @transform_5, window_bounds = array<i64: 1, 256>}, {pipeline_mode = #tpu.pipeline_mode<synchronous>, transform_indices = @transform_6, window_bounds = array<i64: 256, 256>}, {pipeline_mode = #tpu.pipeline_mode<synchronous>, transform_indices = @transform_7, window_bounds = array<i64: 1, 256>}, {pipeline_mode = #tpu.pipeline_mode<synchronous>, transform_indices = @transform_8, window_bounds = array<i64: 128, 256>}, {pipeline_mode = #tpu.pipeline_mode<synchronous>, transform_indices = @transform_9, window_bounds = array<i64: 1, 256>}, {pipeline_mode = #tpu.pipeline_mode<synchronous>, transform_indices = @transform_10, window_bounds = array<i64: 256, 3072>}, {pipeline_mode = #tpu.pipeline_mode<synchronous>, transform_indices = @transform_11, window_bounds = array<i64: 1, 3072>}, {transform_indices = @transform_12, window_bounds = array<i64: 8, 3072>}, {transform_indices = @transform_13, window_bounds = array<i64: 8, 128>}, {transform_indices = @transform_14, window_bounds = array<i64: 8, 128>}]} {
    %c0 = arith.constant 0 : index
    %c0_0 = arith.constant 0 : index
    %0 = vector.load %arg1[%c0, %c0_0] : memref<8x3072xf32, #tpu.memory_space<vmem>>, vector<8x3072xf32>
    %1 = arith.truncf %0 : vector<8x3072xf32> to vector<8x3072xbf16>
    %c0_1 = arith.constant 0 : index
    %c0_2 = arith.constant 0 : index
    %2 = vector.load %arg3[%c0_1, %c0_2] : memref<3072x512xbf16, #tpu.memory_space<vmem>>, vector<3072x512xbf16>
    %cst = arith.constant dense<0.000000e+00> : vector<8x512xf32>
    %3 = tpu.matmul %1, %2, %cst {dimension_numbers = #tpu.dot_dimension_numbers<[1], [0], [0], [1], [0, 0, 1, 1], [], []>} : vector<8x3072xbf16>, vector<3072x512xbf16>, vector<8x512xf32> -> vector<8x512xf32>
    %c0_3 = arith.constant 0 : index
    %c0_4 = arith.constant 0 : index
    %4 = vector.load %arg4[%c0_3, %c0_4] : memref<1x512xf32, #tpu.memory_space<vmem>>, vector<1x512xf32>
    %5 = vector.broadcast %4 : vector<1x512xf32> to vector<8x512xf32>
    %6 = arith.addf %3, %5 : vector<8x512xf32>
    %cst_5 = arith.constant 0.000000e+00 : f32
    %7 = vector.broadcast %cst_5 : f32 to vector<8x512xf32>
    %8 = arith.maximumf %6, %7 : vector<8x512xf32>
    %9 = arith.truncf %8 : vector<8x512xf32> to vector<8x512xbf16>
    %c0_6 = arith.constant 0 : index
    %c0_7 = arith.constant 0 : index
    %10 = vector.load %arg5[%c0_6, %c0_7] : memref<512x256xbf16, #tpu.memory_space<vmem>>, vector<512x256xbf16>
    %cst_8 = arith.constant dense<0.000000e+00> : vector<8x256xf32>
    %11 = tpu.matmul %9, %10, %cst_8 {dimension_numbers = #tpu.dot_dimension_numbers<[1], [0], [0], [1], [0, 0, 1, 1], [], []>} : vector<8x512xbf16>, vector<512x256xbf16>, vector<8x256xf32> -> vector<8x256xf32>
    %c0_9 = arith.constant 0 : index
    %c0_10 = arith.constant 0 : index
    %12 = vector.load %arg6[%c0_9, %c0_10] : memref<1x256xf32, #tpu.memory_space<vmem>>, vector<1x256xf32>
    %13 = vector.broadcast %12 : vector<1x256xf32> to vector<8x256xf32>
    %14 = arith.addf %11, %13 : vector<8x256xf32>
    %cst_11 = arith.constant 0.000000e+00 : f32
    %15 = vector.broadcast %cst_11 : f32 to vector<8x256xf32>
    %16 = arith.maximumf %14, %15 : vector<8x256xf32>
    %17 = arith.truncf %16 : vector<8x256xf32> to vector<8x256xbf16>
    %c0_12 = arith.constant 0 : index
    %c0_13 = arith.constant 0 : index
    %18 = vector.load %arg7[%c0_12, %c0_13] : memref<256x256xbf16, #tpu.memory_space<vmem>>, vector<256x256xbf16>
    %cst_14 = arith.constant dense<0.000000e+00> : vector<8x256xf32>
    %19 = tpu.matmul %17, %18, %cst_14 {dimension_numbers = #tpu.dot_dimension_numbers<[1], [0], [0], [1], [0, 0, 1, 1], [], []>} : vector<8x256xbf16>, vector<256x256xbf16>, vector<8x256xf32> -> vector<8x256xf32>
    %c0_15 = arith.constant 0 : index
    %c0_16 = arith.constant 0 : index
    %20 = vector.load %arg8[%c0_15, %c0_16] : memref<1x256xf32, #tpu.memory_space<vmem>>, vector<1x256xf32>
    %21 = vector.broadcast %20 : vector<1x256xf32> to vector<8x256xf32>
    %22 = arith.addf %19, %21 : vector<8x256xf32>
    %23 = vector.extract_strided_slice %22 {offsets = [0, 0], sizes = [8, 128], strides = [1, 1]} : vector<8x256xf32> to vector<8x128xf32>
    %24 = vector.extract_strided_slice %22 {offsets = [0, 128], sizes = [8, 128], strides = [1, 1]} : vector<8x256xf32> to vector<8x128xf32>
    %cst_17 = arith.constant 5.000000e-01 : f32
    %25 = vector.broadcast %cst_17 : f32 to vector<8x128xf32>
    %26 = arith.mulf %25, %24 : vector<8x128xf32>
    %27 = math.exp %26 : vector<8x128xf32>
    %c0_18 = arith.constant 0 : index
    %c0_19 = arith.constant 0 : index
    %28 = vector.load %arg2[%c0_18, %c0_19] : memref<8x128xf32, #tpu.memory_space<vmem>>, vector<8x128xf32>
    %29 = arith.mulf %27, %28 : vector<8x128xf32>
    %30 = arith.addf %23, %29 : vector<8x128xf32>
    %31 = arith.truncf %30 : vector<8x128xf32> to vector<8x128xbf16>
    %c0_20 = arith.constant 0 : index
    %c0_21 = arith.constant 0 : index
    %32 = vector.load %arg9[%c0_20, %c0_21] : memref<128x256xbf16, #tpu.memory_space<vmem>>, vector<128x256xbf16>
    %cst_22 = arith.constant dense<0.000000e+00> : vector<8x256xf32>
    %33 = tpu.matmul %31, %32, %cst_22 {dimension_numbers = #tpu.dot_dimension_numbers<[1], [0], [0], [1], [0, 0, 1, 1], [], []>} : vector<8x128xbf16>, vector<128x256xbf16>, vector<8x256xf32> -> vector<8x256xf32>
    %c0_23 = arith.constant 0 : index
    %c0_24 = arith.constant 0 : index
    %34 = vector.load %arg10[%c0_23, %c0_24] : memref<1x256xf32, #tpu.memory_space<vmem>>, vector<1x256xf32>
    %35 = vector.broadcast %34 : vector<1x256xf32> to vector<8x256xf32>
    %36 = arith.addf %33, %35 : vector<8x256xf32>
    %cst_25 = arith.constant 0.000000e+00 : f32
    %37 = vector.broadcast %cst_25 : f32 to vector<8x256xf32>
    %38 = arith.maximumf %36, %37 : vector<8x256xf32>
    %39 = arith.truncf %38 : vector<8x256xf32> to vector<8x256xbf16>
    %c0_26 = arith.constant 0 : index
    %c0_27 = arith.constant 0 : index
    %40 = vector.load %arg11[%c0_26, %c0_27] : memref<256x3072xbf16, #tpu.memory_space<vmem>>, vector<256x3072xbf16>
    %cst_28 = arith.constant dense<0.000000e+00> : vector<8x3072xf32>
    %41 = tpu.matmul %39, %40, %cst_28 {dimension_numbers = #tpu.dot_dimension_numbers<[1], [0], [0], [1], [0, 0, 1, 1], [], []>} : vector<8x256xbf16>, vector<256x3072xbf16>, vector<8x3072xf32> -> vector<8x3072xf32>
    %c0_29 = arith.constant 0 : index
    %c0_30 = arith.constant 0 : index
    %42 = vector.load %arg12[%c0_29, %c0_30] : memref<1x3072xf32, #tpu.memory_space<vmem>>, vector<1x3072xf32>
    %43 = vector.broadcast %42 : vector<1x3072xf32> to vector<8x3072xf32>
    %44 = arith.addf %41, %43 : vector<8x3072xf32>
    %45 = arith.truncf %44 : vector<8x3072xf32> to vector<8x3072xbf16>
    %c0_31 = arith.constant 0 : index
    %c0_32 = arith.constant 0 : index
    %46 = vector.load %arg13[%c0_31, %c0_32] : memref<8x3072xbf16, #tpu.memory_space<vmem>>, vector<8x3072xbf16>
    tpu.vector_store %arg13[%c0_31, %c0_32], %45 {strides = array<i32>} : memref<8x3072xbf16, #tpu.memory_space<vmem>>, vector<8x3072xbf16>,
    %c0_33 = arith.constant 0 : index
    %c0_34 = arith.constant 0 : index
    %47 = vector.load %arg14[%c0_33, %c0_34] : memref<8x128xf32, #tpu.memory_space<vmem>>, vector<8x128xf32>
    tpu.vector_store %arg14[%c0_33, %c0_34], %23 {strides = array<i32>} : memref<8x128xf32, #tpu.memory_space<vmem>>, vector<8x128xf32>,
    %c0_35 = arith.constant 0 : index
    %c0_36 = arith.constant 0 : index
    %48 = vector.load %arg15[%c0_35, %c0_36] : memref<8x128xf32, #tpu.memory_space<vmem>>, vector<8x128xf32>
    tpu.vector_store %arg15[%c0_35, %c0_36], %24 {strides = array<i32>} : memref<8x128xf32, #tpu.memory_space<vmem>>, vector<8x128xf32>,
    return
  }
  func.func @transform_0(%arg0: i32) -> (i32, i32) {
    %c0_i32 = arith.constant 0 : i32
    %c0_i32_0 = arith.constant 0 : i32
    return %arg0, %c0_i32 : i32, i32
  }
  func.func @transform_1(%arg0: i32) -> (i32, i32) {
    %c0_i32 = arith.constant 0 : i32
    %c0_i32_0 = arith.constant 0 : i32
    return %arg0, %c0_i32 : i32, i32
  }
  func.func @transform_2(%arg0: i32) -> (i32, i32) {
    %c0_i32 = arith.constant 0 : i32
    %c0_i32_0 = arith.constant 0 : i32
    %c0_i32_1 = arith.constant 0 : i32
    return %c0_i32, %c0_i32_0 : i32, i32
  }
  func.func @transform_3(%arg0: i32) -> (i32, i32) {
    %c0_i32 = arith.constant 0 : i32
    %c0_i32_0 = arith.constant 0 : i32
    %c0_i32_1 = arith.constant 0 : i32
    return %c0_i32, %c0_i32_0 : i32, i32
  }
  func.func @transform_4(%arg0: i32) -> (i32, i32) {
    %c0_i32 = arith.constant 0 : i32
    %c0_i32_0 = arith.constant 0 : i32
    %c0_i32_1 = arith.constant 0 : i32
    return %c0_i32, %c0_i32_0 : i32, i32
  }
  func.func @transform_5(%arg0: i32) -> (i32, i32) {
    %c0_i32 = arith.constant 0 : i32
    %c0_i32_0 = arith.constant 0 : i32
    %c0_i32_1 = arith.constant 0 : i32
    return %c0_i32, %c0_i32_0 : i32, i32
  }
  func.func @transform_6(%arg0: i32) -> (i32, i32) {
    %c0_i32 = arith.constant 0 : i32
    %c0_i32_0 = arith.constant 0 : i32
    %c0_i32_1 = arith.constant 0 : i32
    return %c0_i32, %c0_i32_0 : i32, i32
  }
  func.func @transform_7(%arg0: i32) -> (i32, i32) {
    %c0_i32 = arith.constant 0 : i32
    %c0_i32_0 = arith.constant 0 : i32
    %c0_i32_1 = arith.constant 0 : i32
    return %c0_i32, %c0_i32_0 : i32, i32
  }
  func.func @transform_8(%arg0: i32) -> (i32, i32) {
    %c0_i32 = arith.constant 0 : i32
    %c0_i32_0 = arith.constant 0 : i32
    %c0_i32_1 = arith.constant 0 : i32
    return %c0_i32, %c0_i32_0 : i32, i32
  }
  func.func @transform_9(%arg0: i32) -> (i32, i32) {
    %c0_i32 = arith.constant 0 : i32
    %c0_i32_0 = arith.constant 0 : i32
    %c0_i32_1 = arith.constant 0 : i32
    return %c0_i32, %c0_i32_0 : i32, i32
  }
  func.func @transform_10(%arg0: i32) -> (i32, i32) {
    %c0_i32 = arith.constant 0 : i32
    %c0_i32_0 = arith.constant 0 : i32
    %c0_i32_1 = arith.constant 0 : i32
    return %c0_i32, %c0_i32_0 : i32, i32
  }
  func.func @transform_11(%arg0: i32) -> (i32, i32) {
    %c0_i32 = arith.constant 0 : i32
    %c0_i32_0 = arith.constant 0 : i32
    %c0_i32_1 = arith.constant 0 : i32
    return %c0_i32, %c0_i32_0 : i32, i32
  }
  func.func @transform_12(%arg0: i32) -> (i32, i32) {
    %c0_i32 = arith.constant 0 : i32
    %c0_i32_0 = arith.constant 0 : i32
    return %arg0, %c0_i32 : i32, i32
  }
  func.func @transform_13(%arg0: i32) -> (i32, i32) {
    %c0_i32 = arith.constant 0 : i32
    %c0_i32_0 = arith.constant 0 : i32
    return %arg0, %c0_i32 : i32, i32
  }
  func.func @transform_14(%arg0: i32) -> (i32, i32) {
    %c0_i32 = arith.constant 0 : i32
    %c0_i32_0 = arith.constant 0 : i32
    return %arg0, %c0_i32 : i32, i32
  }
}

</mosaic_0001>

<llo_original>
// kernel: vae_forward.1
$region0: #{vae_forward.1}
  #allocation0 [shape = 'u32[]', space=smem, size = 0x4, offset = 0x4, fixed_abs, tag = 'smem constant byte address 0x4 - core index']
  #allocation1 [shape = 'u32[72,128]{1,0:T(1,128)}', space=vmem, size = 0x9000, scoped, tag = 'internal scratch']
  %s0 = inlined_call_operand.vmem [shape: f32[8,3072], index: 0, kind: input, shape index: {}]
  %s1 = inlined_call_operand.vmem [shape: f32[8,128], index: 1, kind: input, shape index: {}]
  %s2 = inlined_call_operand.hbm [shape: bf16[3072,512], index: 2, kind: input, shape index: {}]
  %s3 = inlined_call_operand.hbm [shape: f32[1,512], index: 3, kind: input, shape index: {}]
  %s4 = inlined_call_operand.hbm [shape: bf16[512,256], index: 4, kind: input, shape index: {}]
  %s5 = inlined_call_operand.hbm [shape: f32[1,256], index: 5, kind: input, shape index: {}]
  %s6 = inlined_call_operand.hbm [shape: bf16[256,256], index: 6, kind: input, shape index: {}]
  %s7 = inlined_call_operand.hbm [shape: f32[1,256], index: 7, kind: input, shape index: {}]
  %s8 = inlined_call_operand.hbm [shape: bf16[128,256], index: 8, kind: input, shape index: {}]
  %s9 = inlined_call_operand.hbm [shape: f32[1,256], index: 9, kind: input, shape index: {}]
  %s10 = inlined_call_operand.vmem [shape: bf16[256,3072], index: 10, kind: input, shape index: {}]
  %s11 = inlined_call_operand.hbm [shape: f32[1,3072], index: 11, kind: input, shape index: {}]
  %s12 = inlined_call_operand.vmem [shape: bf16[8,3072], index: 12, kind: output, shape index: {0}]
  %s13 = inlined_call_operand.vmem [shape: f32[8,128], index: 13, kind: output, shape index: {1}]
  %s14 = inlined_call_operand.vmem [shape: f32[8,128], index: 14, kind: output, shape index: {2}]
  %15 = xla_tuple %s12, %s13, %s14
  %s16 = sld [smem:[#allocation0]]
  $region110: #{vae_forward.1} parent=0
    _
  %s18 = ssub.s32 1, %s16
  %s19 = scalar_select 0, %s18, %s16
  $region1: #{vae_forward.1} parent=0
    #allocation2 [shape = 'u8[3145728]{0}', space=vmem, size = 0x300000, scoped, tag = 'input window, operand 2, single buffered']
    #allocation3 [shape = 's32[1]{0}', space=sflag, size = 0x4, scoped, tag = 'scoped memory for vae_forward.1']
    #allocation4 [shape = 'u8[2048]{0}', space=vmem, size = 0x800, scoped, tag = 'input window, operand 3, single buffered']
    #allocation5 [shape = 's32[1]{0}', space=sflag, size = 0x4, scoped, tag = 'scoped memory for vae_forward.1']
    #allocation6 [shape = 'u8[262144]{0}', space=vmem, size = 0x40000, scoped, tag = 'input window, operand 4, single buffered']
    #allocation7 [shape = 'u8[1024]{0}', space=vmem, size = 0x400, scoped, tag = 'input window, operand 5, single buffered']
    #allocation8 [shape = 's32[1]{0}', space=sflag, size = 0x4, scoped, tag = 'scoped memory for vae_forward.1']
    #allocation9 [shape = 'u8[131072]{0}', space=vmem, size = 0x20000, scoped, tag = 'input window, operand 6, single buffered']
    #allocation10 [shape = 'u8[1024]{0}', space=vmem, size = 0x400, scoped, tag = 'input window, operand 7, single buffered']
    #allocation11 [shape = 's32[1]{0}', space=sflag, size = 0x4, scoped, tag = 'scoped memory for vae_forward.1']
    #allocation12 [shape = 'u8[65536]{0}', space=vmem, size = 0x10000, scoped, tag = 'input window, operand 8, single buffered']
    #allocation13 [shape = 'u8[1024]{0}', space=vmem, size = 0x400, scoped, tag = 'input window, operand 9, single buffered']
    #allocation14 [shape = 's32[1]{0}', space=sflag, size = 0x4, scoped, tag = 'scoped memory for vae_forward.1']
    #allocation15 [shape = 'u8[12288]{0}', space=vmem, size = 0x3000, scoped, tag = 'input window, operand 11, single buffered']
    %20 = vsyncpa [#allocation3], 0
    %21 = vsyncpa [#allocation5], 0
    %22 = vsyncpa [#allocation8], 0
    %23 = vsyncpa [#allocation11], 0
    %24 = vsyncpa [#allocation14], 0
    // Predicated region
    $region2: #{vae_forward.1} parent=1 // pred_check
      _
    $region3: #{vae_forward.1} parent=1 // pred_check_branch
      %26 = sbr.rel (0) target = $region5
    $region4: #{vae_forward.1} parent=1 // pred_region
      _
    $region5: #{vae_forward.1} parent=1 // pred_fallthru
      _
    // Predicated region
    $region6: #{vae_forward.1} parent=1 // pred_check
      _
    $region7: #{vae_forward.1} parent=1 // pred_check_branch
      %28 = sbr.rel (0) target = $region9
    $region8: #{vae_forward.1} parent=1 // pred_region
      _
    $region9: #{vae_forward.1} parent=1 // pred_fallthru
      _
    // Predicated region
    $region10: #{vae_forward.1} parent=1 // pred_check
      _
    $region11: #{vae_forward.1} parent=1 // pred_check_branch
      %30 = sbr.rel (0) target = $region13
    $region12: #{vae_forward.1} parent=1 // pred_region
      %32 = vsyncadd [#allocation3], 0
      %s33 = sshll.u32 %s2, 4
      %s34 = int_to_ptr.hbm [resolvable:$true] %s33
      %s35 = sshll.u32 [#allocation2], 4
      %s36 = int_to_ptr.vmem [resolvable:$true] %s35
      %41 = dma.hbm_to_vmem [thread:$0]  %s34, 98304, %s36, [#allocation3], 256, 256, 16
    $region13: #{vae_forward.1} parent=1 // pred_fallthru
      _
    // Predicated region
    $region14: #{vae_forward.1} parent=1 // pred_check
      _
    $region15: #{vae_forward.1} parent=1 // pred_check_branch
      %43 = sbr.rel (0) target = $region17
    $region16: #{vae_forward.1} parent=1 // pred_region
      %45 = vsyncadd [#allocation5], 0
      %s47 = sshll.u32 %s3, 4
      %s48 = int_to_ptr.hbm [resolvable:$true] %s47
      %s49 = sshll.u32 [#allocation4], 4
      %s50 = int_to_ptr.vmem [resolvable:$true] %s49
      %52 = dma.hbm_to_vmem [thread:$0]  %s48, 64, %s50, [#allocation5]
    $region17: #{vae_forward.1} parent=1 // pred_fallthru
      _
    // Predicated region
    $region18: #{vae_forward.1} parent=1 // pred_check
      _
    $region19: #{vae_forward.1} parent=1 // pred_check_branch
      %54 = sbr.rel (0) target = $region21
    $region20: #{vae_forward.1} parent=1 // pred_region
      %56 = vsyncadd [#allocation5], 0
      %s57 = sshll.u32 %s4, 4
      %s58 = int_to_ptr.hbm [resolvable:$true] %s57
      %s59 = sshll.u32 [#allocation6], 4
      %s60 = int_to_ptr.vmem [resolvable:$true] %s59
      %65 = dma.hbm_to_vmem [thread:$0]  %s58, 8192, %s60, [#allocation5], 128, 128, 8
    $region21: #{vae_forward.1} parent=1 // pred_fallthru
      _
    // Predicated region
    $region22: #{vae_forward.1} parent=1 // pred_check
      _
    $region23: #{vae_forward.1} parent=1 // pred_check_branch
      %67 = sbr.rel (0) target = $region25
    $region24: #{vae_forward.1} parent=1 // pred_region
      %69 = vsyncadd [#allocation8], 0
      %s71 = sshll.u32 %s5, 4
      %s72 = int_to_ptr.hbm [resolvable:$true] %s71
      %s73 = sshll.u32 [#allocation7], 4
      %s74 = int_to_ptr.vmem [resolvable:$true] %s73
      %76 = dma.hbm_to_vmem [thread:$0]  %s72, 32, %s74, [#allocation8]
    $region25: #{vae_forward.1} parent=1 // pred_fallthru
      _
    // Predicated region
    $region26: #{vae_forward.1} parent=1 // pred_check
      _
    $region27: #{vae_forward.1} parent=1 // pred_check_branch
      %78 = sbr.rel (0) target = $region29
    $region28: #{vae_forward.1} parent=1 // pred_region
      %80 = vsyncadd [#allocation8], 0
      %s81 = sshll.u32 %s6, 4
      %s82 = int_to_ptr.hbm [resolvable:$true] %s81
      %s83 = sshll.u32 [#allocation9], 4
      %s84 = int_to_ptr.vmem [resolvable:$true] %s83
      %89 = dma.hbm_to_vmem [thread:$0]  %s82, 4096, %s84, [#allocation8], 128, 128, 8
    $region29: #{vae_forward.1} parent=1 // pred_fallthru
      _
    // Predicated region
    $region30: #{vae_forward.1} parent=1 // pred_check
      _
    $region31: #{vae_forward.1} parent=1 // pred_check_branch
      %91 = sbr.rel (0) target = $region33
    $region32: #{vae_forward.1} parent=1 // pred_region
      %93 = vsyncadd [#allocation11], 0
      %s95 = sshll.u32 %s7, 4
      %s96 = int_to_ptr.hbm [resolvable:$true] %s95
      %s97 = sshll.u32 [#allocation10], 4
      %s98 = int_to_ptr.vmem [resolvable:$true] %s97
      %100 = dma.hbm_to_vmem [thread:$0]  %s96, 32, %s98, [#allocation11]
    $region33: #{vae_forward.1} parent=1 // pred_fallthru
      _
    // Predicated region
    $region34: #{vae_forward.1} parent=1 // pred_check
      _
    $region35: #{vae_forward.1} parent=1 // pred_check_branch
      %102 = sbr.rel (0) target = $region37
    $region36: #{vae_forward.1} parent=1 // pred_region
      %104 = vsyncadd [#allocation11], 0
      %s105 = sshll.u32 %s8, 4
      %s106 = int_to_ptr.hbm [resolvable:$true] %s105
      %s107 = sshll.u32 [#allocation12], 4
      %s108 = int_to_ptr.vmem [resolvable:$true] %s107
      %113 = dma.hbm_to_vmem [thread:$0]  %s106, 2048, %s108, [#allocation11], 128, 128, 8
    $region37: #{vae_forward.1} parent=1 // pred_fallthru
      _
    // Predicated region
    $region38: #{vae_forward.1} parent=1 // pred_check
      _
    $region39: #{vae_forward.1} parent=1 // pred_check_branch
      %115 = sbr.rel (0) target = $region41
    $region40: #{vae_forward.1} parent=1 // pred_region
      %117 = vsyncadd [#allocation14], 0
      %s119 = sshll.u32 %s9, 4
      %s120 = int_to_ptr.hbm [resolvable:$true] %s119
      %s121 = sshll.u32 [#allocation13], 4
      %s122 = int_to_ptr.vmem [resolvable:$true] %s121
      %124 = dma.hbm_to_vmem [thread:$0]  %s120, 32, %s122, [#allocation14]
    $region41: #{vae_forward.1} parent=1 // pred_fallthru
      _
    // Predicated region
    $region42: #{vae_forward.1} parent=1 // pred_check
      _
    $region43: #{vae_forward.1} parent=1 // pred_check_branch
      %126 = sbr.rel (0) target = $region45
    $region44: #{vae_forward.1} parent=1 // pred_region
      _
    $region45: #{vae_forward.1} parent=1 // pred_fallthru
      _
    // Predicated region
    $region46: #{vae_forward.1} parent=1 // pred_check
      _
    $region47: #{vae_forward.1} parent=1 // pred_check_branch
      %128 = sbr.rel (0) target = $region49
    $region48: #{vae_forward.1} parent=1 // pred_region
      %130 = vsyncadd [#allocation14], 0
      %s132 = sshll.u32 %s11, 4
      %s133 = int_to_ptr.hbm [resolvable:$true] %s132
      %s134 = sshll.u32 [#allocation15], 4
      %s135 = int_to_ptr.vmem [resolvable:$true] %s134
      %137 = dma.hbm_to_vmem [thread:$0]  %s133, 384, %s135, [#allocation14]
    $region49: #{vae_forward.1} parent=1 // pred_fallthru
      _
    // Predicated region
    $region50: #{vae_forward.1} parent=1 // pred_check
      _
    $region51: #{vae_forward.1} parent=1 // pred_check_branch
      %139 = sbr.rel (0) target = $region53
    $region52: #{vae_forward.1} parent=1 // pred_region
      %141 = dma.done [#allocation3], 98304
    $region53: #{vae_forward.1} parent=1 // pred_fallthru
      _
    // Predicated region
    $region54: #{vae_forward.1} parent=1 // pred_check
      _
    $region55: #{vae_forward.1} parent=1 // pred_check_branch
      %143 = sbr.rel (0) target = $region57
    $region56: #{vae_forward.1} parent=1 // pred_region
      %145 = dma.done [#allocation5], 64
    $region57: #{vae_forward.1} parent=1 // pred_fallthru
      _
    // Predicated region
    $region58: #{vae_forward.1} parent=1 // pred_check
      _
    $region59: #{vae_forward.1} parent=1 // pred_check_branch
      %147 = sbr.rel (0) target = $region61
    $region60: #{vae_forward.1} parent=1 // pred_region
      %149 = dma.done [#allocation5], 8192
    $region61: #{vae_forward.1} parent=1 // pred_fallthru
      _
    // Predicated region
    $region62: #{vae_forward.1} parent=1 // pred_check
      _
    $region63: #{vae_forward.1} parent=1 // pred_check_branch
      %151 = sbr.rel (0) target = $region65
    $region64: #{vae_forward.1} parent=1 // pred_region
      %153 = dma.done [#allocation8], 32
    $region65: #{vae_forward.1} parent=1 // pred_fallthru
      _
    // Predicated region
    $region66: #{vae_forward.1} parent=1 // pred_check
      _
    $region67: #{vae_forward.1} parent=1 // pred_check_branch
      %155 = sbr.rel (0) target = $region69
    $region68: #{vae_forward.1} parent=1 // pred_region
      %157 = dma.done [#allocation8], 4096
    $region69: #{vae_forward.1} parent=1 // pred_fallthru
      _
    // Predicated region
    $region70: #{vae_forward.1} parent=1 // pred_check
      _
    $region71: #{vae_forward.1} parent=1 // pred_check_branch
      %159 = sbr.rel (0) target = $region73
    $region72: #{vae_forward.1} parent=1 // pred_region
      %161 = dma.done [#allocation11], 32
    $region73: #{vae_forward.1} parent=1 // pred_fallthru
      _
    // Predicated region
    $region74: #{vae_forward.1} parent=1 // pred_check
      _
    $region75: #{vae_forward.1} parent=1 // pred_check_branch
      %163 = sbr.rel (0) target = $region77
    $region76: #{vae_forward.1} parent=1 // pred_region
      %165 = dma.done [#allocation11], 2048
    $region77: #{vae_forward.1} parent=1 // pred_fallthru
      _
    // Predicated region
    $region78: #{vae_forward.1} parent=1 // pred_check
      _
    $region79: #{vae_forward.1} parent=1 // pred_check_branch
      %167 = sbr.rel (0) target = $region81
    $region80: #{vae_forward.1} parent=1 // pred_region
      %169 = dma.done [#allocation14], 32
    $region81: #{vae_forward.1} parent=1 // pred_fallthru
      _
    // Predicated region
    $region82: #{vae_forward.1} parent=1 // pred_check
      _
    $region83: #{vae_forward.1} parent=1 // pred_check_branch
      %171 = sbr.rel (0) target = $region85
    $region84: #{vae_forward.1} parent=1 // pred_region
      %173 = dma.done [#allocation14], 384
    $region85: #{vae_forward.1} parent=1 // pred_fallthru
      _
    %v174 = vld [vmem:[%s0] sm:$0xff]
    %v175 = vld [vmem:[%s0 + $0x8] sm:$0xff]
    %v176 = vld [vmem:[%s0 + $0x10] sm:$0xff]
    %v177 = vld [vmem:[%s0 + $0x18] sm:$0xff]
    %v178 = vld [vmem:[%s0 + $0x20] sm:$0xff]
    %v179 = vld [vmem:[%s0 + $0x28] sm:$0xff]
    %v180 = vld [vmem:[%s0 + $0x30] sm:$0xff]
    %v181 = vld [vmem:[%s0 + $0x38] sm:$0xff]
    %v182 = vld [vmem:[%s0 + $0x40] sm:$0xff]
    %v183 = vld [vmem:[%s0 + $0x48] sm:$0xff]
    %v184 = vld [vmem:[%s0 + $0x50] sm:$0xff]
    %v185 = vld [vmem:[%s0 + $0x58] sm:$0xff]
    %v186 = vld [vmem:[%s0 + $0x60] sm:$0xff]
    %v187 = vld [vmem:[%s0 + $0x68] sm:$0xff]
    %v188 = vld [vmem:[%s0 + $0x70] sm:$0xff]
    %v189 = vld [vmem:[%s0 + $0x78] sm:$0xff]
    %v190 = vld [vmem:[%s0 + $0x80] sm:$0xff]
    %v191 = vld [vmem:[%s0 + $0x88] sm:$0xff]
    %v192 = vld [vmem:[%s0 + $0x90] sm:$0xff]
    %v193 = vld [vmem:[%s0 + $0x98] sm:$0xff]
    %v194 = vld [vmem:[%s0 + $0xa0] sm:$0xff]
    %v195 = vld [vmem:[%s0 + $0xa8] sm:$0xff]
    %v196 = vld [vmem:[%s0 + $0xb0] sm:$0xff]
    %v197 = vld [vmem:[%s0 + $0xb8] sm:$0xff]
    %v198 = vpack.c.bf16 %v174, %v174
    %v199 = vpack.c.bf16 %v175, %v175
    %v200 = vpack.c.bf16 %v176, %v176
    %v201 = vpack.c.bf16 %v177, %v177
    %v202 = vpack.c.bf16 %v178, %v178
    %v203 = vpack.c.bf16 %v179, %v179
    %v204 = vpack.c.bf16 %v180, %v180
    %v205 = vpack.c.bf16 %v181, %v181
    %v206 = vpack.c.bf16 %v182, %v182
    %v207 = vpack.c.bf16 %v183, %v183
    %v208 = vpack.c.bf16 %v184, %v184
    %v209 = vpack.c.bf16 %v185, %v185
    %v210 = vpack.c.bf16 %v186, %v186
    %v211 = vpack.c.bf16 %v187, %v187
    %v212 = vpack.c.bf16 %v188, %v188
    %v213 = vpack.c.bf16 %v189, %v189
    %v214 = vpack.c.bf16 %v190, %v190
    %v215 = vpack.c.bf16 %v191, %v191
    %v216 = vpack.c.bf16 %v192, %v192
    %v217 = vpack.c.bf16 %v193, %v193
    %v218 = vpack.c.bf16 %v194, %v194
    %v219 = vpack.c.bf16 %v195, %v195
    %v220 = vpack.c.bf16 %v196, %v196
    %v221 = vpack.c.bf16 %v197, %v197
    %v222 = vld [vmem:[#allocation2] sm:$0xff]
    %v223 = vld [vmem:[#allocation2 + $0x8] sm:$0xff]
    %v224 = vld [vmem:[#allocation2 + $0x10] sm:$0xff]
    %v225 = vld [vmem:[#allocation2 + $0x18] sm:$0xff]
    %v226 = vld [vmem:[#allocation2 + $0x20] sm:$0xff]
    %v227 = vld [vmem:[#allocation2 + $0x28] sm:$0xff]
    %v228 = vld [vmem:[#allocation2 + $0x30] sm:$0xff]
    %v229 = vld [vmem:[#allocation2 + $0x38] sm:$0xff]
    %v230 = vld [vmem:[#allocation2 + $0x40] sm:$0xff]
    %v231 = vld [vmem:[#allocation2 + $0x48] sm:$0xff]
    %v232 = vld [vmem:[#allocation2 + $0x50] sm:$0xff]
    %v233 = vld [vmem:[#allocation2 + $0x58] sm:$0xff]
    %v234 = vld [vmem:[#allocation2 + $0x60] sm:$0xff]
    %v235 = vld [vmem:[#allocation2 + $0x68] sm:$0xff]
    %v236 = vld [vmem:[#allocation2 + $0x70] sm:$0xff]
    %v237 = vld [vmem:[#allocation2 + $0x78] sm:$0xff]
    %v238 = vld [vmem:[#allocation2 + $0x80] sm:$0xff]
    %v239 = vld [vmem:[#allocation2 + $0x88] sm:$0xff]
    %v240 = vld [vmem:[#allocation2 + $0x90] sm:$0xff]
    %v241 = vld [vmem:[#allocation2 + $0x98] sm:$0xff]
    %v242 = vld [vmem:[#allocation2 + $0xa0] sm:$0xff]
    %v243 = vld [vmem:[#allocation2 + $0xa8] sm:$0xff]
    %v244 = vld [vmem:[#allocation2 + $0xb0] sm:$0xff]
    %v245 = vld [vmem:[#allocation2 + $0xb8] sm:$0xff]
    %v246 = vld [vmem:[#allocation2 + $0xc0] sm:$0xff]
    %v247 = vld [vmem:[#allocation2 + $0xc8] sm:$0xff]
    %v248 = vld [vmem:[#allocation2 + $0xd0] sm:$0xff]
    %v249 = vld [vmem:[#allocation2 + $0xd8] sm:$0xff]
    %v250 = vld [vmem:[#allocation2 + $0xe0] sm:$0xff]
    %v251 = vld [vmem:[#allocation2 + $0xe8] sm:$0xff]
    %v252 = vld [vmem:[#allocation2 + $0xf0] sm:$0xff]
    %v253 = vld [vmem:[#allocation2 + $0xf8] sm:$0xff]
    %v254 = vld [vmem:[#allocation2 + $0x100] sm:$0xff]
    %v255 = vld [vmem:[#allocation2 + $0x108] sm:$0xff]
    %v256 = vld [vmem:[#allocation2 + $0x110] sm:$0xff]
    %v257 = vld [vmem:[#allocation2 + $0x118] sm:$0xff]
    %v258 = vld [vmem:[#allocation2 + $0x120] sm:$0xff]
    %v259 = vld [vmem:[#allocation2 + $0x128] sm:$0xff]
    %v260 = vld [vmem:[#allocation2 + $0x130] sm:$0xff]
    %v261 = vld [vmem:[#allocation2 + $0x138] sm:$0xff]
    %v262 = vld [vmem:[#allocation2 + $0x140] sm:$0xff]
    %v263 = vld [vmem:[#allocation2 + $0x148] sm:$0xff]
    %v264 = vld [vmem:[#allocation2 + $0x150] sm:$0xff]
    %v265 = vld [vmem:[#allocation2 + $0x158] sm:$0xff]
    %v266 = vld [vmem:[#allocation2 + $0x160] sm:$0xff]
    %v267 = vld [vmem:[#allocation2 + $0x168] sm:$0xff]
    %v268 = vld [vmem:[#allocation2 + $0x170] sm:$0xff]
    %v269 = vld [vmem:[#allocation2 + $0x178] sm:$0xff]
    %v270 = vld [vmem:[#allocation2 + $0x180] sm:$0xff]
    %v271 = vld [vmem:[#allocation2 + $0x188] sm:$0xff]
    %v272 = vld [vmem:[#allocation2 + $0x190] sm:$0xff]
    %v273 = vld [vmem:[#allocation2 + $0x198] sm:$0xff]
    %v274 = vld [vmem:[#allocation2 + $0x1a0] sm:$0xff]
    %v275 = vld [vmem:[#allocation2 + $0x1a8] sm:$0xff]
    %v276 = vld [vmem:[#allocation2 + $0x1b0] sm:$0xff]
    %v277 = vld [vmem:[#allocation2 + $0x1b8] sm:$0xff]
    %v278 = vld [vmem:[#allocation2 + $0x1c0] sm:$0xff]
    %v279 = vld [vmem:[#allocation2 + $0x1c8] sm:$0xff]
    %v280 = vld [vmem:[#allocation2 + $0x1d0] sm:$0xff]
    %v281 = vld [vmem:[#allocation2 + $0x1d8] sm:$0xff]
    %v282 = vld [vmem:[#allocation2 + $0x1e0] sm:$0xff]
    %v283 = vld [vmem:[#allocation2 + $0x1e8] sm:$0xff]
    %v284 = vld [vmem:[#allocation2 + $0x1f0] sm:$0xff]
    %v285 = vld [vmem:[#allocation2 + $0x1f8] sm:$0xff]
    %v286 = vld [vmem:[#allocation2 + $0x200] sm:$0xff]
    %v287 = vld [vmem:[#allocation2 + $0x208] sm:$0xff]
    %v288 = vld [vmem:[#allocation2 + $0x210] sm:$0xff]
    %v289 = vld [vmem:[#allocation2 + $0x218] sm:$0xff]
    %v290 = vld [vmem:[#allocation2 + $0x220] sm:$0xff]
    %v291 = vld [vmem:[#allocation2 + $0x228] sm:$0xff]
    %v292 = vld [vmem:[#allocation2 + $0x230] sm:$0xff]
    %v293 = vld [vmem:[#allocation2 + $0x238] sm:$0xff]
    %v294 = vld [vmem:[#allocation2 + $0x240] sm:$0xff]
    %v295 = vld [vmem:[#allocation2 + $0x248] sm:$0xff]
    %v296 = vld [vmem:[#allocation2 + $0x250] sm:$0xff]
    %v297 = vld [vmem:[#allocation2 + $0x258] sm:$0xff]
    %v298 = vld [vmem:[#allocation2 + $0x260] sm:$0xff]
    %v299 = vld [vmem:[#allocation2 + $0x268] sm:$0xff]
    %v300 = vld [vmem:[#allocation2 + $0x270] sm:$0xff]
    %v301 = vld [vmem:[#allocation2 + $0x278] sm:$0xff]
    %v302 = vld [vmem:[#allocation2 + $0x280] sm:$0xff]
    %v303 = vld [vmem:[#allocation2 + $0x288] sm:$0xff]
    %v304 = vld [vmem:[#allocation2 + $0x290] sm:$0xff]
    %v305 = vld [vmem:[#allocation2 + $0x298] sm:$0xff]
    %v306 = vld [vmem:[#allocation2 + $0x2a0] sm:$0xff]
    %v307 = vld [vmem:[#allocation2 + $0x2a8] sm:$0xff]
    %v308 = vld [vmem:[#allocation2 + $0x2b0] sm:$0xff]
    %v309 = vld [vmem:[#allocation2 + $0x2b8] sm:$0xff]
    %v310 = vld [vmem:[#allocation2 + $0x2c0] sm:$0xff]
    %v311 = vld [vmem:[#allocation2 + $0x2c8] sm:$0xff]
    %v312 = vld [vmem:[#allocation2 + $0x2d0] sm:$0xff]
    %v313 = vld [vmem:[#allocation2 + $0x2d8] sm:$0xff]
    %v314 = vld [vmem:[#allocation2 + $0x2e0] sm:$0xff]
    %v315 = vld [vmem:[#allocation2 + $0x2e8] sm:$0xff]
    %v316 = vld [vmem:[#allocation2 + $0x2f0] sm:$0xff]
    %v317 = vld [vmem:[#allocation2 + $0x2f8] sm:$0xff]
    %v318 = vld [vmem:[#allocation2 + $0x300] sm:$0xff]
    %v319 = vld [vmem:[#allocation2 + $0x308] sm:$0xff]
    %v320 = vld [vmem:[#allocation2 + $0x310] sm:$0xff]
    %v321 = vld [vmem:[#allocation2 + $0x318] sm:$0xff]
    %v322 = vld [vmem:[#allocation2 + $0x320] sm:$0xff]
    %v323 = vld [vmem:[#allocation2 + $0x328] sm:$0xff]
    %v324 = vld [vmem:[#allocation2 + $0x330] sm:$0xff]
    %v325 = vld [vmem:[#allocation2 + $0x338] sm:$0xff]
    %v326 = vld [vmem:[#allocation2 + $0x340] sm:$0xff]
    %v327 = vld [vmem:[#allocation2 + $0x348] sm:$0xff]
    %v328 = vld [vmem:[#allocation2 + $0x350] sm:$0xff]
    %v329 = vld [vmem:[#allocation2 + $0x358] sm:$0xff]
    %v330 = vld [vmem:[#allocation2 + $0x360] sm:$0xff]
    %v331 = vld [vmem:[#allocation2 + $0x368] sm:$0xff]
    %v332 = vld [vmem:[#allocation2 + $0x370] sm:$0xff]
    %v333 = vld [vmem:[#allocation2 + $0x378] sm:$0xff]
    %v334 = vld [vmem:[#allocation2 + $0x380] sm:$0xff]
    %v335 = vld [vmem:[#allocation2 + $0x388] sm:$0xff]
    %v336 = vld [vmem:[#allocation2 + $0x390] sm:$0xff]
    %v337 = vld [vmem:[#allocation2 + $0x398] sm:$0xff]
    %v338 = vld [vmem:[#allocation2 + $0x3a0] sm:$0xff]
    %v339 = vld [vmem:[#allocation2 + $0x3a8] sm:$0xff]
    %v340 = vld [vmem:[#allocation2 + $0x3b0] sm:$0xff]
    %v341 = vld [vmem:[#allocation2 + $0x3b8] sm:$0xff]
    %v342 = vld [vmem:[#allocation2 + $0x3c0] sm:$0xff]
    %v343 = vld [vmem:[#allocation2 + $0x3c8] sm:$0xff]
    %v344 = vld [vmem:[#allocation2 + $0x3d0] sm:$0xff]
    %v345 = vld [vmem:[#allocation2 + $0x3d8] sm:$0xff]
    %v346 = vld [vmem:[#allocation2 + $0x3e0] sm:$0xff]
    %v347 = vld [vmem:[#allocation2 + $0x3e8] sm:$0xff]
    %v348 = vld [vmem:[#allocation2 + $0x3f0] sm:$0xff]
    %v349 = vld [vmem:[#allocation2 + $0x3f8] sm:$0xff]
    %v350 = vld [vmem:[#allocation2 + $0x400] sm:$0xff]
    %v351 = vld [vmem:[#allocation2 + $0x408] sm:$0xff]
    %v352 = vld [vmem:[#allocation2 + $0x410] sm:$0xff]
    %v353 = vld [vmem:[#allocation2 + $0x418] sm:$0xff]
    %v354 = vld [vmem:[#allocation2 + $0x420] sm:$0xff]
    %v355 = vld [vmem:[#allocation2 + $0x428] sm:$0xff]
    %v356 = vld [vmem:[#allocation2 + $0x430] sm:$0xff]
    %v357 = vld [vmem:[#allocation2 + $0x438] sm:$0xff]
    %v358 = vld [vmem:[#allocation2 + $0x440] sm:$0xff]
    %v359 = vld [vmem:[#allocation2 + $0x448] sm:$0xff]
    %v360 = vld [vmem:[#allocation2 + $0x450] sm:$0xff]
    %v361 = vld [vmem:[#allocation2 + $0x458] sm:$0xff]
    %v362 = vld [vmem:[#allocation2 + $0x460] sm:$0xff]
    %v363 = vld [vmem:[#allocation2 + $0x468] sm:$0xff]
    %v364 = vld [vmem:[#allocation2 + $0x470] sm:$0xff]
    %v365 = vld [vmem:[#allocation2 + $0x478] sm:$0xff]
    %v366 = vld [vmem:[#allocation2 + $0x480] sm:$0xff]
    %v367 = vld [vmem:[#allocation2 + $0x488] sm:$0xff]
    %v368 = vld [vmem:[#allocation2 + $0x490] sm:$0xff]
    %v369 = vld [vmem:[#allocation2 + $0x498] sm:$0xff]
    %v370 = vld [vmem:[#allocation2 + $0x4a0] sm:$0xff]
    %v371 = vld [vmem:[#allocation2 + $0x4a8] sm:$0xff]
    %v372 = vld [vmem:[#allocation2 + $0x4b0] sm:$0xff]
    %v373 = vld [vmem:[#allocation2 + $0x4b8] sm:$0xff]
    %v374 = vld [vmem:[#allocation2 + $0x4c0] sm:$0xff]
    %v375 = vld [vmem:[#allocation2 + $0x4c8] sm:$0xff]
    %v376 = vld [vmem:[#allocation2 + $0x4d0] sm:$0xff]
    %v377 = vld [vmem:[#allocation2 + $0x4d8] sm:$0xff]
    %v378 = vld [vmem:[#allocation2 + $0x4e0] sm:$0xff]
    %v379 = vld [vmem:[#allocation2 + $0x4e8] sm:$0xff]
    %v380 = vld [vmem:[#allocation2 + $0x4f0] sm:$0xff]
    %v381 = vld [vmem:[#allocation2 + $0x4f8] sm:$0xff]
    %v382 = vld [vmem:[#allocation2 + $0x500] sm:$0xff]
    %v383 = vld [vmem:[#allocation2 + $0x508] sm:$0xff]
    %v384 = vld [vmem:[#allocation2 + $0x510] sm:$0xff]
    %v385 = vld [vmem:[#allocation2 + $0x518] sm:$0xff]
    %v386 = vld [vmem:[#allocation2 + $0x520] sm:$0xff]
    %v387 = vld [vmem:[#allocation2 + $0x528] sm:$0xff]
    %v388 = vld [vmem:[#allocation2 + $0x530] sm:$0xff]
    %v389 = vld [vmem:[#allocation2 + $0x538] sm:$0xff]
    %v390 = vld [vmem:[#allocation2 + $0x540] sm:$0xff]
    %v391 = vld [vmem:[#allocation2 + $0x548] sm:$0xff]
    %v392 = vld [vmem:[#allocation2 + $0x550] sm:$0xff]
    %v393 = vld [vmem:[#allocation2 + $0x558] sm:$0xff]
    %v394 = vld [vmem:[#allocation2 + $0x560] sm:$0xff]
    %v395 = vld [vmem:[#allocation2 + $0x568] sm:$0xff]
    %v396 = vld [vmem:[#allocation2 + $0x570] sm:$0xff]
    %v397 = vld [vmem:[#allocation2 + $0x578] sm:$0xff]
    %v398 = vld [vmem:[#allocation2 + $0x580] sm:$0xff]
    %v399 = vld [vmem:[#allocation2 + $0x588] sm:$0xff]
    %v400 = vld [vmem:[#allocation2 + $0x590] sm:$0xff]
    %v401 = vld [vmem:[#allocation2 + $0x598] sm:$0xff]
    %v402 = vld [vmem:[#allocation2 + $0x5a0] sm:$0xff]
    %v403 = vld [vmem:[#allocation2 + $0x5a8] sm:$0xff]
    %v404 = vld [vmem:[#allocation2 + $0x5b0] sm:$0xff]
    %v405 = vld [vmem:[#allocation2 + $0x5b8] sm:$0xff]
    %v406 = vld [vmem:[#allocation2 + $0x5c0] sm:$0xff]
    %v407 = vld [vmem:[#allocation2 + $0x5c8] sm:$0xff]
    %v408 = vld [vmem:[#allocation2 + $0x5d0] sm:$0xff]
    %v409 = vld [vmem:[#allocation2 + $0x5d8] sm:$0xff]
    %v410 = vld [vmem:[#allocation2 + $0x5e0] sm:$0xff]
    %v411 = vld [vmem:[#allocation2 + $0x5e8] sm:$0xff]
    %v412 = vld [vmem:[#allocation2 + $0x5f0] sm:$0xff]
    %v413 = vld [vmem:[#allocation2 + $0x5f8] sm:$0xff]
    %v414 = vld [vmem:[#allocation2 + $0x600] sm:$0xff]
    %v415 = vld [vmem:[#allocation2 + $0x608] sm:$0xff]
    %v416 = vld [vmem:[#allocation2 + $0x610] sm:$0xff]
    %v417 = vld [vmem:[#allocation2 + $0x618] sm:$0xff]
    %v418 = vld [vmem:[#allocation2 + $0x620] sm:$0xff]
    %v419 = vld [vmem:[#allocation2 + $0x628] sm:$0xff]
    %v420 = vld [vmem:[#allocation2 + $0x630] sm:$0xff]
    %v421 = vld [vmem:[#allocation2 + $0x638] sm:$0xff]
    %v422 = vld [vmem:[#allocation2 + $0x640] sm:$0xff]
    %v423 = vld [vmem:[#allocation2 + $0x648] sm:$0xff]
    %v424 = vld [vmem:[#allocation2 + $0x650] sm:$0xff]
    %v425 = vld [vmem:[#allocation2 + $0x658] sm:$0xff]
    %v426 = vld [vmem:[#allocation2 + $0x660] sm:$0xff]
    %v427 = vld [vmem:[#allocation2 + $0x668] sm:$0xff]
    %v428 = vld [vmem:[#allocation2 + $0x670] sm:$0xff]
    %v429 = vld [vmem:[#allocation2 + $0x678] sm:$0xff]
    %v430 = vld [vmem:[#allocation2 + $0x680] sm:$0xff]
    %v431 = vld [vmem:[#allocation2 + $0x688] sm:$0xff]
    %v432 = vld [vmem:[#allocation2 + $0x690] sm:$0xff]
    %v433 = vld [vmem:[#allocation2 + $0x698] sm:$0xff]
    %v434 = vld [vmem:[#allocation2 + $0x6a0] sm:$0xff]
    %v435 = vld [vmem:[#allocation2 + $0x6a8] sm:$0xff]
    %v436 = vld [vmem:[#allocation2 + $0x6b0] sm:$0xff]
    %v437 = vld [vmem:[#allocation2 + $0x6b8] sm:$0xff]
    %v438 = vld [vmem:[#allocation2 + $0x6c0] sm:$0xff]
    %v439 = vld [vmem:[#allocation2 + $0x6c8] sm:$0xff]
    %v440 = vld [vmem:[#allocation2 + $0x6d0] sm:$0xff]
    %v441 = vld [vmem:[#allocation2 + $0x6d8] sm:$0xff]
    %v442 = vld [vmem:[#allocation2 + $0x6e0] sm:$0xff]
    %v443 = vld [vmem:[#allocation2 + $0x6e8] sm:$0xff]
    %v444 = vld [vmem:[#allocation2 + $0x6f0] sm:$0xff]
    %v445 = vld [vmem:[#allocation2 + $0x6f8] sm:$0xff]
    %v446 = vld [vmem:[#allocation2 + $0x700] sm:$0xff]
    %v447 = vld [vmem:[#allocation2 + $0x708] sm:$0xff]
    %v448 = vld [vmem:[#allocation2 + $0x710] sm:$0xff]
    %v449 = vld [vmem:[#allocation2 + $0x718] sm:$0xff]
    %v450 = vld [vmem:[#allocation2 + $0x720] sm:$0xff]
    %v451 = vld [vmem:[#allocation2 + $0x728] sm:$0xff]
    %v452 = vld [vmem:[#allocation2 + $0x730] sm:$0xff]
    %v453 = vld [vmem:[#allocation2 + $0x738] sm:$0xff]
    %v454 = vld [vmem:[#allocation2 + $0x740] sm:$0xff]
    %v455 = vld [vmem:[#allocation2 + $0x748] sm:$0xff]
    %v456 = vld [vmem:[#allocation2 + $0x750] sm:$0xff]
    %v457 = vld [vmem:[#allocation2 + $0x758] sm:$0xff]
    %v458 = vld [vmem:[#allocation2 + $0x760] sm:$0xff]
    %v459 = vld [vmem:[#allocation2 + $0x768] sm:$0xff]
    %v460 = vld [vmem:[#allocation2 + $0x770] sm:$0xff]
    %v461 = vld [vmem:[#allocation2 + $0x778] sm:$0xff]
    %v462 = vld [vmem:[#allocation2 + $0x780] sm:$0xff]
    %v463 = vld [vmem:[#allocation2 + $0x788] sm:$0xff]
    %v464 = vld [vmem:[#allocation2 + $0x790] sm:$0xff]
    %v465 = vld [vmem:[#allocation2 + $0x798] sm:$0xff]
    %v466 = vld [vmem:[#allocation2 + $0x7a0] sm:$0xff]
    %v467 = vld [vmem:[#allocation2 + $0x7a8] sm:$0xff]
    %v468 = vld [vmem:[#allocation2 + $0x7b0] sm:$0xff]
    %v469 = vld [vmem:[#allocation2 + $0x7b8] sm:$0xff]
    %v470 = vld [vmem:[#allocation2 + $0x7c0] sm:$0xff]
    %v471 = vld [vmem:[#allocation2 + $0x7c8] sm:$0xff]
    %v472 = vld [vmem:[#allocation2 + $0x7d0] sm:$0xff]
    %v473 = vld [vmem:[#allocation2 + $0x7d8] sm:$0xff]
    %v474 = vld [vmem:[#allocation2 + $0x7e0] sm:$0xff]
    %v475 = vld [vmem:[#allocation2 + $0x7e8] sm:$0xff]
    %v476 = vld [vmem:[#allocation2 + $0x7f0] sm:$0xff]
    %v477 = vld [vmem:[#allocation2 + $0x7f8] sm:$0xff]
    %v478 = vld [vmem:[#allocation2 + $0x800] sm:$0xff]
    %v479 = vld [vmem:[#allocation2 + $0x808] sm:$0xff]
    %v480 = vld [vmem:[#allocation2 + $0x810] sm:$0xff]
    %v481 = vld [vmem:[#allocation2 + $0x818] sm:$0xff]
    %v482 = vld [vmem:[#allocation2 + $0x820] sm:$0xff]
    %v483 = vld [vmem:[#allocation2 + $0x828] sm:$0xff]
    %v484 = vld [vmem:[#allocation2 + $0x830] sm:$0xff]
    %v485 = vld [vmem:[#allocation2 + $0x838] sm:$0xff]
    %v486 = vld [vmem:[#allocation2 + $0x840] sm:$0xff]
    %v487 = vld [vmem:[#allocation2 + $0x848] sm:$0xff]
    %v488 = vld [vmem:[#allocation2 + $0x850] sm:$0xff]
    %v489 = vld [vmem:[#allocation2 + $0x858] sm:$0xff]
    %v490 = vld [vmem:[#allocation2 + $0x860] sm:$0xff]
    %v491 = vld [vmem:[#allocation2 + $0x868] sm:$0xff]
    %v492 = vld [vmem:[#allocation2 + $0x870] sm:$0xff]
    %v493 = vld [vmem:[#allocation2 + $0x878] sm:$0xff]
    %v494 = vld [vmem:[#allocation2 + $0x880] sm:$0xff]
    %v495 = vld [vmem:[#allocation2 + $0x888] sm:$0xff]
    %v496 = vld [vmem:[#allocation2 + $0x890] sm:$0xff]
    %v497 = vld [vmem:[#allocation2 + $0x898] sm:$0xff]
    %v498 = vld [vmem:[#allocation2 + $0x8a0] sm:$0xff]
    %v499 = vld [vmem:[#allocation2 + $0x8a8] sm:$0xff]
    %v500 = vld [vmem:[#allocation2 + $0x8b0] sm:$0xff]
    %v501 = vld [vmem:[#allocation2 + $0x8b8] sm:$0xff]
    %v502 = vld [vmem:[#allocation2 + $0x8c0] sm:$0xff]
    %v503 = vld [vmem:[#allocation2 + $0x8c8] sm:$0xff]
    %v504 = vld [vmem:[#allocation2 + $0x8d0] sm:$0xff]
    %v505 = vld [vmem:[#allocation2 + $0x8d8] sm:$0xff]
    %v506 = vld [vmem:[#allocation2 + $0x8e0] sm:$0xff]
    %v507 = vld [vmem:[#allocation2 + $0x8e8] sm:$0xff]
    %v508 = vld [vmem:[#allocation2 + $0x8f0] sm:$0xff]
    %v509 = vld [vmem:[#allocation2 + $0x8f8] sm:$0xff]
    %v510 = vld [vmem:[#allocation2 + $0x900] sm:$0xff]
    %v511 = vld [vmem:[#allocation2 + $0x908] sm:$0xff]
    %v512 = vld [vmem:[#allocation2 + $0x910] sm:$0xff]
    %v513 = vld [vmem:[#allocation2 + $0x918] sm:$0xff]
    %v514 = vld [vmem:[#allocation2 + $0x920] sm:$0xff]
    %v515 = vld [vmem:[#allocation2 + $0x928] sm:$0xff]
    %v516 = vld [vmem:[#allocation2 + $0x930] sm:$0xff]
    %v517 = vld [vmem:[#allocation2 + $0x938] sm:$0xff]
    %v518 = vld [vmem:[#allocation2 + $0x940] sm:$0xff]
    %v519 = vld [vmem:[#allocation2 + $0x948] sm:$0xff]
    %v520 = vld [vmem:[#allocation2 + $0x950] sm:$0xff]
    %v521 = vld [vmem:[#allocation2 + $0x958] sm:$0xff]
    %v522 = vld [vmem:[#allocation2 + $0x960] sm:$0xff]
    %v523 = vld [vmem:[#allocation2 + $0x968] sm:$0xff]
    %v524 = vld [vmem:[#allocation2 + $0x970] sm:$0xff]
    %v525 = vld [vmem:[#allocation2 + $0x978] sm:$0xff]
    %v526 = vld [vmem:[#allocation2 + $0x980] sm:$0xff]
    %v527 = vld [vmem:[#allocation2 + $0x988] sm:$0xff]
    %v528 = vld [vmem:[#allocation2 + $0x990] sm:$0xff]
    %v529 = vld [vmem:[#allocation2 + $0x998] sm:$0xff]
    %v530 = vld [vmem:[#allocation2 + $0x9a0] sm:$0xff]
    %v531 = vld [vmem:[#allocation2 + $0x9a8] sm:$0xff]
    %v532 = vld [vmem:[#allocation2 + $0x9b0] sm:$0xff]
    %v533 = vld [vmem:[#allocation2 + $0x9b8] sm:$0xff]
    %v534 = vld [vmem:[#allocation2 + $0x9c0] sm:$0xff]
    %v535 = vld [vmem:[#allocation2 + $0x9c8] sm:$0xff]
    %v536 = vld [vmem:[#allocation2 + $0x9d0] sm:$0xff]
    %v537 = vld [vmem:[#allocation2 + $0x9d8] sm:$0xff]
    %v538 = vld [vmem:[#allocation2 + $0x9e0] sm:$0xff]
    %v539 = vld [vmem:[#allocation2 + $0x9e8] sm:$0xff]
    %v540 = vld [vmem:[#allocation2 + $0x9f0] sm:$0xff]
    %v541 = vld [vmem:[#allocation2 + $0x9f8] sm:$0xff]
    %v542 = vld [vmem:[#allocation2 + $0xa00] sm:$0xff]
    %v543 = vld [vmem:[#allocation2 + $0xa08] sm:$0xff]
    %v544 = vld [vmem:[#allocation2 + $0xa10] sm:$0xff]
    %v545 = vld [vmem:[#allocation2 + $0xa18] sm:$0xff]
    %v546 = vld [vmem:[#allocation2 + $0xa20] sm:$0xff]
    %v547 = vld [vmem:[#allocation2 + $0xa28] sm:$0xff]
    %v548 = vld [vmem:[#allocation2 + $0xa30] sm:$0xff]
    %v549 = vld [vmem:[#allocation2 + $0xa38] sm:$0xff]
    %v550 = vld [vmem:[#allocation2 + $0xa40] sm:$0xff]
    %v551 = vld [vmem:[#allocation2 + $0xa48] sm:$0xff]
    %v552 = vld [vmem:[#allocation2 + $0xa50] sm:$0xff]
    %v553 = vld [vmem:[#allocation2 + $0xa58] sm:$0xff]
    %v554 = vld [vmem:[#allocation2 + $0xa60] sm:$0xff]
    %v555 = vld [vmem:[#allocation2 + $0xa68] sm:$0xff]
    %v556 = vld [vmem:[#allocation2 + $0xa70] sm:$0xff]
    %v557 = vld [vmem:[#allocation2 + $0xa78] sm:$0xff]
    %v558 = vld [vmem:[#allocation2 + $0xa80] sm:$0xff]
    %v559 = vld [vmem:[#allocation2 + $0xa88] sm:$0xff]
    %v560 = vld [vmem:[#allocation2 + $0xa90] sm:$0xff]
    %v561 = vld [vmem:[#allocation2 + $0xa98] sm:$0xff]
    %v562 = vld [vmem:[#allocation2 + $0xaa0] sm:$0xff]
    %v563 = vld [vmem:[#allocation2 + $0xaa8] sm:$0xff]
    %v564 = vld [vmem:[#allocation2 + $0xab0] sm:$0xff]
    %v565 = vld [vmem:[#allocation2 + $0xab8] sm:$0xff]
    %v566 = vld [vmem:[#allocation2 + $0xac0] sm:$0xff]
    %v567 = vld [vmem:[#allocation2 + $0xac8] sm:$0xff]
    %v568 = vld [vmem:[#allocation2 + $0xad0] sm:$0xff]
    %v569 = vld [vmem:[#allocation2 + $0xad8] sm:$0xff]
    %v570 = vld [vmem:[#allocation2 + $0xae0] sm:$0xff]
    %v571 = vld [vmem:[#allocation2 + $0xae8] sm:$0xff]
    %v572 = vld [vmem:[#allocation2 + $0xaf0] sm:$0xff]
    %v573 = vld [vmem:[#allocation2 + $0xaf8] sm:$0xff]
    %v574 = vld [vmem:[#allocation2 + $0xb00] sm:$0xff]
    %v575 = vld [vmem:[#allocation2 + $0xb08] sm:$0xff]
    %v576 = vld [vmem:[#allocation2 + $0xb10] sm:$0xff]
    %v577 = vld [vmem:[#allocation2 + $0xb18] sm:$0xff]
    %v578 = vld [vmem:[#allocation2 + $0xb20] sm:$0xff]
    %v579 = vld [vmem:[#allocation2 + $0xb28] sm:$0xff]
    %v580 = vld [vmem:[#allocation2 + $0xb30] sm:$0xff]
    %v581 = vld [vmem:[#allocation2 + $0xb38] sm:$0xff]
    %v582 = vld [vmem:[#allocation2 + $0xb40] sm:$0xff]
    %v583 = vld [vmem:[#allocation2 + $0xb48] sm:$0xff]
    %v584 = vld [vmem:[#allocation2 + $0xb50] sm:$0xff]
    %v585 = vld [vmem:[#allocation2 + $0xb58] sm:$0xff]
    %v586 = vld [vmem:[#allocation2 + $0xb60] sm:$0xff]
    %v587 = vld [vmem:[#allocation2 + $0xb68] sm:$0xff]
    %v588 = vld [vmem:[#allocation2 + $0xb70] sm:$0xff]
    %v589 = vld [vmem:[#allocation2 + $0xb78] sm:$0xff]
    %v590 = vld [vmem:[#allocation2 + $0xb80] sm:$0xff]
    %v591 = vld [vmem:[#allocation2 + $0xb88] sm:$0xff]
    %v592 = vld [vmem:[#allocation2 + $0xb90] sm:$0xff]
    %v593 = vld [vmem:[#allocation2 + $0xb98] sm:$0xff]
    %v594 = vld [vmem:[#allocation2 + $0xba0] sm:$0xff]
    %v595 = vld [vmem:[#allocation2 + $0xba8] sm:$0xff]
    %v596 = vld [vmem:[#allocation2 + $0xbb0] sm:$0xff]
    %v597 = vld [vmem:[#allocation2 + $0xbb8] sm:$0xff]
    %v598 = vld [vmem:[#allocation2 + $0xbc0] sm:$0xff]
    %v599 = vld [vmem:[#allocation2 + $0xbc8] sm:$0xff]
    %v600 = vld [vmem:[#allocation2 + $0xbd0] sm:$0xff]
    %v601 = vld [vmem:[#allocation2 + $0xbd8] sm:$0xff]
    %v602 = vld [vmem:[#allocation2 + $0xbe0] sm:$0xff]
    %v603 = vld [vmem:[#allocation2 + $0xbe8] sm:$0xff]
    %v604 = vld [vmem:[#allocation2 + $0xbf0] sm:$0xff]
    %v605 = vld [vmem:[#allocation2 + $0xbf8] sm:$0xff]
    %v606 = vld [vmem:[#allocation2 + $0xc00] sm:$0xff]
    %v607 = vld [vmem:[#allocation2 + $0xc08] sm:$0xff]
    %v608 = vld [vmem:[#allocation2 + $0xc10] sm:$0xff]
    %v609 = vld [vmem:[#allocation2 + $0xc18] sm:$0xff]
    %v610 = vld [vmem:[#allocation2 + $0xc20] sm:$0xff]
    %v611 = vld [vmem:[#allocation2 + $0xc28] sm:$0xff]
    %v612 = vld [vmem:[#allocation2 + $0xc30] sm:$0xff]
    %v613 = vld [vmem:[#allocation2 + $0xc38] sm:$0xff]
    %v614 = vld [vmem:[#allocation2 + $0xc40] sm:$0xff]
    %v615 = vld [vmem:[#allocation2 + $0xc48] sm:$0xff]
    %v616 = vld [vmem:[#allocation2 + $0xc50] sm:$0xff]
    %v617 = vld [vmem:[#allocation2 + $0xc58] sm:$0xff]
    %v618 = vld [vmem:[#allocation2 + $0xc60] sm:$0xff]
    %v619 = vld [vmem:[#allocation2 + $0xc68] sm:$0xff]
    %v620 = vld [vmem:[#allocation2 + $0xc70] sm:$0xff]
    %v621 = vld [vmem:[#allocation2 + $0xc78] sm:$0xff]
    %v622 = vld [vmem:[#allocation2 + $0xc80] sm:$0xff]
    %v623 = vld [vmem:[#allocation2 + $0xc88] sm:$0xff]
    %v624 = vld [vmem:[#allocation2 + $0xc90] sm:$0xff]
    %v625 = vld [vmem:[#allocation2 + $0xc98] sm:$0xff]
    %v626 = vld [vmem:[#allocation2 + $0xca0] sm:$0xff]
    %v627 = vld [vmem:[#allocation2 + $0xca8] sm:$0xff]
    %v628 = vld [vmem:[#allocation2 + $0xcb0] sm:$0xff]
    %v629 = vld [vmem:[#allocation2 + $0xcb8] sm:$0xff]
    %v630 = vld [vmem:[#allocation2 + $0xcc0] sm:$0xff]
    %v631 = vld [vmem:[#allocation2 + $0xcc8] sm:$0xff]
    %v632 = vld [vmem:[#allocation2 + $0xcd0] sm:$0xff]
    %v633 = vld [vmem:[#allocation2 + $0xcd8] sm:$0xff]
    %v634 = vld [vmem:[#allocation2 + $0xce0] sm:$0xff]
    %v635 = vld [vmem:[#allocation2 + $0xce8] sm:$0xff]
    %v636 = vld [vmem:[#allocation2 + $0xcf0] sm:$0xff]
    %v637 = vld [vmem:[#allocation2 + $0xcf8] sm:$0xff]
    %v638 = vld [vmem:[#allocation2 + $0xd00] sm:$0xff]
    %v639 = vld [vmem:[#allocation2 + $0xd08] sm:$0xff]
    %v640 = vld [vmem:[#allocation2 + $0xd10] sm:$0xff]
    %v641 = vld [vmem:[#allocation2 + $0xd18] sm:$0xff]
    %v642 = vld [vmem:[#allocation2 + $0xd20] sm:$0xff]
    %v643 = vld [vmem:[#allocation2 + $0xd28] sm:$0xff]
    %v644 = vld [vmem:[#allocation2 + $0xd30] sm:$0xff]
    %v645 = vld [vmem:[#allocation2 + $0xd38] sm:$0xff]
    %v646 = vld [vmem:[#allocation2 + $0xd40] sm:$0xff]
    %v647 = vld [vmem:[#allocation2 + $0xd48] sm:$0xff]
    %v648 = vld [vmem:[#allocation2 + $0xd50] sm:$0xff]
    %v649 = vld [vmem:[#allocation2 + $0xd58] sm:$0xff]
    %v650 = vld [vmem:[#allocation2 + $0xd60] sm:$0xff]
    %v651 = vld [vmem:[#allocation2 + $0xd68] sm:$0xff]
    %v652 = vld [vmem:[#allocation2 + $0xd70] sm:$0xff]
    %v653 = vld [vmem:[#allocation2 + $0xd78] sm:$0xff]
    %v654 = vld [vmem:[#allocation2 + $0xd80] sm:$0xff]
    %v655 = vld [vmem:[#allocation2 + $0xd88] sm:$0xff]
    %v656 = vld [vmem:[#allocation2 + $0xd90] sm:$0xff]
    %v657 = vld [vmem:[#allocation2 + $0xd98] sm:$0xff]
    %v658 = vld [vmem:[#allocation2 + $0xda0] sm:$0xff]
    %v659 = vld [vmem:[#allocation2 + $0xda8] sm:$0xff]
    %v660 = vld [vmem:[#allocation2 + $0xdb0] sm:$0xff]
    %v661 = vld [vmem:[#allocation2 + $0xdb8] sm:$0xff]
    %v662 = vld [vmem:[#allocation2 + $0xdc0] sm:$0xff]
    %v663 = vld [vmem:[#allocation2 + $0xdc8] sm:$0xff]
    %v664 = vld [vmem:[#allocation2 + $0xdd0] sm:$0xff]
    %v665 = vld [vmem:[#allocation2 + $0xdd8] sm:$0xff]
    %v666 = vld [vmem:[#allocation2 + $0xde0] sm:$0xff]
    %v667 = vld [vmem:[#allocation2 + $0xde8] sm:$0xff]
    %v668 = vld [vmem:[#allocation2 + $0xdf0] sm:$0xff]
    %v669 = vld [vmem:[#allocation2 + $0xdf8] sm:$0xff]
    %v670 = vld [vmem:[#allocation2 + $0xe00] sm:$0xff]
    %v671 = vld [vmem:[#allocation2 + $0xe08] sm:$0xff]
    %v672 = vld [vmem:[#allocation2 + $0xe10] sm:$0xff]
    %v673 = vld [vmem:[#allocation2 + $0xe18] sm:$0xff]
    %v674 = vld [vmem:[#allocation2 + $0xe20] sm:$0xff]
    %v675 = vld [vmem:[#allocation2 + $0xe28] sm:$0xff]
    %v676 = vld [vmem:[#allocation2 + $0xe30] sm:$0xff]
    %v677 = vld [vmem:[#allocation2 + $0xe38] sm:$0xff]
    %v678 = vld [vmem:[#allocation2 + $0xe40] sm:$0xff]
    %v679 = vld [vmem:[#allocation2 + $0xe48] sm:$0xff]
    %v680 = vld [vmem:[#allocation2 + $0xe50] sm:$0xff]
    %v681 = vld [vmem:[#allocation2 + $0xe58] sm:$0xff]
    %v682 = vld [vmem:[#allocation2 + $0xe60] sm:$0xff]
    %v683 = vld [vmem:[#allocation2 + $0xe68] sm:$0xff]
    %v684 = vld [vmem:[#allocation2 + $0xe70] sm:$0xff]
    %v685 = vld [vmem:[#allocation2 + $0xe78] sm:$0xff]
    %v686 = vld [vmem:[#allocation2 + $0xe80] sm:$0xff]
    %v687 = vld [vmem:[#allocation2 + $0xe88] sm:$0xff]
    %v688 = vld [vmem:[#allocation2 + $0xe90] sm:$0xff]
    %v689 = vld [vmem:[#allocation2 + $0xe98] sm:$0xff]
    %v690 = vld [vmem:[#allocation2 + $0xea0] sm:$0xff]
    %v691 = vld [vmem:[#allocation2 + $0xea8] sm:$0xff]
    %v692 = vld [vmem:[#allocation2 + $0xeb0] sm:$0xff]
    %v693 = vld [vmem:[#allocation2 + $0xeb8] sm:$0xff]
    %v694 = vld [vmem:[#allocation2 + $0xec0] sm:$0xff]
    %v695 = vld [vmem:[#allocation2 + $0xec8] sm:$0xff]
    %v696 = vld [vmem:[#allocation2 + $0xed0] sm:$0xff]
    %v697 = vld [vmem:[#allocation2 + $0xed8] sm:$0xff]
    %v698 = vld [vmem:[#allocation2 + $0xee0] sm:$0xff]
    %v699 = vld [vmem:[#allocation2 + $0xee8] sm:$0xff]
    %v700 = vld [vmem:[#allocation2 + $0xef0] sm:$0xff]
    %v701 = vld [vmem:[#allocation2 + $0xef8] sm:$0xff]
    %v702 = vld [vmem:[#allocation2 + $0xf00] sm:$0xff]
    %v703 = vld [vmem:[#allocation2 + $0xf08] sm:$0xff]
    %v704 = vld [vmem:[#allocation2 + $0xf10] sm:$0xff]
    %v705 = vld [vmem:[#allocation2 + $0xf18] sm:$0xff]
    %v706 = vld [vmem:[#allocation2 + $0xf20] sm:$0xff]
    %v707 = vld [vmem:[#allocation2 + $0xf28] sm:$0xff]
    %v708 = vld [vmem:[#allocation2 + $0xf30] sm:$0xff]
    %v709 = vld [vmem:[#allocation2 + $0xf38] sm:$0xff]
    %v710 = vld [vmem:[#allocation2 + $0xf40] sm:$0xff]
    %v711 = vld [vmem:[#allocation2 + $0xf48] sm:$0xff]
    %v712 = vld [vmem:[#allocation2 + $0xf50] sm:$0xff]
    %v713 = vld [vmem:[#allocation2 + $0xf58] sm:$0xff]
    %v714 = vld [vmem:[#allocation2 + $0xf60] sm:$0xff]
    %v715 = vld [vmem:[#allocation2 + $0xf68] sm:$0xff]
    %v716 = vld [vmem:[#allocation2 + $0xf70] sm:$0xff]
    %v717 = vld [vmem:[#allocation2 + $0xf78] sm:$0xff]
    %v718 = vld [vmem:[#allocation2 + $0xf80] sm:$0xff]
    %v719 = vld [vmem:[#allocation2 + $0xf88] sm:$0xff]
    %v720 = vld [vmem:[#allocation2 + $0xf90] sm:$0xff]
    %v721 = vld [vmem:[#allocation2 + $0xf98] sm:$0xff]
    %v722 = vld [vmem:[#allocation2 + $0xfa0] sm:$0xff]
    %v723 = vld [vmem:[#allocation2 + $0xfa8] sm:$0xff]
    %v724 = vld [vmem:[#allocation2 + $0xfb0] sm:$0xff]
    %v725 = vld [vmem:[#allocation2 + $0xfb8] sm:$0xff]
    %v726 = vld [vmem:[#allocation2 + $0xfc0] sm:$0xff]
    %v727 = vld [vmem:[#allocation2 + $0xfc8] sm:$0xff]
    %v728 = vld [vmem:[#allocation2 + $0xfd0] sm:$0xff]
    %v729 = vld [vmem:[#allocation2 + $0xfd8] sm:$0xff]
    %v730 = vld [vmem:[#allocation2 + $0xfe0] sm:$0xff]
    %v731 = vld [vmem:[#allocation2 + $0xfe8] sm:$0xff]
    %v732 = vld [vmem:[#allocation2 + $0xff0] sm:$0xff]
    %v733 = vld [vmem:[#allocation2 + $0xff8] sm:$0xff]
    %v734 = vld [vmem:[#allocation2 + $0x1000] sm:$0xff]
    %v735 = vld [vmem:[#allocation2 + $0x1008] sm:$0xff]
    %v736 = vld [vmem:[#allocation2 + $0x1010] sm:$0xff]
    %v737 = vld [vmem:[#allocation2 + $0x1018] sm:$0xff]
    %v738 = vld [vmem:[#allocation2 + $0x1020] sm:$0xff]
    %v739 = vld [vmem:[#allocation2 + $0x1028] sm:$0xff]
    %v740 = vld [vmem:[#allocation2 + $0x1030] sm:$0xff]
    %v741 = vld [vmem:[#allocation2 + $0x1038] sm:$0xff]
    %v742 = vld [vmem:[#allocation2 + $0x1040] sm:$0xff]
    %v743 = vld [vmem:[#allocation2 + $0x1048] sm:$0xff]
    %v744 = vld [vmem:[#allocation2 + $0x1050] sm:$0xff]
    %v745 = vld [vmem:[#allocation2 + $0x1058] sm:$0xff]
    %v746 = vld [vmem:[#allocation2 + $0x1060] sm:$0xff]
    %v747 = vld [vmem:[#allocation2 + $0x1068] sm:$0xff]
    %v748 = vld [vmem:[#allocation2 + $0x1070] sm:$0xff]
    %v749 = vld [vmem:[#allocation2 + $0x1078] sm:$0xff]
    %v750 = vld [vmem:[#allocation2 + $0x1080] sm:$0xff]
    %v751 = vld [vmem:[#allocation2 + $0x1088] sm:$0xff]
    %v752 = vld [vmem:[#allocation2 + $0x1090] sm:$0xff]
    %v753 = vld [vmem:[#allocation2 + $0x1098] sm:$0xff]
    %v754 = vld [vmem:[#allocation2 + $0x10a0] sm:$0xff]
    %v755 = vld [vmem:[#allocation2 + $0x10a8] sm:$0xff]
    %v756 = vld [vmem:[#allocation2 + $0x10b0] sm:$0xff]
    %v757 = vld [vmem:[#allocation2 + $0x10b8] sm:$0xff]
    %v758 = vld [vmem:[#allocation2 + $0x10c0] sm:$0xff]
    %v759 = vld [vmem:[#allocation2 + $0x10c8] sm:$0xff]
    %v760 = vld [vmem:[#allocation2 + $0x10d0] sm:$0xff]
    %v761 = vld [vmem:[#allocation2 + $0x10d8] sm:$0xff]
    %v762 = vld [vmem:[#allocation2 + $0x10e0] sm:$0xff]
    %v763 = vld [vmem:[#allocation2 + $0x10e8] sm:$0xff]
    %v764 = vld [vmem:[#allocation2 + $0x10f0] sm:$0xff]
    %v765 = vld [vmem:[#allocation2 + $0x10f8] sm:$0xff]
    %v766 = vld [vmem:[#allocation2 + $0x1100] sm:$0xff]
    %v767 = vld [vmem:[#allocation2 + $0x1108] sm:$0xff]
    %v768 = vld [vmem:[#allocation2 + $0x1110] sm:$0xff]
    %v769 = vld [vmem:[#allocation2 + $0x1118] sm:$0xff]
    %v770 = vld [vmem:[#allocation2 + $0x1120] sm:$0xff]
    %v771 = vld [vmem:[#allocation2 + $0x1128] sm:$0xff]
    %v772 = vld [vmem:[#allocation2 + $0x1130] sm:$0xff]
    %v773 = vld [vmem:[#allocation2 + $0x1138] sm:$0xff]
    %v774 = vld [vmem:[#allocation2 + $0x1140] sm:$0xff]
    %v775 = vld [vmem:[#allocation2 + $0x1148] sm:$0xff]
    %v776 = vld [vmem:[#allocation2 + $0x1150] sm:$0xff]
    %v777 = vld [vmem:[#allocation2 + $0x1158] sm:$0xff]
    %v778 = vld [vmem:[#allocation2 + $0x1160] sm:$0xff]
    %v779 = vld [vmem:[#allocation2 + $0x1168] sm:$0xff]
    %v780 = vld [vmem:[#allocation2 + $0x1170] sm:$0xff]
    %v781 = vld [vmem:[#allocation2 + $0x1178] sm:$0xff]
    %v782 = vld [vmem:[#allocation2 + $0x1180] sm:$0xff]
    %v783 = vld [vmem:[#allocation2 + $0x1188] sm:$0xff]
    %v784 = vld [vmem:[#allocation2 + $0x1190] sm:$0xff]
    %v785 = vld [vmem:[#allocation2 + $0x1198] sm:$0xff]
    %v786 = vld [vmem:[#allocation2 + $0x11a0] sm:$0xff]
    %v787 = vld [vmem:[#allocation2 + $0x11a8] sm:$0xff]
    %v788 = vld [vmem:[#allocation2 + $0x11b0] sm:$0xff]
    %v789 = vld [vmem:[#allocation2 + $0x11b8] sm:$0xff]
    %v790 = vld [vmem:[#allocation2 + $0x11c0] sm:$0xff]
    %v791 = vld [vmem:[#allocation2 + $0x11c8] sm:$0xff]
    %v792 = vld [vmem:[#allocation2 + $0x11d0] sm:$0xff]
    %v793 = vld [vmem:[#allocation2 + $0x11d8] sm:$0xff]
    %v794 = vld [vmem:[#allocation2 + $0x11e0] sm:$0xff]
    %v795 = vld [vmem:[#allocation2 + $0x11e8] sm:$0xff]
    %v796 = vld [vmem:[#allocation2 + $0x11f0] sm:$0xff]
    %v797 = vld [vmem:[#allocation2 + $0x11f8] sm:$0xff]
    %v798 = vld [vmem:[#allocation2 + $0x1200] sm:$0xff]
    %v799 = vld [vmem:[#allocation2 + $0x1208] sm:$0xff]
    %v800 = vld [vmem:[#allocation2 + $0x1210] sm:$0xff]
    %v801 = vld [vmem:[#allocation2 + $0x1218] sm:$0xff]
    %v802 = vld [vmem:[#allocation2 + $0x1220] sm:$0xff]
    %v803 = vld [vmem:[#allocation2 + $0x1228] sm:$0xff]
    %v804 = vld [vmem:[#allocation2 + $0x1230] sm:$0xff]
    %v805 = vld [vmem:[#allocation2 + $0x1238] sm:$0xff]
    %v806 = vld [vmem:[#allocation2 + $0x1240] sm:$0xff]
    %v807 = vld [vmem:[#allocation2 + $0x1248] sm:$0xff]
    %v808 = vld [vmem:[#allocation2 + $0x1250] sm:$0xff]
    %v809 = vld [vmem:[#allocation2 + $0x1258] sm:$0xff]
    %v810 = vld [vmem:[#allocation2 + $0x1260] sm:$0xff]
    %v811 = vld [vmem:[#allocation2 + $0x1268] sm:$0xff]
    %v812 = vld [vmem:[#allocation2 + $0x1270] sm:$0xff]
    %v813 = vld [vmem:[#allocation2 + $0x1278] sm:$0xff]
    %v814 = vld [vmem:[#allocation2 + $0x1280] sm:$0xff]
    %v815 = vld [vmem:[#allocation2 + $0x1288] sm:$0xff]
    %v816 = vld [vmem:[#allocation2 + $0x1290] sm:$0xff]
    %v817 = vld [vmem:[#allocation2 + $0x1298] sm:$0xff]
    %v818 = vld [vmem:[#allocation2 + $0x12a0] sm:$0xff]
    %v819 = vld [vmem:[#allocation2 + $0x12a8] sm:$0xff]
    %v820 = vld [vmem:[#allocation2 + $0x12b0] sm:$0xff]
    %v821 = vld [vmem:[#allocation2 + $0x12b8] sm:$0xff]
    %v822 = vld [vmem:[#allocation2 + $0x12c0] sm:$0xff]
    %v823 = vld [vmem:[#allocation2 + $0x12c8] sm:$0xff]
    %v824 = vld [vmem:[#allocation2 + $0x12d0] sm:$0xff]
    %v825 = vld [vmem:[#allocation2 + $0x12d8] sm:$0xff]
    %v826 = vld [vmem:[#allocation2 + $0x12e0] sm:$0xff]
    %v827 = vld [vmem:[#allocation2 + $0x12e8] sm:$0xff]
    %v828 = vld [vmem:[#allocation2 + $0x12f0] sm:$0xff]
    %v829 = vld [vmem:[#allocation2 + $0x12f8] sm:$0xff]
    %v830 = vld [vmem:[#allocation2 + $0x1300] sm:$0xff]
    %v831 = vld [vmem:[#allocation2 + $0x1308] sm:$0xff]
    %v832 = vld [vmem:[#allocation2 + $0x1310] sm:$0xff]
    %v833 = vld [vmem:[#allocation2 + $0x1318] sm:$0xff]
    %v834 = vld [vmem:[#allocation2 + $0x1320] sm:$0xff]
    %v835 = vld [vmem:[#allocation2 + $0x1328] sm:$0xff]
    %v836 = vld [vmem:[#allocation2 + $0x1330] sm:$0xff]
    %v837 = vld [vmem:[#allocation2 + $0x1338] sm:$0xff]
    %v838 = vld [vmem:[#allocation2 + $0x1340] sm:$0xff]
    %v839 = vld [vmem:[#allocation2 + $0x1348] sm:$0xff]
    %v840 = vld [vmem:[#allocation2 + $0x1350] sm:$0xff]
    %v841 = vld [vmem:[#allocation2 + $0x1358] sm:$0xff]
    %v842 = vld [vmem:[#allocation2 + $0x1360] sm:$0xff]
    %v843 = vld [vmem:[#allocation2 + $0x1368] sm:$0xff]
    %v844 = vld [vmem:[#allocation2 + $0x1370] sm:$0xff]
    %v845 = vld [vmem:[#allocation2 + $0x1378] sm:$0xff]
    %v846 = vld [vmem:[#allocation2 + $0x1380] sm:$0xff]
    %v847 = vld [vmem:[#allocation2 + $0x1388] sm:$0xff]
    %v848 = vld [vmem:[#allocation2 + $0x1390] sm:$0xff]
    %v849 = vld [vmem:[#allocation2 + $0x1398] sm:$0xff]
    %v850 = vld [vmem:[#allocation2 + $0x13a0] sm:$0xff]
    %v851 = vld [vmem:[#allocation2 + $0x13a8] sm:$0xff]
    %v852 = vld [vmem:[#allocation2 + $0x13b0] sm:$0xff]
    %v853 = vld [vmem:[#allocation2 + $0x13b8] sm:$0xff]
    %v854 = vld [vmem:[#allocation2 + $0x13c0] sm:$0xff]
    %v855 = vld [vmem:[#allocation2 + $0x13c8] sm:$0xff]
    %v856 = vld [vmem:[#allocation2 + $0x13d0] sm:$0xff]
    %v857 = vld [vmem:[#allocation2 + $0x13d8] sm:$0xff]
    %v858 = vld [vmem:[#allocation2 + $0x13e0] sm:$0xff]
    %v859 = vld [vmem:[#allocation2 + $0x13e8] sm:$0xff]
    %v860 = vld [vmem:[#allocation2 + $0x13f0] sm:$0xff]
    %v861 = vld [vmem:[#allocation2 + $0x13f8] sm:$0xff]
    %v862 = vld [vmem:[#allocation2 + $0x1400] sm:$0xff]
    %v863 = vld [vmem:[#allocation2 + $0x1408] sm:$0xff]
    %v864 = vld [vmem:[#allocation2 + $0x1410] sm:$0xff]
    %v865 = vld [vmem:[#allocation2 + $0x1418] sm:$0xff]
    %v866 = vld [vmem:[#allocation2 + $0x1420] sm:$0xff]
    %v867 = vld [vmem:[#allocation2 + $0x1428] sm:$0xff]
    %v868 = vld [vmem:[#allocation2 + $0x1430] sm:$0xff]
    %v869 = vld [vmem:[#allocation2 + $0x1438] sm:$0xff]
    %v870 = vld [vmem:[#allocation2 + $0x1440] sm:$0xff]
    %v871 = vld [vmem:[#allocation2 + $0x1448] sm:$0xff]
    %v872 = vld [vmem:[#allocation2 + $0x1450] sm:$0xff]
    %v873 = vld [vmem:[#allocation2 + $0x1458] sm:$0xff]
    %v874 = vld [vmem:[#allocation2 + $0x1460] sm:$0xff]
    %v875 = vld [vmem:[#allocation2 + $0x1468] sm:$0xff]
    %v876 = vld [vmem:[#allocation2 + $0x1470] sm:$0xff]
    %v877 = vld [vmem:[#allocation2 + $0x1478] sm:$0xff]
    %v878 = vld [vmem:[#allocation2 + $0x1480] sm:$0xff]
    %v879 = vld [vmem:[#allocation2 + $0x1488] sm:$0xff]
    %v880 = vld [vmem:[#allocation2 + $0x1490] sm:$0xff]
    %v881 = vld [vmem:[#allocation2 + $0x1498] sm:$0xff]
    %v882 = vld [vmem:[#allocation2 + $0x14a0] sm:$0xff]
    %v883 = vld [vmem:[#allocation2 + $0x14a8] sm:$0xff]
    %v884 = vld [vmem:[#allocation2 + $0x14b0] sm:$0xff]
    %v885 = vld [vmem:[#allocation2 + $0x14b8] sm:$0xff]
    %v886 = vld [vmem:[#allocation2 + $0x14c0] sm:$0xff]
    %v887 = vld [vmem:[#allocation2 + $0x14c8] sm:$0xff]
    %v888 = vld [vmem:[#allocation2 + $0x14d0] sm:$0xff]
    %v889 = vld [vmem:[#allocation2 + $0x14d8] sm:$0xff]
    %v890 = vld [vmem:[#allocation2 + $0x14e0] sm:$0xff]
    %v891 = vld [vmem:[#allocation2 + $0x14e8] sm:$0xff]
    %v892 = vld [vmem:[#allocation2 + $0x14f0] sm:$0xff]
    %v893 = vld [vmem:[#allocation2 + $0x14f8] sm:$0xff]
    %v894 = vld [vmem:[#allocation2 + $0x1500] sm:$0xff]
    %v895 = vld [vmem:[#allocation2 + $0x1508] sm:$0xff]
    %v896 = vld [vmem:[#allocation2 + $0x1510] sm:$0xff]
    %v897 = vld [vmem:[#allocation2 + $0x1518] sm:$0xff]
    %v898 = vld [vmem:[#allocation2 + $0x1520] sm:$0xff]
    %v899 = vld [vmem:[#allocation2 + $0x1528] sm:$0xff]
    %v900 = vld [vmem:[#allocation2 + $0x1530] sm:$0xff]
    %v901 = vld [vmem:[#allocation2 + $0x1538] sm:$0xff]
    %v902 = vld [vmem:[#allocation2 + $0x1540] sm:$0xff]
    %v903 = vld [vmem:[#allocation2 + $0x1548] sm:$0xff]
    %v904 = vld [vmem:[#allocation2 + $0x1550] sm:$0xff]
    %v905 = vld [vmem:[#allocation2 + $0x1558] sm:$0xff]
    %v906 = vld [vmem:[#allocation2 + $0x1560] sm:$0xff]
    %v907 = vld [vmem:[#allocation2 + $0x1568] sm:$0xff]
    %v908 = vld [vmem:[#allocation2 + $0x1570] sm:$0xff]
    %v909 = vld [vmem:[#allocation2 + $0x1578] sm:$0xff]
    %v910 = vld [vmem:[#allocation2 + $0x1580] sm:$0xff]
    %v911 = vld [vmem:[#allocation2 + $0x1588] sm:$0xff]
    %v912 = vld [vmem:[#allocation2 + $0x1590] sm:$0xff]
    %v913 = vld [vmem:[#allocation2 + $0x1598] sm:$0xff]
    %v914 = vld [vmem:[#allocation2 + $0x15a0] sm:$0xff]
    %v915 = vld [vmem:[#allocation2 + $0x15a8] sm:$0xff]
    %v916 = vld [vmem:[#allocation2 + $0x15b0] sm:$0xff]
    %v917 = vld [vmem:[#allocation2 + $0x15b8] sm:$0xff]
    %v918 = vld [vmem:[#allocation2 + $0x15c0] sm:$0xff]
    %v919 = vld [vmem:[#allocation2 + $0x15c8] sm:$0xff]
    %v920 = vld [vmem:[#allocation2 + $0x15d0] sm:$0xff]
    %v921 = vld [vmem:[#allocation2 + $0x15d8] sm:$0xff]
    %v922 = vld [vmem:[#allocation2 + $0x15e0] sm:$0xff]
    %v923 = vld [vmem:[#allocation2 + $0x15e8] sm:$0xff]
    %v924 = vld [vmem:[#allocation2 + $0x15f0] sm:$0xff]
    %v925 = vld [vmem:[#allocation2 + $0x15f8] sm:$0xff]
    %v926 = vld [vmem:[#allocation2 + $0x1600] sm:$0xff]
    %v927 = vld [vmem:[#allocation2 + $0x1608] sm:$0xff]
    %v928 = vld [vmem:[#allocation2 + $0x1610] sm:$0xff]
    %v929 = vld [vmem:[#allocation2 + $0x1618] sm:$0xff]
    %v930 = vld [vmem:[#allocation2 + $0x1620] sm:$0xff]
    %v931 = vld [vmem:[#allocation2 + $0x1628] sm:$0xff]
    %v932 = vld [vmem:[#allocation2 + $0x1630] sm:$0xff]
    %v933 = vld [vmem:[#allocation2 + $0x1638] sm:$0xff]
    %v934 = vld [vmem:[#allocation2 + $0x1640] sm:$0xff]
    %v935 = vld [vmem:[#allocation2 + $0x1648] sm:$0xff]
    %v936 = vld [vmem:[#allocation2 + $0x1650] sm:$0xff]
    %v937 = vld [vmem:[#allocation2 + $0x1658] sm:$0xff]
    %v938 = vld [vmem:[#allocation2 + $0x1660] sm:$0xff]
    %v939 = vld [vmem:[#allocation2 + $0x1668] sm:$0xff]
    %v940 = vld [vmem:[#allocation2 + $0x1670] sm:$0xff]
    %v941 = vld [vmem:[#allocation2 + $0x1678] sm:$0xff]
    %v942 = vld [vmem:[#allocation2 + $0x1680] sm:$0xff]
    %v943 = vld [vmem:[#allocation2 + $0x1688] sm:$0xff]
    %v944 = vld [vmem:[#allocation2 + $0x1690] sm:$0xff]
    %v945 = vld [vmem:[#allocation2 + $0x1698] sm:$0xff]
    %v946 = vld [vmem:[#allocation2 + $0x16a0] sm:$0xff]
    %v947 = vld [vmem:[#allocation2 + $0x16a8] sm:$0xff]
    %v948 = vld [vmem:[#allocation2 + $0x16b0] sm:$0xff]
    %v949 = vld [vmem:[#allocation2 + $0x16b8] sm:$0xff]
    %v950 = vld [vmem:[#allocation2 + $0x16c0] sm:$0xff]
    %v951 = vld [vmem:[#allocation2 + $0x16c8] sm:$0xff]
    %v952 = vld [vmem:[#allocation2 + $0x16d0] sm:$0xff]
    %v953 = vld [vmem:[#allocation2 + $0x16d8] sm:$0xff]
    %v954 = vld [vmem:[#allocation2 + $0x16e0] sm:$0xff]
    %v955 = vld [vmem:[#allocation2 + $0x16e8] sm:$0xff]
    %v956 = vld [vmem:[#allocation2 + $0x16f0] sm:$0xff]
    %v957 = vld [vmem:[#allocation2 + $0x16f8] sm:$0xff]
    %v958 = vld [vmem:[#allocation2 + $0x1700] sm:$0xff]
    %v959 = vld [vmem:[#allocation2 + $0x1708] sm:$0xff]
    %v960 = vld [vmem:[#allocation2 + $0x1710] sm:$0xff]
    %v961 = vld [vmem:[#allocation2 + $0x1718] sm:$0xff]
    %v962 = vld [vmem:[#allocation2 + $0x1720] sm:$0xff]
    %v963 = vld [vmem:[#allocation2 + $0x1728] sm:$0xff]
    %v964 = vld [vmem:[#allocation2 + $0x1730] sm:$0xff]
    %v965 = vld [vmem:[#allocation2 + $0x1738] sm:$0xff]
    %v966 = vld [vmem:[#allocation2 + $0x1740] sm:$0xff]
    %v967 = vld [vmem:[#allocation2 + $0x1748] sm:$0xff]
    %v968 = vld [vmem:[#allocation2 + $0x1750] sm:$0xff]
    %v969 = vld [vmem:[#allocation2 + $0x1758] sm:$0xff]
    %v970 = vld [vmem:[#allocation2 + $0x1760] sm:$0xff]
    %v971 = vld [vmem:[#allocation2 + $0x1768] sm:$0xff]
    %v972 = vld [vmem:[#allocation2 + $0x1770] sm:$0xff]
    %v973 = vld [vmem:[#allocation2 + $0x1778] sm:$0xff]
    %v974 = vld [vmem:[#allocation2 + $0x1780] sm:$0xff]
    %v975 = vld [vmem:[#allocation2 + $0x1788] sm:$0xff]
    %v976 = vld [vmem:[#allocation2 + $0x1790] sm:$0xff]
    %v977 = vld [vmem:[#allocation2 + $0x1798] sm:$0xff]
    %v978 = vld [vmem:[#allocation2 + $0x17a0] sm:$0xff]
    %v979 = vld [vmem:[#allocation2 + $0x17a8] sm:$0xff]
    %v980 = vld [vmem:[#allocation2 + $0x17b0] sm:$0xff]
    %v981 = vld [vmem:[#allocation2 + $0x17b8] sm:$0xff]
    %v982 = vld [vmem:[#allocation2 + $0x17c0] sm:$0xff]
    %v983 = vld [vmem:[#allocation2 + $0x17c8] sm:$0xff]
    %v984 = vld [vmem:[#allocation2 + $0x17d0] sm:$0xff]
    %v985 = vld [vmem:[#allocation2 + $0x17d8] sm:$0xff]
    %v986 = vld [vmem:[#allocation2 + $0x17e0] sm:$0xff]
    %v987 = vld [vmem:[#allocation2 + $0x17e8] sm:$0xff]
    %v988 = vld [vmem:[#allocation2 + $0x17f0] sm:$0xff]
    %v989 = vld [vmem:[#allocation2 + $0x17f8] sm:$0xff]
    %v990 = vld [vmem:[#allocation4] sm:$0xf]
    %v992 = vperm.slane %v990, 0
    %v993 = vperm.slane %v990, 1
    %v994 = vperm.slane %v990, 2
    %v995 = vperm.slane %v990, 3
    %v1768 = vunpack.c.l.b16 %v222
    %v1769 = vunpack.c.h.b16 %v222
    %v1770 = vunpack.c.l.b16 %v223
    %v1771 = vunpack.c.h.b16 %v223
    %v1772 = vunpack.c.l.b16 %v224
    %v1773 = vunpack.c.h.b16 %v224
    %v1774 = vunpack.c.l.b16 %v225
    %v1775 = vunpack.c.h.b16 %v225
    %v1776 = vunpack.c.l.b16 %v226
    %v1777 = vunpack.c.h.b16 %v226
    %v1778 = vunpack.c.l.b16 %v227
    %v1779 = vunpack.c.h.b16 %v227
    %v1780 = vunpack.c.l.b16 %v228
    %v1781 = vunpack.c.h.b16 %v228
    %v1782 = vunpack.c.l.b16 %v229
    %v1783 = vunpack.c.h.b16 %v229
    %v1784 = vunpack.c.l.b16 %v230
    %v1785 = vunpack.c.h.b16 %v230
    %v1786 = vunpack.c.l.b16 %v231
    %v1787 = vunpack.c.h.b16 %v231
    %v1788 = vunpack.c.l.b16 %v232
    %v1789 = vunpack.c.h.b16 %v232
    %v1790 = vunpack.c.l.b16 %v233
    %v1791 = vunpack.c.h.b16 %v233
    %v1792 = vunpack.c.l.b16 %v234
    %v1793 = vunpack.c.h.b16 %v234
    %v1794 = vunpack.c.l.b16 %v235
    %v1795 = vunpack.c.h.b16 %v235
    %v1796 = vunpack.c.l.b16 %v236
    %v1797 = vunpack.c.h.b16 %v236
    %v1798 = vunpack.c.l.b16 %v237
    %v1799 = vunpack.c.h.b16 %v237
    %v1800 = vunpack.c.l.b16 %v238
    %v1801 = vunpack.c.h.b16 %v238
    %v1802 = vunpack.c.l.b16 %v239
    %v1803 = vunpack.c.h.b16 %v239
    %v1804 = vunpack.c.l.b16 %v240
    %v1805 = vunpack.c.h.b16 %v240
    %v1806 = vunpack.c.l.b16 %v241
    %v1807 = vunpack.c.h.b16 %v241
    %v1808 = vunpack.c.l.b16 %v242
    %v1809 = vunpack.c.h.b16 %v242
    %v1810 = vunpack.c.l.b16 %v243
    %v1811 = vunpack.c.h.b16 %v243
    %v1812 = vunpack.c.l.b16 %v244
    %v1813 = vunpack.c.h.b16 %v244
    %v1814 = vunpack.c.l.b16 %v245
    %v1815 = vunpack.c.h.b16 %v245
    %v1816 = vunpack.c.l.b16 %v246
    %v1817 = vunpack.c.h.b16 %v246
    %v1818 = vunpack.c.l.b16 %v247
    %v1819 = vunpack.c.h.b16 %v247
    %v1820 = vunpack.c.l.b16 %v248
    %v1821 = vunpack.c.h.b16 %v248
    %v1822 = vunpack.c.l.b16 %v249
    %v1823 = vunpack.c.h.b16 %v249
    %v1824 = vunpack.c.l.b16 %v250
    %v1825 = vunpack.c.h.b16 %v250
    %v1826 = vunpack.c.l.b16 %v251
    %v1827 = vunpack.c.h.b16 %v251
    %v1828 = vunpack.c.l.b16 %v252
    %v1829 = vunpack.c.h.b16 %v252
    %v1830 = vunpack.c.l.b16 %v253
    %v1831 = vunpack.c.h.b16 %v253
    %v1832 = vunpack.c.l.b16 %v254
    %v1833 = vunpack.c.h.b16 %v254
    %v1834 = vunpack.c.l.b16 %v255
    %v1835 = vunpack.c.h.b16 %v255
    %v1836 = vunpack.c.l.b16 %v256
    %v1837 = vunpack.c.h.b16 %v256
    %v1838 = vunpack.c.l.b16 %v257
    %v1839 = vunpack.c.h.b16 %v257
    %v1840 = vunpack.c.l.b16 %v258
    %v1841 = vunpack.c.h.b16 %v258
    %v1842 = vunpack.c.l.b16 %v259
    %v1843 = vunpack.c.h.b16 %v259
    %v1844 = vunpack.c.l.b16 %v260
    %v1845 = vunpack.c.h.b16 %v260
    %v1846 = vunpack.c.l.b16 %v261
    %v1847 = vunpack.c.h.b16 %v261
    %v1848 = vunpack.c.l.b16 %v262
    %v1849 = vunpack.c.h.b16 %v262
    %v1850 = vunpack.c.l.b16 %v263
    %v1851 = vunpack.c.h.b16 %v263
    %v1852 = vunpack.c.l.b16 %v264
    %v1853 = vunpack.c.h.b16 %v264
    %v1854 = vunpack.c.l.b16 %v265
    %v1855 = vunpack.c.h.b16 %v265
    %v1856 = vunpack.c.l.b16 %v266
    %v1857 = vunpack.c.h.b16 %v266
    %v1858 = vunpack.c.l.b16 %v267
    %v1859 = vunpack.c.h.b16 %v267
    %v1860 = vunpack.c.l.b16 %v268
    %v1861 = vunpack.c.h.b16 %v268
    %v1862 = vunpack.c.l.b16 %v269
    %v1863 = vunpack.c.h.b16 %v269
    %v1864 = vunpack.c.l.b16 %v270
    %v1865 = vunpack.c.h.b16 %v270
    %v1866 = vunpack.c.l.b16 %v271
    %v1867 = vunpack.c.h.b16 %v271
    %v1868 = vunpack.c.l.b16 %v272
    %v1869 = vunpack.c.h.b16 %v272
    %v1870 = vunpack.c.l.b16 %v273
    %v1871 = vunpack.c.h.b16 %v273
    %v1872 = vunpack.c.l.b16 %v274
    %v1873 = vunpack.c.h.b16 %v274
    %v1874 = vunpack.c.l.b16 %v275
    %v1875 = vunpack.c.h.b16 %v275
    %v1876 = vunpack.c.l.b16 %v276
    %v1877 = vunpack.c.h.b16 %v276
    %v1878 = vunpack.c.l.b16 %v277
    %v1879 = vunpack.c.h.b16 %v277
    %v1880 = vunpack.c.l.b16 %v278
    %v1881 = vunpack.c.h.b16 %v278
    %v1882 = vunpack.c.l.b16 %v279
    %v1883 = vunpack.c.h.b16 %v279
    %v1884 = vunpack.c.l.b16 %v280
    %v1885 = vunpack.c.h.b16 %v280
    %v1886 = vunpack.c.l.b16 %v281
    %v1887 = vunpack.c.h.b16 %v281
    %v1888 = vunpack.c.l.b16 %v282
    %v1889 = vunpack.c.h.b16 %v282
    %v1890 = vunpack.c.l.b16 %v283
    %v1891 = vunpack.c.h.b16 %v283
    %v1892 = vunpack.c.l.b16 %v284
    %v1893 = vunpack.c.h.b16 %v284
    %v1894 = vunpack.c.l.b16 %v285
    %v1895 = vunpack.c.h.b16 %v285
    %v1896 = vunpack.c.l.b16 %v286
    %v1897 = vunpack.c.h.b16 %v286
    %v1898 = vunpack.c.l.b16 %v287
    %v1899 = vunpack.c.h.b16 %v287
    %v1900 = vunpack.c.l.b16 %v288
    %v1901 = vunpack.c.h.b16 %v288
    %v1902 = vunpack.c.l.b16 %v289
    %v1903 = vunpack.c.h.b16 %v289
    %v1904 = vunpack.c.l.b16 %v290
    %v1905 = vunpack.c.h.b16 %v290
    %v1906 = vunpack.c.l.b16 %v291
    %v1907 = vunpack.c.h.b16 %v291
    %v1908 = vunpack.c.l.b16 %v292
    %v1909 = vunpack.c.h.b16 %v292
    %v1910 = vunpack.c.l.b16 %v293
    %v1911 = vunpack.c.h.b16 %v293
    %v1912 = vunpack.c.l.b16 %v294
    %v1913 = vunpack.c.h.b16 %v294
    %v1914 = vunpack.c.l.b16 %v295
    %v1915 = vunpack.c.h.b16 %v295
    %v1916 = vunpack.c.l.b16 %v296
    %v1917 = vunpack.c.h.b16 %v296
    %v1918 = vunpack.c.l.b16 %v297
    %v1919 = vunpack.c.h.b16 %v297
    %v1920 = vunpack.c.l.b16 %v298
    %v1921 = vunpack.c.h.b16 %v298
    %v1922 = vunpack.c.l.b16 %v299
    %v1923 = vunpack.c.h.b16 %v299
    %v1924 = vunpack.c.l.b16 %v300
    %v1925 = vunpack.c.h.b16 %v300
    %v1926 = vunpack.c.l.b16 %v301
    %v1927 = vunpack.c.h.b16 %v301
    %v1928 = vunpack.c.l.b16 %v302
    %v1929 = vunpack.c.h.b16 %v302
    %v1930 = vunpack.c.l.b16 %v303
    %v1931 = vunpack.c.h.b16 %v303
    %v1932 = vunpack.c.l.b16 %v304
    %v1933 = vunpack.c.h.b16 %v304
    %v1934 = vunpack.c.l.b16 %v305
    %v1935 = vunpack.c.h.b16 %v305
    %v1936 = vunpack.c.l.b16 %v306
    %v1937 = vunpack.c.h.b16 %v306
    %v1938 = vunpack.c.l.b16 %v307
    %v1939 = vunpack.c.h.b16 %v307
    %v1940 = vunpack.c.l.b16 %v308
    %v1941 = vunpack.c.h.b16 %v308
    %v1942 = vunpack.c.l.b16 %v309
    %v1943 = vunpack.c.h.b16 %v309
    %v1944 = vunpack.c.l.b16 %v310
    %v1945 = vunpack.c.h.b16 %v310
    %v1946 = vunpack.c.l.b16 %v311
    %v1947 = vunpack.c.h.b16 %v311
    %v1948 = vunpack.c.l.b16 %v312
    %v1949 = vunpack.c.h.b16 %v312
    %v1950 = vunpack.c.l.b16 %v313
    %v1951 = vunpack.c.h.b16 %v313
    %v1952 = vunpack.c.l.b16 %v314
    %v1953 = vunpack.c.h.b16 %v314
    %v1954 = vunpack.c.l.b16 %v315
    %v1955 = vunpack.c.h.b16 %v315
    %v1956 = vunpack.c.l.b16 %v316
    %v1957 = vunpack.c.h.b16 %v316
    %v1958 = vunpack.c.l.b16 %v317
    %v1959 = vunpack.c.h.b16 %v317
    %v1960 = vunpack.c.l.b16 %v318
    %v1961 = vunpack.c.h.b16 %v318
    %v1962 = vunpack.c.l.b16 %v319
    %v1963 = vunpack.c.h.b16 %v319
    %v1964 = vunpack.c.l.b16 %v320
    %v1965 = vunpack.c.h.b16 %v320
    %v1966 = vunpack.c.l.b16 %v321
    %v1967 = vunpack.c.h.b16 %v321
    %v1968 = vunpack.c.l.b16 %v322
    %v1969 = vunpack.c.h.b16 %v322
    %v1970 = vunpack.c.l.b16 %v323
    %v1971 = vunpack.c.h.b16 %v323
    %v1972 = vunpack.c.l.b16 %v324
    %v1973 = vunpack.c.h.b16 %v324
    %v1974 = vunpack.c.l.b16 %v325
    %v1975 = vunpack.c.h.b16 %v325
    %v1976 = vunpack.c.l.b16 %v326
    %v1977 = vunpack.c.h.b16 %v326
    %v1978 = vunpack.c.l.b16 %v327
    %v1979 = vunpack.c.h.b16 %v327
    %v1980 = vunpack.c.l.b16 %v328
    %v1981 = vunpack.c.h.b16 %v328
    %v1982 = vunpack.c.l.b16 %v329
    %v1983 = vunpack.c.h.b16 %v329
    %v1984 = vunpack.c.l.b16 %v330
    %v1985 = vunpack.c.h.b16 %v330
    %v1986 = vunpack.c.l.b16 %v331
    %v1987 = vunpack.c.h.b16 %v331
    %v1988 = vunpack.c.l.b16 %v332
    %v1989 = vunpack.c.h.b16 %v332
    %v1990 = vunpack.c.l.b16 %v333
    %v1991 = vunpack.c.h.b16 %v333
    %v1992 = vunpack.c.l.b16 %v334
    %v1993 = vunpack.c.h.b16 %v334
    %v1994 = vunpack.c.l.b16 %v335
    %v1995 = vunpack.c.h.b16 %v335
    %v1996 = vunpack.c.l.b16 %v336
    %v1997 = vunpack.c.h.b16 %v336
    %v1998 = vunpack.c.l.b16 %v337
    %v1999 = vunpack.c.h.b16 %v337
    %v2000 = vunpack.c.l.b16 %v338
    %v2001 = vunpack.c.h.b16 %v338
    %v2002 = vunpack.c.l.b16 %v339
    %v2003 = vunpack.c.h.b16 %v339
    %v2004 = vunpack.c.l.b16 %v340
    %v2005 = vunpack.c.h.b16 %v340
    %v2006 = vunpack.c.l.b16 %v341
    %v2007 = vunpack.c.h.b16 %v341
    %v2008 = vunpack.c.l.b16 %v342
    %v2009 = vunpack.c.h.b16 %v342
    %v2010 = vunpack.c.l.b16 %v343
    %v2011 = vunpack.c.h.b16 %v343
    %v2012 = vunpack.c.l.b16 %v344
    %v2013 = vunpack.c.h.b16 %v344
    %v2014 = vunpack.c.l.b16 %v345
    %v2015 = vunpack.c.h.b16 %v345
    %v2016 = vunpack.c.l.b16 %v346
    %v2017 = vunpack.c.h.b16 %v346
    %v2018 = vunpack.c.l.b16 %v347
    %v2019 = vunpack.c.h.b16 %v347
    %v2020 = vunpack.c.l.b16 %v348
    %v2021 = vunpack.c.h.b16 %v348
    %v2022 = vunpack.c.l.b16 %v349
    %v2023 = vunpack.c.h.b16 %v349
    %v2024 = vunpack.c.l.b16 %v350
    %v2025 = vunpack.c.h.b16 %v350
    %v2026 = vunpack.c.l.b16 %v351
    %v2027 = vunpack.c.h.b16 %v351
    %v2028 = vunpack.c.l.b16 %v352
    %v2029 = vunpack.c.h.b16 %v352
    %v2030 = vunpack.c.l.b16 %v353
    %v2031 = vunpack.c.h.b16 %v353
    %v2032 = vunpack.c.l.b16 %v354
    %v2033 = vunpack.c.h.b16 %v354
    %v2034 = vunpack.c.l.b16 %v355
    %v2035 = vunpack.c.h.b16 %v355
    %v2036 = vunpack.c.l.b16 %v356
    %v2037 = vunpack.c.h.b16 %v356
    %v2038 = vunpack.c.l.b16 %v357
    %v2039 = vunpack.c.h.b16 %v357
    %v2040 = vunpack.c.l.b16 %v358
    %v2041 = vunpack.c.h.b16 %v358
    %v2042 = vunpack.c.l.b16 %v359
    %v2043 = vunpack.c.h.b16 %v359
    %v2044 = vunpack.c.l.b16 %v360
    %v2045 = vunpack.c.h.b16 %v360
    %v2046 = vunpack.c.l.b16 %v361
    %v2047 = vunpack.c.h.b16 %v361
    %v2048 = vunpack.c.l.b16 %v362
    %v2049 = vunpack.c.h.b16 %v362
    %v2050 = vunpack.c.l.b16 %v363
    %v2051 = vunpack.c.h.b16 %v363
    %v2052 = vunpack.c.l.b16 %v364
    %v2053 = vunpack.c.h.b16 %v364
    %v2054 = vunpack.c.l.b16 %v365
    %v2055 = vunpack.c.h.b16 %v365
    %v2056 = vunpack.c.l.b16 %v366
    %v2057 = vunpack.c.h.b16 %v366
    %v2058 = vunpack.c.l.b16 %v367
    %v2059 = vunpack.c.h.b16 %v367
    %v2060 = vunpack.c.l.b16 %v368
    %v2061 = vunpack.c.h.b16 %v368
    %v2062 = vunpack.c.l.b16 %v369
    %v2063 = vunpack.c.h.b16 %v369
    %v2064 = vunpack.c.l.b16 %v370
    %v2065 = vunpack.c.h.b16 %v370
    %v2066 = vunpack.c.l.b16 %v371
    %v2067 = vunpack.c.h.b16 %v371
    %v2068 = vunpack.c.l.b16 %v372
    %v2069 = vunpack.c.h.b16 %v372
    %v2070 = vunpack.c.l.b16 %v373
    %v2071 = vunpack.c.h.b16 %v373
    %v2072 = vunpack.c.l.b16 %v374
    %v2073 = vunpack.c.h.b16 %v374
    %v2074 = vunpack.c.l.b16 %v375
    %v2075 = vunpack.c.h.b16 %v375
    %v2076 = vunpack.c.l.b16 %v376
    %v2077 = vunpack.c.h.b16 %v376
    %v2078 = vunpack.c.l.b16 %v377
    %v2079 = vunpack.c.h.b16 %v377
    %v2080 = vunpack.c.l.b16 %v378
    %v2081 = vunpack.c.h.b16 %v378
    %v2082 = vunpack.c.l.b16 %v379
    %v2083 = vunpack.c.h.b16 %v379
    %v2084 = vunpack.c.l.b16 %v380
    %v2085 = vunpack.c.h.b16 %v380
    %v2086 = vunpack.c.l.b16 %v381
    %v2087 = vunpack.c.h.b16 %v381
    %v2088 = vunpack.c.l.b16 %v382
    %v2089 = vunpack.c.h.b16 %v382
    %v2090 = vunpack.c.l.b16 %v383
    %v2091 = vunpack.c.h.b16 %v383
    %v2092 = vunpack.c.l.b16 %v384
    %v2093 = vunpack.c.h.b16 %v384
    %v2094 = vunpack.c.l.b16 %v385
    %v2095 = vunpack.c.h.b16 %v385
    %v2096 = vunpack.c.l.b16 %v386
    %v2097 = vunpack.c.h.b16 %v386
    %v2098 = vunpack.c.l.b16 %v387
    %v2099 = vunpack.c.h.b16 %v387
    %v2100 = vunpack.c.l.b16 %v388
    %v2101 = vunpack.c.h.b16 %v388
    %v2102 = vunpack.c.l.b16 %v389
    %v2103 = vunpack.c.h.b16 %v389
    %v2104 = vunpack.c.l.b16 %v390
    %v2105 = vunpack.c.h.b16 %v390
    %v2106 = vunpack.c.l.b16 %v391
    %v2107 = vunpack.c.h.b16 %v391
    %v2108 = vunpack.c.l.b16 %v392
    %v2109 = vunpack.c.h.b16 %v392
    %v2110 = vunpack.c.l.b16 %v393
    %v2111 = vunpack.c.h.b16 %v393
    %v2112 = vunpack.c.l.b16 %v394
    %v2113 = vunpack.c.h.b16 %v394
    %v2114 = vunpack.c.l.b16 %v395
    %v2115 = vunpack.c.h.b16 %v395
    %v2116 = vunpack.c.l.b16 %v396
    %v2117 = vunpack.c.h.b16 %v396
    %v2118 = vunpack.c.l.b16 %v397
    %v2119 = vunpack.c.h.b16 %v397
    %v2120 = vunpack.c.l.b16 %v398
    %v2121 = vunpack.c.h.b16 %v398
    %v2122 = vunpack.c.l.b16 %v399
    %v2123 = vunpack.c.h.b16 %v399
    %v2124 = vunpack.c.l.b16 %v400
    %v2125 = vunpack.c.h.b16 %v400
    %v2126 = vunpack.c.l.b16 %v401
    %v2127 = vunpack.c.h.b16 %v401
    %v2128 = vunpack.c.l.b16 %v402
    %v2129 = vunpack.c.h.b16 %v402
    %v2130 = vunpack.c.l.b16 %v403
    %v2131 = vunpack.c.h.b16 %v403
    %v2132 = vunpack.c.l.b16 %v404
    %v2133 = vunpack.c.h.b16 %v404
    %v2134 = vunpack.c.l.b16 %v405
    %v2135 = vunpack.c.h.b16 %v405
    %v2136 = vunpack.c.l.b16 %v406
    %v2137 = vunpack.c.h.b16 %v406
    %v2138 = vunpack.c.l.b16 %v407
    %v2139 = vunpack.c.h.b16 %v407
    %v2140 = vunpack.c.l.b16 %v408
    %v2141 = vunpack.c.h.b16 %v408
    %v2142 = vunpack.c.l.b16 %v409
    %v2143 = vunpack.c.h.b16 %v409
    %v2144 = vunpack.c.l.b16 %v410
    %v2145 = vunpack.c.h.b16 %v410
    %v2146 = vunpack.c.l.b16 %v411
    %v2147 = vunpack.c.h.b16 %v411
    %v2148 = vunpack.c.l.b16 %v412
    %v2149 = vunpack.c.h.b16 %v412
    %v2150 = vunpack.c.l.b16 %v413
    %v2151 = vunpack.c.h.b16 %v413
    %v2152 = vunpack.c.l.b16 %v414
    %v2153 = vunpack.c.h.b16 %v414
    %v2154 = vunpack.c.l.b16 %v415
    %v2155 = vunpack.c.h.b16 %v415
    %v2156 = vunpack.c.l.b16 %v416
    %v2157 = vunpack.c.h.b16 %v416
    %v2158 = vunpack.c.l.b16 %v417
    %v2159 = vunpack.c.h.b16 %v417
    %v2160 = vunpack.c.l.b16 %v418
    %v2161 = vunpack.c.h.b16 %v418
    %v2162 = vunpack.c.l.b16 %v419
    %v2163 = vunpack.c.h.b16 %v419
    %v2164 = vunpack.c.l.b16 %v420
    %v2165 = vunpack.c.h.b16 %v420
    %v2166 = vunpack.c.l.b16 %v421
    %v2167 = vunpack.c.h.b16 %v421
    %v2168 = vunpack.c.l.b16 %v422
    %v2169 = vunpack.c.h.b16 %v422
    %v2170 = vunpack.c.l.b16 %v423
    %v2171 = vunpack.c.h.b16 %v423
    %v2172 = vunpack.c.l.b16 %v424
    %v2173 = vunpack.c.h.b16 %v424
    %v2174 = vunpack.c.l.b16 %v425
    %v2175 = vunpack.c.h.b16 %v425
    %v2176 = vunpack.c.l.b16 %v426
    %v2177 = vunpack.c.h.b16 %v426
    %v2178 = vunpack.c.l.b16 %v427
    %v2179 = vunpack.c.h.b16 %v427
    %v2180 = vunpack.c.l.b16 %v428
    %v2181 = vunpack.c.h.b16 %v428
    %v2182 = vunpack.c.l.b16 %v429
    %v2183 = vunpack.c.h.b16 %v429
    %v2184 = vunpack.c.l.b16 %v430
    %v2185 = vunpack.c.h.b16 %v430
    %v2186 = vunpack.c.l.b16 %v431
    %v2187 = vunpack.c.h.b16 %v431
    %v2188 = vunpack.c.l.b16 %v432
    %v2189 = vunpack.c.h.b16 %v432
    %v2190 = vunpack.c.l.b16 %v433
    %v2191 = vunpack.c.h.b16 %v433
    %v2192 = vunpack.c.l.b16 %v434
    %v2193 = vunpack.c.h.b16 %v434
    %v2194 = vunpack.c.l.b16 %v435
    %v2195 = vunpack.c.h.b16 %v435
    %v2196 = vunpack.c.l.b16 %v436
    %v2197 = vunpack.c.h.b16 %v436
    %v2198 = vunpack.c.l.b16 %v437
    %v2199 = vunpack.c.h.b16 %v437
    %v2200 = vunpack.c.l.b16 %v438
    %v2201 = vunpack.c.h.b16 %v438
    %v2202 = vunpack.c.l.b16 %v439
    %v2203 = vunpack.c.h.b16 %v439
    %v2204 = vunpack.c.l.b16 %v440
    %v2205 = vunpack.c.h.b16 %v440
    %v2206 = vunpack.c.l.b16 %v441
    %v2207 = vunpack.c.h.b16 %v441
    %v2208 = vunpack.c.l.b16 %v442
    %v2209 = vunpack.c.h.b16 %v442
    %v2210 = vunpack.c.l.b16 %v443
    %v2211 = vunpack.c.h.b16 %v443
    %v2212 = vunpack.c.l.b16 %v444
    %v2213 = vunpack.c.h.b16 %v444
    %v2214 = vunpack.c.l.b16 %v445
    %v2215 = vunpack.c.h.b16 %v445
    %v2216 = vunpack.c.l.b16 %v446
    %v2217 = vunpack.c.h.b16 %v446
    %v2218 = vunpack.c.l.b16 %v447
    %v2219 = vunpack.c.h.b16 %v447
    %v2220 = vunpack.c.l.b16 %v448
    %v2221 = vunpack.c.h.b16 %v448
    %v2222 = vunpack.c.l.b16 %v449
    %v2223 = vunpack.c.h.b16 %v449
    %v2224 = vunpack.c.l.b16 %v450
    %v2225 = vunpack.c.h.b16 %v450
    %v2226 = vunpack.c.l.b16 %v451
    %v2227 = vunpack.c.h.b16 %v451
    %v2228 = vunpack.c.l.b16 %v452
    %v2229 = vunpack.c.h.b16 %v452
    %v2230 = vunpack.c.l.b16 %v453
    %v2231 = vunpack.c.h.b16 %v453
    %v2232 = vunpack.c.l.b16 %v454
    %v2233 = vunpack.c.h.b16 %v454
    %v2234 = vunpack.c.l.b16 %v455
    %v2235 = vunpack.c.h.b16 %v455
    %v2236 = vunpack.c.l.b16 %v456
    %v2237 = vunpack.c.h.b16 %v456
    %v2238 = vunpack.c.l.b16 %v457
    %v2239 = vunpack.c.h.b16 %v457
    %v2240 = vunpack.c.l.b16 %v458
    %v2241 = vunpack.c.h.b16 %v458
    %v2242 = vunpack.c.l.b16 %v459
    %v2243 = vunpack.c.h.b16 %v459
    %v2244 = vunpack.c.l.b16 %v460
    %v2245 = vunpack.c.h.b16 %v460
    %v2246 = vunpack.c.l.b16 %v461
    %v2247 = vunpack.c.h.b16 %v461
    %v2248 = vunpack.c.l.b16 %v462
    %v2249 = vunpack.c.h.b16 %v462
    %v2250 = vunpack.c.l.b16 %v463
    %v2251 = vunpack.c.h.b16 %v463
    %v2252 = vunpack.c.l.b16 %v464
    %v2253 = vunpack.c.h.b16 %v464
    %v2254 = vunpack.c.l.b16 %v465
    %v2255 = vunpack.c.h.b16 %v465
    %v2256 = vunpack.c.l.b16 %v466
    %v2257 = vunpack.c.h.b16 %v466
    %v2258 = vunpack.c.l.b16 %v467
    %v2259 = vunpack.c.h.b16 %v467
    %v2260 = vunpack.c.l.b16 %v468
    %v2261 = vunpack.c.h.b16 %v468
    %v2262 = vunpack.c.l.b16 %v469
    %v2263 = vunpack.c.h.b16 %v469
    %v2264 = vunpack.c.l.b16 %v470
    %v2265 = vunpack.c.h.b16 %v470
    %v2266 = vunpack.c.l.b16 %v471
    %v2267 = vunpack.c.h.b16 %v471
    %v2268 = vunpack.c.l.b16 %v472
    %v2269 = vunpack.c.h.b16 %v472
    %v2270 = vunpack.c.l.b16 %v473
    %v2271 = vunpack.c.h.b16 %v473
    %v2272 = vunpack.c.l.b16 %v474
    %v2273 = vunpack.c.h.b16 %v474
    %v2274 = vunpack.c.l.b16 %v475
    %v2275 = vunpack.c.h.b16 %v475
    %v2276 = vunpack.c.l.b16 %v476
    %v2277 = vunpack.c.h.b16 %v476
    %v2278 = vunpack.c.l.b16 %v477
    %v2279 = vunpack.c.h.b16 %v477
    %v2280 = vunpack.c.l.b16 %v478
    %v2281 = vunpack.c.h.b16 %v478
    %v2282 = vunpack.c.l.b16 %v479
    %v2283 = vunpack.c.h.b16 %v479
    %v2284 = vunpack.c.l.b16 %v480
    %v2285 = vunpack.c.h.b16 %v480
    %v2286 = vunpack.c.l.b16 %v481
    %v2287 = vunpack.c.h.b16 %v481
    %v2288 = vunpack.c.l.b16 %v482
    %v2289 = vunpack.c.h.b16 %v482
    %v2290 = vunpack.c.l.b16 %v483
    %v2291 = vunpack.c.h.b16 %v483
    %v2292 = vunpack.c.l.b16 %v484
    %v2293 = vunpack.c.h.b16 %v484
    %v2294 = vunpack.c.l.b16 %v485
    %v2295 = vunpack.c.h.b16 %v485
    %v2296 = vunpack.c.l.b16 %v486
    %v2297 = vunpack.c.h.b16 %v486
    %v2298 = vunpack.c.l.b16 %v487
    %v2299 = vunpack.c.h.b16 %v487
    %v2300 = vunpack.c.l.b16 %v488
    %v2301 = vunpack.c.h.b16 %v488
    %v2302 = vunpack.c.l.b16 %v489
    %v2303 = vunpack.c.h.b16 %v489
    %v2304 = vunpack.c.l.b16 %v490
    %v2305 = vunpack.c.h.b16 %v490
    %v2306 = vunpack.c.l.b16 %v491
    %v2307 = vunpack.c.h.b16 %v491
    %v2308 = vunpack.c.l.b16 %v492
    %v2309 = vunpack.c.h.b16 %v492
    %v2310 = vunpack.c.l.b16 %v493
    %v2311 = vunpack.c.h.b16 %v493
    %v2312 = vunpack.c.l.b16 %v494
    %v2313 = vunpack.c.h.b16 %v494
    %v2314 = vunpack.c.l.b16 %v495
    %v2315 = vunpack.c.h.b16 %v495
    %v2316 = vunpack.c.l.b16 %v496
    %v2317 = vunpack.c.h.b16 %v496
    %v2318 = vunpack.c.l.b16 %v497
    %v2319 = vunpack.c.h.b16 %v497
    %v2320 = vunpack.c.l.b16 %v498
    %v2321 = vunpack.c.h.b16 %v498
    %v2322 = vunpack.c.l.b16 %v499
    %v2323 = vunpack.c.h.b16 %v499
    %v2324 = vunpack.c.l.b16 %v500
    %v2325 = vunpack.c.h.b16 %v500
    %v2326 = vunpack.c.l.b16 %v501
    %v2327 = vunpack.c.h.b16 %v501
    %v2328 = vunpack.c.l.b16 %v502
    %v2329 = vunpack.c.h.b16 %v502
    %v2330 = vunpack.c.l.b16 %v503
    %v2331 = vunpack.c.h.b16 %v503
    %v2332 = vunpack.c.l.b16 %v504
    %v2333 = vunpack.c.h.b16 %v504
    %v2334 = vunpack.c.l.b16 %v505
    %v2335 = vunpack.c.h.b16 %v505
    %v2336 = vunpack.c.l.b16 %v506
    %v2337 = vunpack.c.h.b16 %v506
    %v2338 = vunpack.c.l.b16 %v507
    %v2339 = vunpack.c.h.b16 %v507
    %v2340 = vunpack.c.l.b16 %v508
    %v2341 = vunpack.c.h.b16 %v508
    %v2342 = vunpack.c.l.b16 %v509
    %v2343 = vunpack.c.h.b16 %v509
    %v2344 = vunpack.c.l.b16 %v510
    %v2345 = vunpack.c.h.b16 %v510
    %v2346 = vunpack.c.l.b16 %v511
    %v2347 = vunpack.c.h.b16 %v511
    %v2348 = vunpack.c.l.b16 %v512
    %v2349 = vunpack.c.h.b16 %v512
    %v2350 = vunpack.c.l.b16 %v513
    %v2351 = vunpack.c.h.b16 %v513
    %v2352 = vunpack.c.l.b16 %v514
    %v2353 = vunpack.c.h.b16 %v514
    %v2354 = vunpack.c.l.b16 %v515
    %v2355 = vunpack.c.h.b16 %v515
    %v2356 = vunpack.c.l.b16 %v516
    %v2357 = vunpack.c.h.b16 %v516
    %v2358 = vunpack.c.l.b16 %v517
    %v2359 = vunpack.c.h.b16 %v517
    %v2360 = vunpack.c.l.b16 %v518
    %v2361 = vunpack.c.h.b16 %v518
    %v2362 = vunpack.c.l.b16 %v519
    %v2363 = vunpack.c.h.b16 %v519
    %v2364 = vunpack.c.l.b16 %v520
    %v2365 = vunpack.c.h.b16 %v520
    %v2366 = vunpack.c.l.b16 %v521
    %v2367 = vunpack.c.h.b16 %v521
    %v2368 = vunpack.c.l.b16 %v522
    %v2369 = vunpack.c.h.b16 %v522
    %v2370 = vunpack.c.l.b16 %v523
    %v2371 = vunpack.c.h.b16 %v523
    %v2372 = vunpack.c.l.b16 %v524
    %v2373 = vunpack.c.h.b16 %v524
    %v2374 = vunpack.c.l.b16 %v525
    %v2375 = vunpack.c.h.b16 %v525
    %v2376 = vunpack.c.l.b16 %v526
    %v2377 = vunpack.c.h.b16 %v526
    %v2378 = vunpack.c.l.b16 %v527
    %v2379 = vunpack.c.h.b16 %v527
    %v2380 = vunpack.c.l.b16 %v528
    %v2381 = vunpack.c.h.b16 %v528
    %v2382 = vunpack.c.l.b16 %v529
    %v2383 = vunpack.c.h.b16 %v529
    %v2384 = vunpack.c.l.b16 %v530
    %v2385 = vunpack.c.h.b16 %v530
    %v2386 = vunpack.c.l.b16 %v531
    %v2387 = vunpack.c.h.b16 %v531
    %v2388 = vunpack.c.l.b16 %v532
    %v2389 = vunpack.c.h.b16 %v532
    %v2390 = vunpack.c.l.b16 %v533
    %v2391 = vunpack.c.h.b16 %v533
    %v2392 = vunpack.c.l.b16 %v534
    %v2393 = vunpack.c.h.b16 %v534
    %v2394 = vunpack.c.l.b16 %v535
    %v2395 = vunpack.c.h.b16 %v535
    %v2396 = vunpack.c.l.b16 %v536
    %v2397 = vunpack.c.h.b16 %v536
    %v2398 = vunpack.c.l.b16 %v537
    %v2399 = vunpack.c.h.b16 %v537
    %v2400 = vunpack.c.l.b16 %v538
    %v2401 = vunpack.c.h.b16 %v538
    %v2402 = vunpack.c.l.b16 %v539
    %v2403 = vunpack.c.h.b16 %v539
    %v2404 = vunpack.c.l.b16 %v540
    %v2405 = vunpack.c.h.b16 %v540
    %v2406 = vunpack.c.l.b16 %v541
    %v2407 = vunpack.c.h.b16 %v541
    %v2408 = vunpack.c.l.b16 %v542
    %v2409 = vunpack.c.h.b16 %v542
    %v2410 = vunpack.c.l.b16 %v543
    %v2411 = vunpack.c.h.b16 %v543
    %v2412 = vunpack.c.l.b16 %v544
    %v2413 = vunpack.c.h.b16 %v544
    %v2414 = vunpack.c.l.b16 %v545
    %v2415 = vunpack.c.h.b16 %v545
    %v2416 = vunpack.c.l.b16 %v546
    %v2417 = vunpack.c.h.b16 %v546
    %v2418 = vunpack.c.l.b16 %v547
    %v2419 = vunpack.c.h.b16 %v547
    %v2420 = vunpack.c.l.b16 %v548
    %v2421 = vunpack.c.h.b16 %v548
    %v2422 = vunpack.c.l.b16 %v549
    %v2423 = vunpack.c.h.b16 %v549
    %v2424 = vunpack.c.l.b16 %v550
    %v2425 = vunpack.c.h.b16 %v550
    %v2426 = vunpack.c.l.b16 %v551
    %v2427 = vunpack.c.h.b16 %v551
    %v2428 = vunpack.c.l.b16 %v552
    %v2429 = vunpack.c.h.b16 %v552
    %v2430 = vunpack.c.l.b16 %v553
    %v2431 = vunpack.c.h.b16 %v553
    %v2432 = vunpack.c.l.b16 %v554
    %v2433 = vunpack.c.h.b16 %v554
    %v2434 = vunpack.c.l.b16 %v555
    %v2435 = vunpack.c.h.b16 %v555
    %v2436 = vunpack.c.l.b16 %v556
    %v2437 = vunpack.c.h.b16 %v556
    %v2438 = vunpack.c.l.b16 %v557
    %v2439 = vunpack.c.h.b16 %v557
    %v2440 = vunpack.c.l.b16 %v558
    %v2441 = vunpack.c.h.b16 %v558
    %v2442 = vunpack.c.l.b16 %v559
    %v2443 = vunpack.c.h.b16 %v559
    %v2444 = vunpack.c.l.b16 %v560
    %v2445 = vunpack.c.h.b16 %v560
    %v2446 = vunpack.c.l.b16 %v561
    %v2447 = vunpack.c.h.b16 %v561
    %v2448 = vunpack.c.l.b16 %v562
    %v2449 = vunpack.c.h.b16 %v562
    %v2450 = vunpack.c.l.b16 %v563
    %v2451 = vunpack.c.h.b16 %v563
    %v2452 = vunpack.c.l.b16 %v564
    %v2453 = vunpack.c.h.b16 %v564
    %v2454 = vunpack.c.l.b16 %v565
    %v2455 = vunpack.c.h.b16 %v565
    %v2456 = vunpack.c.l.b16 %v566
    %v2457 = vunpack.c.h.b16 %v566
    %v2458 = vunpack.c.l.b16 %v567
    %v2459 = vunpack.c.h.b16 %v567
    %v2460 = vunpack.c.l.b16 %v568
    %v2461 = vunpack.c.h.b16 %v568
    %v2462 = vunpack.c.l.b16 %v569
    %v2463 = vunpack.c.h.b16 %v569
    %v2464 = vunpack.c.l.b16 %v570
    %v2465 = vunpack.c.h.b16 %v570
    %v2466 = vunpack.c.l.b16 %v571
    %v2467 = vunpack.c.h.b16 %v571
    %v2468 = vunpack.c.l.b16 %v572
    %v2469 = vunpack.c.h.b16 %v572
    %v2470 = vunpack.c.l.b16 %v573
    %v2471 = vunpack.c.h.b16 %v573
    %v2472 = vunpack.c.l.b16 %v574
    %v2473 = vunpack.c.h.b16 %v574
    %v2474 = vunpack.c.l.b16 %v575
    %v2475 = vunpack.c.h.b16 %v575
    %v2476 = vunpack.c.l.b16 %v576
    %v2477 = vunpack.c.h.b16 %v576
    %v2478 = vunpack.c.l.b16 %v577
    %v2479 = vunpack.c.h.b16 %v577
    %v2480 = vunpack.c.l.b16 %v578
    %v2481 = vunpack.c.h.b16 %v578
    %v2482 = vunpack.c.l.b16 %v579
    %v2483 = vunpack.c.h.b16 %v579
    %v2484 = vunpack.c.l.b16 %v580
    %v2485 = vunpack.c.h.b16 %v580
    %v2486 = vunpack.c.l.b16 %v581
    %v2487 = vunpack.c.h.b16 %v581
    %v2488 = vunpack.c.l.b16 %v582
    %v2489 = vunpack.c.h.b16 %v582
    %v2490 = vunpack.c.l.b16 %v583
    %v2491 = vunpack.c.h.b16 %v583
    %v2492 = vunpack.c.l.b16 %v584
    %v2493 = vunpack.c.h.b16 %v584
    %v2494 = vunpack.c.l.b16 %v585
    %v2495 = vunpack.c.h.b16 %v585
    %v2496 = vunpack.c.l.b16 %v586
    %v2497 = vunpack.c.h.b16 %v586
    %v2498 = vunpack.c.l.b16 %v587
    %v2499 = vunpack.c.h.b16 %v587
    %v2500 = vunpack.c.l.b16 %v588
    %v2501 = vunpack.c.h.b16 %v588
    %v2502 = vunpack.c.l.b16 %v589
    %v2503 = vunpack.c.h.b16 %v589
    %v2504 = vunpack.c.l.b16 %v590
    %v2505 = vunpack.c.h.b16 %v590
    %v2506 = vunpack.c.l.b16 %v591
    %v2507 = vunpack.c.h.b16 %v591
    %v2508 = vunpack.c.l.b16 %v592
    %v2509 = vunpack.c.h.b16 %v592
    %v2510 = vunpack.c.l.b16 %v593
    %v2511 = vunpack.c.h.b16 %v593
    %v2512 = vunpack.c.l.b16 %v594
    %v2513 = vunpack.c.h.b16 %v594
    %v2514 = vunpack.c.l.b16 %v595
    %v2515 = vunpack.c.h.b16 %v595
    %v2516 = vunpack.c.l.b16 %v596
    %v2517 = vunpack.c.h.b16 %v596
    %v2518 = vunpack.c.l.b16 %v597
    %v2519 = vunpack.c.h.b16 %v597
    %v2520 = vunpack.c.l.b16 %v598
    %v2521 = vunpack.c.h.b16 %v598
    %v2522 = vunpack.c.l.b16 %v599
    %v2523 = vunpack.c.h.b16 %v599
    %v2524 = vunpack.c.l.b16 %v600
    %v2525 = vunpack.c.h.b16 %v600
    %v2526 = vunpack.c.l.b16 %v601
    %v2527 = vunpack.c.h.b16 %v601
    %v2528 = vunpack.c.l.b16 %v602
    %v2529 = vunpack.c.h.b16 %v602
    %v2530 = vunpack.c.l.b16 %v603
    %v2531 = vunpack.c.h.b16 %v603
    %v2532 = vunpack.c.l.b16 %v604
    %v2533 = vunpack.c.h.b16 %v604
    %v2534 = vunpack.c.l.b16 %v605
    %v2535 = vunpack.c.h.b16 %v605
    %v2536 = vunpack.c.l.b16 %v606
    %v2537 = vunpack.c.h.b16 %v606
    %v2538 = vunpack.c.l.b16 %v607
    %v2539 = vunpack.c.h.b16 %v607
    %v2540 = vunpack.c.l.b16 %v608
    %v2541 = vunpack.c.h.b16 %v608
    %v2542 = vunpack.c.l.b16 %v609
    %v2543 = vunpack.c.h.b16 %v609
    %v2544 = vunpack.c.l.b16 %v610
    %v2545 = vunpack.c.h.b16 %v610
    %v2546 = vunpack.c.l.b16 %v611
    %v2547 = vunpack.c.h.b16 %v611
    %v2548 = vunpack.c.l.b16 %v612
    %v2549 = vunpack.c.h.b16 %v612
    %v2550 = vunpack.c.l.b16 %v613
    %v2551 = vunpack.c.h.b16 %v613
    %v2552 = vunpack.c.l.b16 %v614
    %v2553 = vunpack.c.h.b16 %v614
    %v2554 = vunpack.c.l.b16 %v615
    %v2555 = vunpack.c.h.b16 %v615
    %v2556 = vunpack.c.l.b16 %v616
    %v2557 = vunpack.c.h.b16 %v616
    %v2558 = vunpack.c.l.b16 %v617
    %v2559 = vunpack.c.h.b16 %v617
    %v2560 = vunpack.c.l.b16 %v618
    %v2561 = vunpack.c.h.b16 %v618
    %v2562 = vunpack.c.l.b16 %v619
    %v2563 = vunpack.c.h.b16 %v619
    %v2564 = vunpack.c.l.b16 %v620
    %v2565 = vunpack.c.h.b16 %v620
    %v2566 = vunpack.c.l.b16 %v621
    %v2567 = vunpack.c.h.b16 %v621
    %v2568 = vunpack.c.l.b16 %v622
    %v2569 = vunpack.c.h.b16 %v622
    %v2570 = vunpack.c.l.b16 %v623
    %v2571 = vunpack.c.h.b16 %v623
    %v2572 = vunpack.c.l.b16 %v624
    %v2573 = vunpack.c.h.b16 %v624
    %v2574 = vunpack.c.l.b16 %v625
    %v2575 = vunpack.c.h.b16 %v625
    %v2576 = vunpack.c.l.b16 %v626
    %v2577 = vunpack.c.h.b16 %v626
    %v2578 = vunpack.c.l.b16 %v627
    %v2579 = vunpack.c.h.b16 %v627
    %v2580 = vunpack.c.l.b16 %v628
    %v2581 = vunpack.c.h.b16 %v628
    %v2582 = vunpack.c.l.b16 %v629
    %v2583 = vunpack.c.h.b16 %v629
    %v2584 = vunpack.c.l.b16 %v630
    %v2585 = vunpack.c.h.b16 %v630
    %v2586 = vunpack.c.l.b16 %v631
    %v2587 = vunpack.c.h.b16 %v631
    %v2588 = vunpack.c.l.b16 %v632
    %v2589 = vunpack.c.h.b16 %v632
    %v2590 = vunpack.c.l.b16 %v633
    %v2591 = vunpack.c.h.b16 %v633
    %v2592 = vunpack.c.l.b16 %v634
    %v2593 = vunpack.c.h.b16 %v634
    %v2594 = vunpack.c.l.b16 %v635
    %v2595 = vunpack.c.h.b16 %v635
    %v2596 = vunpack.c.l.b16 %v636
    %v2597 = vunpack.c.h.b16 %v636
    %v2598 = vunpack.c.l.b16 %v637
    %v2599 = vunpack.c.h.b16 %v637
    %v2600 = vunpack.c.l.b16 %v638
    %v2601 = vunpack.c.h.b16 %v638
    %v2602 = vunpack.c.l.b16 %v639
    %v2603 = vunpack.c.h.b16 %v639
    %v2604 = vunpack.c.l.b16 %v640
    %v2605 = vunpack.c.h.b16 %v640
    %v2606 = vunpack.c.l.b16 %v641
    %v2607 = vunpack.c.h.b16 %v641
    %v2608 = vunpack.c.l.b16 %v642
    %v2609 = vunpack.c.h.b16 %v642
    %v2610 = vunpack.c.l.b16 %v643
    %v2611 = vunpack.c.h.b16 %v643
    %v2612 = vunpack.c.l.b16 %v644
    %v2613 = vunpack.c.h.b16 %v644
    %v2614 = vunpack.c.l.b16 %v645
    %v2615 = vunpack.c.h.b16 %v645
    %v2616 = vunpack.c.l.b16 %v646
    %v2617 = vunpack.c.h.b16 %v646
    %v2618 = vunpack.c.l.b16 %v647
    %v2619 = vunpack.c.h.b16 %v647
    %v2620 = vunpack.c.l.b16 %v648
    %v2621 = vunpack.c.h.b16 %v648
    %v2622 = vunpack.c.l.b16 %v649
    %v2623 = vunpack.c.h.b16 %v649
    %v2624 = vunpack.c.l.b16 %v650
    %v2625 = vunpack.c.h.b16 %v650
    %v2626 = vunpack.c.l.b16 %v651
    %v2627 = vunpack.c.h.b16 %v651
    %v2628 = vunpack.c.l.b16 %v652
    %v2629 = vunpack.c.h.b16 %v652
    %v2630 = vunpack.c.l.b16 %v653
    %v2631 = vunpack.c.h.b16 %v653
    %v2632 = vunpack.c.l.b16 %v654
    %v2633 = vunpack.c.h.b16 %v654
    %v2634 = vunpack.c.l.b16 %v655
    %v2635 = vunpack.c.h.b16 %v655
    %v2636 = vunpack.c.l.b16 %v656
    %v2637 = vunpack.c.h.b16 %v656
    %v2638 = vunpack.c.l.b16 %v657
    %v2639 = vunpack.c.h.b16 %v657
    %v2640 = vunpack.c.l.b16 %v658
    %v2641 = vunpack.c.h.b16 %v658
    %v2642 = vunpack.c.l.b16 %v659
    %v2643 = vunpack.c.h.b16 %v659
    %v2644 = vunpack.c.l.b16 %v660
    %v2645 = vunpack.c.h.b16 %v660
    %v2646 = vunpack.c.l.b16 %v661
    %v2647 = vunpack.c.h.b16 %v661
    %v2648 = vunpack.c.l.b16 %v662
    %v2649 = vunpack.c.h.b16 %v662
    %v2650 = vunpack.c.l.b16 %v663
    %v2651 = vunpack.c.h.b16 %v663
    %v2652 = vunpack.c.l.b16 %v664
    %v2653 = vunpack.c.h.b16 %v664
    %v2654 = vunpack.c.l.b16 %v665
    %v2655 = vunpack.c.h.b16 %v665
    %v2656 = vunpack.c.l.b16 %v666
    %v2657 = vunpack.c.h.b16 %v666
    %v2658 = vunpack.c.l.b16 %v667
    %v2659 = vunpack.c.h.b16 %v667
    %v2660 = vunpack.c.l.b16 %v668
    %v2661 = vunpack.c.h.b16 %v668
    %v2662 = vunpack.c.l.b16 %v669
    %v2663 = vunpack.c.h.b16 %v669
    %v2664 = vunpack.c.l.b16 %v670
    %v2665 = vunpack.c.h.b16 %v670
    %v2666 = vunpack.c.l.b16 %v671
    %v2667 = vunpack.c.h.b16 %v671
    %v2668 = vunpack.c.l.b16 %v672
    %v2669 = vunpack.c.h.b16 %v672
    %v2670 = vunpack.c.l.b16 %v673
    %v2671 = vunpack.c.h.b16 %v673
    %v2672 = vunpack.c.l.b16 %v674
    %v2673 = vunpack.c.h.b16 %v674
    %v2674 = vunpack.c.l.b16 %v675
    %v2675 = vunpack.c.h.b16 %v675
    %v2676 = vunpack.c.l.b16 %v676
    %v2677 = vunpack.c.h.b16 %v676
    %v2678 = vunpack.c.l.b16 %v677
    %v2679 = vunpack.c.h.b16 %v677
    %v2680 = vunpack.c.l.b16 %v678
    %v2681 = vunpack.c.h.b16 %v678
    %v2682 = vunpack.c.l.b16 %v679
    %v2683 = vunpack.c.h.b16 %v679
    %v2684 = vunpack.c.l.b16 %v680
    %v2685 = vunpack.c.h.b16 %v680
    %v2686 = vunpack.c.l.b16 %v681
    %v2687 = vunpack.c.h.b16 %v681
    %v2688 = vunpack.c.l.b16 %v682
    %v2689 = vunpack.c.h.b16 %v682
    %v2690 = vunpack.c.l.b16 %v683
    %v2691 = vunpack.c.h.b16 %v683
    %v2692 = vunpack.c.l.b16 %v684
    %v2693 = vunpack.c.h.b16 %v684
    %v2694 = vunpack.c.l.b16 %v685
    %v2695 = vunpack.c.h.b16 %v685
    %v2696 = vunpack.c.l.b16 %v686
    %v2697 = vunpack.c.h.b16 %v686
    %v2698 = vunpack.c.l.b16 %v687
    %v2699 = vunpack.c.h.b16 %v687
    %v2700 = vunpack.c.l.b16 %v688
    %v2701 = vunpack.c.h.b16 %v688
    %v2702 = vunpack.c.l.b16 %v689
    %v2703 = vunpack.c.h.b16 %v689
    %v2704 = vunpack.c.l.b16 %v690
    %v2705 = vunpack.c.h.b16 %v690
    %v2706 = vunpack.c.l.b16 %v691
    %v2707 = vunpack.c.h.b16 %v691
    %v2708 = vunpack.c.l.b16 %v692
    %v2709 = vunpack.c.h.b16 %v692
    %v2710 = vunpack.c.l.b16 %v693
    %v2711 = vunpack.c.h.b16 %v693
    %v2712 = vunpack.c.l.b16 %v694
    %v2713 = vunpack.c.h.b16 %v694
    %v2714 = vunpack.c.l.b16 %v695
    %v2715 = vunpack.c.h.b16 %v695
    %v2716 = vunpack.c.l.b16 %v696
    %v2717 = vunpack.c.h.b16 %v696
    %v2718 = vunpack.c.l.b16 %v697
    %v2719 = vunpack.c.h.b16 %v697
    %v2720 = vunpack.c.l.b16 %v698
    %v2721 = vunpack.c.h.b16 %v698
    %v2722 = vunpack.c.l.b16 %v699
    %v2723 = vunpack.c.h.b16 %v699
    %v2724 = vunpack.c.l.b16 %v700
    %v2725 = vunpack.c.h.b16 %v700
    %v2726 = vunpack.c.l.b16 %v701
    %v2727 = vunpack.c.h.b16 %v701
    %v2728 = vunpack.c.l.b16 %v702
    %v2729 = vunpack.c.h.b16 %v702
    %v2730 = vunpack.c.l.b16 %v703
    %v2731 = vunpack.c.h.b16 %v703
    %v2732 = vunpack.c.l.b16 %v704
    %v2733 = vunpack.c.h.b16 %v704
    %v2734 = vunpack.c.l.b16 %v705
    %v2735 = vunpack.c.h.b16 %v705
    %v2736 = vunpack.c.l.b16 %v706
    %v2737 = vunpack.c.h.b16 %v706
    %v2738 = vunpack.c.l.b16 %v707
    %v2739 = vunpack.c.h.b16 %v707
    %v2740 = vunpack.c.l.b16 %v708
    %v2741 = vunpack.c.h.b16 %v708
    %v2742 = vunpack.c.l.b16 %v709
    %v2743 = vunpack.c.h.b16 %v709
    %v2744 = vunpack.c.l.b16 %v710
    %v2745 = vunpack.c.h.b16 %v710
    %v2746 = vunpack.c.l.b16 %v711
    %v2747 = vunpack.c.h.b16 %v711
    %v2748 = vunpack.c.l.b16 %v712
    %v2749 = vunpack.c.h.b16 %v712
    %v2750 = vunpack.c.l.b16 %v713
    %v2751 = vunpack.c.h.b16 %v713
    %v2752 = vunpack.c.l.b16 %v714
    %v2753 = vunpack.c.h.b16 %v714
    %v2754 = vunpack.c.l.b16 %v715
    %v2755 = vunpack.c.h.b16 %v715
    %v2756 = vunpack.c.l.b16 %v716
    %v2757 = vunpack.c.h.b16 %v716
    %v2758 = vunpack.c.l.b16 %v717
    %v2759 = vunpack.c.h.b16 %v717
    %v2760 = vunpack.c.l.b16 %v718
    %v2761 = vunpack.c.h.b16 %v718
    %v2762 = vunpack.c.l.b16 %v719
    %v2763 = vunpack.c.h.b16 %v719
    %v2764 = vunpack.c.l.b16 %v720
    %v2765 = vunpack.c.h.b16 %v720
    %v2766 = vunpack.c.l.b16 %v721
    %v2767 = vunpack.c.h.b16 %v721
    %v2768 = vunpack.c.l.b16 %v722
    %v2769 = vunpack.c.h.b16 %v722
    %v2770 = vunpack.c.l.b16 %v723
    %v2771 = vunpack.c.h.b16 %v723
    %v2772 = vunpack.c.l.b16 %v724
    %v2773 = vunpack.c.h.b16 %v724
    %v2774 = vunpack.c.l.b16 %v725
    %v2775 = vunpack.c.h.b16 %v725
    %v2776 = vunpack.c.l.b16 %v726
    %v2777 = vunpack.c.h.b16 %v726
    %v2778 = vunpack.c.l.b16 %v727
    %v2779 = vunpack.c.h.b16 %v727
    %v2780 = vunpack.c.l.b16 %v728
    %v2781 = vunpack.c.h.b16 %v728
    %v2782 = vunpack.c.l.b16 %v729
    %v2783 = vunpack.c.h.b16 %v729
    %v2784 = vunpack.c.l.b16 %v730
    %v2785 = vunpack.c.h.b16 %v730
    %v2786 = vunpack.c.l.b16 %v731
    %v2787 = vunpack.c.h.b16 %v731
    %v2788 = vunpack.c.l.b16 %v732
    %v2789 = vunpack.c.h.b16 %v732
    %v2790 = vunpack.c.l.b16 %v733
    %v2791 = vunpack.c.h.b16 %v733
    %v2792 = vunpack.c.l.b16 %v734
    %v2793 = vunpack.c.h.b16 %v734
    %v2794 = vunpack.c.l.b16 %v735
    %v2795 = vunpack.c.h.b16 %v735
    %v2796 = vunpack.c.l.b16 %v736
    %v2797 = vunpack.c.h.b16 %v736
    %v2798 = vunpack.c.l.b16 %v737
    %v2799 = vunpack.c.h.b16 %v737
    %v2800 = vunpack.c.l.b16 %v738
    %v2801 = vunpack.c.h.b16 %v738
    %v2802 = vunpack.c.l.b16 %v739
    %v2803 = vunpack.c.h.b16 %v739
    %v2804 = vunpack.c.l.b16 %v740
    %v2805 = vunpack.c.h.b16 %v740
    %v2806 = vunpack.c.l.b16 %v741
    %v2807 = vunpack.c.h.b16 %v741
    %v2808 = vunpack.c.l.b16 %v742
    %v2809 = vunpack.c.h.b16 %v742
    %v2810 = vunpack.c.l.b16 %v743
    %v2811 = vunpack.c.h.b16 %v743
    %v2812 = vunpack.c.l.b16 %v744
    %v2813 = vunpack.c.h.b16 %v744
    %v2814 = vunpack.c.l.b16 %v745
    %v2815 = vunpack.c.h.b16 %v745
    %v2816 = vunpack.c.l.b16 %v746
    %v2817 = vunpack.c.h.b16 %v746
    %v2818 = vunpack.c.l.b16 %v747
    %v2819 = vunpack.c.h.b16 %v747
    %v2820 = vunpack.c.l.b16 %v748
    %v2821 = vunpack.c.h.b16 %v748
    %v2822 = vunpack.c.l.b16 %v749
    %v2823 = vunpack.c.h.b16 %v749
    %v2824 = vunpack.c.l.b16 %v750
    %v2825 = vunpack.c.h.b16 %v750
    %v2826 = vunpack.c.l.b16 %v751
    %v2827 = vunpack.c.h.b16 %v751
    %v2828 = vunpack.c.l.b16 %v752
    %v2829 = vunpack.c.h.b16 %v752
    %v2830 = vunpack.c.l.b16 %v753
    %v2831 = vunpack.c.h.b16 %v753
    %v2832 = vunpack.c.l.b16 %v754
    %v2833 = vunpack.c.h.b16 %v754
    %v2834 = vunpack.c.l.b16 %v755
    %v2835 = vunpack.c.h.b16 %v755
    %v2836 = vunpack.c.l.b16 %v756
    %v2837 = vunpack.c.h.b16 %v756
    %v2838 = vunpack.c.l.b16 %v757
    %v2839 = vunpack.c.h.b16 %v757
    %v2840 = vunpack.c.l.b16 %v758
    %v2841 = vunpack.c.h.b16 %v758
    %v2842 = vunpack.c.l.b16 %v759
    %v2843 = vunpack.c.h.b16 %v759
    %v2844 = vunpack.c.l.b16 %v760
    %v2845 = vunpack.c.h.b16 %v760
    %v2846 = vunpack.c.l.b16 %v761
    %v2847 = vunpack.c.h.b16 %v761
    %v2848 = vunpack.c.l.b16 %v762
    %v2849 = vunpack.c.h.b16 %v762
    %v2850 = vunpack.c.l.b16 %v763
    %v2851 = vunpack.c.h.b16 %v763
    %v2852 = vunpack.c.l.b16 %v764
    %v2853 = vunpack.c.h.b16 %v764
    %v2854 = vunpack.c.l.b16 %v765
    %v2855 = vunpack.c.h.b16 %v765
    %v2856 = vunpack.c.l.b16 %v766
    %v2857 = vunpack.c.h.b16 %v766
    %v2858 = vunpack.c.l.b16 %v767
    %v2859 = vunpack.c.h.b16 %v767
    %v2860 = vunpack.c.l.b16 %v768
    %v2861 = vunpack.c.h.b16 %v768
    %v2862 = vunpack.c.l.b16 %v769
    %v2863 = vunpack.c.h.b16 %v769
    %v2864 = vunpack.c.l.b16 %v770
    %v2865 = vunpack.c.h.b16 %v770
    %v2866 = vunpack.c.l.b16 %v771
    %v2867 = vunpack.c.h.b16 %v771
    %v2868 = vunpack.c.l.b16 %v772
    %v2869 = vunpack.c.h.b16 %v772
    %v2870 = vunpack.c.l.b16 %v773
    %v2871 = vunpack.c.h.b16 %v773
    %v2872 = vunpack.c.l.b16 %v774
    %v2873 = vunpack.c.h.b16 %v774
    %v2874 = vunpack.c.l.b16 %v775
    %v2875 = vunpack.c.h.b16 %v775
    %v2876 = vunpack.c.l.b16 %v776
    %v2877 = vunpack.c.h.b16 %v776
    %v2878 = vunpack.c.l.b16 %v777
    %v2879 = vunpack.c.h.b16 %v777
    %v2880 = vunpack.c.l.b16 %v778
    %v2881 = vunpack.c.h.b16 %v778
    %v2882 = vunpack.c.l.b16 %v779
    %v2883 = vunpack.c.h.b16 %v779
    %v2884 = vunpack.c.l.b16 %v780
    %v2885 = vunpack.c.h.b16 %v780
    %v2886 = vunpack.c.l.b16 %v781
    %v2887 = vunpack.c.h.b16 %v781
    %v2888 = vunpack.c.l.b16 %v782
    %v2889 = vunpack.c.h.b16 %v782
    %v2890 = vunpack.c.l.b16 %v783
    %v2891 = vunpack.c.h.b16 %v783
    %v2892 = vunpack.c.l.b16 %v784
    %v2893 = vunpack.c.h.b16 %v784
    %v2894 = vunpack.c.l.b16 %v785
    %v2895 = vunpack.c.h.b16 %v785
    %v2896 = vunpack.c.l.b16 %v786
    %v2897 = vunpack.c.h.b16 %v786
    %v2898 = vunpack.c.l.b16 %v787
    %v2899 = vunpack.c.h.b16 %v787
    %v2900 = vunpack.c.l.b16 %v788
    %v2901 = vunpack.c.h.b16 %v788
    %v2902 = vunpack.c.l.b16 %v789
    %v2903 = vunpack.c.h.b16 %v789
    %v2904 = vunpack.c.l.b16 %v790
    %v2905 = vunpack.c.h.b16 %v790
    %v2906 = vunpack.c.l.b16 %v791
    %v2907 = vunpack.c.h.b16 %v791
    %v2908 = vunpack.c.l.b16 %v792
    %v2909 = vunpack.c.h.b16 %v792
    %v2910 = vunpack.c.l.b16 %v793
    %v2911 = vunpack.c.h.b16 %v793
    %v2912 = vunpack.c.l.b16 %v794
    %v2913 = vunpack.c.h.b16 %v794
    %v2914 = vunpack.c.l.b16 %v795
    %v2915 = vunpack.c.h.b16 %v795
    %v2916 = vunpack.c.l.b16 %v796
    %v2917 = vunpack.c.h.b16 %v796
    %v2918 = vunpack.c.l.b16 %v797
    %v2919 = vunpack.c.h.b16 %v797
    %v2920 = vunpack.c.l.b16 %v798
    %v2921 = vunpack.c.h.b16 %v798
    %v2922 = vunpack.c.l.b16 %v799
    %v2923 = vunpack.c.h.b16 %v799
    %v2924 = vunpack.c.l.b16 %v800
    %v2925 = vunpack.c.h.b16 %v800
    %v2926 = vunpack.c.l.b16 %v801
    %v2927 = vunpack.c.h.b16 %v801
    %v2928 = vunpack.c.l.b16 %v802
    %v2929 = vunpack.c.h.b16 %v802
    %v2930 = vunpack.c.l.b16 %v803
    %v2931 = vunpack.c.h.b16 %v803
    %v2932 = vunpack.c.l.b16 %v804
    %v2933 = vunpack.c.h.b16 %v804
    %v2934 = vunpack.c.l.b16 %v805
    %v2935 = vunpack.c.h.b16 %v805
    %v2936 = vunpack.c.l.b16 %v806
    %v2937 = vunpack.c.h.b16 %v806
    %v2938 = vunpack.c.l.b16 %v807
    %v2939 = vunpack.c.h.b16 %v807
    %v2940 = vunpack.c.l.b16 %v808
    %v2941 = vunpack.c.h.b16 %v808
    %v2942 = vunpack.c.l.b16 %v809
    %v2943 = vunpack.c.h.b16 %v809
    %v2944 = vunpack.c.l.b16 %v810
    %v2945 = vunpack.c.h.b16 %v810
    %v2946 = vunpack.c.l.b16 %v811
    %v2947 = vunpack.c.h.b16 %v811
    %v2948 = vunpack.c.l.b16 %v812
    %v2949 = vunpack.c.h.b16 %v812
    %v2950 = vunpack.c.l.b16 %v813
    %v2951 = vunpack.c.h.b16 %v813
    %v2952 = vunpack.c.l.b16 %v814
    %v2953 = vunpack.c.h.b16 %v814
    %v2954 = vunpack.c.l.b16 %v815
    %v2955 = vunpack.c.h.b16 %v815
    %v2956 = vunpack.c.l.b16 %v816
    %v2957 = vunpack.c.h.b16 %v816
    %v2958 = vunpack.c.l.b16 %v817
    %v2959 = vunpack.c.h.b16 %v817
    %v2960 = vunpack.c.l.b16 %v818
    %v2961 = vunpack.c.h.b16 %v818
    %v2962 = vunpack.c.l.b16 %v819
    %v2963 = vunpack.c.h.b16 %v819
    %v2964 = vunpack.c.l.b16 %v820
    %v2965 = vunpack.c.h.b16 %v820
    %v2966 = vunpack.c.l.b16 %v821
    %v2967 = vunpack.c.h.b16 %v821
    %v2968 = vunpack.c.l.b16 %v822
    %v2969 = vunpack.c.h.b16 %v822
    %v2970 = vunpack.c.l.b16 %v823
    %v2971 = vunpack.c.h.b16 %v823
    %v2972 = vunpack.c.l.b16 %v824
    %v2973 = vunpack.c.h.b16 %v824
    %v2974 = vunpack.c.l.b16 %v825
    %v2975 = vunpack.c.h.b16 %v825
    %v2976 = vunpack.c.l.b16 %v826
    %v2977 = vunpack.c.h.b16 %v826
    %v2978 = vunpack.c.l.b16 %v827
    %v2979 = vunpack.c.h.b16 %v827
    %v2980 = vunpack.c.l.b16 %v828
    %v2981 = vunpack.c.h.b16 %v828
    %v2982 = vunpack.c.l.b16 %v829
    %v2983 = vunpack.c.h.b16 %v829
    %v2984 = vunpack.c.l.b16 %v830
    %v2985 = vunpack.c.h.b16 %v830
    %v2986 = vunpack.c.l.b16 %v831
    %v2987 = vunpack.c.h.b16 %v831
    %v2988 = vunpack.c.l.b16 %v832
    %v2989 = vunpack.c.h.b16 %v832
    %v2990 = vunpack.c.l.b16 %v833
    %v2991 = vunpack.c.h.b16 %v833
    %v2992 = vunpack.c.l.b16 %v834
    %v2993 = vunpack.c.h.b16 %v834
    %v2994 = vunpack.c.l.b16 %v835
    %v2995 = vunpack.c.h.b16 %v835
    %v2996 = vunpack.c.l.b16 %v836
    %v2997 = vunpack.c.h.b16 %v836
    %v2998 = vunpack.c.l.b16 %v837
    %v2999 = vunpack.c.h.b16 %v837
    %v3000 = vunpack.c.l.b16 %v838
    %v3001 = vunpack.c.h.b16 %v838
    %v3002 = vunpack.c.l.b16 %v839
    %v3003 = vunpack.c.h.b16 %v839
    %v3004 = vunpack.c.l.b16 %v840
    %v3005 = vunpack.c.h.b16 %v840
    %v3006 = vunpack.c.l.b16 %v841
    %v3007 = vunpack.c.h.b16 %v841
    %v3008 = vunpack.c.l.b16 %v842
    %v3009 = vunpack.c.h.b16 %v842
    %v3010 = vunpack.c.l.b16 %v843
    %v3011 = vunpack.c.h.b16 %v843
    %v3012 = vunpack.c.l.b16 %v844
    %v3013 = vunpack.c.h.b16 %v844
    %v3014 = vunpack.c.l.b16 %v845
    %v3015 = vunpack.c.h.b16 %v845
    %v3016 = vunpack.c.l.b16 %v846
    %v3017 = vunpack.c.h.b16 %v846
    %v3018 = vunpack.c.l.b16 %v847
    %v3019 = vunpack.c.h.b16 %v847
    %v3020 = vunpack.c.l.b16 %v848
    %v3021 = vunpack.c.h.b16 %v848
    %v3022 = vunpack.c.l.b16 %v849
    %v3023 = vunpack.c.h.b16 %v849
    %v3024 = vunpack.c.l.b16 %v850
    %v3025 = vunpack.c.h.b16 %v850
    %v3026 = vunpack.c.l.b16 %v851
    %v3027 = vunpack.c.h.b16 %v851
    %v3028 = vunpack.c.l.b16 %v852
    %v3029 = vunpack.c.h.b16 %v852
    %v3030 = vunpack.c.l.b16 %v853
    %v3031 = vunpack.c.h.b16 %v853
    %v3032 = vunpack.c.l.b16 %v854
    %v3033 = vunpack.c.h.b16 %v854
    %v3034 = vunpack.c.l.b16 %v855
    %v3035 = vunpack.c.h.b16 %v855
    %v3036 = vunpack.c.l.b16 %v856
    %v3037 = vunpack.c.h.b16 %v856
    %v3038 = vunpack.c.l.b16 %v857
    %v3039 = vunpack.c.h.b16 %v857
    %v3040 = vunpack.c.l.b16 %v858
    %v3041 = vunpack.c.h.b16 %v858
    %v3042 = vunpack.c.l.b16 %v859
    %v3043 = vunpack.c.h.b16 %v859
    %v3044 = vunpack.c.l.b16 %v860
    %v3045 = vunpack.c.h.b16 %v860
    %v3046 = vunpack.c.l.b16 %v861
    %v3047 = vunpack.c.h.b16 %v861
    %v3048 = vunpack.c.l.b16 %v862
    %v3049 = vunpack.c.h.b16 %v862
    %v3050 = vunpack.c.l.b16 %v863
    %v3051 = vunpack.c.h.b16 %v863
    %v3052 = vunpack.c.l.b16 %v864
    %v3053 = vunpack.c.h.b16 %v864
    %v3054 = vunpack.c.l.b16 %v865
    %v3055 = vunpack.c.h.b16 %v865
    %v3056 = vunpack.c.l.b16 %v866
    %v3057 = vunpack.c.h.b16 %v866
    %v3058 = vunpack.c.l.b16 %v867
    %v3059 = vunpack.c.h.b16 %v867
    %v3060 = vunpack.c.l.b16 %v868
    %v3061 = vunpack.c.h.b16 %v868
    %v3062 = vunpack.c.l.b16 %v869
    %v3063 = vunpack.c.h.b16 %v869
    %v3064 = vunpack.c.l.b16 %v870
    %v3065 = vunpack.c.h.b16 %v870
    %v3066 = vunpack.c.l.b16 %v871
    %v3067 = vunpack.c.h.b16 %v871
    %v3068 = vunpack.c.l.b16 %v872
    %v3069 = vunpack.c.h.b16 %v872
    %v3070 = vunpack.c.l.b16 %v873
    %v3071 = vunpack.c.h.b16 %v873
    %v3072 = vunpack.c.l.b16 %v874
    %v3073 = vunpack.c.h.b16 %v874
    %v3074 = vunpack.c.l.b16 %v875
    %v3075 = vunpack.c.h.b16 %v875
    %v3076 = vunpack.c.l.b16 %v876
    %v3077 = vunpack.c.h.b16 %v876
    %v3078 = vunpack.c.l.b16 %v877
    %v3079 = vunpack.c.h.b16 %v877
    %v3080 = vunpack.c.l.b16 %v878
    %v3081 = vunpack.c.h.b16 %v878
    %v3082 = vunpack.c.l.b16 %v879
    %v3083 = vunpack.c.h.b16 %v879
    %v3084 = vunpack.c.l.b16 %v880
    %v3085 = vunpack.c.h.b16 %v880
    %v3086 = vunpack.c.l.b16 %v881
    %v3087 = vunpack.c.h.b16 %v881
    %v3088 = vunpack.c.l.b16 %v882
    %v3089 = vunpack.c.h.b16 %v882
    %v3090 = vunpack.c.l.b16 %v883
    %v3091 = vunpack.c.h.b16 %v883
    %v3092 = vunpack.c.l.b16 %v884
    %v3093 = vunpack.c.h.b16 %v884
    %v3094 = vunpack.c.l.b16 %v885
    %v3095 = vunpack.c.h.b16 %v885
    %v3096 = vunpack.c.l.b16 %v886
    %v3097 = vunpack.c.h.b16 %v886
    %v3098 = vunpack.c.l.b16 %v887
    %v3099 = vunpack.c.h.b16 %v887
    %v3100 = vunpack.c.l.b16 %v888
    %v3101 = vunpack.c.h.b16 %v888
    %v3102 = vunpack.c.l.b16 %v889
    %v3103 = vunpack.c.h.b16 %v889
    %v3104 = vunpack.c.l.b16 %v890
    %v3105 = vunpack.c.h.b16 %v890
    %v3106 = vunpack.c.l.b16 %v891
    %v3107 = vunpack.c.h.b16 %v891
    %v3108 = vunpack.c.l.b16 %v892
    %v3109 = vunpack.c.h.b16 %v892
    %v3110 = vunpack.c.l.b16 %v893
    %v3111 = vunpack.c.h.b16 %v893
    %v3112 = vunpack.c.l.b16 %v894
    %v3113 = vunpack.c.h.b16 %v894
    %v3114 = vunpack.c.l.b16 %v895
    %v3115 = vunpack.c.h.b16 %v895
    %v3116 = vunpack.c.l.b16 %v896
    %v3117 = vunpack.c.h.b16 %v896
    %v3118 = vunpack.c.l.b16 %v897
    %v3119 = vunpack.c.h.b16 %v897
    %v3120 = vunpack.c.l.b16 %v898
    %v3121 = vunpack.c.h.b16 %v898
    %v3122 = vunpack.c.l.b16 %v899
    %v3123 = vunpack.c.h.b16 %v899
    %v3124 = vunpack.c.l.b16 %v900
    %v3125 = vunpack.c.h.b16 %v900
    %v3126 = vunpack.c.l.b16 %v901
    %v3127 = vunpack.c.h.b16 %v901
    %v3128 = vunpack.c.l.b16 %v902
    %v3129 = vunpack.c.h.b16 %v902
    %v3130 = vunpack.c.l.b16 %v903
    %v3131 = vunpack.c.h.b16 %v903
    %v3132 = vunpack.c.l.b16 %v904
    %v3133 = vunpack.c.h.b16 %v904
    %v3134 = vunpack.c.l.b16 %v905
    %v3135 = vunpack.c.h.b16 %v905
    %v3136 = vunpack.c.l.b16 %v906
    %v3137 = vunpack.c.h.b16 %v906
    %v3138 = vunpack.c.l.b16 %v907
    %v3139 = vunpack.c.h.b16 %v907
    %v3140 = vunpack.c.l.b16 %v908
    %v3141 = vunpack.c.h.b16 %v908
    %v3142 = vunpack.c.l.b16 %v909
    %v3143 = vunpack.c.h.b16 %v909
    %v3144 = vunpack.c.l.b16 %v910
    %v3145 = vunpack.c.h.b16 %v910
    %v3146 = vunpack.c.l.b16 %v911
    %v3147 = vunpack.c.h.b16 %v911
    %v3148 = vunpack.c.l.b16 %v912
    %v3149 = vunpack.c.h.b16 %v912
    %v3150 = vunpack.c.l.b16 %v913
    %v3151 = vunpack.c.h.b16 %v913
    %v3152 = vunpack.c.l.b16 %v914
    %v3153 = vunpack.c.h.b16 %v914
    %v3154 = vunpack.c.l.b16 %v915
    %v3155 = vunpack.c.h.b16 %v915
    %v3156 = vunpack.c.l.b16 %v916
    %v3157 = vunpack.c.h.b16 %v916
    %v3158 = vunpack.c.l.b16 %v917
    %v3159 = vunpack.c.h.b16 %v917
    %v3160 = vunpack.c.l.b16 %v918
    %v3161 = vunpack.c.h.b16 %v918
    %v3162 = vunpack.c.l.b16 %v919
    %v3163 = vunpack.c.h.b16 %v919
    %v3164 = vunpack.c.l.b16 %v920
    %v3165 = vunpack.c.h.b16 %v920
    %v3166 = vunpack.c.l.b16 %v921
    %v3167 = vunpack.c.h.b16 %v921
    %v3168 = vunpack.c.l.b16 %v922
    %v3169 = vunpack.c.h.b16 %v922
    %v3170 = vunpack.c.l.b16 %v923
    %v3171 = vunpack.c.h.b16 %v923
    %v3172 = vunpack.c.l.b16 %v924
    %v3173 = vunpack.c.h.b16 %v924
    %v3174 = vunpack.c.l.b16 %v925
    %v3175 = vunpack.c.h.b16 %v925
    %v3176 = vunpack.c.l.b16 %v926
    %v3177 = vunpack.c.h.b16 %v926
    %v3178 = vunpack.c.l.b16 %v927
    %v3179 = vunpack.c.h.b16 %v927
    %v3180 = vunpack.c.l.b16 %v928
    %v3181 = vunpack.c.h.b16 %v928
    %v3182 = vunpack.c.l.b16 %v929
    %v3183 = vunpack.c.h.b16 %v929
    %v3184 = vunpack.c.l.b16 %v930
    %v3185 = vunpack.c.h.b16 %v930
    %v3186 = vunpack.c.l.b16 %v931
    %v3187 = vunpack.c.h.b16 %v931
    %v3188 = vunpack.c.l.b16 %v932
    %v3189 = vunpack.c.h.b16 %v932
    %v3190 = vunpack.c.l.b16 %v933
    %v3191 = vunpack.c.h.b16 %v933
    %v3192 = vunpack.c.l.b16 %v934
    %v3193 = vunpack.c.h.b16 %v934
    %v3194 = vunpack.c.l.b16 %v935
    %v3195 = vunpack.c.h.b16 %v935
    %v3196 = vunpack.c.l.b16 %v936
    %v3197 = vunpack.c.h.b16 %v936
    %v3198 = vunpack.c.l.b16 %v937
    %v3199 = vunpack.c.h.b16 %v937
    %v3200 = vunpack.c.l.b16 %v938
    %v3201 = vunpack.c.h.b16 %v938
    %v3202 = vunpack.c.l.b16 %v939
    %v3203 = vunpack.c.h.b16 %v939
    %v3204 = vunpack.c.l.b16 %v940
    %v3205 = vunpack.c.h.b16 %v940
    %v3206 = vunpack.c.l.b16 %v941
    %v3207 = vunpack.c.h.b16 %v941
    %v3208 = vunpack.c.l.b16 %v942
    %v3209 = vunpack.c.h.b16 %v942
    %v3210 = vunpack.c.l.b16 %v943
    %v3211 = vunpack.c.h.b16 %v943
    %v3212 = vunpack.c.l.b16 %v944
    %v3213 = vunpack.c.h.b16 %v944
    %v3214 = vunpack.c.l.b16 %v945
    %v3215 = vunpack.c.h.b16 %v945
    %v3216 = vunpack.c.l.b16 %v946
    %v3217 = vunpack.c.h.b16 %v946
    %v3218 = vunpack.c.l.b16 %v947
    %v3219 = vunpack.c.h.b16 %v947
    %v3220 = vunpack.c.l.b16 %v948
    %v3221 = vunpack.c.h.b16 %v948
    %v3222 = vunpack.c.l.b16 %v949
    %v3223 = vunpack.c.h.b16 %v949
    %v3224 = vunpack.c.l.b16 %v950
    %v3225 = vunpack.c.h.b16 %v950
    %v3226 = vunpack.c.l.b16 %v951
    %v3227 = vunpack.c.h.b16 %v951
    %v3228 = vunpack.c.l.b16 %v952
    %v3229 = vunpack.c.h.b16 %v952
    %v3230 = vunpack.c.l.b16 %v953
    %v3231 = vunpack.c.h.b16 %v953
    %v3232 = vunpack.c.l.b16 %v954
    %v3233 = vunpack.c.h.b16 %v954
    %v3234 = vunpack.c.l.b16 %v955
    %v3235 = vunpack.c.h.b16 %v955
    %v3236 = vunpack.c.l.b16 %v956
    %v3237 = vunpack.c.h.b16 %v956
    %v3238 = vunpack.c.l.b16 %v957
    %v3239 = vunpack.c.h.b16 %v957
    %v3240 = vunpack.c.l.b16 %v958
    %v3241 = vunpack.c.h.b16 %v958
    %v3242 = vunpack.c.l.b16 %v959
    %v3243 = vunpack.c.h.b16 %v959
    %v3244 = vunpack.c.l.b16 %v960
    %v3245 = vunpack.c.h.b16 %v960
    %v3246 = vunpack.c.l.b16 %v961
    %v3247 = vunpack.c.h.b16 %v961
    %v3248 = vunpack.c.l.b16 %v962
    %v3249 = vunpack.c.h.b16 %v962
    %v3250 = vunpack.c.l.b16 %v963
    %v3251 = vunpack.c.h.b16 %v963
    %v3252 = vunpack.c.l.b16 %v964
    %v3253 = vunpack.c.h.b16 %v964
    %v3254 = vunpack.c.l.b16 %v965
    %v3255 = vunpack.c.h.b16 %v965
    %v3256 = vunpack.c.l.b16 %v966
    %v3257 = vunpack.c.h.b16 %v966
    %v3258 = vunpack.c.l.b16 %v967
    %v3259 = vunpack.c.h.b16 %v967
    %v3260 = vunpack.c.l.b16 %v968
    %v3261 = vunpack.c.h.b16 %v968
    %v3262 = vunpack.c.l.b16 %v969
    %v3263 = vunpack.c.h.b16 %v969
    %v3264 = vunpack.c.l.b16 %v970
    %v3265 = vunpack.c.h.b16 %v970
    %v3266 = vunpack.c.l.b16 %v971
    %v3267 = vunpack.c.h.b16 %v971
    %v3268 = vunpack.c.l.b16 %v972
    %v3269 = vunpack.c.h.b16 %v972
    %v3270 = vunpack.c.l.b16 %v973
    %v3271 = vunpack.c.h.b16 %v973
    %v3272 = vunpack.c.l.b16 %v974
    %v3273 = vunpack.c.h.b16 %v974
    %v3274 = vunpack.c.l.b16 %v975
    %v3275 = vunpack.c.h.b16 %v975
    %v3276 = vunpack.c.l.b16 %v976
    %v3277 = vunpack.c.h.b16 %v976
    %v3278 = vunpack.c.l.b16 %v977
    %v3279 = vunpack.c.h.b16 %v977
    %v3280 = vunpack.c.l.b16 %v978
    %v3281 = vunpack.c.h.b16 %v978
    %v3282 = vunpack.c.l.b16 %v979
    %v3283 = vunpack.c.h.b16 %v979
    %v3284 = vunpack.c.l.b16 %v980
    %v3285 = vunpack.c.h.b16 %v980
    %v3286 = vunpack.c.l.b16 %v981
    %v3287 = vunpack.c.h.b16 %v981
    %v3288 = vunpack.c.l.b16 %v982
    %v3289 = vunpack.c.h.b16 %v982
    %v3290 = vunpack.c.l.b16 %v983
    %v3291 = vunpack.c.h.b16 %v983
    %v3292 = vunpack.c.l.b16 %v984
    %v3293 = vunpack.c.h.b16 %v984
    %v3294 = vunpack.c.l.b16 %v985
    %v3295 = vunpack.c.h.b16 %v985
    %v3296 = vunpack.c.l.b16 %v986
    %v3297 = vunpack.c.h.b16 %v986
    %v3298 = vunpack.c.l.b16 %v987
    %v3299 = vunpack.c.h.b16 %v987
    %v3300 = vunpack.c.l.b16 %v988
    %v3301 = vunpack.c.h.b16 %v988
    %v3302 = vunpack.c.l.b16 %v989
    %v3303 = vunpack.c.h.b16 %v989
    %v3304 = vpack.c.b16 %v1772, %v1768
    %v3305 = vpack.c.b16 %v1773, %v1769
    %v3306 = vpack.c.b16 %v1774, %v1770
    %v3307 = vpack.c.b16 %v1775, %v1771
    %v3308 = vpack.c.b16 %v1780, %v1776
    %v3309 = vpack.c.b16 %v1781, %v1777
    %v3310 = vpack.c.b16 %v1782, %v1778
    %v3311 = vpack.c.b16 %v1783, %v1779
    %v3312 = vpack.c.b16 %v1788, %v1784
    %v3313 = vpack.c.b16 %v1789, %v1785
    %v3314 = vpack.c.b16 %v1790, %v1786
    %v3315 = vpack.c.b16 %v1791, %v1787
    %v3316 = vpack.c.b16 %v1796, %v1792
    %v3317 = vpack.c.b16 %v1797, %v1793
    %v3318 = vpack.c.b16 %v1798, %v1794
    %v3319 = vpack.c.b16 %v1799, %v1795
    %v3320 = vpack.c.b16 %v1804, %v1800
    %v3321 = vpack.c.b16 %v1805, %v1801
    %v3322 = vpack.c.b16 %v1806, %v1802
    %v3323 = vpack.c.b16 %v1807, %v1803
    %v3324 = vpack.c.b16 %v1812, %v1808
    %v3325 = vpack.c.b16 %v1813, %v1809
    %v3326 = vpack.c.b16 %v1814, %v1810
    %v3327 = vpack.c.b16 %v1815, %v1811
    %v3328 = vpack.c.b16 %v1820, %v1816
    %v3329 = vpack.c.b16 %v1821, %v1817
    %v3330 = vpack.c.b16 %v1822, %v1818
    %v3331 = vpack.c.b16 %v1823, %v1819
    %v3332 = vpack.c.b16 %v1828, %v1824
    %v3333 = vpack.c.b16 %v1829, %v1825
    %v3334 = vpack.c.b16 %v1830, %v1826
    %v3335 = vpack.c.b16 %v1831, %v1827
    %v3336 = vpack.c.b16 %v1836, %v1832
    %v3337 = vpack.c.b16 %v1837, %v1833
    %v3338 = vpack.c.b16 %v1838, %v1834
    %v3339 = vpack.c.b16 %v1839, %v1835
    %v3340 = vpack.c.b16 %v1844, %v1840
    %v3341 = vpack.c.b16 %v1845, %v1841
    %v3342 = vpack.c.b16 %v1846, %v1842
    %v3343 = vpack.c.b16 %v1847, %v1843
    %v3344 = vpack.c.b16 %v1852, %v1848
    %v3345 = vpack.c.b16 %v1853, %v1849
    %v3346 = vpack.c.b16 %v1854, %v1850
    %v3347 = vpack.c.b16 %v1855, %v1851
    %v3348 = vpack.c.b16 %v1860, %v1856
    %v3349 = vpack.c.b16 %v1861, %v1857
    %v3350 = vpack.c.b16 %v1862, %v1858
    %v3351 = vpack.c.b16 %v1863, %v1859
    %v3352 = vpack.c.b16 %v1868, %v1864
    %v3353 = vpack.c.b16 %v1869, %v1865
    %v3354 = vpack.c.b16 %v1870, %v1866
    %v3355 = vpack.c.b16 %v1871, %v1867
    %v3356 = vpack.c.b16 %v1876, %v1872
    %v3357 = vpack.c.b16 %v1877, %v1873
    %v3358 = vpack.c.b16 %v1878, %v1874
    %v3359 = vpack.c.b16 %v1879, %v1875
    %v3360 = vpack.c.b16 %v1884, %v1880
    %v3361 = vpack.c.b16 %v1885, %v1881
    %v3362 = vpack.c.b16 %v1886, %v1882
    %v3363 = vpack.c.b16 %v1887, %v1883
    %v3364 = vpack.c.b16 %v1892, %v1888
    %v3365 = vpack.c.b16 %v1893, %v1889
    %v3366 = vpack.c.b16 %v1894, %v1890
    %v3367 = vpack.c.b16 %v1895, %v1891
    %v3368 = vpack.c.b16 %v1900, %v1896
    %v3369 = vpack.c.b16 %v1901, %v1897
    %v3370 = vpack.c.b16 %v1902, %v1898
    %v3371 = vpack.c.b16 %v1903, %v1899
    %v3372 = vpack.c.b16 %v1908, %v1904
    %v3373 = vpack.c.b16 %v1909, %v1905
    %v3374 = vpack.c.b16 %v1910, %v1906
    %v3375 = vpack.c.b16 %v1911, %v1907
    %v3376 = vpack.c.b16 %v1916, %v1912
    %v3377 = vpack.c.b16 %v1917, %v1913
    %v3378 = vpack.c.b16 %v1918, %v1914
    %v3379 = vpack.c.b16 %v1919, %v1915
    %v3380 = vpack.c.b16 %v1924, %v1920
    %v3381 = vpack.c.b16 %v1925, %v1921
    %v3382 = vpack.c.b16 %v1926, %v1922
    %v3383 = vpack.c.b16 %v1927, %v1923
    %v3384 = vpack.c.b16 %v1932, %v1928
    %v3385 = vpack.c.b16 %v1933, %v1929
    %v3386 = vpack.c.b16 %v1934, %v1930
    %v3387 = vpack.c.b16 %v1935, %v1931
    %v3388 = vpack.c.b16 %v1940, %v1936
    %v3389 = vpack.c.b16 %v1941, %v1937
    %v3390 = vpack.c.b16 %v1942, %v1938
    %v3391 = vpack.c.b16 %v1943, %v1939
    %v3392 = vpack.c.b16 %v1948, %v1944
    %v3393 = vpack.c.b16 %v1949, %v1945
    %v3394 = vpack.c.b16 %v1950, %v1946
    %v3395 = vpack.c.b16 %v1951, %v1947
    %v3396 = vpack.c.b16 %v1956, %v1952
    %v3397 = vpack.c.b16 %v1957, %v1953
    %v3398 = vpack.c.b16 %v1958, %v1954
    %v3399 = vpack.c.b16 %v1959, %v1955
    %v3400 = vpack.c.b16 %v1964, %v1960
    %v3401 = vpack.c.b16 %v1965, %v1961
    %v3402 = vpack.c.b16 %v1966, %v1962
    %v3403 = vpack.c.b16 %v1967, %v1963
    %v3404 = vpack.c.b16 %v1972, %v1968
    %v3405 = vpack.c.b16 %v1973, %v1969
    %v3406 = vpack.c.b16 %v1974, %v1970
    %v3407 = vpack.c.b16 %v1975, %v1971
    %v3408 = vpack.c.b16 %v1980, %v1976
    %v3409 = vpack.c.b16 %v1981, %v1977
    %v3410 = vpack.c.b16 %v1982, %v1978
    %v3411 = vpack.c.b16 %v1983, %v1979
    %v3412 = vpack.c.b16 %v1988, %v1984
    %v3413 = vpack.c.b16 %v1989, %v1985
    %v3414 = vpack.c.b16 %v1990, %v1986
    %v3415 = vpack.c.b16 %v1991, %v1987
    %v3416 = vpack.c.b16 %v1996, %v1992
    %v3417 = vpack.c.b16 %v1997, %v1993
    %v3418 = vpack.c.b16 %v1998, %v1994
    %v3419 = vpack.c.b16 %v1999, %v1995
    %v3420 = vpack.c.b16 %v2004, %v2000
    %v3421 = vpack.c.b16 %v2005, %v2001
    %v3422 = vpack.c.b16 %v2006, %v2002
    %v3423 = vpack.c.b16 %v2007, %v2003
    %v3424 = vpack.c.b16 %v2012, %v2008
    %v3425 = vpack.c.b16 %v2013, %v2009
    %v3426 = vpack.c.b16 %v2014, %v2010
    %v3427 = vpack.c.b16 %v2015, %v2011
    %v3428 = vpack.c.b16 %v2020, %v2016
    %v3429 = vpack.c.b16 %v2021, %v2017
    %v3430 = vpack.c.b16 %v2022, %v2018
    %v3431 = vpack.c.b16 %v2023, %v2019
    %v3432 = vpack.c.b16 %v2028, %v2024
    %v3433 = vpack.c.b16 %v2029, %v2025
    %v3434 = vpack.c.b16 %v2030, %v2026
    %v3435 = vpack.c.b16 %v2031, %v2027
    %v3436 = vpack.c.b16 %v2036, %v2032
    %v3437 = vpack.c.b16 %v2037, %v2033
    %v3438 = vpack.c.b16 %v2038, %v2034
    %v3439 = vpack.c.b16 %v2039, %v2035
    %v3440 = vpack.c.b16 %v2044, %v2040
    %v3441 = vpack.c.b16 %v2045, %v2041
    %v3442 = vpack.c.b16 %v2046, %v2042
    %v3443 = vpack.c.b16 %v2047, %v2043
    %v3444 = vpack.c.b16 %v2052, %v2048
    %v3445 = vpack.c.b16 %v2053, %v2049
    %v3446 = vpack.c.b16 %v2054, %v2050
    %v3447 = vpack.c.b16 %v2055, %v2051
    %v3448 = vpack.c.b16 %v2060, %v2056
    %v3449 = vpack.c.b16 %v2061, %v2057
    %v3450 = vpack.c.b16 %v2062, %v2058
    %v3451 = vpack.c.b16 %v2063, %v2059
    %v3452 = vpack.c.b16 %v2068, %v2064
    %v3453 = vpack.c.b16 %v2069, %v2065
    %v3454 = vpack.c.b16 %v2070, %v2066
    %v3455 = vpack.c.b16 %v2071, %v2067
    %v3456 = vpack.c.b16 %v2076, %v2072
    %v3457 = vpack.c.b16 %v2077, %v2073
    %v3458 = vpack.c.b16 %v2078, %v2074
    %v3459 = vpack.c.b16 %v2079, %v2075
    %v3460 = vpack.c.b16 %v2084, %v2080
    %v3461 = vpack.c.b16 %v2085, %v2081
    %v3462 = vpack.c.b16 %v2086, %v2082
    %v3463 = vpack.c.b16 %v2087, %v2083
    %v3464 = vpack.c.b16 %v2092, %v2088
    %v3465 = vpack.c.b16 %v2093, %v2089
    %v3466 = vpack.c.b16 %v2094, %v2090
    %v3467 = vpack.c.b16 %v2095, %v2091
    %v3468 = vpack.c.b16 %v2100, %v2096
    %v3469 = vpack.c.b16 %v2101, %v2097
    %v3470 = vpack.c.b16 %v2102, %v2098
    %v3471 = vpack.c.b16 %v2103, %v2099
    %v3472 = vpack.c.b16 %v2108, %v2104
    %v3473 = vpack.c.b16 %v2109, %v2105
    %v3474 = vpack.c.b16 %v2110, %v2106
    %v3475 = vpack.c.b16 %v2111, %v2107
    %v3476 = vpack.c.b16 %v2116, %v2112
    %v3477 = vpack.c.b16 %v2117, %v2113
    %v3478 = vpack.c.b16 %v2118, %v2114
    %v3479 = vpack.c.b16 %v2119, %v2115
    %v3480 = vpack.c.b16 %v2124, %v2120
    %v3481 = vpack.c.b16 %v2125, %v2121
    %v3482 = vpack.c.b16 %v2126, %v2122
    %v3483 = vpack.c.b16 %v2127, %v2123
    %v3484 = vpack.c.b16 %v2132, %v2128
    %v3485 = vpack.c.b16 %v2133, %v2129
    %v3486 = vpack.c.b16 %v2134, %v2130
    %v3487 = vpack.c.b16 %v2135, %v2131
    %v3488 = vpack.c.b16 %v2140, %v2136
    %v3489 = vpack.c.b16 %v2141, %v2137
    %v3490 = vpack.c.b16 %v2142, %v2138
    %v3491 = vpack.c.b16 %v2143, %v2139
    %v3492 = vpack.c.b16 %v2148, %v2144
    %v3493 = vpack.c.b16 %v2149, %v2145
    %v3494 = vpack.c.b16 %v2150, %v2146
    %v3495 = vpack.c.b16 %v2151, %v2147
    %v3496 = vpack.c.b16 %v2156, %v2152
    %v3497 = vpack.c.b16 %v2157, %v2153
    %v3498 = vpack.c.b16 %v2158, %v2154
    %v3499 = vpack.c.b16 %v2159, %v2155
    %v3500 = vpack.c.b16 %v2164, %v2160
    %v3501 = vpack.c.b16 %v2165, %v2161
    %v3502 = vpack.c.b16 %v2166, %v2162
    %v3503 = vpack.c.b16 %v2167, %v2163
    %v3504 = vpack.c.b16 %v2172, %v2168
    %v3505 = vpack.c.b16 %v2173, %v2169
    %v3506 = vpack.c.b16 %v2174, %v2170
    %v3507 = vpack.c.b16 %v2175, %v2171
    %v3508 = vpack.c.b16 %v2180, %v2176
    %v3509 = vpack.c.b16 %v2181, %v2177
    %v3510 = vpack.c.b16 %v2182, %v2178
    %v3511 = vpack.c.b16 %v2183, %v2179
    %v3512 = vpack.c.b16 %v2188, %v2184
    %v3513 = vpack.c.b16 %v2189, %v2185
    %v3514 = vpack.c.b16 %v2190, %v2186
    %v3515 = vpack.c.b16 %v2191, %v2187
    %v3516 = vpack.c.b16 %v2196, %v2192
    %v3517 = vpack.c.b16 %v2197, %v2193
    %v3518 = vpack.c.b16 %v2198, %v2194
    %v3519 = vpack.c.b16 %v2199, %v2195
    %v3520 = vpack.c.b16 %v2204, %v2200
    %v3521 = vpack.c.b16 %v2205, %v2201
    %v3522 = vpack.c.b16 %v2206, %v2202
    %v3523 = vpack.c.b16 %v2207, %v2203
    %v3524 = vpack.c.b16 %v2212, %v2208
    %v3525 = vpack.c.b16 %v2213, %v2209
    %v3526 = vpack.c.b16 %v2214, %v2210
    %v3527 = vpack.c.b16 %v2215, %v2211
    %v3528 = vpack.c.b16 %v2220, %v2216
    %v3529 = vpack.c.b16 %v2221, %v2217
    %v3530 = vpack.c.b16 %v2222, %v2218
    %v3531 = vpack.c.b16 %v2223, %v2219
    %v3532 = vpack.c.b16 %v2228, %v2224
    %v3533 = vpack.c.b16 %v2229, %v2225
    %v3534 = vpack.c.b16 %v2230, %v2226
    %v3535 = vpack.c.b16 %v2231, %v2227
    %v3536 = vpack.c.b16 %v2236, %v2232
    %v3537 = vpack.c.b16 %v2237, %v2233
    %v3538 = vpack.c.b16 %v2238, %v2234
    %v3539 = vpack.c.b16 %v2239, %v2235
    %v3540 = vpack.c.b16 %v2244, %v2240
    %v3541 = vpack.c.b16 %v2245, %v2241
    %v3542 = vpack.c.b16 %v2246, %v2242
    %v3543 = vpack.c.b16 %v2247, %v2243
    %v3544 = vpack.c.b16 %v2252, %v2248
    %v3545 = vpack.c.b16 %v2253, %v2249
    %v3546 = vpack.c.b16 %v2254, %v2250
    %v3547 = vpack.c.b16 %v2255, %v2251
    %v3548 = vpack.c.b16 %v2260, %v2256
    %v3549 = vpack.c.b16 %v2261, %v2257
    %v3550 = vpack.c.b16 %v2262, %v2258
    %v3551 = vpack.c.b16 %v2263, %v2259
    %v3552 = vpack.c.b16 %v2268, %v2264
    %v3553 = vpack.c.b16 %v2269, %v2265
    %v3554 = vpack.c.b16 %v2270, %v2266
    %v3555 = vpack.c.b16 %v2271, %v2267
    %v3556 = vpack.c.b16 %v2276, %v2272
    %v3557 = vpack.c.b16 %v2277, %v2273
    %v3558 = vpack.c.b16 %v2278, %v2274
    %v3559 = vpack.c.b16 %v2279, %v2275
    %v3560 = vpack.c.b16 %v2284, %v2280
    %v3561 = vpack.c.b16 %v2285, %v2281
    %v3562 = vpack.c.b16 %v2286, %v2282
    %v3563 = vpack.c.b16 %v2287, %v2283
    %v3564 = vpack.c.b16 %v2292, %v2288
    %v3565 = vpack.c.b16 %v2293, %v2289
    %v3566 = vpack.c.b16 %v2294, %v2290
    %v3567 = vpack.c.b16 %v2295, %v2291
    %v3568 = vpack.c.b16 %v2300, %v2296
    %v3569 = vpack.c.b16 %v2301, %v2297
    %v3570 = vpack.c.b16 %v2302, %v2298
    %v3571 = vpack.c.b16 %v2303, %v2299
    %v3572 = vpack.c.b16 %v2308, %v2304
    %v3573 = vpack.c.b16 %v2309, %v2305
    %v3574 = vpack.c.b16 %v2310, %v2306
    %v3575 = vpack.c.b16 %v2311, %v2307
    %v3576 = vpack.c.b16 %v2316, %v2312
    %v3577 = vpack.c.b16 %v2317, %v2313
    %v3578 = vpack.c.b16 %v2318, %v2314
    %v3579 = vpack.c.b16 %v2319, %v2315
    %v3580 = vpack.c.b16 %v2324, %v2320
    %v3581 = vpack.c.b16 %v2325, %v2321
    %v3582 = vpack.c.b16 %v2326, %v2322
    %v3583 = vpack.c.b16 %v2327, %v2323
    %v3584 = vpack.c.b16 %v2332, %v2328
    %v3585 = vpack.c.b16 %v2333, %v2329
    %v3586 = vpack.c.b16 %v2334, %v2330
    %v3587 = vpack.c.b16 %v2335, %v2331
    %v3588 = vpack.c.b16 %v2340, %v2336
    %v3589 = vpack.c.b16 %v2341, %v2337
    %v3590 = vpack.c.b16 %v2342, %v2338
    %v3591 = vpack.c.b16 %v2343, %v2339
    %v3592 = vpack.c.b16 %v2348, %v2344
    %v3593 = vpack.c.b16 %v2349, %v2345
    %v3594 = vpack.c.b16 %v2350, %v2346
    %v3595 = vpack.c.b16 %v2351, %v2347
    %v3596 = vpack.c.b16 %v2356, %v2352
    %v3597 = vpack.c.b16 %v2357, %v2353
    %v3598 = vpack.c.b16 %v2358, %v2354
    %v3599 = vpack.c.b16 %v2359, %v2355
    %v3600 = vpack.c.b16 %v2364, %v2360
    %v3601 = vpack.c.b16 %v2365, %v2361
    %v3602 = vpack.c.b16 %v2366, %v2362
    %v3603 = vpack.c.b16 %v2367, %v2363
    %v3604 = vpack.c.b16 %v2372, %v2368
    %v3605 = vpack.c.b16 %v2373, %v2369
    %v3606 = vpack.c.b16 %v2374, %v2370
    %v3607 = vpack.c.b16 %v2375, %v2371
    %v3608 = vpack.c.b16 %v2380, %v2376
    %v3609 = vpack.c.b16 %v2381, %v2377
    %v3610 = vpack.c.b16 %v2382, %v2378
    %v3611 = vpack.c.b16 %v2383, %v2379
    %v3612 = vpack.c.b16 %v2388, %v2384
    %v3613 = vpack.c.b16 %v2389, %v2385
    %v3614 = vpack.c.b16 %v2390, %v2386
    %v3615 = vpack.c.b16 %v2391, %v2387
    %v3616 = vpack.c.b16 %v2396, %v2392
    %v3617 = vpack.c.b16 %v2397, %v2393
    %v3618 = vpack.c.b16 %v2398, %v2394
    %v3619 = vpack.c.b16 %v2399, %v2395
    %v3620 = vpack.c.b16 %v2404, %v2400
    %v3621 = vpack.c.b16 %v2405, %v2401
    %v3622 = vpack.c.b16 %v2406, %v2402
    %v3623 = vpack.c.b16 %v2407, %v2403
    %v3624 = vpack.c.b16 %v2412, %v2408
    %v3625 = vpack.c.b16 %v2413, %v2409
    %v3626 = vpack.c.b16 %v2414, %v2410
    %v3627 = vpack.c.b16 %v2415, %v2411
    %v3628 = vpack.c.b16 %v2420, %v2416
    %v3629 = vpack.c.b16 %v2421, %v2417
    %v3630 = vpack.c.b16 %v2422, %v2418
    %v3631 = vpack.c.b16 %v2423, %v2419
    %v3632 = vpack.c.b16 %v2428, %v2424
    %v3633 = vpack.c.b16 %v2429, %v2425
    %v3634 = vpack.c.b16 %v2430, %v2426
    %v3635 = vpack.c.b16 %v2431, %v2427
    %v3636 = vpack.c.b16 %v2436, %v2432
    %v3637 = vpack.c.b16 %v2437, %v2433
    %v3638 = vpack.c.b16 %v2438, %v2434
    %v3639 = vpack.c.b16 %v2439, %v2435
    %v3640 = vpack.c.b16 %v2444, %v2440
    %v3641 = vpack.c.b16 %v2445, %v2441
    %v3642 = vpack.c.b16 %v2446, %v2442
    %v3643 = vpack.c.b16 %v2447, %v2443
    %v3644 = vpack.c.b16 %v2452, %v2448
    %v3645 = vpack.c.b16 %v2453, %v2449
    %v3646 = vpack.c.b16 %v2454, %v2450
    %v3647 = vpack.c.b16 %v2455, %v2451
    %v3648 = vpack.c.b16 %v2460, %v2456
    %v3649 = vpack.c.b16 %v2461, %v2457
    %v3650 = vpack.c.b16 %v2462, %v2458
    %v3651 = vpack.c.b16 %v2463, %v2459
    %v3652 = vpack.c.b16 %v2468, %v2464
    %v3653 = vpack.c.b16 %v2469, %v2465
    %v3654 = vpack.c.b16 %v2470, %v2466
    %v3655 = vpack.c.b16 %v2471, %v2467
    %v3656 = vpack.c.b16 %v2476, %v2472
    %v3657 = vpack.c.b16 %v2477, %v2473
    %v3658 = vpack.c.b16 %v2478, %v2474
    %v3659 = vpack.c.b16 %v2479, %v2475
    %v3660 = vpack.c.b16 %v2484, %v2480
    %v3661 = vpack.c.b16 %v2485, %v2481
    %v3662 = vpack.c.b16 %v2486, %v2482
    %v3663 = vpack.c.b16 %v2487, %v2483
    %v3664 = vpack.c.b16 %v2492, %v2488
    %v3665 = vpack.c.b16 %v2493, %v2489
    %v3666 = vpack.c.b16 %v2494, %v2490
    %v3667 = vpack.c.b16 %v2495, %v2491
    %v3668 = vpack.c.b16 %v2500, %v2496
    %v3669 = vpack.c.b16 %v2501, %v2497
    %v3670 = vpack.c.b16 %v2502, %v2498
    %v3671 = vpack.c.b16 %v2503, %v2499
    %v3672 = vpack.c.b16 %v2508, %v2504
    %v3673 = vpack.c.b16 %v2509, %v2505
    %v3674 = vpack.c.b16 %v2510, %v2506
    %v3675 = vpack.c.b16 %v2511, %v2507
    %v3676 = vpack.c.b16 %v2516, %v2512
    %v3677 = vpack.c.b16 %v2517, %v2513
    %v3678 = vpack.c.b16 %v2518, %v2514
    %v3679 = vpack.c.b16 %v2519, %v2515
    %v3680 = vpack.c.b16 %v2524, %v2520
    %v3681 = vpack.c.b16 %v2525, %v2521
    %v3682 = vpack.c.b16 %v2526, %v2522
    %v3683 = vpack.c.b16 %v2527, %v2523
    %v3684 = vpack.c.b16 %v2532, %v2528
    %v3685 = vpack.c.b16 %v2533, %v2529
    %v3686 = vpack.c.b16 %v2534, %v2530
    %v3687 = vpack.c.b16 %v2535, %v2531
    %v3688 = vpack.c.b16 %v2540, %v2536
    %v3689 = vpack.c.b16 %v2541, %v2537
    %v3690 = vpack.c.b16 %v2542, %v2538
    %v3691 = vpack.c.b16 %v2543, %v2539
    %v3692 = vpack.c.b16 %v2548, %v2544
    %v3693 = vpack.c.b16 %v2549, %v2545
    %v3694 = vpack.c.b16 %v2550, %v2546
    %v3695 = vpack.c.b16 %v2551, %v2547
    %v3696 = vpack.c.b16 %v2556, %v2552
    %v3697 = vpack.c.b16 %v2557, %v2553
    %v3698 = vpack.c.b16 %v2558, %v2554
    %v3699 = vpack.c.b16 %v2559, %v2555
    %v3700 = vpack.c.b16 %v2564, %v2560
    %v3701 = vpack.c.b16 %v2565, %v2561
    %v3702 = vpack.c.b16 %v2566, %v2562
    %v3703 = vpack.c.b16 %v2567, %v2563
    %v3704 = vpack.c.b16 %v2572, %v2568
    %v3705 = vpack.c.b16 %v2573, %v2569
    %v3706 = vpack.c.b16 %v2574, %v2570
    %v3707 = vpack.c.b16 %v2575, %v2571
    %v3708 = vpack.c.b16 %v2580, %v2576
    %v3709 = vpack.c.b16 %v2581, %v2577
    %v3710 = vpack.c.b16 %v2582, %v2578
    %v3711 = vpack.c.b16 %v2583, %v2579
    %v3712 = vpack.c.b16 %v2588, %v2584
    %v3713 = vpack.c.b16 %v2589, %v2585
    %v3714 = vpack.c.b16 %v2590, %v2586
    %v3715 = vpack.c.b16 %v2591, %v2587
    %v3716 = vpack.c.b16 %v2596, %v2592
    %v3717 = vpack.c.b16 %v2597, %v2593
    %v3718 = vpack.c.b16 %v2598, %v2594
    %v3719 = vpack.c.b16 %v2599, %v2595
    %v3720 = vpack.c.b16 %v2604, %v2600
    %v3721 = vpack.c.b16 %v2605, %v2601
    %v3722 = vpack.c.b16 %v2606, %v2602
    %v3723 = vpack.c.b16 %v2607, %v2603
    %v3724 = vpack.c.b16 %v2612, %v2608
    %v3725 = vpack.c.b16 %v2613, %v2609
    %v3726 = vpack.c.b16 %v2614, %v2610
    %v3727 = vpack.c.b16 %v2615, %v2611
    %v3728 = vpack.c.b16 %v2620, %v2616
    %v3729 = vpack.c.b16 %v2621, %v2617
    %v3730 = vpack.c.b16 %v2622, %v2618
    %v3731 = vpack.c.b16 %v2623, %v2619
    %v3732 = vpack.c.b16 %v2628, %v2624
    %v3733 = vpack.c.b16 %v2629, %v2625
    %v3734 = vpack.c.b16 %v2630, %v2626
    %v3735 = vpack.c.b16 %v2631, %v2627
    %v3736 = vpack.c.b16 %v2636, %v2632
    %v3737 = vpack.c.b16 %v2637, %v2633
    %v3738 = vpack.c.b16 %v2638, %v2634
    %v3739 = vpack.c.b16 %v2639, %v2635
    %v3740 = vpack.c.b16 %v2644, %v2640
    %v3741 = vpack.c.b16 %v2645, %v2641
    %v3742 = vpack.c.b16 %v2646, %v2642
    %v3743 = vpack.c.b16 %v2647, %v2643
    %v3744 = vpack.c.b16 %v2652, %v2648
    %v3745 = vpack.c.b16 %v2653, %v2649
    %v3746 = vpack.c.b16 %v2654, %v2650
    %v3747 = vpack.c.b16 %v2655, %v2651
    %v3748 = vpack.c.b16 %v2660, %v2656
    %v3749 = vpack.c.b16 %v2661, %v2657
    %v3750 = vpack.c.b16 %v2662, %v2658
    %v3751 = vpack.c.b16 %v2663, %v2659
    %v3752 = vpack.c.b16 %v2668, %v2664
    %v3753 = vpack.c.b16 %v2669, %v2665
    %v3754 = vpack.c.b16 %v2670, %v2666
    %v3755 = vpack.c.b16 %v2671, %v2667
    %v3756 = vpack.c.b16 %v2676, %v2672
    %v3757 = vpack.c.b16 %v2677, %v2673
    %v3758 = vpack.c.b16 %v2678, %v2674
    %v3759 = vpack.c.b16 %v2679, %v2675
    %v3760 = vpack.c.b16 %v2684, %v2680
    %v3761 = vpack.c.b16 %v2685, %v2681
    %v3762 = vpack.c.b16 %v2686, %v2682
    %v3763 = vpack.c.b16 %v2687, %v2683
    %v3764 = vpack.c.b16 %v2692, %v2688
    %v3765 = vpack.c.b16 %v2693, %v2689
    %v3766 = vpack.c.b16 %v2694, %v2690
    %v3767 = vpack.c.b16 %v2695, %v2691
    %v3768 = vpack.c.b16 %v2700, %v2696
    %v3769 = vpack.c.b16 %v2701, %v2697
    %v3770 = vpack.c.b16 %v2702, %v2698
    %v3771 = vpack.c.b16 %v2703, %v2699
    %v3772 = vpack.c.b16 %v2708, %v2704
    %v3773 = vpack.c.b16 %v2709, %v2705
    %v3774 = vpack.c.b16 %v2710, %v2706
    %v3775 = vpack.c.b16 %v2711, %v2707
    %v3776 = vpack.c.b16 %v2716, %v2712
    %v3777 = vpack.c.b16 %v2717, %v2713
    %v3778 = vpack.c.b16 %v2718, %v2714
    %v3779 = vpack.c.b16 %v2719, %v2715
    %v3780 = vpack.c.b16 %v2724, %v2720
    %v3781 = vpack.c.b16 %v2725, %v2721
    %v3782 = vpack.c.b16 %v2726, %v2722
    %v3783 = vpack.c.b16 %v2727, %v2723
    %v3784 = vpack.c.b16 %v2732, %v2728
    %v3785 = vpack.c.b16 %v2733, %v2729
    %v3786 = vpack.c.b16 %v2734, %v2730
    %v3787 = vpack.c.b16 %v2735, %v2731
    %v3788 = vpack.c.b16 %v2740, %v2736
    %v3789 = vpack.c.b16 %v2741, %v2737
    %v3790 = vpack.c.b16 %v2742, %v2738
    %v3791 = vpack.c.b16 %v2743, %v2739
    %v3792 = vpack.c.b16 %v2748, %v2744
    %v3793 = vpack.c.b16 %v2749, %v2745
    %v3794 = vpack.c.b16 %v2750, %v2746
    %v3795 = vpack.c.b16 %v2751, %v2747
    %v3796 = vpack.c.b16 %v2756, %v2752
    %v3797 = vpack.c.b16 %v2757, %v2753
    %v3798 = vpack.c.b16 %v2758, %v2754
    %v3799 = vpack.c.b16 %v2759, %v2755
    %v3800 = vpack.c.b16 %v2764, %v2760
    %v3801 = vpack.c.b16 %v2765, %v2761
    %v3802 = vpack.c.b16 %v2766, %v2762
    %v3803 = vpack.c.b16 %v2767, %v2763
    %v3804 = vpack.c.b16 %v2772, %v2768
    %v3805 = vpack.c.b16 %v2773, %v2769
    %v3806 = vpack.c.b16 %v2774, %v2770
    %v3807 = vpack.c.b16 %v2775, %v2771
    %v3808 = vpack.c.b16 %v2780, %v2776
    %v3809 = vpack.c.b16 %v2781, %v2777
    %v3810 = vpack.c.b16 %v2782, %v2778
    %v3811 = vpack.c.b16 %v2783, %v2779
    %v3812 = vpack.c.b16 %v2788, %v2784
    %v3813 = vpack.c.b16 %v2789, %v2785
    %v3814 = vpack.c.b16 %v2790, %v2786
    %v3815 = vpack.c.b16 %v2791, %v2787
    %v3816 = vpack.c.b16 %v2796, %v2792
    %v3817 = vpack.c.b16 %v2797, %v2793
    %v3818 = vpack.c.b16 %v2798, %v2794
    %v3819 = vpack.c.b16 %v2799, %v2795
    %v3820 = vpack.c.b16 %v2804, %v2800
    %v3821 = vpack.c.b16 %v2805, %v2801
    %v3822 = vpack.c.b16 %v2806, %v2802
    %v3823 = vpack.c.b16 %v2807, %v2803
    %v3824 = vpack.c.b16 %v2812, %v2808
    %v3825 = vpack.c.b16 %v2813, %v2809
    %v3826 = vpack.c.b16 %v2814, %v2810
    %v3827 = vpack.c.b16 %v2815, %v2811
    %v3828 = vpack.c.b16 %v2820, %v2816
    %v3829 = vpack.c.b16 %v2821, %v2817
    %v3830 = vpack.c.b16 %v2822, %v2818
    %v3831 = vpack.c.b16 %v2823, %v2819
    %v3832 = vpack.c.b16 %v2828, %v2824
    %v3833 = vpack.c.b16 %v2829, %v2825
    %v3834 = vpack.c.b16 %v2830, %v2826
    %v3835 = vpack.c.b16 %v2831, %v2827
    %v3836 = vpack.c.b16 %v2836, %v2832
    %v3837 = vpack.c.b16 %v2837, %v2833
    %v3838 = vpack.c.b16 %v2838, %v2834
    %v3839 = vpack.c.b16 %v2839, %v2835
    %v3840 = vpack.c.b16 %v2844, %v2840
    %v3841 = vpack.c.b16 %v2845, %v2841
    %v3842 = vpack.c.b16 %v2846, %v2842
    %v3843 = vpack.c.b16 %v2847, %v2843
    %v3844 = vpack.c.b16 %v2852, %v2848
    %v3845 = vpack.c.b16 %v2853, %v2849
    %v3846 = vpack.c.b16 %v2854, %v2850
    %v3847 = vpack.c.b16 %v2855, %v2851
    %v3848 = vpack.c.b16 %v2860, %v2856
    %v3849 = vpack.c.b16 %v2861, %v2857
    %v3850 = vpack.c.b16 %v2862, %v2858
    %v3851 = vpack.c.b16 %v2863, %v2859
    %v3852 = vpack.c.b16 %v2868, %v2864
    %v3853 = vpack.c.b16 %v2869, %v2865
    %v3854 = vpack.c.b16 %v2870, %v2866
    %v3855 = vpack.c.b16 %v2871, %v2867
    %v3856 = vpack.c.b16 %v2876, %v2872
    %v3857 = vpack.c.b16 %v2877, %v2873
    %v3858 = vpack.c.b16 %v2878, %v2874
    %v3859 = vpack.c.b16 %v2879, %v2875
    %v3860 = vpack.c.b16 %v2884, %v2880
    %v3861 = vpack.c.b16 %v2885, %v2881
    %v3862 = vpack.c.b16 %v2886, %v2882
    %v3863 = vpack.c.b16 %v2887, %v2883
    %v3864 = vpack.c.b16 %v2892, %v2888
    %v3865 = vpack.c.b16 %v2893, %v2889
    %v3866 = vpack.c.b16 %v2894, %v2890
    %v3867 = vpack.c.b16 %v2895, %v2891
    %v3868 = vpack.c.b16 %v2900, %v2896
    %v3869 = vpack.c.b16 %v2901, %v2897
    %v3870 = vpack.c.b16 %v2902, %v2898
    %v3871 = vpack.c.b16 %v2903, %v2899
    %v3872 = vpack.c.b16 %v2908, %v2904
    %v3873 = vpack.c.b16 %v2909, %v2905
    %v3874 = vpack.c.b16 %v2910, %v2906
    %v3875 = vpack.c.b16 %v2911, %v2907
    %v3876 = vpack.c.b16 %v2916, %v2912
    %v3877 = vpack.c.b16 %v2917, %v2913
    %v3878 = vpack.c.b16 %v2918, %v2914
    %v3879 = vpack.c.b16 %v2919, %v2915
    %v3880 = vpack.c.b16 %v2924, %v2920
    %v3881 = vpack.c.b16 %v2925, %v2921
    %v3882 = vpack.c.b16 %v2926, %v2922
    %v3883 = vpack.c.b16 %v2927, %v2923
    %v3884 = vpack.c.b16 %v2932, %v2928
    %v3885 = vpack.c.b16 %v2933, %v2929
    %v3886 = vpack.c.b16 %v2934, %v2930
    %v3887 = vpack.c.b16 %v2935, %v2931
    %v3888 = vpack.c.b16 %v2940, %v2936
    %v3889 = vpack.c.b16 %v2941, %v2937
    %v3890 = vpack.c.b16 %v2942, %v2938
    %v3891 = vpack.c.b16 %v2943, %v2939
    %v3892 = vpack.c.b16 %v2948, %v2944
    %v3893 = vpack.c.b16 %v2949, %v2945
    %v3894 = vpack.c.b16 %v2950, %v2946
    %v3895 = vpack.c.b16 %v2951, %v2947
    %v3896 = vpack.c.b16 %v2956, %v2952
    %v3897 = vpack.c.b16 %v2957, %v2953
    %v3898 = vpack.c.b16 %v2958, %v2954
    %v3899 = vpack.c.b16 %v2959, %v2955
    %v3900 = vpack.c.b16 %v2964, %v2960
    %v3901 = vpack.c.b16 %v2965, %v2961
    %v3902 = vpack.c.b16 %v2966, %v2962
    %v3903 = vpack.c.b16 %v2967, %v2963
    %v3904 = vpack.c.b16 %v2972, %v2968
    %v3905 = vpack.c.b16 %v2973, %v2969
    %v3906 = vpack.c.b16 %v2974, %v2970
    %v3907 = vpack.c.b16 %v2975, %v2971
    %v3908 = vpack.c.b16 %v2980, %v2976
    %v3909 = vpack.c.b16 %v2981, %v2977
    %v3910 = vpack.c.b16 %v2982, %v2978
    %v3911 = vpack.c.b16 %v2983, %v2979
    %v3912 = vpack.c.b16 %v2988, %v2984
    %v3913 = vpack.c.b16 %v2989, %v2985
    %v3914 = vpack.c.b16 %v2990, %v2986
    %v3915 = vpack.c.b16 %v2991, %v2987
    %v3916 = vpack.c.b16 %v2996, %v2992
    %v3917 = vpack.c.b16 %v2997, %v2993
    %v3918 = vpack.c.b16 %v2998, %v2994
    %v3919 = vpack.c.b16 %v2999, %v2995
    %v3920 = vpack.c.b16 %v3004, %v3000
    %v3921 = vpack.c.b16 %v3005, %v3001
    %v3922 = vpack.c.b16 %v3006, %v3002
    %v3923 = vpack.c.b16 %v3007, %v3003
    %v3924 = vpack.c.b16 %v3012, %v3008
    %v3925 = vpack.c.b16 %v3013, %v3009
    %v3926 = vpack.c.b16 %v3014, %v3010
    %v3927 = vpack.c.b16 %v3015, %v3011
    %v3928 = vpack.c.b16 %v3020, %v3016
    %v3929 = vpack.c.b16 %v3021, %v3017
    %v3930 = vpack.c.b16 %v3022, %v3018
    %v3931 = vpack.c.b16 %v3023, %v3019
    %v3932 = vpack.c.b16 %v3028, %v3024
    %v3933 = vpack.c.b16 %v3029, %v3025
    %v3934 = vpack.c.b16 %v3030, %v3026
    %v3935 = vpack.c.b16 %v3031, %v3027
    %v3936 = vpack.c.b16 %v3036, %v3032
    %v3937 = vpack.c.b16 %v3037, %v3033
    %v3938 = vpack.c.b16 %v3038, %v3034
    %v3939 = vpack.c.b16 %v3039, %v3035
    %v3940 = vpack.c.b16 %v3044, %v3040
    %v3941 = vpack.c.b16 %v3045, %v3041
    %v3942 = vpack.c.b16 %v3046, %v3042
    %v3943 = vpack.c.b16 %v3047, %v3043
    %v3944 = vpack.c.b16 %v3052, %v3048
    %v3945 = vpack.c.b16 %v3053, %v3049
    %v3946 = vpack.c.b16 %v3054, %v3050
    %v3947 = vpack.c.b16 %v3055, %v3051
    %v3948 = vpack.c.b16 %v3060, %v3056
    %v3949 = vpack.c.b16 %v3061, %v3057
    %v3950 = vpack.c.b16 %v3062, %v3058
    %v3951 = vpack.c.b16 %v3063, %v3059
    %v3952 = vpack.c.b16 %v3068, %v3064
    %v3953 = vpack.c.b16 %v3069, %v3065
    %v3954 = vpack.c.b16 %v3070, %v3066
    %v3955 = vpack.c.b16 %v3071, %v3067
    %v3956 = vpack.c.b16 %v3076, %v3072
    %v3957 = vpack.c.b16 %v3077, %v3073
    %v3958 = vpack.c.b16 %v3078, %v3074
    %v3959 = vpack.c.b16 %v3079, %v3075
    %v3960 = vpack.c.b16 %v3084, %v3080
    %v3961 = vpack.c.b16 %v3085, %v3081
    %v3962 = vpack.c.b16 %v3086, %v3082
    %v3963 = vpack.c.b16 %v3087, %v3083
    %v3964 = vpack.c.b16 %v3092, %v3088
    %v3965 = vpack.c.b16 %v3093, %v3089
    %v3966 = vpack.c.b16 %v3094, %v3090
    %v3967 = vpack.c.b16 %v3095, %v3091
    %v3968 = vpack.c.b16 %v3100, %v3096
    %v3969 = vpack.c.b16 %v3101, %v3097
    %v3970 = vpack.c.b16 %v3102, %v3098
    %v3971 = vpack.c.b16 %v3103, %v3099
    %v3972 = vpack.c.b16 %v3108, %v3104
    %v3973 = vpack.c.b16 %v3109, %v3105
    %v3974 = vpack.c.b16 %v3110, %v3106
    %v3975 = vpack.c.b16 %v3111, %v3107
    %v3976 = vpack.c.b16 %v3116, %v3112
    %v3977 = vpack.c.b16 %v3117, %v3113
    %v3978 = vpack.c.b16 %v3118, %v3114
    %v3979 = vpack.c.b16 %v3119, %v3115
    %v3980 = vpack.c.b16 %v3124, %v3120
    %v3981 = vpack.c.b16 %v3125, %v3121
    %v3982 = vpack.c.b16 %v3126, %v3122
    %v3983 = vpack.c.b16 %v3127, %v3123
    %v3984 = vpack.c.b16 %v3132, %v3128
    %v3985 = vpack.c.b16 %v3133, %v3129
    %v3986 = vpack.c.b16 %v3134, %v3130
    %v3987 = vpack.c.b16 %v3135, %v3131
    %v3988 = vpack.c.b16 %v3140, %v3136
    %v3989 = vpack.c.b16 %v3141, %v3137
    %v3990 = vpack.c.b16 %v3142, %v3138
    %v3991 = vpack.c.b16 %v3143, %v3139
    %v3992 = vpack.c.b16 %v3148, %v3144
    %v3993 = vpack.c.b16 %v3149, %v3145
    %v3994 = vpack.c.b16 %v3150, %v3146
    %v3995 = vpack.c.b16 %v3151, %v3147
    %v3996 = vpack.c.b16 %v3156, %v3152
    %v3997 = vpack.c.b16 %v3157, %v3153
    %v3998 = vpack.c.b16 %v3158, %v3154
    %v3999 = vpack.c.b16 %v3159, %v3155
    %v4000 = vpack.c.b16 %v3164, %v3160
    %v4001 = vpack.c.b16 %v3165, %v3161
    %v4002 = vpack.c.b16 %v3166, %v3162
    %v4003 = vpack.c.b16 %v3167, %v3163
    %v4004 = vpack.c.b16 %v3172, %v3168
    %v4005 = vpack.c.b16 %v3173, %v3169
    %v4006 = vpack.c.b16 %v3174, %v3170
    %v4007 = vpack.c.b16 %v3175, %v3171
    %v4008 = vpack.c.b16 %v3180, %v3176
    %v4009 = vpack.c.b16 %v3181, %v3177
    %v4010 = vpack.c.b16 %v3182, %v3178
    %v4011 = vpack.c.b16 %v3183, %v3179
    %v4012 = vpack.c.b16 %v3188, %v3184
    %v4013 = vpack.c.b16 %v3189, %v3185
    %v4014 = vpack.c.b16 %v3190, %v3186
    %v4015 = vpack.c.b16 %v3191, %v3187
    %v4016 = vpack.c.b16 %v3196, %v3192
    %v4017 = vpack.c.b16 %v3197, %v3193
    %v4018 = vpack.c.b16 %v3198, %v3194
    %v4019 = vpack.c.b16 %v3199, %v3195
    %v4020 = vpack.c.b16 %v3204, %v3200
    %v4021 = vpack.c.b16 %v3205, %v3201
    %v4022 = vpack.c.b16 %v3206, %v3202
    %v4023 = vpack.c.b16 %v3207, %v3203
    %v4024 = vpack.c.b16 %v3212, %v3208
    %v4025 = vpack.c.b16 %v3213, %v3209
    %v4026 = vpack.c.b16 %v3214, %v3210
    %v4027 = vpack.c.b16 %v3215, %v3211
    %v4028 = vpack.c.b16 %v3220, %v3216
    %v4029 = vpack.c.b16 %v3221, %v3217
    %v4030 = vpack.c.b16 %v3222, %v3218
    %v4031 = vpack.c.b16 %v3223, %v3219
    %v4032 = vpack.c.b16 %v3228, %v3224
    %v4033 = vpack.c.b16 %v3229, %v3225
    %v4034 = vpack.c.b16 %v3230, %v3226
    %v4035 = vpack.c.b16 %v3231, %v3227
    %v4036 = vpack.c.b16 %v3236, %v3232
    %v4037 = vpack.c.b16 %v3237, %v3233
    %v4038 = vpack.c.b16 %v3238, %v3234
    %v4039 = vpack.c.b16 %v3239, %v3235
    %v4040 = vpack.c.b16 %v3244, %v3240
    %v4041 = vpack.c.b16 %v3245, %v3241
    %v4042 = vpack.c.b16 %v3246, %v3242
    %v4043 = vpack.c.b16 %v3247, %v3243
    %v4044 = vpack.c.b16 %v3252, %v3248
    %v4045 = vpack.c.b16 %v3253, %v3249
    %v4046 = vpack.c.b16 %v3254, %v3250
    %v4047 = vpack.c.b16 %v3255, %v3251
    %v4048 = vpack.c.b16 %v3260, %v3256
    %v4049 = vpack.c.b16 %v3261, %v3257
    %v4050 = vpack.c.b16 %v3262, %v3258
    %v4051 = vpack.c.b16 %v3263, %v3259
    %v4052 = vpack.c.b16 %v3268, %v3264
    %v4053 = vpack.c.b16 %v3269, %v3265
    %v4054 = vpack.c.b16 %v3270, %v3266
    %v4055 = vpack.c.b16 %v3271, %v3267
    %v4056 = vpack.c.b16 %v3276, %v3272
    %v4057 = vpack.c.b16 %v3277, %v3273
    %v4058 = vpack.c.b16 %v3278, %v3274
    %v4059 = vpack.c.b16 %v3279, %v3275
    %v4060 = vpack.c.b16 %v3284, %v3280
    %v4061 = vpack.c.b16 %v3285, %v3281
    %v4062 = vpack.c.b16 %v3286, %v3282
    %v4063 = vpack.c.b16 %v3287, %v3283
    %v4064 = vpack.c.b16 %v3292, %v3288
    %v4065 = vpack.c.b16 %v3293, %v3289
    %v4066 = vpack.c.b16 %v3294, %v3290
    %v4067 = vpack.c.b16 %v3295, %v3291
    %v4068 = vpack.c.b16 %v3300, %v3296
    %v4069 = vpack.c.b16 %v3301, %v3297
    %v4070 = vpack.c.b16 %v3302, %v3298
    %v4071 = vpack.c.b16 %v3303, %v3299
    %4840 = vmatpush.bf16.msra.mxu0 %v3332
    %4841 = vmatpush.bf16.msra.mxu0 %v3328
    %4842 = vmatpush.bf16.msra.mxu0 %v3324
    %4843 = vmatpush.bf16.msra.mxu0 %v3320
    %4844 = vmatpush.bf16.msra.mxu0 %v3316
    %4845 = vmatpush.bf16.msra.mxu0 %v3312
    %4846 = vmatpush.bf16.msra.mxu0 %v3308
    %4847 = vmatpush.bf16.msra.mxu0 %v3304
    %4848 = vmatmul.bf16.gmra.mxu0 %v198
    %v4849 = vpop.f32.mrf.mxu0
    %v4850 = vadd.f32 %v992, %v4849
    %v4851 = vpop.f32.mrf.mxu0
    %4852 = vdwg.mxu0
    %4853 = vmatpush.bf16.msra.mxu0 %v3364
    %4854 = vmatpush.bf16.msra.mxu0 %v3360
    %4855 = vmatpush.bf16.msra.mxu0 %v3356
    %4856 = vmatpush.bf16.msra.mxu0 %v3352
    %4857 = vmatpush.bf16.msra.mxu0 %v3348
    %4858 = vmatpush.bf16.msra.mxu0 %v3344
    %4859 = vmatpush.bf16.msra.mxu0 %v3340
    %4860 = vmatpush.bf16.msra.mxu0 %v3336
    %4861 = vmatmul.bf16.gmra.mxu0 %v199
    %v4862 = vpop.f32.mrf.mxu0
    %v4863 = vadd.f32 %v4850, %v4862
    %v4864 = vpop.f32.mrf.mxu0
    %4865 = vdwg.mxu0
    %4866 = vmatpush.bf16.msra.mxu0 %v3396
    %4867 = vmatpush.bf16.msra.mxu0 %v3392
    %4868 = vmatpush.bf16.msra.mxu0 %v3388
    %4869 = vmatpush.bf16.msra.mxu0 %v3384
    %4870 = vmatpush.bf16.msra.mxu0 %v3380
    %4871 = vmatpush.bf16.msra.mxu0 %v3376
    %4872 = vmatpush.bf16.msra.mxu0 %v3372
    %4873 = vmatpush.bf16.msra.mxu0 %v3368
    %4874 = vmatmul.bf16.gmra.mxu0 %v200
    %v4875 = vpop.f32.mrf.mxu0
    %v4876 = vadd.f32 %v4863, %v4875
    %v4877 = vpop.f32.mrf.mxu0
    %4878 = vdwg.mxu0
    %4879 = vmatpush.bf16.msra.mxu0 %v3428
    %4880 = vmatpush.bf16.msra.mxu0 %v3424
    %4881 = vmatpush.bf16.msra.mxu0 %v3420
    %4882 = vmatpush.bf16.msra.mxu0 %v3416
    %4883 = vmatpush.bf16.msra.mxu0 %v3412
    %4884 = vmatpush.bf16.msra.mxu0 %v3408
    %4885 = vmatpush.bf16.msra.mxu0 %v3404
    %4886 = vmatpush.bf16.msra.mxu0 %v3400
    %4887 = vmatmul.bf16.gmra.mxu0 %v201
    %v4888 = vpop.f32.mrf.mxu0
    %v4889 = vadd.f32 %v4876, %v4888
    %v4890 = vpop.f32.mrf.mxu0
    %4891 = vdwg.mxu0
    %4892 = vmatpush.bf16.msra.mxu0 %v3460
    %4893 = vmatpush.bf16.msra.mxu0 %v3456
    %4894 = vmatpush.bf16.msra.mxu0 %v3452
    %4895 = vmatpush.bf16.msra.mxu0 %v3448
    %4896 = vmatpush.bf16.msra.mxu0 %v3444
    %4897 = vmatpush.bf16.msra.mxu0 %v3440
    %4898 = vmatpush.bf16.msra.mxu0 %v3436
    %4899 = vmatpush.bf16.msra.mxu0 %v3432
    %4900 = vmatmul.bf16.gmra.mxu0 %v202
    %v4901 = vpop.f32.mrf.mxu0
    %v4902 = vadd.f32 %v4889, %v4901
    %v4903 = vpop.f32.mrf.mxu0
    %4904 = vdwg.mxu0
    %4905 = vmatpush.bf16.msra.mxu0 %v3492
    %4906 = vmatpush.bf16.msra.mxu0 %v3488
    %4907 = vmatpush.bf16.msra.mxu0 %v3484
    %4908 = vmatpush.bf16.msra.mxu0 %v3480
    %4909 = vmatpush.bf16.msra.mxu0 %v3476
    %4910 = vmatpush.bf16.msra.mxu0 %v3472
    %4911 = vmatpush.bf16.msra.mxu0 %v3468
    %4912 = vmatpush.bf16.msra.mxu0 %v3464
    %4913 = vmatmul.bf16.gmra.mxu0 %v203
    %v4914 = vpop.f32.mrf.mxu0
    %v4915 = vadd.f32 %v4902, %v4914
    %v4916 = vpop.f32.mrf.mxu0
    %4917 = vdwg.mxu0
    %4918 = vmatpush.bf16.msra.mxu0 %v3524
    %4919 = vmatpush.bf16.msra.mxu0 %v3520
    %4920 = vmatpush.bf16.msra.mxu0 %v3516
    %4921 = vmatpush.bf16.msra.mxu0 %v3512
    %4922 = vmatpush.bf16.msra.mxu0 %v3508
    %4923 = vmatpush.bf16.msra.mxu0 %v3504
    %4924 = vmatpush.bf16.msra.mxu0 %v3500
    %4925 = vmatpush.bf16.msra.mxu0 %v3496
    %4926 = vmatmul.bf16.gmra.mxu0 %v204
    %v4927 = vpop.f32.mrf.mxu0
    %v4928 = vadd.f32 %v4915, %v4927
    %v4929 = vpop.f32.mrf.mxu0
    %4930 = vdwg.mxu0
    %4931 = vmatpush.bf16.msra.mxu0 %v3556
    %4932 = vmatpush.bf16.msra.mxu0 %v3552
    %4933 = vmatpush.bf16.msra.mxu0 %v3548
    %4934 = vmatpush.bf16.msra.mxu0 %v3544
    %4935 = vmatpush.bf16.msra.mxu0 %v3540
    %4936 = vmatpush.bf16.msra.mxu0 %v3536
    %4937 = vmatpush.bf16.msra.mxu0 %v3532
    %4938 = vmatpush.bf16.msra.mxu0 %v3528
    %4939 = vmatmul.bf16.gmra.mxu0 %v205
    %v4940 = vpop.f32.mrf.mxu0
    %v4941 = vadd.f32 %v4928, %v4940
    %v4942 = vpop.f32.mrf.mxu0
    %4943 = vdwg.mxu0
    %4944 = vmatpush.bf16.msra.mxu0 %v3588
    %4945 = vmatpush.bf16.msra.mxu0 %v3584
    %4946 = vmatpush.bf16.msra.mxu0 %v3580
    %4947 = vmatpush.bf16.msra.mxu0 %v3576
    %4948 = vmatpush.bf16.msra.mxu0 %v3572
    %4949 = vmatpush.bf16.msra.mxu0 %v3568
    %4950 = vmatpush.bf16.msra.mxu0 %v3564
    %4951 = vmatpush.bf16.msra.mxu0 %v3560
    %4952 = vmatmul.bf16.gmra.mxu0 %v206
    %v4953 = vpop.f32.mrf.mxu0
    %v4954 = vadd.f32 %v4941, %v4953
    %v4955 = vpop.f32.mrf.mxu0
    %4956 = vdwg.mxu0
    %4957 = vmatpush.bf16.msra.mxu0 %v3620
    %4958 = vmatpush.bf16.msra.mxu0 %v3616
    %4959 = vmatpush.bf16.msra.mxu0 %v3612
    %4960 = vmatpush.bf16.msra.mxu0 %v3608
    %4961 = vmatpush.bf16.msra.mxu0 %v3604
    %4962 = vmatpush.bf16.msra.mxu0 %v3600
    %4963 = vmatpush.bf16.msra.mxu0 %v3596
    %4964 = vmatpush.bf16.msra.mxu0 %v3592
    %4965 = vmatmul.bf16.gmra.mxu0 %v207
    %v4966 = vpop.f32.mrf.mxu0
    %v4967 = vadd.f32 %v4954, %v4966
    %v4968 = vpop.f32.mrf.mxu0
    %4969 = vdwg.mxu0
    %4970 = vmatpush.bf16.msra.mxu0 %v3652
    %4971 = vmatpush.bf16.msra.mxu0 %v3648
    %4972 = vmatpush.bf16.msra.mxu0 %v3644
    %4973 = vmatpush.bf16.msra.mxu0 %v3640
    %4974 = vmatpush.bf16.msra.mxu0 %v3636
    %4975 = vmatpush.bf16.msra.mxu0 %v3632
    %4976 = vmatpush.bf16.msra.mxu0 %v3628
    %4977 = vmatpush.bf16.msra.mxu0 %v3624
    %4978 = vmatmul.bf16.gmra.mxu0 %v208
    %v4979 = vpop.f32.mrf.mxu0
    %v4980 = vadd.f32 %v4967, %v4979
    %v4981 = vpop.f32.mrf.mxu0
    %4982 = vdwg.mxu0
    %4983 = vmatpush.bf16.msra.mxu0 %v3684
    %4984 = vmatpush.bf16.msra.mxu0 %v3680
    %4985 = vmatpush.bf16.msra.mxu0 %v3676
    %4986 = vmatpush.bf16.msra.mxu0 %v3672
    %4987 = vmatpush.bf16.msra.mxu0 %v3668
    %4988 = vmatpush.bf16.msra.mxu0 %v3664
    %4989 = vmatpush.bf16.msra.mxu0 %v3660
    %4990 = vmatpush.bf16.msra.mxu0 %v3656
    %4991 = vmatmul.bf16.gmra.mxu0 %v209
    %v4992 = vpop.f32.mrf.mxu0
    %v4993 = vadd.f32 %v4980, %v4992
    %v4994 = vpop.f32.mrf.mxu0
    %4995 = vdwg.mxu0
    %4996 = vmatpush.bf16.msra.mxu0 %v3716
    %4997 = vmatpush.bf16.msra.mxu0 %v3712
    %4998 = vmatpush.bf16.msra.mxu0 %v3708
    %4999 = vmatpush.bf16.msra.mxu0 %v3704
    %5000 = vmatpush.bf16.msra.mxu0 %v3700
    %5001 = vmatpush.bf16.msra.mxu0 %v3696
    %5002 = vmatpush.bf16.msra.mxu0 %v3692
    %5003 = vmatpush.bf16.msra.mxu0 %v3688
    %5004 = vmatmul.bf16.gmra.mxu0 %v210
    %v5005 = vpop.f32.mrf.mxu0
    %v5006 = vadd.f32 %v4993, %v5005
    %v5007 = vpop.f32.mrf.mxu0
    %5008 = vdwg.mxu0
    %5009 = vmatpush.bf16.msra.mxu0 %v3748
    %5010 = vmatpush.bf16.msra.mxu0 %v3744
    %5011 = vmatpush.bf16.msra.mxu0 %v3740
    %5012 = vmatpush.bf16.msra.mxu0 %v3736
    %5013 = vmatpush.bf16.msra.mxu0 %v3732
    %5014 = vmatpush.bf16.msra.mxu0 %v3728
    %5015 = vmatpush.bf16.msra.mxu0 %v3724
    %5016 = vmatpush.bf16.msra.mxu0 %v3720
    %5017 = vmatmul.bf16.gmra.mxu0 %v211
    %v5018 = vpop.f32.mrf.mxu0
    %v5019 = vadd.f32 %v5006, %v5018
    %v5020 = vpop.f32.mrf.mxu0
    %5021 = vdwg.mxu0
    %5022 = vmatpush.bf16.msra.mxu0 %v3780
    %5023 = vmatpush.bf16.msra.mxu0 %v3776
    %5024 = vmatpush.bf16.msra.mxu0 %v3772
    %5025 = vmatpush.bf16.msra.mxu0 %v3768
    %5026 = vmatpush.bf16.msra.mxu0 %v3764
    %5027 = vmatpush.bf16.msra.mxu0 %v3760
    %5028 = vmatpush.bf16.msra.mxu0 %v3756
    %5029 = vmatpush.bf16.msra.mxu0 %v3752
    %5030 = vmatmul.bf16.gmra.mxu0 %v212
    %v5031 = vpop.f32.mrf.mxu0
    %v5032 = vadd.f32 %v5019, %v5031
    %v5033 = vpop.f32.mrf.mxu0
    %5034 = vdwg.mxu0
    %5035 = vmatpush.bf16.msra.mxu0 %v3812
    %5036 = vmatpush.bf16.msra.mxu0 %v3808
    %5037 = vmatpush.bf16.msra.mxu0 %v3804
    %5038 = vmatpush.bf16.msra.mxu0 %v3800
    %5039 = vmatpush.bf16.msra.mxu0 %v3796
    %5040 = vmatpush.bf16.msra.mxu0 %v3792
    %5041 = vmatpush.bf16.msra.mxu0 %v3788
    %5042 = vmatpush.bf16.msra.mxu0 %v3784
    %5043 = vmatmul.bf16.gmra.mxu0 %v213
    %v5044 = vpop.f32.mrf.mxu0
    %v5045 = vadd.f32 %v5032, %v5044
    %v5046 = vpop.f32.mrf.mxu0
    %5047 = vdwg.mxu0
    %5048 = vmatpush.bf16.msra.mxu0 %v3844
    %5049 = vmatpush.bf16.msra.mxu0 %v3840
    %5050 = vmatpush.bf16.msra.mxu0 %v3836
    %5051 = vmatpush.bf16.msra.mxu0 %v3832
    %5052 = vmatpush.bf16.msra.mxu0 %v3828
    %5053 = vmatpush.bf16.msra.mxu0 %v3824
    %5054 = vmatpush.bf16.msra.mxu0 %v3820
    %5055 = vmatpush.bf16.msra.mxu0 %v3816
    %5056 = vmatmul.bf16.gmra.mxu0 %v214
    %v5057 = vpop.f32.mrf.mxu0
    %v5058 = vadd.f32 %v5045, %v5057
    %v5059 = vpop.f32.mrf.mxu0
    %5060 = vdwg.mxu0
    %5061 = vmatpush.bf16.msra.mxu0 %v3876
    %5062 = vmatpush.bf16.msra.mxu0 %v3872
    %5063 = vmatpush.bf16.msra.mxu0 %v3868
    %5064 = vmatpush.bf16.msra.mxu0 %v3864
    %5065 = vmatpush.bf16.msra.mxu0 %v3860
    %5066 = vmatpush.bf16.msra.mxu0 %v3856
    %5067 = vmatpush.bf16.msra.mxu0 %v3852
    %5068 = vmatpush.bf16.msra.mxu0 %v3848
    %5069 = vmatmul.bf16.gmra.mxu0 %v215
    %v5070 = vpop.f32.mrf.mxu0
    %v5071 = vadd.f32 %v5058, %v5070
    %v5072 = vpop.f32.mrf.mxu0
    %5073 = vdwg.mxu0
    %5074 = vmatpush.bf16.msra.mxu0 %v3908
    %5075 = vmatpush.bf16.msra.mxu0 %v3904
    %5076 = vmatpush.bf16.msra.mxu0 %v3900
    %5077 = vmatpush.bf16.msra.mxu0 %v3896
    %5078 = vmatpush.bf16.msra.mxu0 %v3892
    %5079 = vmatpush.bf16.msra.mxu0 %v3888
    %5080 = vmatpush.bf16.msra.mxu0 %v3884
    %5081 = vmatpush.bf16.msra.mxu0 %v3880
    %5082 = vmatmul.bf16.gmra.mxu0 %v216
    %v5083 = vpop.f32.mrf.mxu0
    %v5084 = vadd.f32 %v5071, %v5083
    %v5085 = vpop.f32.mrf.mxu0
    %5086 = vdwg.mxu0
    %5087 = vmatpush.bf16.msra.mxu0 %v3940
    %5088 = vmatpush.bf16.msra.mxu0 %v3936
    %5089 = vmatpush.bf16.msra.mxu0 %v3932
    %5090 = vmatpush.bf16.msra.mxu0 %v3928
    %5091 = vmatpush.bf16.msra.mxu0 %v3924
    %5092 = vmatpush.bf16.msra.mxu0 %v3920
    %5093 = vmatpush.bf16.msra.mxu0 %v3916
    %5094 = vmatpush.bf16.msra.mxu0 %v3912
    %5095 = vmatmul.bf16.gmra.mxu0 %v217
    %v5096 = vpop.f32.mrf.mxu0
    %v5097 = vadd.f32 %v5084, %v5096
    %v5098 = vpop.f32.mrf.mxu0
    %5099 = vdwg.mxu0
    %5100 = vmatpush.bf16.msra.mxu0 %v3972
    %5101 = vmatpush.bf16.msra.mxu0 %v3968
    %5102 = vmatpush.bf16.msra.mxu0 %v3964
    %5103 = vmatpush.bf16.msra.mxu0 %v3960
    %5104 = vmatpush.bf16.msra.mxu0 %v3956
    %5105 = vmatpush.bf16.msra.mxu0 %v3952
    %5106 = vmatpush.bf16.msra.mxu0 %v3948
    %5107 = vmatpush.bf16.msra.mxu0 %v3944
    %5108 = vmatmul.bf16.gmra.mxu0 %v218
    %v5109 = vpop.f32.mrf.mxu0
    %v5110 = vadd.f32 %v5097, %v5109
    %v5111 = vpop.f32.mrf.mxu0
    %5112 = vdwg.mxu0
    %5113 = vmatpush.bf16.msra.mxu0 %v4004
    %5114 = vmatpush.bf16.msra.mxu0 %v4000
    %5115 = vmatpush.bf16.msra.mxu0 %v3996
    %5116 = vmatpush.bf16.msra.mxu0 %v3992
    %5117 = vmatpush.bf16.msra.mxu0 %v3988
    %5118 = vmatpush.bf16.msra.mxu0 %v3984
    %5119 = vmatpush.bf16.msra.mxu0 %v3980
    %5120 = vmatpush.bf16.msra.mxu0 %v3976
    %5121 = vmatmul.bf16.gmra.mxu0 %v219
    %v5122 = vpop.f32.mrf.mxu0
    %v5123 = vadd.f32 %v5110, %v5122
    %v5124 = vpop.f32.mrf.mxu0
    %5125 = vdwg.mxu0
    %5126 = vmatpush.bf16.msra.mxu0 %v4036
    %5127 = vmatpush.bf16.msra.mxu0 %v4032
    %5128 = vmatpush.bf16.msra.mxu0 %v4028
    %5129 = vmatpush.bf16.msra.mxu0 %v4024
    %5130 = vmatpush.bf16.msra.mxu0 %v4020
    %5131 = vmatpush.bf16.msra.mxu0 %v4016
    %5132 = vmatpush.bf16.msra.mxu0 %v4012
    %5133 = vmatpush.bf16.msra.mxu0 %v4008
    %5134 = vmatmul.bf16.gmra.mxu0 %v220
    %v5135 = vpop.f32.mrf.mxu0
    %v5136 = vadd.f32 %v5123, %v5135
    %v5137 = vpop.f32.mrf.mxu0
    %5138 = vdwg.mxu0
    %5139 = vmatpush.bf16.msra.mxu0 %v4068
    %5140 = vmatpush.bf16.msra.mxu0 %v4064
    %5141 = vmatpush.bf16.msra.mxu0 %v4060
    %5142 = vmatpush.bf16.msra.mxu0 %v4056
    %5143 = vmatpush.bf16.msra.mxu0 %v4052
    %5144 = vmatpush.bf16.msra.mxu0 %v4048
    %5145 = vmatpush.bf16.msra.mxu0 %v4044
    %5146 = vmatpush.bf16.msra.mxu0 %v4040
    %5147 = vmatmul.bf16.gmra.mxu0 %v221
    %v5148 = vpop.f32.mrf.mxu0
    %v5149 = vadd.f32 %v5136, %v5148
    %v5150 = vpop.f32.mrf.mxu0
    %5151 = vdwg.mxu0
    %5152 = vmatpush.bf16.msra.mxu0 %v3333
    %5153 = vmatpush.bf16.msra.mxu0 %v3329
    %5154 = vmatpush.bf16.msra.mxu0 %v3325
    %5155 = vmatpush.bf16.msra.mxu0 %v3321
    %5156 = vmatpush.bf16.msra.mxu0 %v3317
    %5157 = vmatpush.bf16.msra.mxu0 %v3313
    %5158 = vmatpush.bf16.msra.mxu0 %v3309
    %5159 = vmatpush.bf16.msra.mxu0 %v3305
    %5160 = vmatmul.bf16.gmra.mxu0 %v198
    %v5161 = vpop.f32.mrf.mxu0
    %v5162 = vadd.f32 %v993, %v5161
    %v5163 = vpop.f32.mrf.mxu0
    %5164 = vdwg.mxu0
    %5165 = vmatpush.bf16.msra.mxu0 %v3365
    %5166 = vmatpush.bf16.msra.mxu0 %v3361
    %5167 = vmatpush.bf16.msra.mxu0 %v3357
    %5168 = vmatpush.bf16.msra.mxu0 %v3353
    %5169 = vmatpush.bf16.msra.mxu0 %v3349
    %5170 = vmatpush.bf16.msra.mxu0 %v3345
    %5171 = vmatpush.bf16.msra.mxu0 %v3341
    %5172 = vmatpush.bf16.msra.mxu0 %v3337
    %5173 = vmatmul.bf16.gmra.mxu0 %v199
    %v5174 = vpop.f32.mrf.mxu0
    %v5175 = vadd.f32 %v5162, %v5174
    %v5176 = vpop.f32.mrf.mxu0
    %5177 = vdwg.mxu0
    %5178 = vmatpush.bf16.msra.mxu0 %v3397
    %5179 = vmatpush.bf16.msra.mxu0 %v3393
    %5180 = vmatpush.bf16.msra.mxu0 %v3389
    %5181 = vmatpush.bf16.msra.mxu0 %v3385
    %5182 = vmatpush.bf16.msra.mxu0 %v3381
    %5183 = vmatpush.bf16.msra.mxu0 %v3377
    %5184 = vmatpush.bf16.msra.mxu0 %v3373
    %5185 = vmatpush.bf16.msra.mxu0 %v3369
    %5186 = vmatmul.bf16.gmra.mxu0 %v200
    %v5187 = vpop.f32.mrf.mxu0
    %v5188 = vadd.f32 %v5175, %v5187
    %v5189 = vpop.f32.mrf.mxu0
    %5190 = vdwg.mxu0
    %5191 = vmatpush.bf16.msra.mxu0 %v3429
    %5192 = vmatpush.bf16.msra.mxu0 %v3425
    %5193 = vmatpush.bf16.msra.mxu0 %v3421
    %5194 = vmatpush.bf16.msra.mxu0 %v3417
    %5195 = vmatpush.bf16.msra.mxu0 %v3413
    %5196 = vmatpush.bf16.msra.mxu0 %v3409
    %5197 = vmatpush.bf16.msra.mxu0 %v3405
    %5198 = vmatpush.bf16.msra.mxu0 %v3401
    %5199 = vmatmul.bf16.gmra.mxu0 %v201
    %v5200 = vpop.f32.mrf.mxu0
    %v5201 = vadd.f32 %v5188, %v5200
    %v5202 = vpop.f32.mrf.mxu0
    %5203 = vdwg.mxu0
    %5204 = vmatpush.bf16.msra.mxu0 %v3461
    %5205 = vmatpush.bf16.msra.mxu0 %v3457
    %5206 = vmatpush.bf16.msra.mxu0 %v3453
    %5207 = vmatpush.bf16.msra.mxu0 %v3449
    %5208 = vmatpush.bf16.msra.mxu0 %v3445
    %5209 = vmatpush.bf16.msra.mxu0 %v3441
    %5210 = vmatpush.bf16.msra.mxu0 %v3437
    %5211 = vmatpush.bf16.msra.mxu0 %v3433
    %5212 = vmatmul.bf16.gmra.mxu0 %v202
    %v5213 = vpop.f32.mrf.mxu0
    %v5214 = vadd.f32 %v5201, %v5213
    %v5215 = vpop.f32.mrf.mxu0
    %5216 = vdwg.mxu0
    %5217 = vmatpush.bf16.msra.mxu0 %v3493
    %5218 = vmatpush.bf16.msra.mxu0 %v3489
    %5219 = vmatpush.bf16.msra.mxu0 %v3485
    %5220 = vmatpush.bf16.msra.mxu0 %v3481
    %5221 = vmatpush.bf16.msra.mxu0 %v3477
    %5222 = vmatpush.bf16.msra.mxu0 %v3473
    %5223 = vmatpush.bf16.msra.mxu0 %v3469
    %5224 = vmatpush.bf16.msra.mxu0 %v3465
    %5225 = vmatmul.bf16.gmra.mxu0 %v203
    %v5226 = vpop.f32.mrf.mxu0
    %v5227 = vadd.f32 %v5214, %v5226
    %v5228 = vpop.f32.mrf.mxu0
    %5229 = vdwg.mxu0
    %5230 = vmatpush.bf16.msra.mxu0 %v3525
    %5231 = vmatpush.bf16.msra.mxu0 %v3521
    %5232 = vmatpush.bf16.msra.mxu0 %v3517
    %5233 = vmatpush.bf16.msra.mxu0 %v3513
    %5234 = vmatpush.bf16.msra.mxu0 %v3509
    %5235 = vmatpush.bf16.msra.mxu0 %v3505
    %5236 = vmatpush.bf16.msra.mxu0 %v3501
    %5237 = vmatpush.bf16.msra.mxu0 %v3497
    %5238 = vmatmul.bf16.gmra.mxu0 %v204
    %v5239 = vpop.f32.mrf.mxu0
    %v5240 = vadd.f32 %v5227, %v5239
    %v5241 = vpop.f32.mrf.mxu0
    %5242 = vdwg.mxu0
    %5243 = vmatpush.bf16.msra.mxu0 %v3557
    %5244 = vmatpush.bf16.msra.mxu0 %v3553
    %5245 = vmatpush.bf16.msra.mxu0 %v3549
    %5246 = vmatpush.bf16.msra.mxu0 %v3545
    %5247 = vmatpush.bf16.msra.mxu0 %v3541
    %5248 = vmatpush.bf16.msra.mxu0 %v3537
    %5249 = vmatpush.bf16.msra.mxu0 %v3533
    %5250 = vmatpush.bf16.msra.mxu0 %v3529
    %5251 = vmatmul.bf16.gmra.mxu0 %v205
    %v5252 = vpop.f32.mrf.mxu0
    %v5253 = vadd.f32 %v5240, %v5252
    %v5254 = vpop.f32.mrf.mxu0
    %5255 = vdwg.mxu0
    %5256 = vmatpush.bf16.msra.mxu0 %v3589
    %5257 = vmatpush.bf16.msra.mxu0 %v3585
    %5258 = vmatpush.bf16.msra.mxu0 %v3581
    %5259 = vmatpush.bf16.msra.mxu0 %v3577
    %5260 = vmatpush.bf16.msra.mxu0 %v3573
    %5261 = vmatpush.bf16.msra.mxu0 %v3569
    %5262 = vmatpush.bf16.msra.mxu0 %v3565
    %5263 = vmatpush.bf16.msra.mxu0 %v3561
    %5264 = vmatmul.bf16.gmra.mxu0 %v206
    %v5265 = vpop.f32.mrf.mxu0
    %v5266 = vadd.f32 %v5253, %v5265
    %v5267 = vpop.f32.mrf.mxu0
    %5268 = vdwg.mxu0
    %5269 = vmatpush.bf16.msra.mxu0 %v3621
    %5270 = vmatpush.bf16.msra.mxu0 %v3617
    %5271 = vmatpush.bf16.msra.mxu0 %v3613
    %5272 = vmatpush.bf16.msra.mxu0 %v3609
    %5273 = vmatpush.bf16.msra.mxu0 %v3605
    %5274 = vmatpush.bf16.msra.mxu0 %v3601
    %5275 = vmatpush.bf16.msra.mxu0 %v3597
    %5276 = vmatpush.bf16.msra.mxu0 %v3593
    %5277 = vmatmul.bf16.gmra.mxu0 %v207
    %v5278 = vpop.f32.mrf.mxu0
    %v5279 = vadd.f32 %v5266, %v5278
    %v5280 = vpop.f32.mrf.mxu0
    %5281 = vdwg.mxu0
    %5282 = vmatpush.bf16.msra.mxu0 %v3653
    %5283 = vmatpush.bf16.msra.mxu0 %v3649
    %5284 = vmatpush.bf16.msra.mxu0 %v3645
    %5285 = vmatpush.bf16.msra.mxu0 %v3641
    %5286 = vmatpush.bf16.msra.mxu0 %v3637
    %5287 = vmatpush.bf16.msra.mxu0 %v3633
    %5288 = vmatpush.bf16.msra.mxu0 %v3629
    %5289 = vmatpush.bf16.msra.mxu0 %v3625
    %5290 = vmatmul.bf16.gmra.mxu0 %v208
    %v5291 = vpop.f32.mrf.mxu0
    %v5292 = vadd.f32 %v5279, %v5291
    %v5293 = vpop.f32.mrf.mxu0
    %5294 = vdwg.mxu0
    %5295 = vmatpush.bf16.msra.mxu0 %v3685
    %5296 = vmatpush.bf16.msra.mxu0 %v3681
    %5297 = vmatpush.bf16.msra.mxu0 %v3677
    %5298 = vmatpush.bf16.msra.mxu0 %v3673
    %5299 = vmatpush.bf16.msra.mxu0 %v3669
    %5300 = vmatpush.bf16.msra.mxu0 %v3665
    %5301 = vmatpush.bf16.msra.mxu0 %v3661
    %5302 = vmatpush.bf16.msra.mxu0 %v3657
    %5303 = vmatmul.bf16.gmra.mxu0 %v209
    %v5304 = vpop.f32.mrf.mxu0
    %v5305 = vadd.f32 %v5292, %v5304
    %v5306 = vpop.f32.mrf.mxu0
    %5307 = vdwg.mxu0
    %5308 = vmatpush.bf16.msra.mxu0 %v3717
    %5309 = vmatpush.bf16.msra.mxu0 %v3713
    %5310 = vmatpush.bf16.msra.mxu0 %v3709
    %5311 = vmatpush.bf16.msra.mxu0 %v3705
    %5312 = vmatpush.bf16.msra.mxu0 %v3701
    %5313 = vmatpush.bf16.msra.mxu0 %v3697
    %5314 = vmatpush.bf16.msra.mxu0 %v3693
    %5315 = vmatpush.bf16.msra.mxu0 %v3689
    %5316 = vmatmul.bf16.gmra.mxu0 %v210
    %v5317 = vpop.f32.mrf.mxu0
    %v5318 = vadd.f32 %v5305, %v5317
    %v5319 = vpop.f32.mrf.mxu0
    %5320 = vdwg.mxu0
    %5321 = vmatpush.bf16.msra.mxu0 %v3749
    %5322 = vmatpush.bf16.msra.mxu0 %v3745
    %5323 = vmatpush.bf16.msra.mxu0 %v3741
    %5324 = vmatpush.bf16.msra.mxu0 %v3737
    %5325 = vmatpush.bf16.msra.mxu0 %v3733
    %5326 = vmatpush.bf16.msra.mxu0 %v3729
    %5327 = vmatpush.bf16.msra.mxu0 %v3725
    %5328 = vmatpush.bf16.msra.mxu0 %v3721
    %5329 = vmatmul.bf16.gmra.mxu0 %v211
    %v5330 = vpop.f32.mrf.mxu0
    %v5331 = vadd.f32 %v5318, %v5330
    %v5332 = vpop.f32.mrf.mxu0
    %5333 = vdwg.mxu0
    %5334 = vmatpush.bf16.msra.mxu0 %v3781
    %5335 = vmatpush.bf16.msra.mxu0 %v3777
    %5336 = vmatpush.bf16.msra.mxu0 %v3773
    %5337 = vmatpush.bf16.msra.mxu0 %v3769
    %5338 = vmatpush.bf16.msra.mxu0 %v3765
    %5339 = vmatpush.bf16.msra.mxu0 %v3761
    %5340 = vmatpush.bf16.msra.mxu0 %v3757
    %5341 = vmatpush.bf16.msra.mxu0 %v3753
    %5342 = vmatmul.bf16.gmra.mxu0 %v212
    %v5343 = vpop.f32.mrf.mxu0
    %v5344 = vadd.f32 %v5331, %v5343
    %v5345 = vpop.f32.mrf.mxu0
    %5346 = vdwg.mxu0
    %5347 = vmatpush.bf16.msra.mxu0 %v3813
    %5348 = vmatpush.bf16.msra.mxu0 %v3809
    %5349 = vmatpush.bf16.msra.mxu0 %v3805
    %5350 = vmatpush.bf16.msra.mxu0 %v3801
    %5351 = vmatpush.bf16.msra.mxu0 %v3797
    %5352 = vmatpush.bf16.msra.mxu0 %v3793
    %5353 = vmatpush.bf16.msra.mxu0 %v3789
    %5354 = vmatpush.bf16.msra.mxu0 %v3785
    %5355 = vmatmul.bf16.gmra.mxu0 %v213
    %v5356 = vpop.f32.mrf.mxu0
    %v5357 = vadd.f32 %v5344, %v5356
    %v5358 = vpop.f32.mrf.mxu0
    %5359 = vdwg.mxu0
    %5360 = vmatpush.bf16.msra.mxu0 %v3845
    %5361 = vmatpush.bf16.msra.mxu0 %v3841
    %5362 = vmatpush.bf16.msra.mxu0 %v3837
    %5363 = vmatpush.bf16.msra.mxu0 %v3833
    %5364 = vmatpush.bf16.msra.mxu0 %v3829
    %5365 = vmatpush.bf16.msra.mxu0 %v3825
    %5366 = vmatpush.bf16.msra.mxu0 %v3821
    %5367 = vmatpush.bf16.msra.mxu0 %v3817
    %5368 = vmatmul.bf16.gmra.mxu0 %v214
    %v5369 = vpop.f32.mrf.mxu0
    %v5370 = vadd.f32 %v5357, %v5369
    %v5371 = vpop.f32.mrf.mxu0
    %5372 = vdwg.mxu0
    %5373 = vmatpush.bf16.msra.mxu0 %v3877
    %5374 = vmatpush.bf16.msra.mxu0 %v3873
    %5375 = vmatpush.bf16.msra.mxu0 %v3869
    %5376 = vmatpush.bf16.msra.mxu0 %v3865
    %5377 = vmatpush.bf16.msra.mxu0 %v3861
    %5378 = vmatpush.bf16.msra.mxu0 %v3857
    %5379 = vmatpush.bf16.msra.mxu0 %v3853
    %5380 = vmatpush.bf16.msra.mxu0 %v3849
    %5381 = vmatmul.bf16.gmra.mxu0 %v215
    %v5382 = vpop.f32.mrf.mxu0
    %v5383 = vadd.f32 %v5370, %v5382
    %v5384 = vpop.f32.mrf.mxu0
    %5385 = vdwg.mxu0
    %5386 = vmatpush.bf16.msra.mxu0 %v3909
    %5387 = vmatpush.bf16.msra.mxu0 %v3905
    %5388 = vmatpush.bf16.msra.mxu0 %v3901
    %5389 = vmatpush.bf16.msra.mxu0 %v3897
    %5390 = vmatpush.bf16.msra.mxu0 %v3893
    %5391 = vmatpush.bf16.msra.mxu0 %v3889
    %5392 = vmatpush.bf16.msra.mxu0 %v3885
    %5393 = vmatpush.bf16.msra.mxu0 %v3881
    %5394 = vmatmul.bf16.gmra.mxu0 %v216
    %v5395 = vpop.f32.mrf.mxu0
    %v5396 = vadd.f32 %v5383, %v5395
    %v5397 = vpop.f32.mrf.mxu0
    %5398 = vdwg.mxu0
    %5399 = vmatpush.bf16.msra.mxu0 %v3941
    %5400 = vmatpush.bf16.msra.mxu0 %v3937
    %5401 = vmatpush.bf16.msra.mxu0 %v3933
    %5402 = vmatpush.bf16.msra.mxu0 %v3929
    %5403 = vmatpush.bf16.msra.mxu0 %v3925
    %5404 = vmatpush.bf16.msra.mxu0 %v3921
    %5405 = vmatpush.bf16.msra.mxu0 %v3917
    %5406 = vmatpush.bf16.msra.mxu0 %v3913
    %5407 = vmatmul.bf16.gmra.mxu0 %v217
    %v5408 = vpop.f32.mrf.mxu0
    %v5409 = vadd.f32 %v5396, %v5408
    %v5410 = vpop.f32.mrf.mxu0
    %5411 = vdwg.mxu0
    %5412 = vmatpush.bf16.msra.mxu0 %v3973
    %5413 = vmatpush.bf16.msra.mxu0 %v3969
    %5414 = vmatpush.bf16.msra.mxu0 %v3965
    %5415 = vmatpush.bf16.msra.mxu0 %v3961
    %5416 = vmatpush.bf16.msra.mxu0 %v3957
    %5417 = vmatpush.bf16.msra.mxu0 %v3953
    %5418 = vmatpush.bf16.msra.mxu0 %v3949
    %5419 = vmatpush.bf16.msra.mxu0 %v3945
    %5420 = vmatmul.bf16.gmra.mxu0 %v218
    %v5421 = vpop.f32.mrf.mxu0
    %v5422 = vadd.f32 %v5409, %v5421
    %v5423 = vpop.f32.mrf.mxu0
    %5424 = vdwg.mxu0
    %5425 = vmatpush.bf16.msra.mxu0 %v4005
    %5426 = vmatpush.bf16.msra.mxu0 %v4001
    %5427 = vmatpush.bf16.msra.mxu0 %v3997
    %5428 = vmatpush.bf16.msra.mxu0 %v3993
    %5429 = vmatpush.bf16.msra.mxu0 %v3989
    %5430 = vmatpush.bf16.msra.mxu0 %v3985
    %5431 = vmatpush.bf16.msra.mxu0 %v3981
    %5432 = vmatpush.bf16.msra.mxu0 %v3977
    %5433 = vmatmul.bf16.gmra.mxu0 %v219
    %v5434 = vpop.f32.mrf.mxu0
    %v5435 = vadd.f32 %v5422, %v5434
    %v5436 = vpop.f32.mrf.mxu0
    %5437 = vdwg.mxu0
    %5438 = vmatpush.bf16.msra.mxu0 %v4037
    %5439 = vmatpush.bf16.msra.mxu0 %v4033
    %5440 = vmatpush.bf16.msra.mxu0 %v4029
    %5441 = vmatpush.bf16.msra.mxu0 %v4025
    %5442 = vmatpush.bf16.msra.mxu0 %v4021
    %5443 = vmatpush.bf16.msra.mxu0 %v4017
    %5444 = vmatpush.bf16.msra.mxu0 %v4013
    %5445 = vmatpush.bf16.msra.mxu0 %v4009
    %5446 = vmatmul.bf16.gmra.mxu0 %v220
    %v5447 = vpop.f32.mrf.mxu0
    %v5448 = vadd.f32 %v5435, %v5447
    %v5449 = vpop.f32.mrf.mxu0
    %5450 = vdwg.mxu0
    %5451 = vmatpush.bf16.msra.mxu0 %v4069
    %5452 = vmatpush.bf16.msra.mxu0 %v4065
    %5453 = vmatpush.bf16.msra.mxu0 %v4061
    %5454 = vmatpush.bf16.msra.mxu0 %v4057
    %5455 = vmatpush.bf16.msra.mxu0 %v4053
    %5456 = vmatpush.bf16.msra.mxu0 %v4049
    %5457 = vmatpush.bf16.msra.mxu0 %v4045
    %5458 = vmatpush.bf16.msra.mxu0 %v4041
    %5459 = vmatmul.bf16.gmra.mxu0 %v221
    %v5460 = vpop.f32.mrf.mxu0
    %v5461 = vadd.f32 %v5448, %v5460
    %v5462 = vpop.f32.mrf.mxu0
    %5463 = vdwg.mxu0
    %5464 = vmatpush.bf16.msra.mxu0 %v3334
    %5465 = vmatpush.bf16.msra.mxu0 %v3330
    %5466 = vmatpush.bf16.msra.mxu0 %v3326
    %5467 = vmatpush.bf16.msra.mxu0 %v3322
    %5468 = vmatpush.bf16.msra.mxu0 %v3318
    %5469 = vmatpush.bf16.msra.mxu0 %v3314
    %5470 = vmatpush.bf16.msra.mxu0 %v3310
    %5471 = vmatpush.bf16.msra.mxu0 %v3306
    %5472 = vmatmul.bf16.gmra.mxu0 %v198
    %v5473 = vpop.f32.mrf.mxu0
    %v5474 = vadd.f32 %v994, %v5473
    %v5475 = vpop.f32.mrf.mxu0
    %5476 = vdwg.mxu0
    %5477 = vmatpush.bf16.msra.mxu0 %v3366
    %5478 = vmatpush.bf16.msra.mxu0 %v3362
    %5479 = vmatpush.bf16.msra.mxu0 %v3358
    %5480 = vmatpush.bf16.msra.mxu0 %v3354
    %5481 = vmatpush.bf16.msra.mxu0 %v3350
    %5482 = vmatpush.bf16.msra.mxu0 %v3346
    %5483 = vmatpush.bf16.msra.mxu0 %v3342
    %5484 = vmatpush.bf16.msra.mxu0 %v3338
    %5485 = vmatmul.bf16.gmra.mxu0 %v199
    %v5486 = vpop.f32.mrf.mxu0
    %v5487 = vadd.f32 %v5474, %v5486
    %v5488 = vpop.f32.mrf.mxu0
    %5489 = vdwg.mxu0
    %5490 = vmatpush.bf16.msra.mxu0 %v3398
    %5491 = vmatpush.bf16.msra.mxu0 %v3394
    %5492 = vmatpush.bf16.msra.mxu0 %v3390
    %5493 = vmatpush.bf16.msra.mxu0 %v3386
    %5494 = vmatpush.bf16.msra.mxu0 %v3382
    %5495 = vmatpush.bf16.msra.mxu0 %v3378
    %5496 = vmatpush.bf16.msra.mxu0 %v3374
    %5497 = vmatpush.bf16.msra.mxu0 %v3370
    %5498 = vmatmul.bf16.gmra.mxu0 %v200
    %v5499 = vpop.f32.mrf.mxu0
    %v5500 = vadd.f32 %v5487, %v5499
    %v5501 = vpop.f32.mrf.mxu0
    %5502 = vdwg.mxu0
    %5503 = vmatpush.bf16.msra.mxu0 %v3430
    %5504 = vmatpush.bf16.msra.mxu0 %v3426
    %5505 = vmatpush.bf16.msra.mxu0 %v3422
    %5506 = vmatpush.bf16.msra.mxu0 %v3418
    %5507 = vmatpush.bf16.msra.mxu0 %v3414
    %5508 = vmatpush.bf16.msra.mxu0 %v3410
    %5509 = vmatpush.bf16.msra.mxu0 %v3406
    %5510 = vmatpush.bf16.msra.mxu0 %v3402
    %5511 = vmatmul.bf16.gmra.mxu0 %v201
    %v5512 = vpop.f32.mrf.mxu0
    %v5513 = vadd.f32 %v5500, %v5512
    %v5514 = vpop.f32.mrf.mxu0
    %5515 = vdwg.mxu0
    %5516 = vmatpush.bf16.msra.mxu0 %v3462
    %5517 = vmatpush.bf16.msra.mxu0 %v3458
    %5518 = vmatpush.bf16.msra.mxu0 %v3454
    %5519 = vmatpush.bf16.msra.mxu0 %v3450
    %5520 = vmatpush.bf16.msra.mxu0 %v3446
    %5521 = vmatpush.bf16.msra.mxu0 %v3442
    %5522 = vmatpush.bf16.msra.mxu0 %v3438
    %5523 = vmatpush.bf16.msra.mxu0 %v3434
    %5524 = vmatmul.bf16.gmra.mxu0 %v202
    %v5525 = vpop.f32.mrf.mxu0
    %v5526 = vadd.f32 %v5513, %v5525
    %v5527 = vpop.f32.mrf.mxu0
    %5528 = vdwg.mxu0
    %5529 = vmatpush.bf16.msra.mxu0 %v3494
    %5530 = vmatpush.bf16.msra.mxu0 %v3490
    %5531 = vmatpush.bf16.msra.mxu0 %v3486
    %5532 = vmatpush.bf16.msra.mxu0 %v3482
    %5533 = vmatpush.bf16.msra.mxu0 %v3478
    %5534 = vmatpush.bf16.msra.mxu0 %v3474
    %5535 = vmatpush.bf16.msra.mxu0 %v3470
    %5536 = vmatpush.bf16.msra.mxu0 %v3466
    %5537 = vmatmul.bf16.gmra.mxu0 %v203
    %v5538 = vpop.f32.mrf.mxu0
    %v5539 = vadd.f32 %v5526, %v5538
    %v5540 = vpop.f32.mrf.mxu0
    %5541 = vdwg.mxu0
    %5542 = vmatpush.bf16.msra.mxu0 %v3526
    %5543 = vmatpush.bf16.msra.mxu0 %v3522
    %5544 = vmatpush.bf16.msra.mxu0 %v3518
    %5545 = vmatpush.bf16.msra.mxu0 %v3514
    %5546 = vmatpush.bf16.msra.mxu0 %v3510
    %5547 = vmatpush.bf16.msra.mxu0 %v3506
    %5548 = vmatpush.bf16.msra.mxu0 %v3502
    %5549 = vmatpush.bf16.msra.mxu0 %v3498
    %5550 = vmatmul.bf16.gmra.mxu0 %v204
    %v5551 = vpop.f32.mrf.mxu0
    %v5552 = vadd.f32 %v5539, %v5551
    %v5553 = vpop.f32.mrf.mxu0
    %5554 = vdwg.mxu0
    %5555 = vmatpush.bf16.msra.mxu0 %v3558
    %5556 = vmatpush.bf16.msra.mxu0 %v3554
    %5557 = vmatpush.bf16.msra.mxu0 %v3550
    %5558 = vmatpush.bf16.msra.mxu0 %v3546
    %5559 = vmatpush.bf16.msra.mxu0 %v3542
    %5560 = vmatpush.bf16.msra.mxu0 %v3538
    %5561 = vmatpush.bf16.msra.mxu0 %v3534
    %5562 = vmatpush.bf16.msra.mxu0 %v3530
    %5563 = vmatmul.bf16.gmra.mxu0 %v205
    %v5564 = vpop.f32.mrf.mxu0
    %v5565 = vadd.f32 %v5552, %v5564
    %v5566 = vpop.f32.mrf.mxu0
    %5567 = vdwg.mxu0
    %5568 = vmatpush.bf16.msra.mxu0 %v3590
    %5569 = vmatpush.bf16.msra.mxu0 %v3586
    %5570 = vmatpush.bf16.msra.mxu0 %v3582
    %5571 = vmatpush.bf16.msra.mxu0 %v3578
    %5572 = vmatpush.bf16.msra.mxu0 %v3574
    %5573 = vmatpush.bf16.msra.mxu0 %v3570
    %5574 = vmatpush.bf16.msra.mxu0 %v3566
    %5575 = vmatpush.bf16.msra.mxu0 %v3562
    %5576 = vmatmul.bf16.gmra.mxu0 %v206
    %v5577 = vpop.f32.mrf.mxu0
    %v5578 = vadd.f32 %v5565, %v5577
    %v5579 = vpop.f32.mrf.mxu0
    %5580 = vdwg.mxu0
    %5581 = vmatpush.bf16.msra.mxu0 %v3622
    %5582 = vmatpush.bf16.msra.mxu0 %v3618
    %5583 = vmatpush.bf16.msra.mxu0 %v3614
    %5584 = vmatpush.bf16.msra.mxu0 %v3610
    %5585 = vmatpush.bf16.msra.mxu0 %v3606
    %5586 = vmatpush.bf16.msra.mxu0 %v3602
    %5587 = vmatpush.bf16.msra.mxu0 %v3598
    %5588 = vmatpush.bf16.msra.mxu0 %v3594
    %5589 = vmatmul.bf16.gmra.mxu0 %v207
    %v5590 = vpop.f32.mrf.mxu0
    %v5591 = vadd.f32 %v5578, %v5590
    %v5592 = vpop.f32.mrf.mxu0
    %5593 = vdwg.mxu0
    %5594 = vmatpush.bf16.msra.mxu0 %v3654
    %5595 = vmatpush.bf16.msra.mxu0 %v3650
    %5596 = vmatpush.bf16.msra.mxu0 %v3646
    %5597 = vmatpush.bf16.msra.mxu0 %v3642
    %5598 = vmatpush.bf16.msra.mxu0 %v3638
    %5599 = vmatpush.bf16.msra.mxu0 %v3634
    %5600 = vmatpush.bf16.msra.mxu0 %v3630
    %5601 = vmatpush.bf16.msra.mxu0 %v3626
    %5602 = vmatmul.bf16.gmra.mxu0 %v208
    %v5603 = vpop.f32.mrf.mxu0
    %v5604 = vadd.f32 %v5591, %v5603
    %v5605 = vpop.f32.mrf.mxu0
    %5606 = vdwg.mxu0
    %5607 = vmatpush.bf16.msra.mxu0 %v3686
    %5608 = vmatpush.bf16.msra.mxu0 %v3682
    %5609 = vmatpush.bf16.msra.mxu0 %v3678
    %5610 = vmatpush.bf16.msra.mxu0 %v3674
    %5611 = vmatpush.bf16.msra.mxu0 %v3670
    %5612 = vmatpush.bf16.msra.mxu0 %v3666
    %5613 = vmatpush.bf16.msra.mxu0 %v3662
    %5614 = vmatpush.bf16.msra.mxu0 %v3658
    %5615 = vmatmul.bf16.gmra.mxu0 %v209
    %v5616 = vpop.f32.mrf.mxu0
    %v5617 = vadd.f32 %v5604, %v5616
    %v5618 = vpop.f32.mrf.mxu0
    %5619 = vdwg.mxu0
    %5620 = vmatpush.bf16.msra.mxu0 %v3718
    %5621 = vmatpush.bf16.msra.mxu0 %v3714
    %5622 = vmatpush.bf16.msra.mxu0 %v3710
    %5623 = vmatpush.bf16.msra.mxu0 %v3706
    %5624 = vmatpush.bf16.msra.mxu0 %v3702
    %5625 = vmatpush.bf16.msra.mxu0 %v3698
    %5626 = vmatpush.bf16.msra.mxu0 %v3694
    %5627 = vmatpush.bf16.msra.mxu0 %v3690
    %5628 = vmatmul.bf16.gmra.mxu0 %v210
    %v5629 = vpop.f32.mrf.mxu0
    %v5630 = vadd.f32 %v5617, %v5629
    %v5631 = vpop.f32.mrf.mxu0
    %5632 = vdwg.mxu0
    %5633 = vmatpush.bf16.msra.mxu0 %v3750
    %5634 = vmatpush.bf16.msra.mxu0 %v3746
    %5635 = vmatpush.bf16.msra.mxu0 %v3742
    %5636 = vmatpush.bf16.msra.mxu0 %v3738
    %5637 = vmatpush.bf16.msra.mxu0 %v3734
    %5638 = vmatpush.bf16.msra.mxu0 %v3730
    %5639 = vmatpush.bf16.msra.mxu0 %v3726
    %5640 = vmatpush.bf16.msra.mxu0 %v3722
    %5641 = vmatmul.bf16.gmra.mxu0 %v211
    %v5642 = vpop.f32.mrf.mxu0
    %v5643 = vadd.f32 %v5630, %v5642
    %v5644 = vpop.f32.mrf.mxu0
    %5645 = vdwg.mxu0
    %5646 = vmatpush.bf16.msra.mxu0 %v3782
    %5647 = vmatpush.bf16.msra.mxu0 %v3778
    %5648 = vmatpush.bf16.msra.mxu0 %v3774
    %5649 = vmatpush.bf16.msra.mxu0 %v3770
    %5650 = vmatpush.bf16.msra.mxu0 %v3766
    %5651 = vmatpush.bf16.msra.mxu0 %v3762
    %5652 = vmatpush.bf16.msra.mxu0 %v3758
    %5653 = vmatpush.bf16.msra.mxu0 %v3754
    %5654 = vmatmul.bf16.gmra.mxu0 %v212
    %v5655 = vpop.f32.mrf.mxu0
    %v5656 = vadd.f32 %v5643, %v5655
    %v5657 = vpop.f32.mrf.mxu0
    %5658 = vdwg.mxu0
    %5659 = vmatpush.bf16.msra.mxu0 %v3814
    %5660 = vmatpush.bf16.msra.mxu0 %v3810
    %5661 = vmatpush.bf16.msra.mxu0 %v3806
    %5662 = vmatpush.bf16.msra.mxu0 %v3802
    %5663 = vmatpush.bf16.msra.mxu0 %v3798
    %5664 = vmatpush.bf16.msra.mxu0 %v3794
    %5665 = vmatpush.bf16.msra.mxu0 %v3790
    %5666 = vmatpush.bf16.msra.mxu0 %v3786
    %5667 = vmatmul.bf16.gmra.mxu0 %v213
    %v5668 = vpop.f32.mrf.mxu0
    %v5669 = vadd.f32 %v5656, %v5668
    %v5670 = vpop.f32.mrf.mxu0
    %5671 = vdwg.mxu0
    %5672 = vmatpush.bf16.msra.mxu0 %v3846
    %5673 = vmatpush.bf16.msra.mxu0 %v3842
    %5674 = vmatpush.bf16.msra.mxu0 %v3838
    %5675 = vmatpush.bf16.msra.mxu0 %v3834
    %5676 = vmatpush.bf16.msra.mxu0 %v3830
    %5677 = vmatpush.bf16.msra.mxu0 %v3826
    %5678 = vmatpush.bf16.msra.mxu0 %v3822
    %5679 = vmatpush.bf16.msra.mxu0 %v3818
    %5680 = vmatmul.bf16.gmra.mxu0 %v214
    %v5681 = vpop.f32.mrf.mxu0
    %v5682 = vadd.f32 %v5669, %v5681
    %v5683 = vpop.f32.mrf.mxu0
    %5684 = vdwg.mxu0
    %5685 = vmatpush.bf16.msra.mxu0 %v3878
    %5686 = vmatpush.bf16.msra.mxu0 %v3874
    %5687 = vmatpush.bf16.msra.mxu0 %v3870
    %5688 = vmatpush.bf16.msra.mxu0 %v3866
    %5689 = vmatpush.bf16.msra.mxu0 %v3862
    %5690 = vmatpush.bf16.msra.mxu0 %v3858
    %5691 = vmatpush.bf16.msra.mxu0 %v3854
    %5692 = vmatpush.bf16.msra.mxu0 %v3850
    %5693 = vmatmul.bf16.gmra.mxu0 %v215
    %v5694 = vpop.f32.mrf.mxu0
    %v5695 = vadd.f32 %v5682, %v5694
    %v5696 = vpop.f32.mrf.mxu0
    %5697 = vdwg.mxu0
    %5698 = vmatpush.bf16.msra.mxu0 %v3910
    %5699 = vmatpush.bf16.msra.mxu0 %v3906
    %5700 = vmatpush.bf16.msra.mxu0 %v3902
    %5701 = vmatpush.bf16.msra.mxu0 %v3898
    %5702 = vmatpush.bf16.msra.mxu0 %v3894
    %5703 = vmatpush.bf16.msra.mxu0 %v3890
    %5704 = vmatpush.bf16.msra.mxu0 %v3886
    %5705 = vmatpush.bf16.msra.mxu0 %v3882
    %5706 = vmatmul.bf16.gmra.mxu0 %v216
    %v5707 = vpop.f32.mrf.mxu0
    %v5708 = vadd.f32 %v5695, %v5707
    %v5709 = vpop.f32.mrf.mxu0
    %5710 = vdwg.mxu0
    %5711 = vmatpush.bf16.msra.mxu0 %v3942
    %5712 = vmatpush.bf16.msra.mxu0 %v3938
    %5713 = vmatpush.bf16.msra.mxu0 %v3934
    %5714 = vmatpush.bf16.msra.mxu0 %v3930
    %5715 = vmatpush.bf16.msra.mxu0 %v3926
    %5716 = vmatpush.bf16.msra.mxu0 %v3922
    %5717 = vmatpush.bf16.msra.mxu0 %v3918
    %5718 = vmatpush.bf16.msra.mxu0 %v3914
    %5719 = vmatmul.bf16.gmra.mxu0 %v217
    %v5720 = vpop.f32.mrf.mxu0
    %v5721 = vadd.f32 %v5708, %v5720
    %v5722 = vpop.f32.mrf.mxu0
    %5723 = vdwg.mxu0
    %5724 = vmatpush.bf16.msra.mxu0 %v3974
    %5725 = vmatpush.bf16.msra.mxu0 %v3970
    %5726 = vmatpush.bf16.msra.mxu0 %v3966
    %5727 = vmatpush.bf16.msra.mxu0 %v3962
    %5728 = vmatpush.bf16.msra.mxu0 %v3958
    %5729 = vmatpush.bf16.msra.mxu0 %v3954
    %5730 = vmatpush.bf16.msra.mxu0 %v3950
    %5731 = vmatpush.bf16.msra.mxu0 %v3946
    %5732 = vmatmul.bf16.gmra.mxu0 %v218
    %v5733 = vpop.f32.mrf.mxu0
    %v5734 = vadd.f32 %v5721, %v5733
    %v5735 = vpop.f32.mrf.mxu0
    %5736 = vdwg.mxu0
    %5737 = vmatpush.bf16.msra.mxu0 %v4006
    %5738 = vmatpush.bf16.msra.mxu0 %v4002
    %5739 = vmatpush.bf16.msra.mxu0 %v3998
    %5740 = vmatpush.bf16.msra.mxu0 %v3994
    %5741 = vmatpush.bf16.msra.mxu0 %v3990
    %5742 = vmatpush.bf16.msra.mxu0 %v3986
    %5743 = vmatpush.bf16.msra.mxu0 %v3982
    %5744 = vmatpush.bf16.msra.mxu0 %v3978
    %5745 = vmatmul.bf16.gmra.mxu0 %v219
    %v5746 = vpop.f32.mrf.mxu0
    %v5747 = vadd.f32 %v5734, %v5746
    %v5748 = vpop.f32.mrf.mxu0
    %5749 = vdwg.mxu0
    %5750 = vmatpush.bf16.msra.mxu0 %v4038
    %5751 = vmatpush.bf16.msra.mxu0 %v4034
    %5752 = vmatpush.bf16.msra.mxu0 %v4030
    %5753 = vmatpush.bf16.msra.mxu0 %v4026
    %5754 = vmatpush.bf16.msra.mxu0 %v4022
    %5755 = vmatpush.bf16.msra.mxu0 %v4018
    %5756 = vmatpush.bf16.msra.mxu0 %v4014
    %5757 = vmatpush.bf16.msra.mxu0 %v4010
    %5758 = vmatmul.bf16.gmra.mxu0 %v220
    %v5759 = vpop.f32.mrf.mxu0
    %v5760 = vadd.f32 %v5747, %v5759
    %v5761 = vpop.f32.mrf.mxu0
    %5762 = vdwg.mxu0
    %5763 = vmatpush.bf16.msra.mxu0 %v4070
    %5764 = vmatpush.bf16.msra.mxu0 %v4066
    %5765 = vmatpush.bf16.msra.mxu0 %v4062
    %5766 = vmatpush.bf16.msra.mxu0 %v4058
    %5767 = vmatpush.bf16.msra.mxu0 %v4054
    %5768 = vmatpush.bf16.msra.mxu0 %v4050
    %5769 = vmatpush.bf16.msra.mxu0 %v4046
    %5770 = vmatpush.bf16.msra.mxu0 %v4042
    %5771 = vmatmul.bf16.gmra.mxu0 %v221
    %v5772 = vpop.f32.mrf.mxu0
    %v5773 = vadd.f32 %v5760, %v5772
    %v5774 = vpop.f32.mrf.mxu0
    %5775 = vdwg.mxu0
    %5776 = vmatpush.bf16.msra.mxu0 %v3335
    %5777 = vmatpush.bf16.msra.mxu0 %v3331
    %5778 = vmatpush.bf16.msra.mxu0 %v3327
    %5779 = vmatpush.bf16.msra.mxu0 %v3323
    %5780 = vmatpush.bf16.msra.mxu0 %v3319
    %5781 = vmatpush.bf16.msra.mxu0 %v3315
    %5782 = vmatpush.bf16.msra.mxu0 %v3311
    %5783 = vmatpush.bf16.msra.mxu0 %v3307
    %5784 = vmatmul.bf16.gmra.mxu0 %v198
    %v5785 = vpop.f32.mrf.mxu0
    %v5786 = vadd.f32 %v995, %v5785
    %v5787 = vpop.f32.mrf.mxu0
    %5788 = vdwg.mxu0
    %5789 = vmatpush.bf16.msra.mxu0 %v3367
    %5790 = vmatpush.bf16.msra.mxu0 %v3363
    %5791 = vmatpush.bf16.msra.mxu0 %v3359
    %5792 = vmatpush.bf16.msra.mxu0 %v3355
    %5793 = vmatpush.bf16.msra.mxu0 %v3351
    %5794 = vmatpush.bf16.msra.mxu0 %v3347
    %5795 = vmatpush.bf16.msra.mxu0 %v3343
    %5796 = vmatpush.bf16.msra.mxu0 %v3339
    %5797 = vmatmul.bf16.gmra.mxu0 %v199
    %v5798 = vpop.f32.mrf.mxu0
    %v5799 = vadd.f32 %v5786, %v5798
    %v5800 = vpop.f32.mrf.mxu0
    %5801 = vdwg.mxu0
    %5802 = vmatpush.bf16.msra.mxu0 %v3399
    %5803 = vmatpush.bf16.msra.mxu0 %v3395
    %5804 = vmatpush.bf16.msra.mxu0 %v3391
    %5805 = vmatpush.bf16.msra.mxu0 %v3387
    %5806 = vmatpush.bf16.msra.mxu0 %v3383
    %5807 = vmatpush.bf16.msra.mxu0 %v3379
    %5808 = vmatpush.bf16.msra.mxu0 %v3375
    %5809 = vmatpush.bf16.msra.mxu0 %v3371
    %5810 = vmatmul.bf16.gmra.mxu0 %v200
    %v5811 = vpop.f32.mrf.mxu0
    %v5812 = vadd.f32 %v5799, %v5811
    %v5813 = vpop.f32.mrf.mxu0
    %5814 = vdwg.mxu0
    %5815 = vmatpush.bf16.msra.mxu0 %v3431
    %5816 = vmatpush.bf16.msra.mxu0 %v3427
    %5817 = vmatpush.bf16.msra.mxu0 %v3423
    %5818 = vmatpush.bf16.msra.mxu0 %v3419
    %5819 = vmatpush.bf16.msra.mxu0 %v3415
    %5820 = vmatpush.bf16.msra.mxu0 %v3411
    %5821 = vmatpush.bf16.msra.mxu0 %v3407
    %5822 = vmatpush.bf16.msra.mxu0 %v3403
    %5823 = vmatmul.bf16.gmra.mxu0 %v201
    %v5824 = vpop.f32.mrf.mxu0
    %v5825 = vadd.f32 %v5812, %v5824
    %v5826 = vpop.f32.mrf.mxu0
    %5827 = vdwg.mxu0
    %5828 = vmatpush.bf16.msra.mxu0 %v3463
    %5829 = vmatpush.bf16.msra.mxu0 %v3459
    %5830 = vmatpush.bf16.msra.mxu0 %v3455
    %5831 = vmatpush.bf16.msra.mxu0 %v3451
    %5832 = vmatpush.bf16.msra.mxu0 %v3447
    %5833 = vmatpush.bf16.msra.mxu0 %v3443
    %5834 = vmatpush.bf16.msra.mxu0 %v3439
    %5835 = vmatpush.bf16.msra.mxu0 %v3435
    %5836 = vmatmul.bf16.gmra.mxu0 %v202
    %v5837 = vpop.f32.mrf.mxu0
    %v5838 = vadd.f32 %v5825, %v5837
    %v5839 = vpop.f32.mrf.mxu0
    %5840 = vdwg.mxu0
    %5841 = vmatpush.bf16.msra.mxu0 %v3495
    %5842 = vmatpush.bf16.msra.mxu0 %v3491
    %5843 = vmatpush.bf16.msra.mxu0 %v3487
    %5844 = vmatpush.bf16.msra.mxu0 %v3483
    %5845 = vmatpush.bf16.msra.mxu0 %v3479
    %5846 = vmatpush.bf16.msra.mxu0 %v3475
    %5847 = vmatpush.bf16.msra.mxu0 %v3471
    %5848 = vmatpush.bf16.msra.mxu0 %v3467
    %5849 = vmatmul.bf16.gmra.mxu0 %v203
    %v5850 = vpop.f32.mrf.mxu0
    %v5851 = vadd.f32 %v5838, %v5850
    %v5852 = vpop.f32.mrf.mxu0
    %5853 = vdwg.mxu0
    %5854 = vmatpush.bf16.msra.mxu0 %v3527
    %5855 = vmatpush.bf16.msra.mxu0 %v3523
    %5856 = vmatpush.bf16.msra.mxu0 %v3519
    %5857 = vmatpush.bf16.msra.mxu0 %v3515
    %5858 = vmatpush.bf16.msra.mxu0 %v3511
    %5859 = vmatpush.bf16.msra.mxu0 %v3507
    %5860 = vmatpush.bf16.msra.mxu0 %v3503
    %5861 = vmatpush.bf16.msra.mxu0 %v3499
    %5862 = vmatmul.bf16.gmra.mxu0 %v204
    %v5863 = vpop.f32.mrf.mxu0
    %v5864 = vadd.f32 %v5851, %v5863
    %v5865 = vpop.f32.mrf.mxu0
    %5866 = vdwg.mxu0
    %5867 = vmatpush.bf16.msra.mxu0 %v3559
    %5868 = vmatpush.bf16.msra.mxu0 %v3555
    %5869 = vmatpush.bf16.msra.mxu0 %v3551
    %5870 = vmatpush.bf16.msra.mxu0 %v3547
    %5871 = vmatpush.bf16.msra.mxu0 %v3543
    %5872 = vmatpush.bf16.msra.mxu0 %v3539
    %5873 = vmatpush.bf16.msra.mxu0 %v3535
    %5874 = vmatpush.bf16.msra.mxu0 %v3531
    %5875 = vmatmul.bf16.gmra.mxu0 %v205
    %v5876 = vpop.f32.mrf.mxu0
    %v5877 = vadd.f32 %v5864, %v5876
    %v5878 = vpop.f32.mrf.mxu0
    %5879 = vdwg.mxu0
    %5880 = vmatpush.bf16.msra.mxu0 %v3591
    %5881 = vmatpush.bf16.msra.mxu0 %v3587
    %5882 = vmatpush.bf16.msra.mxu0 %v3583
    %5883 = vmatpush.bf16.msra.mxu0 %v3579
    %5884 = vmatpush.bf16.msra.mxu0 %v3575
    %5885 = vmatpush.bf16.msra.mxu0 %v3571
    %5886 = vmatpush.bf16.msra.mxu0 %v3567
    %5887 = vmatpush.bf16.msra.mxu0 %v3563
    %5888 = vmatmul.bf16.gmra.mxu0 %v206
    %v5889 = vpop.f32.mrf.mxu0
    %v5890 = vadd.f32 %v5877, %v5889
    %v5891 = vpop.f32.mrf.mxu0
    %5892 = vdwg.mxu0
    %5893 = vmatpush.bf16.msra.mxu0 %v3623
    %5894 = vmatpush.bf16.msra.mxu0 %v3619
    %5895 = vmatpush.bf16.msra.mxu0 %v3615
    %5896 = vmatpush.bf16.msra.mxu0 %v3611
    %5897 = vmatpush.bf16.msra.mxu0 %v3607
    %5898 = vmatpush.bf16.msra.mxu0 %v3603
    %5899 = vmatpush.bf16.msra.mxu0 %v3599
    %5900 = vmatpush.bf16.msra.mxu0 %v3595
    %5901 = vmatmul.bf16.gmra.mxu0 %v207
    %v5902 = vpop.f32.mrf.mxu0
    %v5903 = vadd.f32 %v5890, %v5902
    %v5904 = vpop.f32.mrf.mxu0
    %5905 = vdwg.mxu0
    %5906 = vmatpush.bf16.msra.mxu0 %v3655
    %5907 = vmatpush.bf16.msra.mxu0 %v3651
    %5908 = vmatpush.bf16.msra.mxu0 %v3647
    %5909 = vmatpush.bf16.msra.mxu0 %v3643
    %5910 = vmatpush.bf16.msra.mxu0 %v3639
    %5911 = vmatpush.bf16.msra.mxu0 %v3635
    %5912 = vmatpush.bf16.msra.mxu0 %v3631
    %5913 = vmatpush.bf16.msra.mxu0 %v3627
    %5914 = vmatmul.bf16.gmra.mxu0 %v208
    %v5915 = vpop.f32.mrf.mxu0
    %v5916 = vadd.f32 %v5903, %v5915
    %v5917 = vpop.f32.mrf.mxu0
    %5918 = vdwg.mxu0
    %5919 = vmatpush.bf16.msra.mxu0 %v3687
    %5920 = vmatpush.bf16.msra.mxu0 %v3683
    %5921 = vmatpush.bf16.msra.mxu0 %v3679
    %5922 = vmatpush.bf16.msra.mxu0 %v3675
    %5923 = vmatpush.bf16.msra.mxu0 %v3671
    %5924 = vmatpush.bf16.msra.mxu0 %v3667
    %5925 = vmatpush.bf16.msra.mxu0 %v3663
    %5926 = vmatpush.bf16.msra.mxu0 %v3659
    %5927 = vmatmul.bf16.gmra.mxu0 %v209
    %v5928 = vpop.f32.mrf.mxu0
    %v5929 = vadd.f32 %v5916, %v5928
    %v5930 = vpop.f32.mrf.mxu0
    %5931 = vdwg.mxu0
    %5932 = vmatpush.bf16.msra.mxu0 %v3719
    %5933 = vmatpush.bf16.msra.mxu0 %v3715
    %5934 = vmatpush.bf16.msra.mxu0 %v3711
    %5935 = vmatpush.bf16.msra.mxu0 %v3707
    %5936 = vmatpush.bf16.msra.mxu0 %v3703
    %5937 = vmatpush.bf16.msra.mxu0 %v3699
    %5938 = vmatpush.bf16.msra.mxu0 %v3695
    %5939 = vmatpush.bf16.msra.mxu0 %v3691
    %5940 = vmatmul.bf16.gmra.mxu0 %v210
    %v5941 = vpop.f32.mrf.mxu0
    %v5942 = vadd.f32 %v5929, %v5941
    %v5943 = vpop.f32.mrf.mxu0
    %5944 = vdwg.mxu0
    %5945 = vmatpush.bf16.msra.mxu0 %v3751
    %5946 = vmatpush.bf16.msra.mxu0 %v3747
    %5947 = vmatpush.bf16.msra.mxu0 %v3743
    %5948 = vmatpush.bf16.msra.mxu0 %v3739
    %5949 = vmatpush.bf16.msra.mxu0 %v3735
    %5950 = vmatpush.bf16.msra.mxu0 %v3731
    %5951 = vmatpush.bf16.msra.mxu0 %v3727
    %5952 = vmatpush.bf16.msra.mxu0 %v3723
    %5953 = vmatmul.bf16.gmra.mxu0 %v211
    %v5954 = vpop.f32.mrf.mxu0
    %v5955 = vadd.f32 %v5942, %v5954
    %v5956 = vpop.f32.mrf.mxu0
    %5957 = vdwg.mxu0
    %5958 = vmatpush.bf16.msra.mxu0 %v3783
    %5959 = vmatpush.bf16.msra.mxu0 %v3779
    %5960 = vmatpush.bf16.msra.mxu0 %v3775
    %5961 = vmatpush.bf16.msra.mxu0 %v3771
    %5962 = vmatpush.bf16.msra.mxu0 %v3767
    %5963 = vmatpush.bf16.msra.mxu0 %v3763
    %5964 = vmatpush.bf16.msra.mxu0 %v3759
    %5965 = vmatpush.bf16.msra.mxu0 %v3755
    %5966 = vmatmul.bf16.gmra.mxu0 %v212
    %v5967 = vpop.f32.mrf.mxu0
    %v5968 = vadd.f32 %v5955, %v5967
    %v5969 = vpop.f32.mrf.mxu0
    %5970 = vdwg.mxu0
    %5971 = vmatpush.bf16.msra.mxu0 %v3815
    %5972 = vmatpush.bf16.msra.mxu0 %v3811
    %5973 = vmatpush.bf16.msra.mxu0 %v3807
    %5974 = vmatpush.bf16.msra.mxu0 %v3803
    %5975 = vmatpush.bf16.msra.mxu0 %v3799
    %5976 = vmatpush.bf16.msra.mxu0 %v3795
    %5977 = vmatpush.bf16.msra.mxu0 %v3791
    %5978 = vmatpush.bf16.msra.mxu0 %v3787
    %5979 = vmatmul.bf16.gmra.mxu0 %v213
    %v5980 = vpop.f32.mrf.mxu0
    %v5981 = vadd.f32 %v5968, %v5980
    %v5982 = vpop.f32.mrf.mxu0
    %5983 = vdwg.mxu0
    %5984 = vmatpush.bf16.msra.mxu0 %v3847
    %5985 = vmatpush.bf16.msra.mxu0 %v3843
    %5986 = vmatpush.bf16.msra.mxu0 %v3839
    %5987 = vmatpush.bf16.msra.mxu0 %v3835
    %5988 = vmatpush.bf16.msra.mxu0 %v3831
    %5989 = vmatpush.bf16.msra.mxu0 %v3827
    %5990 = vmatpush.bf16.msra.mxu0 %v3823
    %5991 = vmatpush.bf16.msra.mxu0 %v3819
    %5992 = vmatmul.bf16.gmra.mxu0 %v214
    %v5993 = vpop.f32.mrf.mxu0
    %v5994 = vadd.f32 %v5981, %v5993
    %v5995 = vpop.f32.mrf.mxu0
    %5996 = vdwg.mxu0
    %5997 = vmatpush.bf16.msra.mxu0 %v3879
    %5998 = vmatpush.bf16.msra.mxu0 %v3875
    %5999 = vmatpush.bf16.msra.mxu0 %v3871
    %6000 = vmatpush.bf16.msra.mxu0 %v3867
    %6001 = vmatpush.bf16.msra.mxu0 %v3863
    %6002 = vmatpush.bf16.msra.mxu0 %v3859
    %6003 = vmatpush.bf16.msra.mxu0 %v3855
    %6004 = vmatpush.bf16.msra.mxu0 %v3851
    %6005 = vmatmul.bf16.gmra.mxu0 %v215
    %v6006 = vpop.f32.mrf.mxu0
    %v6007 = vadd.f32 %v5994, %v6006
    %v6008 = vpop.f32.mrf.mxu0
    %6009 = vdwg.mxu0
    %6010 = vmatpush.bf16.msra.mxu0 %v3911
    %6011 = vmatpush.bf16.msra.mxu0 %v3907
    %6012 = vmatpush.bf16.msra.mxu0 %v3903
    %6013 = vmatpush.bf16.msra.mxu0 %v3899
    %6014 = vmatpush.bf16.msra.mxu0 %v3895
    %6015 = vmatpush.bf16.msra.mxu0 %v3891
    %6016 = vmatpush.bf16.msra.mxu0 %v3887
    %6017 = vmatpush.bf16.msra.mxu0 %v3883
    %6018 = vmatmul.bf16.gmra.mxu0 %v216
    %v6019 = vpop.f32.mrf.mxu0
    %v6020 = vadd.f32 %v6007, %v6019
    %v6021 = vpop.f32.mrf.mxu0
    %6022 = vdwg.mxu0
    %6023 = vmatpush.bf16.msra.mxu0 %v3943
    %6024 = vmatpush.bf16.msra.mxu0 %v3939
    %6025 = vmatpush.bf16.msra.mxu0 %v3935
    %6026 = vmatpush.bf16.msra.mxu0 %v3931
    %6027 = vmatpush.bf16.msra.mxu0 %v3927
    %6028 = vmatpush.bf16.msra.mxu0 %v3923
    %6029 = vmatpush.bf16.msra.mxu0 %v3919
    %6030 = vmatpush.bf16.msra.mxu0 %v3915
    %6031 = vmatmul.bf16.gmra.mxu0 %v217
    %v6032 = vpop.f32.mrf.mxu0
    %v6033 = vadd.f32 %v6020, %v6032
    %v6034 = vpop.f32.mrf.mxu0
    %6035 = vdwg.mxu0
    %6036 = vmatpush.bf16.msra.mxu0 %v3975
    %6037 = vmatpush.bf16.msra.mxu0 %v3971
    %6038 = vmatpush.bf16.msra.mxu0 %v3967
    %6039 = vmatpush.bf16.msra.mxu0 %v3963
    %6040 = vmatpush.bf16.msra.mxu0 %v3959
    %6041 = vmatpush.bf16.msra.mxu0 %v3955
    %6042 = vmatpush.bf16.msra.mxu0 %v3951
    %6043 = vmatpush.bf16.msra.mxu0 %v3947
    %6044 = vmatmul.bf16.gmra.mxu0 %v218
    %v6045 = vpop.f32.mrf.mxu0
    %v6046 = vadd.f32 %v6033, %v6045
    %v6047 = vpop.f32.mrf.mxu0
    %6048 = vdwg.mxu0
    %6049 = vmatpush.bf16.msra.mxu0 %v4007
    %6050 = vmatpush.bf16.msra.mxu0 %v4003
    %6051 = vmatpush.bf16.msra.mxu0 %v3999
    %6052 = vmatpush.bf16.msra.mxu0 %v3995
    %6053 = vmatpush.bf16.msra.mxu0 %v3991
    %6054 = vmatpush.bf16.msra.mxu0 %v3987
    %6055 = vmatpush.bf16.msra.mxu0 %v3983
    %6056 = vmatpush.bf16.msra.mxu0 %v3979
    %6057 = vmatmul.bf16.gmra.mxu0 %v219
    %v6058 = vpop.f32.mrf.mxu0
    %v6059 = vadd.f32 %v6046, %v6058
    %v6060 = vpop.f32.mrf.mxu0
    %6061 = vdwg.mxu0
    %6062 = vmatpush.bf16.msra.mxu0 %v4039
    %6063 = vmatpush.bf16.msra.mxu0 %v4035
    %6064 = vmatpush.bf16.msra.mxu0 %v4031
    %6065 = vmatpush.bf16.msra.mxu0 %v4027
    %6066 = vmatpush.bf16.msra.mxu0 %v4023
    %6067 = vmatpush.bf16.msra.mxu0 %v4019
    %6068 = vmatpush.bf16.msra.mxu0 %v4015
    %6069 = vmatpush.bf16.msra.mxu0 %v4011
    %6070 = vmatmul.bf16.gmra.mxu0 %v220
    %v6071 = vpop.f32.mrf.mxu0
    %v6072 = vadd.f32 %v6059, %v6071
    %v6073 = vpop.f32.mrf.mxu0
    %6074 = vdwg.mxu0
    %6075 = vmatpush.bf16.msra.mxu0 %v4071
    %6076 = vmatpush.bf16.msra.mxu0 %v4067
    %6077 = vmatpush.bf16.msra.mxu0 %v4063
    %6078 = vmatpush.bf16.msra.mxu0 %v4059
    %6079 = vmatpush.bf16.msra.mxu0 %v4055
    %6080 = vmatpush.bf16.msra.mxu0 %v4051
    %6081 = vmatpush.bf16.msra.mxu0 %v4047
    %6082 = vmatpush.bf16.msra.mxu0 %v4043
    %6083 = vmatmul.bf16.gmra.mxu0 %v221
    %v6084 = vpop.f32.mrf.mxu0
    %v6085 = vadd.f32 %v6072, %v6084
    %v6086 = vpop.f32.mrf.mxu0
    %6087 = vdwg.mxu0
    %v6088 = vmax.f32 %v5149, 0.0
    %v6089 = vmax.f32 %v5461, 0.0
    %v6090 = vmax.f32 %v5773, 0.0
    %v6091 = vmax.f32 %v6085, 0.0
    %v6092 = vpack.c.bf16 %v6088, %v6088
    %v6093 = vpack.c.bf16 %v6089, %v6089
    %v6094 = vpack.c.bf16 %v6090, %v6090
    %v6095 = vpack.c.bf16 %v6091, %v6091
    %v6096 = vld [vmem:[#allocation6] sm:$0xff]
    %v6097 = vld [vmem:[#allocation6 + $0x8] sm:$0xff]
    %v6098 = vld [vmem:[#allocation6 + $0x10] sm:$0xff]
    %v6099 = vld [vmem:[#allocation6 + $0x18] sm:$0xff]
    %v6100 = vld [vmem:[#allocation6 + $0x20] sm:$0xff]
    %v6101 = vld [vmem:[#allocation6 + $0x28] sm:$0xff]
    %v6102 = vld [vmem:[#allocation6 + $0x30] sm:$0xff]
    %v6103 = vld [vmem:[#allocation6 + $0x38] sm:$0xff]
    %v6104 = vld [vmem:[#allocation6 + $0x40] sm:$0xff]
    %v6105 = vld [vmem:[#allocation6 + $0x48] sm:$0xff]
    %v6106 = vld [vmem:[#allocation6 + $0x50] sm:$0xff]
    %v6107 = vld [vmem:[#allocation6 + $0x58] sm:$0xff]
    %v6108 = vld [vmem:[#allocation6 + $0x60] sm:$0xff]
    %v6109 = vld [vmem:[#allocation6 + $0x68] sm:$0xff]
    %v6110 = vld [vmem:[#allocation6 + $0x70] sm:$0xff]
    %v6111 = vld [vmem:[#allocation6 + $0x78] sm:$0xff]
    %v6112 = vld [vmem:[#allocation6 + $0x80] sm:$0xff]
    %v6113 = vld [vmem:[#allocation6 + $0x88] sm:$0xff]
    %v6114 = vld [vmem:[#allocation6 + $0x90] sm:$0xff]
    %v6115 = vld [vmem:[#allocation6 + $0x98] sm:$0xff]
    %v6116 = vld [vmem:[#allocation6 + $0xa0] sm:$0xff]
    %v6117 = vld [vmem:[#allocation6 + $0xa8] sm:$0xff]
    %v6118 = vld [vmem:[#allocation6 + $0xb0] sm:$0xff]
    %v6119 = vld [vmem:[#allocation6 + $0xb8] sm:$0xff]
    %v6120 = vld [vmem:[#allocation6 + $0xc0] sm:$0xff]
    %v6121 = vld [vmem:[#allocation6 + $0xc8] sm:$0xff]
    %v6122 = vld [vmem:[#allocation6 + $0xd0] sm:$0xff]
    %v6123 = vld [vmem:[#allocation6 + $0xd8] sm:$0xff]
    %v6124 = vld [vmem:[#allocation6 + $0xe0] sm:$0xff]
    %v6125 = vld [vmem:[#allocation6 + $0xe8] sm:$0xff]
    %v6126 = vld [vmem:[#allocation6 + $0xf0] sm:$0xff]
    %v6127 = vld [vmem:[#allocation6 + $0xf8] sm:$0xff]
    %v6128 = vld [vmem:[#allocation6 + $0x100] sm:$0xff]
    %v6129 = vld [vmem:[#allocation6 + $0x108] sm:$0xff]
    %v6130 = vld [vmem:[#allocation6 + $0x110] sm:$0xff]
    %v6131 = vld [vmem:[#allocation6 + $0x118] sm:$0xff]
    %v6132 = vld [vmem:[#allocation6 + $0x120] sm:$0xff]
    %v6133 = vld [vmem:[#allocation6 + $0x128] sm:$0xff]
    %v6134 = vld [vmem:[#allocation6 + $0x130] sm:$0xff]
    %v6135 = vld [vmem:[#allocation6 + $0x138] sm:$0xff]
    %v6136 = vld [vmem:[#allocation6 + $0x140] sm:$0xff]
    %v6137 = vld [vmem:[#allocation6 + $0x148] sm:$0xff]
    %v6138 = vld [vmem:[#allocation6 + $0x150] sm:$0xff]
    %v6139 = vld [vmem:[#allocation6 + $0x158] sm:$0xff]
    %v6140 = vld [vmem:[#allocation6 + $0x160] sm:$0xff]
    %v6141 = vld [vmem:[#allocation6 + $0x168] sm:$0xff]
    %v6142 = vld [vmem:[#allocation6 + $0x170] sm:$0xff]
    %v6143 = vld [vmem:[#allocation6 + $0x178] sm:$0xff]
    %v6144 = vld [vmem:[#allocation6 + $0x180] sm:$0xff]
    %v6145 = vld [vmem:[#allocation6 + $0x188] sm:$0xff]
    %v6146 = vld [vmem:[#allocation6 + $0x190] sm:$0xff]
    %v6147 = vld [vmem:[#allocation6 + $0x198] sm:$0xff]
    %v6148 = vld [vmem:[#allocation6 + $0x1a0] sm:$0xff]
    %v6149 = vld [vmem:[#allocation6 + $0x1a8] sm:$0xff]
    %v6150 = vld [vmem:[#allocation6 + $0x1b0] sm:$0xff]
    %v6151 = vld [vmem:[#allocation6 + $0x1b8] sm:$0xff]
    %v6152 = vld [vmem:[#allocation6 + $0x1c0] sm:$0xff]
    %v6153 = vld [vmem:[#allocation6 + $0x1c8] sm:$0xff]
    %v6154 = vld [vmem:[#allocation6 + $0x1d0] sm:$0xff]
    %v6155 = vld [vmem:[#allocation6 + $0x1d8] sm:$0xff]
    %v6156 = vld [vmem:[#allocation6 + $0x1e0] sm:$0xff]
    %v6157 = vld [vmem:[#allocation6 + $0x1e8] sm:$0xff]
    %v6158 = vld [vmem:[#allocation6 + $0x1f0] sm:$0xff]
    %v6159 = vld [vmem:[#allocation6 + $0x1f8] sm:$0xff]
    %v6160 = vld [vmem:[#allocation7] sm:$0x3]
    %v6162 = vperm.slane %v6160, 0
    %v6163 = vperm.slane %v6160, 1
    %v6230 = vunpack.c.l.b16 %v6096
    %v6231 = vunpack.c.h.b16 %v6096
    %v6232 = vunpack.c.l.b16 %v6097
    %v6233 = vunpack.c.h.b16 %v6097
    %v6234 = vunpack.c.l.b16 %v6098
    %v6235 = vunpack.c.h.b16 %v6098
    %v6236 = vunpack.c.l.b16 %v6099
    %v6237 = vunpack.c.h.b16 %v6099
    %v6238 = vunpack.c.l.b16 %v6100
    %v6239 = vunpack.c.h.b16 %v6100
    %v6240 = vunpack.c.l.b16 %v6101
    %v6241 = vunpack.c.h.b16 %v6101
    %v6242 = vunpack.c.l.b16 %v6102
    %v6243 = vunpack.c.h.b16 %v6102
    %v6244 = vunpack.c.l.b16 %v6103
    %v6245 = vunpack.c.h.b16 %v6103
    %v6246 = vunpack.c.l.b16 %v6104
    %v6247 = vunpack.c.h.b16 %v6104
    %v6248 = vunpack.c.l.b16 %v6105
    %v6249 = vunpack.c.h.b16 %v6105
    %v6250 = vunpack.c.l.b16 %v6106
    %v6251 = vunpack.c.h.b16 %v6106
    %v6252 = vunpack.c.l.b16 %v6107
    %v6253 = vunpack.c.h.b16 %v6107
    %v6254 = vunpack.c.l.b16 %v6108
    %v6255 = vunpack.c.h.b16 %v6108
    %v6256 = vunpack.c.l.b16 %v6109
    %v6257 = vunpack.c.h.b16 %v6109
    %v6258 = vunpack.c.l.b16 %v6110
    %v6259 = vunpack.c.h.b16 %v6110
    %v6260 = vunpack.c.l.b16 %v6111
    %v6261 = vunpack.c.h.b16 %v6111
    %v6262 = vunpack.c.l.b16 %v6112
    %v6263 = vunpack.c.h.b16 %v6112
    %v6264 = vunpack.c.l.b16 %v6113
    %v6265 = vunpack.c.h.b16 %v6113
    %v6266 = vunpack.c.l.b16 %v6114
    %v6267 = vunpack.c.h.b16 %v6114
    %v6268 = vunpack.c.l.b16 %v6115
    %v6269 = vunpack.c.h.b16 %v6115
    %v6270 = vunpack.c.l.b16 %v6116
    %v6271 = vunpack.c.h.b16 %v6116
    %v6272 = vunpack.c.l.b16 %v6117
    %v6273 = vunpack.c.h.b16 %v6117
    %v6274 = vunpack.c.l.b16 %v6118
    %v6275 = vunpack.c.h.b16 %v6118
    %v6276 = vunpack.c.l.b16 %v6119
    %v6277 = vunpack.c.h.b16 %v6119
    %v6278 = vunpack.c.l.b16 %v6120
    %v6279 = vunpack.c.h.b16 %v6120
    %v6280 = vunpack.c.l.b16 %v6121
    %v6281 = vunpack.c.h.b16 %v6121
    %v6282 = vunpack.c.l.b16 %v6122
    %v6283 = vunpack.c.h.b16 %v6122
    %v6284 = vunpack.c.l.b16 %v6123
    %v6285 = vunpack.c.h.b16 %v6123
    %v6286 = vunpack.c.l.b16 %v6124
    %v6287 = vunpack.c.h.b16 %v6124
    %v6288 = vunpack.c.l.b16 %v6125
    %v6289 = vunpack.c.h.b16 %v6125
    %v6290 = vunpack.c.l.b16 %v6126
    %v6291 = vunpack.c.h.b16 %v6126
    %v6292 = vunpack.c.l.b16 %v6127
    %v6293 = vunpack.c.h.b16 %v6127
    %v6294 = vunpack.c.l.b16 %v6128
    %v6295 = vunpack.c.h.b16 %v6128
    %v6296 = vunpack.c.l.b16 %v6129
    %v6297 = vunpack.c.h.b16 %v6129
    %v6298 = vunpack.c.l.b16 %v6130
    %v6299 = vunpack.c.h.b16 %v6130
    %v6300 = vunpack.c.l.b16 %v6131
    %v6301 = vunpack.c.h.b16 %v6131
    %v6302 = vunpack.c.l.b16 %v6132
    %v6303 = vunpack.c.h.b16 %v6132
    %v6304 = vunpack.c.l.b16 %v6133
    %v6305 = vunpack.c.h.b16 %v6133
    %v6306 = vunpack.c.l.b16 %v6134
    %v6307 = vunpack.c.h.b16 %v6134
    %v6308 = vunpack.c.l.b16 %v6135
    %v6309 = vunpack.c.h.b16 %v6135
    %v6310 = vunpack.c.l.b16 %v6136
    %v6311 = vunpack.c.h.b16 %v6136
    %v6312 = vunpack.c.l.b16 %v6137
    %v6313 = vunpack.c.h.b16 %v6137
    %v6314 = vunpack.c.l.b16 %v6138
    %v6315 = vunpack.c.h.b16 %v6138
    %v6316 = vunpack.c.l.b16 %v6139
    %v6317 = vunpack.c.h.b16 %v6139
    %v6318 = vunpack.c.l.b16 %v6140
    %v6319 = vunpack.c.h.b16 %v6140
    %v6320 = vunpack.c.l.b16 %v6141
    %v6321 = vunpack.c.h.b16 %v6141
    %v6322 = vunpack.c.l.b16 %v6142
    %v6323 = vunpack.c.h.b16 %v6142
    %v6324 = vunpack.c.l.b16 %v6143
    %v6325 = vunpack.c.h.b16 %v6143
    %v6326 = vunpack.c.l.b16 %v6144
    %v6327 = vunpack.c.h.b16 %v6144
    %v6328 = vunpack.c.l.b16 %v6145
    %v6329 = vunpack.c.h.b16 %v6145
    %v6330 = vunpack.c.l.b16 %v6146
    %v6331 = vunpack.c.h.b16 %v6146
    %v6332 = vunpack.c.l.b16 %v6147
    %v6333 = vunpack.c.h.b16 %v6147
    %v6334 = vunpack.c.l.b16 %v6148
    %v6335 = vunpack.c.h.b16 %v6148
    %v6336 = vunpack.c.l.b16 %v6149
    %v6337 = vunpack.c.h.b16 %v6149
    %v6338 = vunpack.c.l.b16 %v6150
    %v6339 = vunpack.c.h.b16 %v6150
    %v6340 = vunpack.c.l.b16 %v6151
    %v6341 = vunpack.c.h.b16 %v6151
    %v6342 = vunpack.c.l.b16 %v6152
    %v6343 = vunpack.c.h.b16 %v6152
    %v6344 = vunpack.c.l.b16 %v6153
    %v6345 = vunpack.c.h.b16 %v6153
    %v6346 = vunpack.c.l.b16 %v6154
    %v6347 = vunpack.c.h.b16 %v6154
    %v6348 = vunpack.c.l.b16 %v6155
    %v6349 = vunpack.c.h.b16 %v6155
    %v6350 = vunpack.c.l.b16 %v6156
    %v6351 = vunpack.c.h.b16 %v6156
    %v6352 = vunpack.c.l.b16 %v6157
    %v6353 = vunpack.c.h.b16 %v6157
    %v6354 = vunpack.c.l.b16 %v6158
    %v6355 = vunpack.c.h.b16 %v6158
    %v6356 = vunpack.c.l.b16 %v6159
    %v6357 = vunpack.c.h.b16 %v6159
    %v6358 = vpack.c.b16 %v6232, %v6230
    %v6359 = vpack.c.b16 %v6233, %v6231
    %v6360 = vpack.c.b16 %v6236, %v6234
    %v6361 = vpack.c.b16 %v6237, %v6235
    %v6362 = vpack.c.b16 %v6240, %v6238
    %v6363 = vpack.c.b16 %v6241, %v6239
    %v6364 = vpack.c.b16 %v6244, %v6242
    %v6365 = vpack.c.b16 %v6245, %v6243
    %v6366 = vpack.c.b16 %v6248, %v6246
    %v6367 = vpack.c.b16 %v6249, %v6247
    %v6368 = vpack.c.b16 %v6252, %v6250
    %v6369 = vpack.c.b16 %v6253, %v6251
    %v6370 = vpack.c.b16 %v6256, %v6254
    %v6371 = vpack.c.b16 %v6257, %v6255
    %v6372 = vpack.c.b16 %v6260, %v6258
    %v6373 = vpack.c.b16 %v6261, %v6259
    %v6374 = vpack.c.b16 %v6264, %v6262
    %v6375 = vpack.c.b16 %v6265, %v6263
    %v6376 = vpack.c.b16 %v6268, %v6266
    %v6377 = vpack.c.b16 %v6269, %v6267
    %v6378 = vpack.c.b16 %v6272, %v6270
    %v6379 = vpack.c.b16 %v6273, %v6271
    %v6380 = vpack.c.b16 %v6276, %v6274
    %v6381 = vpack.c.b16 %v6277, %v6275
    %v6382 = vpack.c.b16 %v6280, %v6278
    %v6383 = vpack.c.b16 %v6281, %v6279
    %v6384 = vpack.c.b16 %v6284, %v6282
    %v6385 = vpack.c.b16 %v6285, %v6283
    %v6386 = vpack.c.b16 %v6288, %v6286
    %v6387 = vpack.c.b16 %v6289, %v6287
    %v6388 = vpack.c.b16 %v6292, %v6290
    %v6389 = vpack.c.b16 %v6293, %v6291
    %v6390 = vpack.c.b16 %v6296, %v6294
    %v6391 = vpack.c.b16 %v6297, %v6295
    %v6392 = vpack.c.b16 %v6300, %v6298
    %v6393 = vpack.c.b16 %v6301, %v6299
    %v6394 = vpack.c.b16 %v6304, %v6302
    %v6395 = vpack.c.b16 %v6305, %v6303
    %v6396 = vpack.c.b16 %v6308, %v6306
    %v6397 = vpack.c.b16 %v6309, %v6307
    %v6398 = vpack.c.b16 %v6312, %v6310
    %v6399 = vpack.c.b16 %v6313, %v6311
    %v6400 = vpack.c.b16 %v6316, %v6314
    %v6401 = vpack.c.b16 %v6317, %v6315
    %v6402 = vpack.c.b16 %v6320, %v6318
    %v6403 = vpack.c.b16 %v6321, %v6319
    %v6404 = vpack.c.b16 %v6324, %v6322
    %v6405 = vpack.c.b16 %v6325, %v6323
    %v6406 = vpack.c.b16 %v6328, %v6326
    %v6407 = vpack.c.b16 %v6329, %v6327
    %v6408 = vpack.c.b16 %v6332, %v6330
    %v6409 = vpack.c.b16 %v6333, %v6331
    %v6410 = vpack.c.b16 %v6336, %v6334
    %v6411 = vpack.c.b16 %v6337, %v6335
    %v6412 = vpack.c.b16 %v6340, %v6338
    %v6413 = vpack.c.b16 %v6341, %v6339
    %v6414 = vpack.c.b16 %v6344, %v6342
    %v6415 = vpack.c.b16 %v6345, %v6343
    %v6416 = vpack.c.b16 %v6348, %v6346
    %v6417 = vpack.c.b16 %v6349, %v6347
    %v6418 = vpack.c.b16 %v6352, %v6350
    %v6419 = vpack.c.b16 %v6353, %v6351
    %v6420 = vpack.c.b16 %v6356, %v6354
    %v6421 = vpack.c.b16 %v6357, %v6355
    %6486 = vmatpush.bf16.msra.mxu0 %v6372
    %6487 = vmatpush.bf16.msra.mxu0 %v6370
    %6488 = vmatpush.bf16.msra.mxu0 %v6368
    %6489 = vmatpush.bf16.msra.mxu0 %v6366
    %6490 = vmatpush.bf16.msra.mxu0 %v6364
    %6491 = vmatpush.bf16.msra.mxu0 %v6362
    %6492 = vmatpush.bf16.msra.mxu0 %v6360
    %6493 = vmatpush.bf16.msra.mxu0 %v6358
    %6494 = vmatmul.bf16.gmra.mxu0 %v6092
    %v6495 = vpop.f32.mrf.mxu0
    %v6496 = vadd.f32 %v6162, %v6495
    %v6497 = vpop.f32.mrf.mxu0
    %6498 = vdwg.mxu0
    %6499 = vmatpush.bf16.msra.mxu0 %v6388
    %6500 = vmatpush.bf16.msra.mxu0 %v6386
    %6501 = vmatpush.bf16.msra.mxu0 %v6384
    %6502 = vmatpush.bf16.msra.mxu0 %v6382
    %6503 = vmatpush.bf16.msra.mxu0 %v6380
    %6504 = vmatpush.bf16.msra.mxu0 %v6378
    %6505 = vmatpush.bf16.msra.mxu0 %v6376
    %6506 = vmatpush.bf16.msra.mxu0 %v6374
    %6507 = vmatmul.bf16.gmra.mxu0 %v6093
    %v6508 = vpop.f32.mrf.mxu0
    %v6509 = vadd.f32 %v6496, %v6508
    %v6510 = vpop.f32.mrf.mxu0
    %6511 = vdwg.mxu0
    %6512 = vmatpush.bf16.msra.mxu0 %v6404
    %6513 = vmatpush.bf16.msra.mxu0 %v6402
    %6514 = vmatpush.bf16.msra.mxu0 %v6400
    %6515 = vmatpush.bf16.msra.mxu0 %v6398
    %6516 = vmatpush.bf16.msra.mxu0 %v6396
    %6517 = vmatpush.bf16.msra.mxu0 %v6394
    %6518 = vmatpush.bf16.msra.mxu0 %v6392
    %6519 = vmatpush.bf16.msra.mxu0 %v6390
    %6520 = vmatmul.bf16.gmra.mxu0 %v6094
    %v6521 = vpop.f32.mrf.mxu0
    %v6522 = vadd.f32 %v6509, %v6521
    %v6523 = vpop.f32.mrf.mxu0
    %6524 = vdwg.mxu0
    %6525 = vmatpush.bf16.msra.mxu0 %v6420
    %6526 = vmatpush.bf16.msra.mxu0 %v6418
    %6527 = vmatpush.bf16.msra.mxu0 %v6416
    %6528 = vmatpush.bf16.msra.mxu0 %v6414
    %6529 = vmatpush.bf16.msra.mxu0 %v6412
    %6530 = vmatpush.bf16.msra.mxu0 %v6410
    %6531 = vmatpush.bf16.msra.mxu0 %v6408
    %6532 = vmatpush.bf16.msra.mxu0 %v6406
    %6533 = vmatmul.bf16.gmra.mxu0 %v6095
    %v6534 = vpop.f32.mrf.mxu0
    %v6535 = vadd.f32 %v6522, %v6534
    %v6536 = vpop.f32.mrf.mxu0
    %6537 = vdwg.mxu0
    %6538 = vmatpush.bf16.msra.mxu0 %v6373
    %6539 = vmatpush.bf16.msra.mxu0 %v6371
    %6540 = vmatpush.bf16.msra.mxu0 %v6369
    %6541 = vmatpush.bf16.msra.mxu0 %v6367
    %6542 = vmatpush.bf16.msra.mxu0 %v6365
    %6543 = vmatpush.bf16.msra.mxu0 %v6363
    %6544 = vmatpush.bf16.msra.mxu0 %v6361
    %6545 = vmatpush.bf16.msra.mxu0 %v6359
    %6546 = vmatmul.bf16.gmra.mxu0 %v6092
    %v6547 = vpop.f32.mrf.mxu0
    %v6548 = vadd.f32 %v6163, %v6547
    %v6549 = vpop.f32.mrf.mxu0
    %6550 = vdwg.mxu0
    %6551 = vmatpush.bf16.msra.mxu0 %v6389
    %6552 = vmatpush.bf16.msra.mxu0 %v6387
    %6553 = vmatpush.bf16.msra.mxu0 %v6385
    %6554 = vmatpush.bf16.msra.mxu0 %v6383
    %6555 = vmatpush.bf16.msra.mxu0 %v6381
    %6556 = vmatpush.bf16.msra.mxu0 %v6379
    %6557 = vmatpush.bf16.msra.mxu0 %v6377
    %6558 = vmatpush.bf16.msra.mxu0 %v6375
    %6559 = vmatmul.bf16.gmra.mxu0 %v6093
    %v6560 = vpop.f32.mrf.mxu0
    %v6561 = vadd.f32 %v6548, %v6560
    %v6562 = vpop.f32.mrf.mxu0
    %6563 = vdwg.mxu0
    %6564 = vmatpush.bf16.msra.mxu0 %v6405
    %6565 = vmatpush.bf16.msra.mxu0 %v6403
    %6566 = vmatpush.bf16.msra.mxu0 %v6401
    %6567 = vmatpush.bf16.msra.mxu0 %v6399
    %6568 = vmatpush.bf16.msra.mxu0 %v6397
    %6569 = vmatpush.bf16.msra.mxu0 %v6395
    %6570 = vmatpush.bf16.msra.mxu0 %v6393
    %6571 = vmatpush.bf16.msra.mxu0 %v6391
    %6572 = vmatmul.bf16.gmra.mxu0 %v6094
    %v6573 = vpop.f32.mrf.mxu0
    %v6574 = vadd.f32 %v6561, %v6573
    %v6575 = vpop.f32.mrf.mxu0
    %6576 = vdwg.mxu0
    %6577 = vmatpush.bf16.msra.mxu0 %v6421
    %6578 = vmatpush.bf16.msra.mxu0 %v6419
    %6579 = vmatpush.bf16.msra.mxu0 %v6417
    %6580 = vmatpush.bf16.msra.mxu0 %v6415
    %6581 = vmatpush.bf16.msra.mxu0 %v6413
    %6582 = vmatpush.bf16.msra.mxu0 %v6411
    %6583 = vmatpush.bf16.msra.mxu0 %v6409
    %6584 = vmatpush.bf16.msra.mxu0 %v6407
    %6585 = vmatmul.bf16.gmra.mxu0 %v6095
    %v6586 = vpop.f32.mrf.mxu0
    %v6587 = vadd.f32 %v6574, %v6586
    %v6588 = vpop.f32.mrf.mxu0
    %6589 = vdwg.mxu0
    %v6590 = vmax.f32 %v6535, 0.0
    %v6591 = vmax.f32 %v6587, 0.0
    %v6592 = vpack.c.bf16 %v6590, %v6590
    %v6593 = vpack.c.bf16 %v6591, %v6591
    %v6594 = vld [vmem:[#allocation9] sm:$0xff]
    %v6595 = vld [vmem:[#allocation9 + $0x8] sm:$0xff]
    %v6596 = vld [vmem:[#allocation9 + $0x10] sm:$0xff]
    %v6597 = vld [vmem:[#allocation9 + $0x18] sm:$0xff]
    %v6598 = vld [vmem:[#allocation9 + $0x20] sm:$0xff]
    %v6599 = vld [vmem:[#allocation9 + $0x28] sm:$0xff]
    %v6600 = vld [vmem:[#allocation9 + $0x30] sm:$0xff]
    %v6601 = vld [vmem:[#allocation9 + $0x38] sm:$0xff]
    %v6602 = vld [vmem:[#allocation9 + $0x40] sm:$0xff]
    %v6603 = vld [vmem:[#allocation9 + $0x48] sm:$0xff]
    %v6604 = vld [vmem:[#allocation9 + $0x50] sm:$0xff]
    %v6605 = vld [vmem:[#allocation9 + $0x58] sm:$0xff]
    %v6606 = vld [vmem:[#allocation9 + $0x60] sm:$0xff]
    %v6607 = vld [vmem:[#allocation9 + $0x68] sm:$0xff]
    %v6608 = vld [vmem:[#allocation9 + $0x70] sm:$0xff]
    %v6609 = vld [vmem:[#allocation9 + $0x78] sm:$0xff]
    %v6610 = vld [vmem:[#allocation9 + $0x80] sm:$0xff]
    %v6611 = vld [vmem:[#allocation9 + $0x88] sm:$0xff]
    %v6612 = vld [vmem:[#allocation9 + $0x90] sm:$0xff]
    %v6613 = vld [vmem:[#allocation9 + $0x98] sm:$0xff]
    %v6614 = vld [vmem:[#allocation9 + $0xa0] sm:$0xff]
    %v6615 = vld [vmem:[#allocation9 + $0xa8] sm:$0xff]
    %v6616 = vld [vmem:[#allocation9 + $0xb0] sm:$0xff]
    %v6617 = vld [vmem:[#allocation9 + $0xb8] sm:$0xff]
    %v6618 = vld [vmem:[#allocation9 + $0xc0] sm:$0xff]
    %v6619 = vld [vmem:[#allocation9 + $0xc8] sm:$0xff]
    %v6620 = vld [vmem:[#allocation9 + $0xd0] sm:$0xff]
    %v6621 = vld [vmem:[#allocation9 + $0xd8] sm:$0xff]
    %v6622 = vld [vmem:[#allocation9 + $0xe0] sm:$0xff]
    %v6623 = vld [vmem:[#allocation9 + $0xe8] sm:$0xff]
    %v6624 = vld [vmem:[#allocation9 + $0xf0] sm:$0xff]
    %v6625 = vld [vmem:[#allocation9 + $0xf8] sm:$0xff]
    %v6626 = vld [vmem:[#allocation10] sm:$0x3]
    %v6628 = vperm.slane %v6626, 0
    %v6629 = vperm.slane %v6626, 1
    %v6664 = vunpack.c.l.b16 %v6594
    %v6665 = vunpack.c.h.b16 %v6594
    %v6666 = vunpack.c.l.b16 %v6595
    %v6667 = vunpack.c.h.b16 %v6595
    %v6668 = vunpack.c.l.b16 %v6596
    %v6669 = vunpack.c.h.b16 %v6596
    %v6670 = vunpack.c.l.b16 %v6597
    %v6671 = vunpack.c.h.b16 %v6597
    %v6672 = vunpack.c.l.b16 %v6598
    %v6673 = vunpack.c.h.b16 %v6598
    %v6674 = vunpack.c.l.b16 %v6599
    %v6675 = vunpack.c.h.b16 %v6599
    %v6676 = vunpack.c.l.b16 %v6600
    %v6677 = vunpack.c.h.b16 %v6600
    %v6678 = vunpack.c.l.b16 %v6601
    %v6679 = vunpack.c.h.b16 %v6601
    %v6680 = vunpack.c.l.b16 %v6602
    %v6681 = vunpack.c.h.b16 %v6602
    %v6682 = vunpack.c.l.b16 %v6603
    %v6683 = vunpack.c.h.b16 %v6603
    %v6684 = vunpack.c.l.b16 %v6604
    %v6685 = vunpack.c.h.b16 %v6604
    %v6686 = vunpack.c.l.b16 %v6605
    %v6687 = vunpack.c.h.b16 %v6605
    %v6688 = vunpack.c.l.b16 %v6606
    %v6689 = vunpack.c.h.b16 %v6606
    %v6690 = vunpack.c.l.b16 %v6607
    %v6691 = vunpack.c.h.b16 %v6607
    %v6692 = vunpack.c.l.b16 %v6608
    %v6693 = vunpack.c.h.b16 %v6608
    %v6694 = vunpack.c.l.b16 %v6609
    %v6695 = vunpack.c.h.b16 %v6609
    %v6696 = vunpack.c.l.b16 %v6610
    %v6697 = vunpack.c.h.b16 %v6610
    %v6698 = vunpack.c.l.b16 %v6611
    %v6699 = vunpack.c.h.b16 %v6611
    %v6700 = vunpack.c.l.b16 %v6612
    %v6701 = vunpack.c.h.b16 %v6612
    %v6702 = vunpack.c.l.b16 %v6613
    %v6703 = vunpack.c.h.b16 %v6613
    %v6704 = vunpack.c.l.b16 %v6614
    %v6705 = vunpack.c.h.b16 %v6614
    %v6706 = vunpack.c.l.b16 %v6615
    %v6707 = vunpack.c.h.b16 %v6615
    %v6708 = vunpack.c.l.b16 %v6616
    %v6709 = vunpack.c.h.b16 %v6616
    %v6710 = vunpack.c.l.b16 %v6617
    %v6711 = vunpack.c.h.b16 %v6617
    %v6712 = vunpack.c.l.b16 %v6618
    %v6713 = vunpack.c.h.b16 %v6618
    %v6714 = vunpack.c.l.b16 %v6619
    %v6715 = vunpack.c.h.b16 %v6619
    %v6716 = vunpack.c.l.b16 %v6620
    %v6717 = vunpack.c.h.b16 %v6620
    %v6718 = vunpack.c.l.b16 %v6621
    %v6719 = vunpack.c.h.b16 %v6621
    %v6720 = vunpack.c.l.b16 %v6622
    %v6721 = vunpack.c.h.b16 %v6622
    %v6722 = vunpack.c.l.b16 %v6623
    %v6723 = vunpack.c.h.b16 %v6623
    %v6724 = vunpack.c.l.b16 %v6624
    %v6725 = vunpack.c.h.b16 %v6624
    %v6726 = vunpack.c.l.b16 %v6625
    %v6727 = vunpack.c.h.b16 %v6625
    %v6728 = vpack.c.b16 %v6666, %v6664
    %v6729 = vpack.c.b16 %v6667, %v6665
    %v6730 = vpack.c.b16 %v6670, %v6668
    %v6731 = vpack.c.b16 %v6671, %v6669
    %v6732 = vpack.c.b16 %v6674, %v6672
    %v6733 = vpack.c.b16 %v6675, %v6673
    %v6734 = vpack.c.b16 %v6678, %v6676
    %v6735 = vpack.c.b16 %v6679, %v6677
    %v6736 = vpack.c.b16 %v6682, %v6680
    %v6737 = vpack.c.b16 %v6683, %v6681
    %v6738 = vpack.c.b16 %v6686, %v6684
    %v6739 = vpack.c.b16 %v6687, %v6685
    %v6740 = vpack.c.b16 %v6690, %v6688
    %v6741 = vpack.c.b16 %v6691, %v6689
    %v6742 = vpack.c.b16 %v6694, %v6692
    %v6743 = vpack.c.b16 %v6695, %v6693
    %v6744 = vpack.c.b16 %v6698, %v6696
    %v6745 = vpack.c.b16 %v6699, %v6697
    %v6746 = vpack.c.b16 %v6702, %v6700
    %v6747 = vpack.c.b16 %v6703, %v6701
    %v6748 = vpack.c.b16 %v6706, %v6704
    %v6749 = vpack.c.b16 %v6707, %v6705
    %v6750 = vpack.c.b16 %v6710, %v6708
    %v6751 = vpack.c.b16 %v6711, %v6709
    %v6752 = vpack.c.b16 %v6714, %v6712
    %v6753 = vpack.c.b16 %v6715, %v6713
    %v6754 = vpack.c.b16 %v6718, %v6716
    %v6755 = vpack.c.b16 %v6719, %v6717
    %v6756 = vpack.c.b16 %v6722, %v6720
    %v6757 = vpack.c.b16 %v6723, %v6721
    %v6758 = vpack.c.b16 %v6726, %v6724
    %v6759 = vpack.c.b16 %v6727, %v6725
    %6792 = vmatpush.bf16.msra.mxu0 %v6742
    %6793 = vmatpush.bf16.msra.mxu0 %v6740
    %6794 = vmatpush.bf16.msra.mxu0 %v6738
    %6795 = vmatpush.bf16.msra.mxu0 %v6736
    %6796 = vmatpush.bf16.msra.mxu0 %v6734
    %6797 = vmatpush.bf16.msra.mxu0 %v6732
    %6798 = vmatpush.bf16.msra.mxu0 %v6730
    %6799 = vmatpush.bf16.msra.mxu0 %v6728
    %6800 = vmatmul.bf16.gmra.mxu0 %v6592
    %v6801 = vpop.f32.mrf.mxu0
    %v6802 = vadd.f32 %v6628, %v6801
    %v6803 = vpop.f32.mrf.mxu0
    %6804 = vdwg.mxu0
    %6805 = vmatpush.bf16.msra.mxu0 %v6758
    %6806 = vmatpush.bf16.msra.mxu0 %v6756
    %6807 = vmatpush.bf16.msra.mxu0 %v6754
    %6808 = vmatpush.bf16.msra.mxu0 %v6752
    %6809 = vmatpush.bf16.msra.mxu0 %v6750
    %6810 = vmatpush.bf16.msra.mxu0 %v6748
    %6811 = vmatpush.bf16.msra.mxu0 %v6746
    %6812 = vmatpush.bf16.msra.mxu0 %v6744
    %6813 = vmatmul.bf16.gmra.mxu0 %v6593
    %v6814 = vpop.f32.mrf.mxu0
    %v6815 = vadd.f32 %v6802, %v6814
    %v6816 = vpop.f32.mrf.mxu0
    %6817 = vdwg.mxu0
    %6818 = vmatpush.bf16.msra.mxu0 %v6743
    %6819 = vmatpush.bf16.msra.mxu0 %v6741
    %6820 = vmatpush.bf16.msra.mxu0 %v6739
    %6821 = vmatpush.bf16.msra.mxu0 %v6737
    %6822 = vmatpush.bf16.msra.mxu0 %v6735
    %6823 = vmatpush.bf16.msra.mxu0 %v6733
    %6824 = vmatpush.bf16.msra.mxu0 %v6731
    %6825 = vmatpush.bf16.msra.mxu0 %v6729
    %6826 = vmatmul.bf16.gmra.mxu0 %v6592
    %v6827 = vpop.f32.mrf.mxu0
    %v6828 = vadd.f32 %v6629, %v6827
    %v6829 = vpop.f32.mrf.mxu0
    %6830 = vdwg.mxu0
    %6831 = vmatpush.bf16.msra.mxu0 %v6759
    %6832 = vmatpush.bf16.msra.mxu0 %v6757
    %6833 = vmatpush.bf16.msra.mxu0 %v6755
    %6834 = vmatpush.bf16.msra.mxu0 %v6753
    %6835 = vmatpush.bf16.msra.mxu0 %v6751
    %6836 = vmatpush.bf16.msra.mxu0 %v6749
    %6837 = vmatpush.bf16.msra.mxu0 %v6747
    %6838 = vmatpush.bf16.msra.mxu0 %v6745
    %6839 = vmatmul.bf16.gmra.mxu0 %v6593
    %v6840 = vpop.f32.mrf.mxu0
    %v6841 = vadd.f32 %v6828, %v6840
    %v6842 = vpop.f32.mrf.mxu0
    %6843 = vdwg.mxu0
    %v6844 = vmul.f32 %v6841, 0.5
    %v6845 = vmul.f32 %v6844, 1.442695
    %v6846 = vpow.pop %v6845
    %v6847 = vld [vmem:[%s1] sm:$0xff]
    %v6848 = vmul.f32 %v6846, %v6847
    %v6849 = vadd.f32 %v6815, %v6848
    %v6850 = vpack.c.bf16 %v6849, %v6849
    %v6851 = vld [vmem:[#allocation12] sm:$0xff]
    %v6852 = vld [vmem:[#allocation12 + $0x8] sm:$0xff]
    %v6853 = vld [vmem:[#allocation12 + $0x10] sm:$0xff]
    %v6854 = vld [vmem:[#allocation12 + $0x18] sm:$0xff]
    %v6855 = vld [vmem:[#allocation12 + $0x20] sm:$0xff]
    %v6856 = vld [vmem:[#allocation12 + $0x28] sm:$0xff]
    %v6857 = vld [vmem:[#allocation12 + $0x30] sm:$0xff]
    %v6858 = vld [vmem:[#allocation12 + $0x38] sm:$0xff]
    %v6859 = vld [vmem:[#allocation12 + $0x40] sm:$0xff]
    %v6860 = vld [vmem:[#allocation12 + $0x48] sm:$0xff]
    %v6861 = vld [vmem:[#allocation12 + $0x50] sm:$0xff]
    %v6862 = vld [vmem:[#allocation12 + $0x58] sm:$0xff]
    %v6863 = vld [vmem:[#allocation12 + $0x60] sm:$0xff]
    %v6864 = vld [vmem:[#allocation12 + $0x68] sm:$0xff]
    %v6865 = vld [vmem:[#allocation12 + $0x70] sm:$0xff]
    %v6866 = vld [vmem:[#allocation12 + $0x78] sm:$0xff]
    %v6867 = vld [vmem:[#allocation13] sm:$0x3]
    %v6869 = vperm.slane %v6867, 0
    %v6870 = vperm.slane %v6867, 1
    %v6889 = vunpack.c.l.b16 %v6851
    %v6890 = vunpack.c.h.b16 %v6851
    %v6891 = vunpack.c.l.b16 %v6852
    %v6892 = vunpack.c.h.b16 %v6852
    %v6893 = vunpack.c.l.b16 %v6853
    %v6894 = vunpack.c.h.b16 %v6853
    %v6895 = vunpack.c.l.b16 %v6854
    %v6896 = vunpack.c.h.b16 %v6854
    %v6897 = vunpack.c.l.b16 %v6855
    %v6898 = vunpack.c.h.b16 %v6855
    %v6899 = vunpack.c.l.b16 %v6856
    %v6900 = vunpack.c.h.b16 %v6856
    %v6901 = vunpack.c.l.b16 %v6857
    %v6902 = vunpack.c.h.b16 %v6857
    %v6903 = vunpack.c.l.b16 %v6858
    %v6904 = vunpack.c.h.b16 %v6858
    %v6905 = vunpack.c.l.b16 %v6859
    %v6906 = vunpack.c.h.b16 %v6859
    %v6907 = vunpack.c.l.b16 %v6860
    %v6908 = vunpack.c.h.b16 %v6860
    %v6909 = vunpack.c.l.b16 %v6861
    %v6910 = vunpack.c.h.b16 %v6861
    %v6911 = vunpack.c.l.b16 %v6862
    %v6912 = vunpack.c.h.b16 %v6862
    %v6913 = vunpack.c.l.b16 %v6863
    %v6914 = vunpack.c.h.b16 %v6863
    %v6915 = vunpack.c.l.b16 %v6864
    %v6916 = vunpack.c.h.b16 %v6864
    %v6917 = vunpack.c.l.b16 %v6865
    %v6918 = vunpack.c.h.b16 %v6865
    %v6919 = vunpack.c.l.b16 %v6866
    %v6920 = vunpack.c.h.b16 %v6866
    %v6921 = vpack.c.b16 %v6891, %v6889
    %v6922 = vpack.c.b16 %v6892, %v6890
    %v6923 = vpack.c.b16 %v6895, %v6893
    %v6924 = vpack.c.b16 %v6896, %v6894
    %v6925 = vpack.c.b16 %v6899, %v6897
    %v6926 = vpack.c.b16 %v6900, %v6898
    %v6927 = vpack.c.b16 %v6903, %v6901
    %v6928 = vpack.c.b16 %v6904, %v6902
    %v6929 = vpack.c.b16 %v6907, %v6905
    %v6930 = vpack.c.b16 %v6908, %v6906
    %v6931 = vpack.c.b16 %v6911, %v6909
    %v6932 = vpack.c.b16 %v6912, %v6910
    %v6933 = vpack.c.b16 %v6915, %v6913
    %v6934 = vpack.c.b16 %v6916, %v6914
    %v6935 = vpack.c.b16 %v6919, %v6917
    %v6936 = vpack.c.b16 %v6920, %v6918
    %6953 = vmatpush.bf16.msra.mxu0 %v6935
    %6954 = vmatpush.bf16.msra.mxu0 %v6933
    %6955 = vmatpush.bf16.msra.mxu0 %v6931
    %6956 = vmatpush.bf16.msra.mxu0 %v6929
    %6957 = vmatpush.bf16.msra.mxu0 %v6927
    %6958 = vmatpush.bf16.msra.mxu0 %v6925
    %6959 = vmatpush.bf16.msra.mxu0 %v6923
    %6960 = vmatpush.bf16.msra.mxu0 %v6921
    %6961 = vmatmul.bf16.gmra.mxu0 %v6850
    %v6962 = vpop.f32.mrf.mxu0
    %v6963 = vadd.f32 %v6869, %v6962
    %v6964 = vpop.f32.mrf.mxu0
    %6965 = vdwg.mxu0
    %6966 = vmatpush.bf16.msra.mxu0 %v6936
    %6967 = vmatpush.bf16.msra.mxu0 %v6934
    %6968 = vmatpush.bf16.msra.mxu0 %v6932
    %6969 = vmatpush.bf16.msra.mxu0 %v6930
    %6970 = vmatpush.bf16.msra.mxu0 %v6928
    %6971 = vmatpush.bf16.msra.mxu0 %v6926
    %6972 = vmatpush.bf16.msra.mxu0 %v6924
    %6973 = vmatpush.bf16.msra.mxu0 %v6922
    %6974 = vmatmul.bf16.gmra.mxu0 %v6850
    %v6975 = vpop.f32.mrf.mxu0
    %v6976 = vadd.f32 %v6870, %v6975
    %v6977 = vpop.f32.mrf.mxu0
    %6978 = vdwg.mxu0
    %v6979 = vmax.f32 %v6963, 0.0
    %v6980 = vmax.f32 %v6976, 0.0
    %v6981 = vpack.c.bf16 %v6979, %v6979
    %v6982 = vpack.c.bf16 %v6980, %v6980
    %v6983 = vld [vmem:[%s10] sm:$0xff]
    %v6984 = vld [vmem:[%s10 + $0x8] sm:$0xff]
    %v6985 = vld [vmem:[%s10 + $0x10] sm:$0xff]
    %v6986 = vld [vmem:[%s10 + $0x18] sm:$0xff]
    %v6987 = vld [vmem:[%s10 + $0x20] sm:$0xff]
    %v6988 = vld [vmem:[%s10 + $0x28] sm:$0xff]
    %v6989 = vld [vmem:[%s10 + $0x30] sm:$0xff]
    %v6990 = vld [vmem:[%s10 + $0x38] sm:$0xff]
    %v6991 = vld [vmem:[%s10 + $0x40] sm:$0xff]
    %v6992 = vld [vmem:[%s10 + $0x48] sm:$0xff]
    %v6993 = vld [vmem:[%s10 + $0x50] sm:$0xff]
    %v6994 = vld [vmem:[%s10 + $0x58] sm:$0xff]
    %v6995 = vld [vmem:[%s10 + $0x60] sm:$0xff]
    %v6996 = vld [vmem:[%s10 + $0x68] sm:$0xff]
    %v6997 = vld [vmem:[%s10 + $0x70] sm:$0xff]
    %v6998 = vld [vmem:[%s10 + $0x78] sm:$0xff]
    %v6999 = vld [vmem:[%s10 + $0x80] sm:$0xff]
    %v7000 = vld [vmem:[%s10 + $0x88] sm:$0xff]
    %v7001 = vld [vmem:[%s10 + $0x90] sm:$0xff]
    %v7002 = vld [vmem:[%s10 + $0x98] sm:$0xff]
    %v7003 = vld [vmem:[%s10 + $0xa0] sm:$0xff]
    %v7004 = vld [vmem:[%s10 + $0xa8] sm:$0xff]
    %v7005 = vld [vmem:[%s10 + $0xb0] sm:$0xff]
    %v7006 = vld [vmem:[%s10 + $0xb8] sm:$0xff]
    %v7007 = vld [vmem:[%s10 + $0xc0] sm:$0xff]
    %v7008 = vld [vmem:[%s10 + $0xc8] sm:$0xff]
    %v7009 = vld [vmem:[%s10 + $0xd0] sm:$0xff]
    %v7010 = vld [vmem:[%s10 + $0xd8] sm:$0xff]
    %v7011 = vld [vmem:[%s10 + $0xe0] sm:$0xff]
    %v7012 = vld [vmem:[%s10 + $0xe8] sm:$0xff]
    %v7013 = vld [vmem:[%s10 + $0xf0] sm:$0xff]
    %v7014 = vld [vmem:[%s10 + $0xf8] sm:$0xff]
    %v7015 = vld [vmem:[%s10 + $0x100] sm:$0xff]
    %v7016 = vld [vmem:[%s10 + $0x108] sm:$0xff]
    %v7017 = vld [vmem:[%s10 + $0x110] sm:$0xff]
    %v7018 = vld [vmem:[%s10 + $0x118] sm:$0xff]
    %v7019 = vld [vmem:[%s10 + $0x120] sm:$0xff]
    %v7020 = vld [vmem:[%s10 + $0x128] sm:$0xff]
    %v7021 = vld [vmem:[%s10 + $0x130] sm:$0xff]
    %v7022 = vld [vmem:[%s10 + $0x138] sm:$0xff]
    %v7023 = vld [vmem:[%s10 + $0x140] sm:$0xff]
    %v7024 = vld [vmem:[%s10 + $0x148] sm:$0xff]
    %v7025 = vld [vmem:[%s10 + $0x150] sm:$0xff]
    %v7026 = vld [vmem:[%s10 + $0x158] sm:$0xff]
    %v7027 = vld [vmem:[%s10 + $0x160] sm:$0xff]
    %v7028 = vld [vmem:[%s10 + $0x168] sm:$0xff]
    %v7029 = vld [vmem:[%s10 + $0x170] sm:$0xff]
    %v7030 = vld [vmem:[%s10 + $0x178] sm:$0xff]
    %v7031 = vld [vmem:[%s10 + $0x180] sm:$0xff]
    %v7032 = vld [vmem:[%s10 + $0x188] sm:$0xff]
    %v7033 = vld [vmem:[%s10 + $0x190] sm:$0xff]
    %v7034 = vld [vmem:[%s10 + $0x198] sm:$0xff]
    %v7035 = vld [vmem:[%s10 + $0x1a0] sm:$0xff]
    %v7036 = vld [vmem:[%s10 + $0x1a8] sm:$0xff]
    %v7037 = vld [vmem:[%s10 + $0x1b0] sm:$0xff]
    %v7038 = vld [vmem:[%s10 + $0x1b8] sm:$0xff]
    %v7039 = vld [vmem:[%s10 + $0x1c0] sm:$0xff]
    %v7040 = vld [vmem:[%s10 + $0x1c8] sm:$0xff]
    %v7041 = vld [vmem:[%s10 + $0x1d0] sm:$0xff]
    %v7042 = vld [vmem:[%s10 + $0x1d8] sm:$0xff]
    %v7043 = vld [vmem:[%s10 + $0x1e0] sm:$0xff]
    %v7044 = vld [vmem:[%s10 + $0x1e8] sm:$0xff]
    %v7045 = vld [vmem:[%s10 + $0x1f0] sm:$0xff]
    %v7046 = vld [vmem:[%s10 + $0x1f8] sm:$0xff]
    %v7047 = vld [vmem:[%s10 + $0x200] sm:$0xff]
    %v7048 = vld [vmem:[%s10 + $0x208] sm:$0xff]
    %v7049 = vld [vmem:[%s10 + $0x210] sm:$0xff]
    %v7050 = vld [vmem:[%s10 + $0x218] sm:$0xff]
    %v7051 = vld [vmem:[%s10 + $0x220] sm:$0xff]
    %v7052 = vld [vmem:[%s10 + $0x228] sm:$0xff]
    %v7053 = vld [vmem:[%s10 + $0x230] sm:$0xff]
    %v7054 = vld [vmem:[%s10 + $0x238] sm:$0xff]
    %v7055 = vld [vmem:[%s10 + $0x240] sm:$0xff]
    %v7056 = vld [vmem:[%s10 + $0x248] sm:$0xff]
    %v7057 = vld [vmem:[%s10 + $0x250] sm:$0xff]
    %v7058 = vld [vmem:[%s10 + $0x258] sm:$0xff]
    %v7059 = vld [vmem:[%s10 + $0x260] sm:$0xff]
    %v7060 = vld [vmem:[%s10 + $0x268] sm:$0xff]
    %v7061 = vld [vmem:[%s10 + $0x270] sm:$0xff]
    %v7062 = vld [vmem:[%s10 + $0x278] sm:$0xff]
    %v7063 = vld [vmem:[%s10 + $0x280] sm:$0xff]
    %v7064 = vld [vmem:[%s10 + $0x288] sm:$0xff]
    %v7065 = vld [vmem:[%s10 + $0x290] sm:$0xff]
    %v7066 = vld [vmem:[%s10 + $0x298] sm:$0xff]
    %v7067 = vld [vmem:[%s10 + $0x2a0] sm:$0xff]
    %v7068 = vld [vmem:[%s10 + $0x2a8] sm:$0xff]
    %v7069 = vld [vmem:[%s10 + $0x2b0] sm:$0xff]
    %v7070 = vld [vmem:[%s10 + $0x2b8] sm:$0xff]
    %v7071 = vld [vmem:[%s10 + $0x2c0] sm:$0xff]
    %v7072 = vld [vmem:[%s10 + $0x2c8] sm:$0xff]
    %v7073 = vld [vmem:[%s10 + $0x2d0] sm:$0xff]
    %v7074 = vld [vmem:[%s10 + $0x2d8] sm:$0xff]
    %v7075 = vld [vmem:[%s10 + $0x2e0] sm:$0xff]
    %v7076 = vld [vmem:[%s10 + $0x2e8] sm:$0xff]
    %v7077 = vld [vmem:[%s10 + $0x2f0] sm:$0xff]
    %v7078 = vld [vmem:[%s10 + $0x2f8] sm:$0xff]
    %v7079 = vld [vmem:[%s10 + $0x300] sm:$0xff]
    %v7080 = vld [vmem:[%s10 + $0x308] sm:$0xff]
    %v7081 = vld [vmem:[%s10 + $0x310] sm:$0xff]
    %v7082 = vld [vmem:[%s10 + $0x318] sm:$0xff]
    %v7083 = vld [vmem:[%s10 + $0x320] sm:$0xff]
    %v7084 = vld [vmem:[%s10 + $0x328] sm:$0xff]
    %v7085 = vld [vmem:[%s10 + $0x330] sm:$0xff]
    %v7086 = vld [vmem:[%s10 + $0x338] sm:$0xff]
    %v7087 = vld [vmem:[%s10 + $0x340] sm:$0xff]
    %v7088 = vld [vmem:[%s10 + $0x348] sm:$0xff]
    %v7089 = vld [vmem:[%s10 + $0x350] sm:$0xff]
    %v7090 = vld [vmem:[%s10 + $0x358] sm:$0xff]
    %v7091 = vld [vmem:[%s10 + $0x360] sm:$0xff]
    %v7092 = vld [vmem:[%s10 + $0x368] sm:$0xff]
    %v7093 = vld [vmem:[%s10 + $0x370] sm:$0xff]
    %v7094 = vld [vmem:[%s10 + $0x378] sm:$0xff]
    %v7095 = vld [vmem:[%s10 + $0x380] sm:$0xff]
    %v7096 = vld [vmem:[%s10 + $0x388] sm:$0xff]
    %v7097 = vld [vmem:[%s10 + $0x390] sm:$0xff]
    %v7098 = vld [vmem:[%s10 + $0x398] sm:$0xff]
    %v7099 = vld [vmem:[%s10 + $0x3a0] sm:$0xff]
    %v7100 = vld [vmem:[%s10 + $0x3a8] sm:$0xff]
    %v7101 = vld [vmem:[%s10 + $0x3b0] sm:$0xff]
    %v7102 = vld [vmem:[%s10 + $0x3b8] sm:$0xff]
    %v7103 = vld [vmem:[%s10 + $0x3c0] sm:$0xff]
    %v7104 = vld [vmem:[%s10 + $0x3c8] sm:$0xff]
    %v7105 = vld [vmem:[%s10 + $0x3d0] sm:$0xff]
    %v7106 = vld [vmem:[%s10 + $0x3d8] sm:$0xff]
    %v7107 = vld [vmem:[%s10 + $0x3e0] sm:$0xff]
    %v7108 = vld [vmem:[%s10 + $0x3e8] sm:$0xff]
    %v7109 = vld [vmem:[%s10 + $0x3f0] sm:$0xff]
    %v7110 = vld [vmem:[%s10 + $0x3f8] sm:$0xff]
    %v7111 = vld [vmem:[%s10 + $0x400] sm:$0xff]
    %v7112 = vld [vmem:[%s10 + $0x408] sm:$0xff]
    %v7113 = vld [vmem:[%s10 + $0x410] sm:$0xff]
    %v7114 = vld [vmem:[%s10 + $0x418] sm:$0xff]
    %v7115 = vld [vmem:[%s10 + $0x420] sm:$0xff]
    %v7116 = vld [vmem:[%s10 + $0x428] sm:$0xff]
    %v7117 = vld [vmem:[%s10 + $0x430] sm:$0xff]
    %v7118 = vld [vmem:[%s10 + $0x438] sm:$0xff]
    %v7119 = vld [vmem:[%s10 + $0x440] sm:$0xff]
    %v7120 = vld [vmem:[%s10 + $0x448] sm:$0xff]
    %v7121 = vld [vmem:[%s10 + $0x450] sm:$0xff]
    %v7122 = vld [vmem:[%s10 + $0x458] sm:$0xff]
    %v7123 = vld [vmem:[%s10 + $0x460] sm:$0xff]
    %v7124 = vld [vmem:[%s10 + $0x468] sm:$0xff]
    %v7125 = vld [vmem:[%s10 + $0x470] sm:$0xff]
    %v7126 = vld [vmem:[%s10 + $0x478] sm:$0xff]
    %v7127 = vld [vmem:[%s10 + $0x480] sm:$0xff]
    %v7128 = vld [vmem:[%s10 + $0x488] sm:$0xff]
    %v7129 = vld [vmem:[%s10 + $0x490] sm:$0xff]
    %v7130 = vld [vmem:[%s10 + $0x498] sm:$0xff]
    %v7131 = vld [vmem:[%s10 + $0x4a0] sm:$0xff]
    %v7132 = vld [vmem:[%s10 + $0x4a8] sm:$0xff]
    %v7133 = vld [vmem:[%s10 + $0x4b0] sm:$0xff]
    %v7134 = vld [vmem:[%s10 + $0x4b8] sm:$0xff]
    %v7135 = vld [vmem:[%s10 + $0x4c0] sm:$0xff]
    %v7136 = vld [vmem:[%s10 + $0x4c8] sm:$0xff]
    %v7137 = vld [vmem:[%s10 + $0x4d0] sm:$0xff]
    %v7138 = vld [vmem:[%s10 + $0x4d8] sm:$0xff]
    %v7139 = vld [vmem:[%s10 + $0x4e0] sm:$0xff]
    %v7140 = vld [vmem:[%s10 + $0x4e8] sm:$0xff]
    %v7141 = vld [vmem:[%s10 + $0x4f0] sm:$0xff]
    %v7142 = vld [vmem:[%s10 + $0x4f8] sm:$0xff]
    %v7143 = vld [vmem:[%s10 + $0x500] sm:$0xff]
    %v7144 = vld [vmem:[%s10 + $0x508] sm:$0xff]
    %v7145 = vld [vmem:[%s10 + $0x510] sm:$0xff]
    %v7146 = vld [vmem:[%s10 + $0x518] sm:$0xff]
    %v7147 = vld [vmem:[%s10 + $0x520] sm:$0xff]
    %v7148 = vld [vmem:[%s10 + $0x528] sm:$0xff]
    %v7149 = vld [vmem:[%s10 + $0x530] sm:$0xff]
    %v7150 = vld [vmem:[%s10 + $0x538] sm:$0xff]
    %v7151 = vld [vmem:[%s10 + $0x540] sm:$0xff]
    %v7152 = vld [vmem:[%s10 + $0x548] sm:$0xff]
    %v7153 = vld [vmem:[%s10 + $0x550] sm:$0xff]
    %v7154 = vld [vmem:[%s10 + $0x558] sm:$0xff]
    %v7155 = vld [vmem:[%s10 + $0x560] sm:$0xff]
    %v7156 = vld [vmem:[%s10 + $0x568] sm:$0xff]
    %v7157 = vld [vmem:[%s10 + $0x570] sm:$0xff]
    %v7158 = vld [vmem:[%s10 + $0x578] sm:$0xff]
    %v7159 = vld [vmem:[%s10 + $0x580] sm:$0xff]
    %v7160 = vld [vmem:[%s10 + $0x588] sm:$0xff]
    %v7161 = vld [vmem:[%s10 + $0x590] sm:$0xff]
    %v7162 = vld [vmem:[%s10 + $0x598] sm:$0xff]
    %v7163 = vld [vmem:[%s10 + $0x5a0] sm:$0xff]
    %v7164 = vld [vmem:[%s10 + $0x5a8] sm:$0xff]
    %v7165 = vld [vmem:[%s10 + $0x5b0] sm:$0xff]
    %v7166 = vld [vmem:[%s10 + $0x5b8] sm:$0xff]
    %v7167 = vld [vmem:[%s10 + $0x5c0] sm:$0xff]
    %v7168 = vld [vmem:[%s10 + $0x5c8] sm:$0xff]
    %v7169 = vld [vmem:[%s10 + $0x5d0] sm:$0xff]
    %v7170 = vld [vmem:[%s10 + $0x5d8] sm:$0xff]
    %v7171 = vld [vmem:[%s10 + $0x5e0] sm:$0xff]
    %v7172 = vld [vmem:[%s10 + $0x5e8] sm:$0xff]
    %v7173 = vld [vmem:[%s10 + $0x5f0] sm:$0xff]
    %v7174 = vld [vmem:[%s10 + $0x5f8] sm:$0xff]
    %v7175 = vld [vmem:[%s10 + $0x600] sm:$0xff]
    %v7176 = vld [vmem:[%s10 + $0x608] sm:$0xff]
    %v7177 = vld [vmem:[%s10 + $0x610] sm:$0xff]
    %v7178 = vld [vmem:[%s10 + $0x618] sm:$0xff]
    %v7179 = vld [vmem:[%s10 + $0x620] sm:$0xff]
    %v7180 = vld [vmem:[%s10 + $0x628] sm:$0xff]
    %v7181 = vld [vmem:[%s10 + $0x630] sm:$0xff]
    %v7182 = vld [vmem:[%s10 + $0x638] sm:$0xff]
    %v7183 = vld [vmem:[%s10 + $0x640] sm:$0xff]
    %v7184 = vld [vmem:[%s10 + $0x648] sm:$0xff]
    %v7185 = vld [vmem:[%s10 + $0x650] sm:$0xff]
    %v7186 = vld [vmem:[%s10 + $0x658] sm:$0xff]
    %v7187 = vld [vmem:[%s10 + $0x660] sm:$0xff]
    %v7188 = vld [vmem:[%s10 + $0x668] sm:$0xff]
    %v7189 = vld [vmem:[%s10 + $0x670] sm:$0xff]
    %v7190 = vld [vmem:[%s10 + $0x678] sm:$0xff]
    %v7191 = vld [vmem:[%s10 + $0x680] sm:$0xff]
    %v7192 = vld [vmem:[%s10 + $0x688] sm:$0xff]
    %v7193 = vld [vmem:[%s10 + $0x690] sm:$0xff]
    %v7194 = vld [vmem:[%s10 + $0x698] sm:$0xff]
    %v7195 = vld [vmem:[%s10 + $0x6a0] sm:$0xff]
    %v7196 = vld [vmem:[%s10 + $0x6a8] sm:$0xff]
    %v7197 = vld [vmem:[%s10 + $0x6b0] sm:$0xff]
    %v7198 = vld [vmem:[%s10 + $0x6b8] sm:$0xff]
    %v7199 = vld [vmem:[%s10 + $0x6c0] sm:$0xff]
    %v7200 = vld [vmem:[%s10 + $0x6c8] sm:$0xff]
    %v7201 = vld [vmem:[%s10 + $0x6d0] sm:$0xff]
    %v7202 = vld [vmem:[%s10 + $0x6d8] sm:$0xff]
    %v7203 = vld [vmem:[%s10 + $0x6e0] sm:$0xff]
    %v7204 = vld [vmem:[%s10 + $0x6e8] sm:$0xff]
    %v7205 = vld [vmem:[%s10 + $0x6f0] sm:$0xff]
    %v7206 = vld [vmem:[%s10 + $0x6f8] sm:$0xff]
    %v7207 = vld [vmem:[%s10 + $0x700] sm:$0xff]
    %v7208 = vld [vmem:[%s10 + $0x708] sm:$0xff]
    %v7209 = vld [vmem:[%s10 + $0x710] sm:$0xff]
    %v7210 = vld [vmem:[%s10 + $0x718] sm:$0xff]
    %v7211 = vld [vmem:[%s10 + $0x720] sm:$0xff]
    %v7212 = vld [vmem:[%s10 + $0x728] sm:$0xff]
    %v7213 = vld [vmem:[%s10 + $0x730] sm:$0xff]
    %v7214 = vld [vmem:[%s10 + $0x738] sm:$0xff]
    %v7215 = vld [vmem:[%s10 + $0x740] sm:$0xff]
    %v7216 = vld [vmem:[%s10 + $0x748] sm:$0xff]
    %v7217 = vld [vmem:[%s10 + $0x750] sm:$0xff]
    %v7218 = vld [vmem:[%s10 + $0x758] sm:$0xff]
    %v7219 = vld [vmem:[%s10 + $0x760] sm:$0xff]
    %v7220 = vld [vmem:[%s10 + $0x768] sm:$0xff]
    %v7221 = vld [vmem:[%s10 + $0x770] sm:$0xff]
    %v7222 = vld [vmem:[%s10 + $0x778] sm:$0xff]
    %v7223 = vld [vmem:[%s10 + $0x780] sm:$0xff]
    %v7224 = vld [vmem:[%s10 + $0x788] sm:$0xff]
    %v7225 = vld [vmem:[%s10 + $0x790] sm:$0xff]
    %v7226 = vld [vmem:[%s10 + $0x798] sm:$0xff]
    %v7227 = vld [vmem:[%s10 + $0x7a0] sm:$0xff]
    %v7228 = vld [vmem:[%s10 + $0x7a8] sm:$0xff]
    %v7229 = vld [vmem:[%s10 + $0x7b0] sm:$0xff]
    %v7230 = vld [vmem:[%s10 + $0x7b8] sm:$0xff]
    %v7231 = vld [vmem:[%s10 + $0x7c0] sm:$0xff]
    %v7232 = vld [vmem:[%s10 + $0x7c8] sm:$0xff]
    %v7233 = vld [vmem:[%s10 + $0x7d0] sm:$0xff]
    %v7234 = vld [vmem:[%s10 + $0x7d8] sm:$0xff]
    %v7235 = vld [vmem:[%s10 + $0x7e0] sm:$0xff]
    %v7236 = vld [vmem:[%s10 + $0x7e8] sm:$0xff]
    %v7237 = vld [vmem:[%s10 + $0x7f0] sm:$0xff]
    %v7238 = vld [vmem:[%s10 + $0x7f8] sm:$0xff]
    %v7239 = vld [vmem:[%s10 + $0x800] sm:$0xff]
    %v7240 = vld [vmem:[%s10 + $0x808] sm:$0xff]
    %v7241 = vld [vmem:[%s10 + $0x810] sm:$0xff]
    %v7242 = vld [vmem:[%s10 + $0x818] sm:$0xff]
    %v7243 = vld [vmem:[%s10 + $0x820] sm:$0xff]
    %v7244 = vld [vmem:[%s10 + $0x828] sm:$0xff]
    %v7245 = vld [vmem:[%s10 + $0x830] sm:$0xff]
    %v7246 = vld [vmem:[%s10 + $0x838] sm:$0xff]
    %v7247 = vld [vmem:[%s10 + $0x840] sm:$0xff]
    %v7248 = vld [vmem:[%s10 + $0x848] sm:$0xff]
    %v7249 = vld [vmem:[%s10 + $0x850] sm:$0xff]
    %v7250 = vld [vmem:[%s10 + $0x858] sm:$0xff]
    %v7251 = vld [vmem:[%s10 + $0x860] sm:$0xff]
    %v7252 = vld [vmem:[%s10 + $0x868] sm:$0xff]
    %v7253 = vld [vmem:[%s10 + $0x870] sm:$0xff]
    %v7254 = vld [vmem:[%s10 + $0x878] sm:$0xff]
    %v7255 = vld [vmem:[%s10 + $0x880] sm:$0xff]
    %v7256 = vld [vmem:[%s10 + $0x888] sm:$0xff]
    %v7257 = vld [vmem:[%s10 + $0x890] sm:$0xff]
    %v7258 = vld [vmem:[%s10 + $0x898] sm:$0xff]
    %v7259 = vld [vmem:[%s10 + $0x8a0] sm:$0xff]
    %v7260 = vld [vmem:[%s10 + $0x8a8] sm:$0xff]
    %v7261 = vld [vmem:[%s10 + $0x8b0] sm:$0xff]
    %v7262 = vld [vmem:[%s10 + $0x8b8] sm:$0xff]
    %v7263 = vld [vmem:[%s10 + $0x8c0] sm:$0xff]
    %v7264 = vld [vmem:[%s10 + $0x8c8] sm:$0xff]
    %v7265 = vld [vmem:[%s10 + $0x8d0] sm:$0xff]
    %v7266 = vld [vmem:[%s10 + $0x8d8] sm:$0xff]
    %v7267 = vld [vmem:[%s10 + $0x8e0] sm:$0xff]
    %v7268 = vld [vmem:[%s10 + $0x8e8] sm:$0xff]
    %v7269 = vld [vmem:[%s10 + $0x8f0] sm:$0xff]
    %v7270 = vld [vmem:[%s10 + $0x8f8] sm:$0xff]
    %v7271 = vld [vmem:[%s10 + $0x900] sm:$0xff]
    %v7272 = vld [vmem:[%s10 + $0x908] sm:$0xff]
    %v7273 = vld [vmem:[%s10 + $0x910] sm:$0xff]
    %v7274 = vld [vmem:[%s10 + $0x918] sm:$0xff]
    %v7275 = vld [vmem:[%s10 + $0x920] sm:$0xff]
    %v7276 = vld [vmem:[%s10 + $0x928] sm:$0xff]
    %v7277 = vld [vmem:[%s10 + $0x930] sm:$0xff]
    %v7278 = vld [vmem:[%s10 + $0x938] sm:$0xff]
    %v7279 = vld [vmem:[%s10 + $0x940] sm:$0xff]
    %v7280 = vld [vmem:[%s10 + $0x948] sm:$0xff]
    %v7281 = vld [vmem:[%s10 + $0x950] sm:$0xff]
    %v7282 = vld [vmem:[%s10 + $0x958] sm:$0xff]
    %v7283 = vld [vmem:[%s10 + $0x960] sm:$0xff]
    %v7284 = vld [vmem:[%s10 + $0x968] sm:$0xff]
    %v7285 = vld [vmem:[%s10 + $0x970] sm:$0xff]
    %v7286 = vld [vmem:[%s10 + $0x978] sm:$0xff]
    %v7287 = vld [vmem:[%s10 + $0x980] sm:$0xff]
    %v7288 = vld [vmem:[%s10 + $0x988] sm:$0xff]
    %v7289 = vld [vmem:[%s10 + $0x990] sm:$0xff]
    %v7290 = vld [vmem:[%s10 + $0x998] sm:$0xff]
    %v7291 = vld [vmem:[%s10 + $0x9a0] sm:$0xff]
    %v7292 = vld [vmem:[%s10 + $0x9a8] sm:$0xff]
    %v7293 = vld [vmem:[%s10 + $0x9b0] sm:$0xff]
    %v7294 = vld [vmem:[%s10 + $0x9b8] sm:$0xff]
    %v7295 = vld [vmem:[%s10 + $0x9c0] sm:$0xff]
    %v7296 = vld [vmem:[%s10 + $0x9c8] sm:$0xff]
    %v7297 = vld [vmem:[%s10 + $0x9d0] sm:$0xff]
    %v7298 = vld [vmem:[%s10 + $0x9d8] sm:$0xff]
    %v7299 = vld [vmem:[%s10 + $0x9e0] sm:$0xff]
    %v7300 = vld [vmem:[%s10 + $0x9e8] sm:$0xff]
    %v7301 = vld [vmem:[%s10 + $0x9f0] sm:$0xff]
    %v7302 = vld [vmem:[%s10 + $0x9f8] sm:$0xff]
    %v7303 = vld [vmem:[%s10 + $0xa00] sm:$0xff]
    %v7304 = vld [vmem:[%s10 + $0xa08] sm:$0xff]
    %v7305 = vld [vmem:[%s10 + $0xa10] sm:$0xff]
    %v7306 = vld [vmem:[%s10 + $0xa18] sm:$0xff]
    %v7307 = vld [vmem:[%s10 + $0xa20] sm:$0xff]
    %v7308 = vld [vmem:[%s10 + $0xa28] sm:$0xff]
    %v7309 = vld [vmem:[%s10 + $0xa30] sm:$0xff]
    %v7310 = vld [vmem:[%s10 + $0xa38] sm:$0xff]
    %v7311 = vld [vmem:[%s10 + $0xa40] sm:$0xff]
    %v7312 = vld [vmem:[%s10 + $0xa48] sm:$0xff]
    %v7313 = vld [vmem:[%s10 + $0xa50] sm:$0xff]
    %v7314 = vld [vmem:[%s10 + $0xa58] sm:$0xff]
    %v7315 = vld [vmem:[%s10 + $0xa60] sm:$0xff]
    %v7316 = vld [vmem:[%s10 + $0xa68] sm:$0xff]
    %v7317 = vld [vmem:[%s10 + $0xa70] sm:$0xff]
    %v7318 = vld [vmem:[%s10 + $0xa78] sm:$0xff]
    %v7319 = vld [vmem:[%s10 + $0xa80] sm:$0xff]
    %v7320 = vld [vmem:[%s10 + $0xa88] sm:$0xff]
    %v7321 = vld [vmem:[%s10 + $0xa90] sm:$0xff]
    %v7322 = vld [vmem:[%s10 + $0xa98] sm:$0xff]
    %v7323 = vld [vmem:[%s10 + $0xaa0] sm:$0xff]
    %v7324 = vld [vmem:[%s10 + $0xaa8] sm:$0xff]
    %v7325 = vld [vmem:[%s10 + $0xab0] sm:$0xff]
    %v7326 = vld [vmem:[%s10 + $0xab8] sm:$0xff]
    %v7327 = vld [vmem:[%s10 + $0xac0] sm:$0xff]
    %v7328 = vld [vmem:[%s10 + $0xac8] sm:$0xff]
    %v7329 = vld [vmem:[%s10 + $0xad0] sm:$0xff]
    %v7330 = vld [vmem:[%s10 + $0xad8] sm:$0xff]
    %v7331 = vld [vmem:[%s10 + $0xae0] sm:$0xff]
    %v7332 = vld [vmem:[%s10 + $0xae8] sm:$0xff]
    %v7333 = vld [vmem:[%s10 + $0xaf0] sm:$0xff]
    %v7334 = vld [vmem:[%s10 + $0xaf8] sm:$0xff]
    %v7335 = vld [vmem:[%s10 + $0xb00] sm:$0xff]
    %v7336 = vld [vmem:[%s10 + $0xb08] sm:$0xff]
    %v7337 = vld [vmem:[%s10 + $0xb10] sm:$0xff]
    %v7338 = vld [vmem:[%s10 + $0xb18] sm:$0xff]
    %v7339 = vld [vmem:[%s10 + $0xb20] sm:$0xff]
    %v7340 = vld [vmem:[%s10 + $0xb28] sm:$0xff]
    %v7341 = vld [vmem:[%s10 + $0xb30] sm:$0xff]
    %v7342 = vld [vmem:[%s10 + $0xb38] sm:$0xff]
    %v7343 = vld [vmem:[%s10 + $0xb40] sm:$0xff]
    %v7344 = vld [vmem:[%s10 + $0xb48] sm:$0xff]
    %v7345 = vld [vmem:[%s10 + $0xb50] sm:$0xff]
    %v7346 = vld [vmem:[%s10 + $0xb58] sm:$0xff]
    %v7347 = vld [vmem:[%s10 + $0xb60] sm:$0xff]
    %v7348 = vld [vmem:[%s10 + $0xb68] sm:$0xff]
    %v7349 = vld [vmem:[%s10 + $0xb70] sm:$0xff]
    %v7350 = vld [vmem:[%s10 + $0xb78] sm:$0xff]
    %v7351 = vld [vmem:[%s10 + $0xb80] sm:$0xff]
    %v7352 = vld [vmem:[%s10 + $0xb88] sm:$0xff]
    %v7353 = vld [vmem:[%s10 + $0xb90] sm:$0xff]
    %v7354 = vld [vmem:[%s10 + $0xb98] sm:$0xff]
    %v7355 = vld [vmem:[%s10 + $0xba0] sm:$0xff]
    %v7356 = vld [vmem:[%s10 + $0xba8] sm:$0xff]
    %v7357 = vld [vmem:[%s10 + $0xbb0] sm:$0xff]
    %v7358 = vld [vmem:[%s10 + $0xbb8] sm:$0xff]
    %v7359 = vld [vmem:[%s10 + $0xbc0] sm:$0xff]
    %v7360 = vld [vmem:[%s10 + $0xbc8] sm:$0xff]
    %v7361 = vld [vmem:[%s10 + $0xbd0] sm:$0xff]
    %v7362 = vld [vmem:[%s10 + $0xbd8] sm:$0xff]
    %v7363 = vld [vmem:[%s10 + $0xbe0] sm:$0xff]
    %v7364 = vld [vmem:[%s10 + $0xbe8] sm:$0xff]
    %v7365 = vld [vmem:[%s10 + $0xbf0] sm:$0xff]
    %v7366 = vld [vmem:[%s10 + $0xbf8] sm:$0xff]
    %v7367 = vld [vmem:[#allocation15] sm:$0xff]
    %v7368 = vld [vmem:[#allocation15 + $0x8] sm:$0xff]
    %v7369 = vld [vmem:[#allocation15 + $0x10] sm:$0xff]
    %v7373 = vperm.slane %v7367, 0
    %v7374 = vperm.slane %v7367, 1
    %v7375 = vperm.slane %v7367, 2
    %v7376 = vperm.slane %v7367, 3
    %v7377 = vperm.slane %v7367, 4
    %v7378 = vperm.slane %v7367, 5
    %v7379 = vperm.slane %v7367, 6
    %v7380 = vperm.slane %v7367, 7
    %v7381 = vperm.slane %v7368, 0
    %v7382 = vperm.slane %v7368, 1
    %v7383 = vperm.slane %v7368, 2
    %v7384 = vperm.slane %v7368, 3
    %v7385 = vperm.slane %v7368, 4
    %v7386 = vperm.slane %v7368, 5
    %v7387 = vperm.slane %v7368, 6
    %v7388 = vperm.slane %v7368, 7
    %v7389 = vperm.slane %v7369, 0
    %v7390 = vperm.slane %v7369, 1
    %v7391 = vperm.slane %v7369, 2
    %v7392 = vperm.slane %v7369, 3
    %v7393 = vperm.slane %v7369, 4
    %v7394 = vperm.slane %v7369, 5
    %v7395 = vperm.slane %v7369, 6
    %v7396 = vperm.slane %v7369, 7
    %v7805 = vunpack.c.l.b16 %v6983
    %v7806 = vunpack.c.h.b16 %v6983
    %v7807 = vunpack.c.l.b16 %v6984
    %v7808 = vunpack.c.h.b16 %v6984
    %v7809 = vunpack.c.l.b16 %v6985
    %v7810 = vunpack.c.h.b16 %v6985
    %v7811 = vunpack.c.l.b16 %v6986
    %v7812 = vunpack.c.h.b16 %v6986
    %v7813 = vunpack.c.l.b16 %v6987
    %v7814 = vunpack.c.h.b16 %v6987
    %v7815 = vunpack.c.l.b16 %v6988
    %v7816 = vunpack.c.h.b16 %v6988
    %v7817 = vunpack.c.l.b16 %v6989
    %v7818 = vunpack.c.h.b16 %v6989
    %v7819 = vunpack.c.l.b16 %v6990
    %v7820 = vunpack.c.h.b16 %v6990
    %v7821 = vunpack.c.l.b16 %v6991
    %v7822 = vunpack.c.h.b16 %v6991
    %v7823 = vunpack.c.l.b16 %v6992
    %v7824 = vunpack.c.h.b16 %v6992
    %v7825 = vunpack.c.l.b16 %v6993
    %v7826 = vunpack.c.h.b16 %v6993
    %v7827 = vunpack.c.l.b16 %v6994
    %v7828 = vunpack.c.h.b16 %v6994
    %v7829 = vunpack.c.l.b16 %v6995
    %v7830 = vunpack.c.h.b16 %v6995
    %v7831 = vunpack.c.l.b16 %v6996
    %v7832 = vunpack.c.h.b16 %v6996
    %v7833 = vunpack.c.l.b16 %v6997
    %v7834 = vunpack.c.h.b16 %v6997
    %v7835 = vunpack.c.l.b16 %v6998
    %v7836 = vunpack.c.h.b16 %v6998
    %v7837 = vunpack.c.l.b16 %v6999
    %v7838 = vunpack.c.h.b16 %v6999
    %v7839 = vunpack.c.l.b16 %v7000
    %v7840 = vunpack.c.h.b16 %v7000
    %v7841 = vunpack.c.l.b16 %v7001
    %v7842 = vunpack.c.h.b16 %v7001
    %v7843 = vunpack.c.l.b16 %v7002
    %v7844 = vunpack.c.h.b16 %v7002
    %v7845 = vunpack.c.l.b16 %v7003
    %v7846 = vunpack.c.h.b16 %v7003
    %v7847 = vunpack.c.l.b16 %v7004
    %v7848 = vunpack.c.h.b16 %v7004
    %v7849 = vunpack.c.l.b16 %v7005
    %v7850 = vunpack.c.h.b16 %v7005
    %v7851 = vunpack.c.l.b16 %v7006
    %v7852 = vunpack.c.h.b16 %v7006
    %v7853 = vunpack.c.l.b16 %v7007
    %v7854 = vunpack.c.h.b16 %v7007
    %v7855 = vunpack.c.l.b16 %v7008
    %v7856 = vunpack.c.h.b16 %v7008
    %v7857 = vunpack.c.l.b16 %v7009
    %v7858 = vunpack.c.h.b16 %v7009
    %v7859 = vunpack.c.l.b16 %v7010
    %v7860 = vunpack.c.h.b16 %v7010
    %v7861 = vunpack.c.l.b16 %v7011
    %v7862 = vunpack.c.h.b16 %v7011
    %v7863 = vunpack.c.l.b16 %v7012
    %v7864 = vunpack.c.h.b16 %v7012
    %v7865 = vunpack.c.l.b16 %v7013
    %v7866 = vunpack.c.h.b16 %v7013
    %v7867 = vunpack.c.l.b16 %v7014
    %v7868 = vunpack.c.h.b16 %v7014
    %v7869 = vunpack.c.l.b16 %v7015
    %v7870 = vunpack.c.h.b16 %v7015
    %v7871 = vunpack.c.l.b16 %v7016
    %v7872 = vunpack.c.h.b16 %v7016
    %v7873 = vunpack.c.l.b16 %v7017
    %v7874 = vunpack.c.h.b16 %v7017
    %v7875 = vunpack.c.l.b16 %v7018
    %v7876 = vunpack.c.h.b16 %v7018
    %v7877 = vunpack.c.l.b16 %v7019
    %v7878 = vunpack.c.h.b16 %v7019
    %v7879 = vunpack.c.l.b16 %v7020
    %v7880 = vunpack.c.h.b16 %v7020
    %v7881 = vunpack.c.l.b16 %v7021
    %v7882 = vunpack.c.h.b16 %v7021
    %v7883 = vunpack.c.l.b16 %v7022
    %v7884 = vunpack.c.h.b16 %v7022
    %v7885 = vunpack.c.l.b16 %v7023
    %v7886 = vunpack.c.h.b16 %v7023
    %v7887 = vunpack.c.l.b16 %v7024
    %v7888 = vunpack.c.h.b16 %v7024
    %v7889 = vunpack.c.l.b16 %v7025
    %v7890 = vunpack.c.h.b16 %v7025
    %v7891 = vunpack.c.l.b16 %v7026
    %v7892 = vunpack.c.h.b16 %v7026
    %v7893 = vunpack.c.l.b16 %v7027
    %v7894 = vunpack.c.h.b16 %v7027
    %v7895 = vunpack.c.l.b16 %v7028
    %v7896 = vunpack.c.h.b16 %v7028
    %v7897 = vunpack.c.l.b16 %v7029
    %v7898 = vunpack.c.h.b16 %v7029
    %v7899 = vunpack.c.l.b16 %v7030
    %v7900 = vunpack.c.h.b16 %v7030
    %v7901 = vunpack.c.l.b16 %v7031
    %v7902 = vunpack.c.h.b16 %v7031
    %v7903 = vunpack.c.l.b16 %v7032
    %v7904 = vunpack.c.h.b16 %v7032
    %v7905 = vunpack.c.l.b16 %v7033
    %v7906 = vunpack.c.h.b16 %v7033
    %v7907 = vunpack.c.l.b16 %v7034
    %v7908 = vunpack.c.h.b16 %v7034
    %v7909 = vunpack.c.l.b16 %v7035
    %v7910 = vunpack.c.h.b16 %v7035
    %v7911 = vunpack.c.l.b16 %v7036
    %v7912 = vunpack.c.h.b16 %v7036
    %v7913 = vunpack.c.l.b16 %v7037
    %v7914 = vunpack.c.h.b16 %v7037
    %v7915 = vunpack.c.l.b16 %v7038
    %v7916 = vunpack.c.h.b16 %v7038
    %v7917 = vunpack.c.l.b16 %v7039
    %v7918 = vunpack.c.h.b16 %v7039
    %v7919 = vunpack.c.l.b16 %v7040
    %v7920 = vunpack.c.h.b16 %v7040
    %v7921 = vunpack.c.l.b16 %v7041
    %v7922 = vunpack.c.h.b16 %v7041
    %v7923 = vunpack.c.l.b16 %v7042
    %v7924 = vunpack.c.h.b16 %v7042
    %v7925 = vunpack.c.l.b16 %v7043
    %v7926 = vunpack.c.h.b16 %v7043
    %v7927 = vunpack.c.l.b16 %v7044
    %v7928 = vunpack.c.h.b16 %v7044
    %v7929 = vunpack.c.l.b16 %v7045
    %v7930 = vunpack.c.h.b16 %v7045
    %v7931 = vunpack.c.l.b16 %v7046
    %v7932 = vunpack.c.h.b16 %v7046
    %v7933 = vunpack.c.l.b16 %v7047
    %v7934 = vunpack.c.h.b16 %v7047
    %v7935 = vunpack.c.l.b16 %v7048
    %v7936 = vunpack.c.h.b16 %v7048
    %v7937 = vunpack.c.l.b16 %v7049
    %v7938 = vunpack.c.h.b16 %v7049
    %v7939 = vunpack.c.l.b16 %v7050
    %v7940 = vunpack.c.h.b16 %v7050
    %v7941 = vunpack.c.l.b16 %v7051
    %v7942 = vunpack.c.h.b16 %v7051
    %v7943 = vunpack.c.l.b16 %v7052
    %v7944 = vunpack.c.h.b16 %v7052
    %v7945 = vunpack.c.l.b16 %v7053
    %v7946 = vunpack.c.h.b16 %v7053
    %v7947 = vunpack.c.l.b16 %v7054
    %v7948 = vunpack.c.h.b16 %v7054
    %v7949 = vunpack.c.l.b16 %v7055
    %v7950 = vunpack.c.h.b16 %v7055
    %v7951 = vunpack.c.l.b16 %v7056
    %v7952 = vunpack.c.h.b16 %v7056
    %v7953 = vunpack.c.l.b16 %v7057
    %v7954 = vunpack.c.h.b16 %v7057
    %v7955 = vunpack.c.l.b16 %v7058
    %v7956 = vunpack.c.h.b16 %v7058
    %v7957 = vunpack.c.l.b16 %v7059
    %v7958 = vunpack.c.h.b16 %v7059
    %v7959 = vunpack.c.l.b16 %v7060
    %v7960 = vunpack.c.h.b16 %v7060
    %v7961 = vunpack.c.l.b16 %v7061
    %v7962 = vunpack.c.h.b16 %v7061
    %v7963 = vunpack.c.l.b16 %v7062
    %v7964 = vunpack.c.h.b16 %v7062
    %v7965 = vunpack.c.l.b16 %v7063
    %v7966 = vunpack.c.h.b16 %v7063
    %v7967 = vunpack.c.l.b16 %v7064
    %v7968 = vunpack.c.h.b16 %v7064
    %v7969 = vunpack.c.l.b16 %v7065
    %v7970 = vunpack.c.h.b16 %v7065
    %v7971 = vunpack.c.l.b16 %v7066
    %v7972 = vunpack.c.h.b16 %v7066
    %v7973 = vunpack.c.l.b16 %v7067
    %v7974 = vunpack.c.h.b16 %v7067
    %v7975 = vunpack.c.l.b16 %v7068
    %v7976 = vunpack.c.h.b16 %v7068
    %v7977 = vunpack.c.l.b16 %v7069
    %v7978 = vunpack.c.h.b16 %v7069
    %v7979 = vunpack.c.l.b16 %v7070
    %v7980 = vunpack.c.h.b16 %v7070
    %v7981 = vunpack.c.l.b16 %v7071
    %v7982 = vunpack.c.h.b16 %v7071
    %v7983 = vunpack.c.l.b16 %v7072
    %v7984 = vunpack.c.h.b16 %v7072
    %v7985 = vunpack.c.l.b16 %v7073
    %v7986 = vunpack.c.h.b16 %v7073
    %v7987 = vunpack.c.l.b16 %v7074
    %v7988 = vunpack.c.h.b16 %v7074
    %v7989 = vunpack.c.l.b16 %v7075
    %v7990 = vunpack.c.h.b16 %v7075
    %v7991 = vunpack.c.l.b16 %v7076
    %v7992 = vunpack.c.h.b16 %v7076
    %v7993 = vunpack.c.l.b16 %v7077
    %v7994 = vunpack.c.h.b16 %v7077
    %v7995 = vunpack.c.l.b16 %v7078
    %v7996 = vunpack.c.h.b16 %v7078
    %v7997 = vunpack.c.l.b16 %v7079
    %v7998 = vunpack.c.h.b16 %v7079
    %v7999 = vunpack.c.l.b16 %v7080
    %v8000 = vunpack.c.h.b16 %v7080
    %v8001 = vunpack.c.l.b16 %v7081
    %v8002 = vunpack.c.h.b16 %v7081
    %v8003 = vunpack.c.l.b16 %v7082
    %v8004 = vunpack.c.h.b16 %v7082
    %v8005 = vunpack.c.l.b16 %v7083
    %v8006 = vunpack.c.h.b16 %v7083
    %v8007 = vunpack.c.l.b16 %v7084
    %v8008 = vunpack.c.h.b16 %v7084
    %v8009 = vunpack.c.l.b16 %v7085
    %v8010 = vunpack.c.h.b16 %v7085
    %v8011 = vunpack.c.l.b16 %v7086
    %v8012 = vunpack.c.h.b16 %v7086
    %v8013 = vunpack.c.l.b16 %v7087
    %v8014 = vunpack.c.h.b16 %v7087
    %v8015 = vunpack.c.l.b16 %v7088
    %v8016 = vunpack.c.h.b16 %v7088
    %v8017 = vunpack.c.l.b16 %v7089
    %v8018 = vunpack.c.h.b16 %v7089
    %v8019 = vunpack.c.l.b16 %v7090
    %v8020 = vunpack.c.h.b16 %v7090
    %v8021 = vunpack.c.l.b16 %v7091
    %v8022 = vunpack.c.h.b16 %v7091
    %v8023 = vunpack.c.l.b16 %v7092
    %v8024 = vunpack.c.h.b16 %v7092
    %v8025 = vunpack.c.l.b16 %v7093
    %v8026 = vunpack.c.h.b16 %v7093
    %v8027 = vunpack.c.l.b16 %v7094
    %v8028 = vunpack.c.h.b16 %v7094
    %v8029 = vunpack.c.l.b16 %v7095
    %v8030 = vunpack.c.h.b16 %v7095
    %v8031 = vunpack.c.l.b16 %v7096
    %v8032 = vunpack.c.h.b16 %v7096
    %v8033 = vunpack.c.l.b16 %v7097
    %v8034 = vunpack.c.h.b16 %v7097
    %v8035 = vunpack.c.l.b16 %v7098
    %v8036 = vunpack.c.h.b16 %v7098
    %v8037 = vunpack.c.l.b16 %v7099
    %v8038 = vunpack.c.h.b16 %v7099
    %v8039 = vunpack.c.l.b16 %v7100
    %v8040 = vunpack.c.h.b16 %v7100
    %v8041 = vunpack.c.l.b16 %v7101
    %v8042 = vunpack.c.h.b16 %v7101
    %v8043 = vunpack.c.l.b16 %v7102
    %v8044 = vunpack.c.h.b16 %v7102
    %v8045 = vunpack.c.l.b16 %v7103
    %v8046 = vunpack.c.h.b16 %v7103
    %v8047 = vunpack.c.l.b16 %v7104
    %v8048 = vunpack.c.h.b16 %v7104
    %v8049 = vunpack.c.l.b16 %v7105
    %v8050 = vunpack.c.h.b16 %v7105
    %v8051 = vunpack.c.l.b16 %v7106
    %v8052 = vunpack.c.h.b16 %v7106
    %v8053 = vunpack.c.l.b16 %v7107
    %v8054 = vunpack.c.h.b16 %v7107
    %v8055 = vunpack.c.l.b16 %v7108
    %v8056 = vunpack.c.h.b16 %v7108
    %v8057 = vunpack.c.l.b16 %v7109
    %v8058 = vunpack.c.h.b16 %v7109
    %v8059 = vunpack.c.l.b16 %v7110
    %v8060 = vunpack.c.h.b16 %v7110
    %v8061 = vunpack.c.l.b16 %v7111
    %v8062 = vunpack.c.h.b16 %v7111
    %v8063 = vunpack.c.l.b16 %v7112
    %v8064 = vunpack.c.h.b16 %v7112
    %v8065 = vunpack.c.l.b16 %v7113
    %v8066 = vunpack.c.h.b16 %v7113
    %v8067 = vunpack.c.l.b16 %v7114
    %v8068 = vunpack.c.h.b16 %v7114
    %v8069 = vunpack.c.l.b16 %v7115
    %v8070 = vunpack.c.h.b16 %v7115
    %v8071 = vunpack.c.l.b16 %v7116
    %v8072 = vunpack.c.h.b16 %v7116
    %v8073 = vunpack.c.l.b16 %v7117
    %v8074 = vunpack.c.h.b16 %v7117
    %v8075 = vunpack.c.l.b16 %v7118
    %v8076 = vunpack.c.h.b16 %v7118
    %v8077 = vunpack.c.l.b16 %v7119
    %v8078 = vunpack.c.h.b16 %v7119
    %v8079 = vunpack.c.l.b16 %v7120
    %v8080 = vunpack.c.h.b16 %v7120
    %v8081 = vunpack.c.l.b16 %v7121
    %v8082 = vunpack.c.h.b16 %v7121
    %v8083 = vunpack.c.l.b16 %v7122
    %v8084 = vunpack.c.h.b16 %v7122
    %v8085 = vunpack.c.l.b16 %v7123
    %v8086 = vunpack.c.h.b16 %v7123
    %v8087 = vunpack.c.l.b16 %v7124
    %v8088 = vunpack.c.h.b16 %v7124
    %v8089 = vunpack.c.l.b16 %v7125
    %v8090 = vunpack.c.h.b16 %v7125
    %v8091 = vunpack.c.l.b16 %v7126
    %v8092 = vunpack.c.h.b16 %v7126
    %v8093 = vunpack.c.l.b16 %v7127
    %v8094 = vunpack.c.h.b16 %v7127
    %v8095 = vunpack.c.l.b16 %v7128
    %v8096 = vunpack.c.h.b16 %v7128
    %v8097 = vunpack.c.l.b16 %v7129
    %v8098 = vunpack.c.h.b16 %v7129
    %v8099 = vunpack.c.l.b16 %v7130
    %v8100 = vunpack.c.h.b16 %v7130
    %v8101 = vunpack.c.l.b16 %v7131
    %v8102 = vunpack.c.h.b16 %v7131
    %v8103 = vunpack.c.l.b16 %v7132
    %v8104 = vunpack.c.h.b16 %v7132
    %v8105 = vunpack.c.l.b16 %v7133
    %v8106 = vunpack.c.h.b16 %v7133
    %v8107 = vunpack.c.l.b16 %v7134
    %v8108 = vunpack.c.h.b16 %v7134
    %v8109 = vunpack.c.l.b16 %v7135
    %v8110 = vunpack.c.h.b16 %v7135
    %v8111 = vunpack.c.l.b16 %v7136
    %v8112 = vunpack.c.h.b16 %v7136
    %v8113 = vunpack.c.l.b16 %v7137
    %v8114 = vunpack.c.h.b16 %v7137
    %v8115 = vunpack.c.l.b16 %v7138
    %v8116 = vunpack.c.h.b16 %v7138
    %v8117 = vunpack.c.l.b16 %v7139
    %v8118 = vunpack.c.h.b16 %v7139
    %v8119 = vunpack.c.l.b16 %v7140
    %v8120 = vunpack.c.h.b16 %v7140
    %v8121 = vunpack.c.l.b16 %v7141
    %v8122 = vunpack.c.h.b16 %v7141
    %v8123 = vunpack.c.l.b16 %v7142
    %v8124 = vunpack.c.h.b16 %v7142
    %v8125 = vunpack.c.l.b16 %v7143
    %v8126 = vunpack.c.h.b16 %v7143
    %v8127 = vunpack.c.l.b16 %v7144
    %v8128 = vunpack.c.h.b16 %v7144
    %v8129 = vunpack.c.l.b16 %v7145
    %v8130 = vunpack.c.h.b16 %v7145
    %v8131 = vunpack.c.l.b16 %v7146
    %v8132 = vunpack.c.h.b16 %v7146
    %v8133 = vunpack.c.l.b16 %v7147
    %v8134 = vunpack.c.h.b16 %v7147
    %v8135 = vunpack.c.l.b16 %v7148
    %v8136 = vunpack.c.h.b16 %v7148
    %v8137 = vunpack.c.l.b16 %v7149
    %v8138 = vunpack.c.h.b16 %v7149
    %v8139 = vunpack.c.l.b16 %v7150
    %v8140 = vunpack.c.h.b16 %v7150
    %v8141 = vunpack.c.l.b16 %v7151
    %v8142 = vunpack.c.h.b16 %v7151
    %v8143 = vunpack.c.l.b16 %v7152
    %v8144 = vunpack.c.h.b16 %v7152
    %v8145 = vunpack.c.l.b16 %v7153
    %v8146 = vunpack.c.h.b16 %v7153
    %v8147 = vunpack.c.l.b16 %v7154
    %v8148 = vunpack.c.h.b16 %v7154
    %v8149 = vunpack.c.l.b16 %v7155
    %v8150 = vunpack.c.h.b16 %v7155
    %v8151 = vunpack.c.l.b16 %v7156
    %v8152 = vunpack.c.h.b16 %v7156
    %v8153 = vunpack.c.l.b16 %v7157
    %v8154 = vunpack.c.h.b16 %v7157
    %v8155 = vunpack.c.l.b16 %v7158
    %v8156 = vunpack.c.h.b16 %v7158
    %v8157 = vunpack.c.l.b16 %v7159
    %v8158 = vunpack.c.h.b16 %v7159
    %v8159 = vunpack.c.l.b16 %v7160
    %v8160 = vunpack.c.h.b16 %v7160
    %v8161 = vunpack.c.l.b16 %v7161
    %v8162 = vunpack.c.h.b16 %v7161
    %v8163 = vunpack.c.l.b16 %v7162
    %v8164 = vunpack.c.h.b16 %v7162
    %v8165 = vunpack.c.l.b16 %v7163
    %v8166 = vunpack.c.h.b16 %v7163
    %v8167 = vunpack.c.l.b16 %v7164
    %v8168 = vunpack.c.h.b16 %v7164
    %v8169 = vunpack.c.l.b16 %v7165
    %v8170 = vunpack.c.h.b16 %v7165
    %v8171 = vunpack.c.l.b16 %v7166
    %v8172 = vunpack.c.h.b16 %v7166
    %v8173 = vunpack.c.l.b16 %v7167
    %v8174 = vunpack.c.h.b16 %v7167
    %v8175 = vunpack.c.l.b16 %v7168
    %v8176 = vunpack.c.h.b16 %v7168
    %v8177 = vunpack.c.l.b16 %v7169
    %v8178 = vunpack.c.h.b16 %v7169
    %v8179 = vunpack.c.l.b16 %v7170
    %v8180 = vunpack.c.h.b16 %v7170
    %v8181 = vunpack.c.l.b16 %v7171
    %v8182 = vunpack.c.h.b16 %v7171
    %v8183 = vunpack.c.l.b16 %v7172
    %v8184 = vunpack.c.h.b16 %v7172
    %v8185 = vunpack.c.l.b16 %v7173
    %v8186 = vunpack.c.h.b16 %v7173
    %v8187 = vunpack.c.l.b16 %v7174
    %v8188 = vunpack.c.h.b16 %v7174
    %v8189 = vunpack.c.l.b16 %v7175
    %v8190 = vunpack.c.h.b16 %v7175
    %v8191 = vunpack.c.l.b16 %v7176
    %v8192 = vunpack.c.h.b16 %v7176
    %v8193 = vunpack.c.l.b16 %v7177
    %v8194 = vunpack.c.h.b16 %v7177
    %v8195 = vunpack.c.l.b16 %v7178
    %v8196 = vunpack.c.h.b16 %v7178
    %v8197 = vunpack.c.l.b16 %v7179
    %v8198 = vunpack.c.h.b16 %v7179
    %v8199 = vunpack.c.l.b16 %v7180
    %v8200 = vunpack.c.h.b16 %v7180
    %v8201 = vunpack.c.l.b16 %v7181
    %v8202 = vunpack.c.h.b16 %v7181
    %v8203 = vunpack.c.l.b16 %v7182
    %v8204 = vunpack.c.h.b16 %v7182
    %v8205 = vunpack.c.l.b16 %v7183
    %v8206 = vunpack.c.h.b16 %v7183
    %v8207 = vunpack.c.l.b16 %v7184
    %v8208 = vunpack.c.h.b16 %v7184
    %v8209 = vunpack.c.l.b16 %v7185
    %v8210 = vunpack.c.h.b16 %v7185
    %v8211 = vunpack.c.l.b16 %v7186
    %v8212 = vunpack.c.h.b16 %v7186
    %v8213 = vunpack.c.l.b16 %v7187
    %v8214 = vunpack.c.h.b16 %v7187
    %v8215 = vunpack.c.l.b16 %v7188
    %v8216 = vunpack.c.h.b16 %v7188
    %v8217 = vunpack.c.l.b16 %v7189
    %v8218 = vunpack.c.h.b16 %v7189
    %v8219 = vunpack.c.l.b16 %v7190
    %v8220 = vunpack.c.h.b16 %v7190
    %v8221 = vunpack.c.l.b16 %v7191
    %v8222 = vunpack.c.h.b16 %v7191
    %v8223 = vunpack.c.l.b16 %v7192
    %v8224 = vunpack.c.h.b16 %v7192
    %v8225 = vunpack.c.l.b16 %v7193
    %v8226 = vunpack.c.h.b16 %v7193
    %v8227 = vunpack.c.l.b16 %v7194
    %v8228 = vunpack.c.h.b16 %v7194
    %v8229 = vunpack.c.l.b16 %v7195
    %v8230 = vunpack.c.h.b16 %v7195
    %v8231 = vunpack.c.l.b16 %v7196
    %v8232 = vunpack.c.h.b16 %v7196
    %v8233 = vunpack.c.l.b16 %v7197
    %v8234 = vunpack.c.h.b16 %v7197
    %v8235 = vunpack.c.l.b16 %v7198
    %v8236 = vunpack.c.h.b16 %v7198
    %v8237 = vunpack.c.l.b16 %v7199
    %v8238 = vunpack.c.h.b16 %v7199
    %v8239 = vunpack.c.l.b16 %v7200
    %v8240 = vunpack.c.h.b16 %v7200
    %v8241 = vunpack.c.l.b16 %v7201
    %v8242 = vunpack.c.h.b16 %v7201
    %v8243 = vunpack.c.l.b16 %v7202
    %v8244 = vunpack.c.h.b16 %v7202
    %v8245 = vunpack.c.l.b16 %v7203
    %v8246 = vunpack.c.h.b16 %v7203
    %v8247 = vunpack.c.l.b16 %v7204
    %v8248 = vunpack.c.h.b16 %v7204
    %v8249 = vunpack.c.l.b16 %v7205
    %v8250 = vunpack.c.h.b16 %v7205
    %v8251 = vunpack.c.l.b16 %v7206
    %v8252 = vunpack.c.h.b16 %v7206
    %v8253 = vunpack.c.l.b16 %v7207
    %v8254 = vunpack.c.h.b16 %v7207
    %v8255 = vunpack.c.l.b16 %v7208
    %v8256 = vunpack.c.h.b16 %v7208
    %v8257 = vunpack.c.l.b16 %v7209
    %v8258 = vunpack.c.h.b16 %v7209
    %v8259 = vunpack.c.l.b16 %v7210
    %v8260 = vunpack.c.h.b16 %v7210
    %v8261 = vunpack.c.l.b16 %v7211
    %v8262 = vunpack.c.h.b16 %v7211
    %v8263 = vunpack.c.l.b16 %v7212
    %v8264 = vunpack.c.h.b16 %v7212
    %v8265 = vunpack.c.l.b16 %v7213
    %v8266 = vunpack.c.h.b16 %v7213
    %v8267 = vunpack.c.l.b16 %v7214
    %v8268 = vunpack.c.h.b16 %v7214
    %v8269 = vunpack.c.l.b16 %v7215
    %v8270 = vunpack.c.h.b16 %v7215
    %v8271 = vunpack.c.l.b16 %v7216
    %v8272 = vunpack.c.h.b16 %v7216
    %v8273 = vunpack.c.l.b16 %v7217
    %v8274 = vunpack.c.h.b16 %v7217
    %v8275 = vunpack.c.l.b16 %v7218
    %v8276 = vunpack.c.h.b16 %v7218
    %v8277 = vunpack.c.l.b16 %v7219
    %v8278 = vunpack.c.h.b16 %v7219
    %v8279 = vunpack.c.l.b16 %v7220
    %v8280 = vunpack.c.h.b16 %v7220
    %v8281 = vunpack.c.l.b16 %v7221
    %v8282 = vunpack.c.h.b16 %v7221
    %v8283 = vunpack.c.l.b16 %v7222
    %v8284 = vunpack.c.h.b16 %v7222
    %v8285 = vunpack.c.l.b16 %v7223
    %v8286 = vunpack.c.h.b16 %v7223
    %v8287 = vunpack.c.l.b16 %v7224
    %v8288 = vunpack.c.h.b16 %v7224
    %v8289 = vunpack.c.l.b16 %v7225
    %v8290 = vunpack.c.h.b16 %v7225
    %v8291 = vunpack.c.l.b16 %v7226
    %v8292 = vunpack.c.h.b16 %v7226
    %v8293 = vunpack.c.l.b16 %v7227
    %v8294 = vunpack.c.h.b16 %v7227
    %v8295 = vunpack.c.l.b16 %v7228
    %v8296 = vunpack.c.h.b16 %v7228
    %v8297 = vunpack.c.l.b16 %v7229
    %v8298 = vunpack.c.h.b16 %v7229
    %v8299 = vunpack.c.l.b16 %v7230
    %v8300 = vunpack.c.h.b16 %v7230
    %v8301 = vunpack.c.l.b16 %v7231
    %v8302 = vunpack.c.h.b16 %v7231
    %v8303 = vunpack.c.l.b16 %v7232
    %v8304 = vunpack.c.h.b16 %v7232
    %v8305 = vunpack.c.l.b16 %v7233
    %v8306 = vunpack.c.h.b16 %v7233
    %v8307 = vunpack.c.l.b16 %v7234
    %v8308 = vunpack.c.h.b16 %v7234
    %v8309 = vunpack.c.l.b16 %v7235
    %v8310 = vunpack.c.h.b16 %v7235
    %v8311 = vunpack.c.l.b16 %v7236
    %v8312 = vunpack.c.h.b16 %v7236
    %v8313 = vunpack.c.l.b16 %v7237
    %v8314 = vunpack.c.h.b16 %v7237
    %v8315 = vunpack.c.l.b16 %v7238
    %v8316 = vunpack.c.h.b16 %v7238
    %v8317 = vunpack.c.l.b16 %v7239
    %v8318 = vunpack.c.h.b16 %v7239
    %v8319 = vunpack.c.l.b16 %v7240
    %v8320 = vunpack.c.h.b16 %v7240
    %v8321 = vunpack.c.l.b16 %v7241
    %v8322 = vunpack.c.h.b16 %v7241
    %v8323 = vunpack.c.l.b16 %v7242
    %v8324 = vunpack.c.h.b16 %v7242
    %v8325 = vunpack.c.l.b16 %v7243
    %v8326 = vunpack.c.h.b16 %v7243
    %v8327 = vunpack.c.l.b16 %v7244
    %v8328 = vunpack.c.h.b16 %v7244
    %v8329 = vunpack.c.l.b16 %v7245
    %v8330 = vunpack.c.h.b16 %v7245
    %v8331 = vunpack.c.l.b16 %v7246
    %v8332 = vunpack.c.h.b16 %v7246
    %v8333 = vunpack.c.l.b16 %v7247
    %v8334 = vunpack.c.h.b16 %v7247
    %v8335 = vunpack.c.l.b16 %v7248
    %v8336 = vunpack.c.h.b16 %v7248
    %v8337 = vunpack.c.l.b16 %v7249
    %v8338 = vunpack.c.h.b16 %v7249
    %v8339 = vunpack.c.l.b16 %v7250
    %v8340 = vunpack.c.h.b16 %v7250
    %v8341 = vunpack.c.l.b16 %v7251
    %v8342 = vunpack.c.h.b16 %v7251
    %v8343 = vunpack.c.l.b16 %v7252
    %v8344 = vunpack.c.h.b16 %v7252
    %v8345 = vunpack.c.l.b16 %v7253
    %v8346 = vunpack.c.h.b16 %v7253
    %v8347 = vunpack.c.l.b16 %v7254
    %v8348 = vunpack.c.h.b16 %v7254
    %v8349 = vunpack.c.l.b16 %v7255
    %v8350 = vunpack.c.h.b16 %v7255
    %v8351 = vunpack.c.l.b16 %v7256
    %v8352 = vunpack.c.h.b16 %v7256
    %v8353 = vunpack.c.l.b16 %v7257
    %v8354 = vunpack.c.h.b16 %v7257
    %v8355 = vunpack.c.l.b16 %v7258
    %v8356 = vunpack.c.h.b16 %v7258
    %v8357 = vunpack.c.l.b16 %v7259
    %v8358 = vunpack.c.h.b16 %v7259
    %v8359 = vunpack.c.l.b16 %v7260
    %v8360 = vunpack.c.h.b16 %v7260
    %v8361 = vunpack.c.l.b16 %v7261
    %v8362 = vunpack.c.h.b16 %v7261
    %v8363 = vunpack.c.l.b16 %v7262
    %v8364 = vunpack.c.h.b16 %v7262
    %v8365 = vunpack.c.l.b16 %v7263
    %v8366 = vunpack.c.h.b16 %v7263
    %v8367 = vunpack.c.l.b16 %v7264
    %v8368 = vunpack.c.h.b16 %v7264
    %v8369 = vunpack.c.l.b16 %v7265
    %v8370 = vunpack.c.h.b16 %v7265
    %v8371 = vunpack.c.l.b16 %v7266
    %v8372 = vunpack.c.h.b16 %v7266
    %v8373 = vunpack.c.l.b16 %v7267
    %v8374 = vunpack.c.h.b16 %v7267
    %v8375 = vunpack.c.l.b16 %v7268
    %v8376 = vunpack.c.h.b16 %v7268
    %v8377 = vunpack.c.l.b16 %v7269
    %v8378 = vunpack.c.h.b16 %v7269
    %v8379 = vunpack.c.l.b16 %v7270
    %v8380 = vunpack.c.h.b16 %v7270
    %v8381 = vunpack.c.l.b16 %v7271
    %v8382 = vunpack.c.h.b16 %v7271
    %v8383 = vunpack.c.l.b16 %v7272
    %v8384 = vunpack.c.h.b16 %v7272
    %v8385 = vunpack.c.l.b16 %v7273
    %v8386 = vunpack.c.h.b16 %v7273
    %v8387 = vunpack.c.l.b16 %v7274
    %v8388 = vunpack.c.h.b16 %v7274
    %v8389 = vunpack.c.l.b16 %v7275
    %v8390 = vunpack.c.h.b16 %v7275
    %v8391 = vunpack.c.l.b16 %v7276
    %v8392 = vunpack.c.h.b16 %v7276
    %v8393 = vunpack.c.l.b16 %v7277
    %v8394 = vunpack.c.h.b16 %v7277
    %v8395 = vunpack.c.l.b16 %v7278
    %v8396 = vunpack.c.h.b16 %v7278
    %v8397 = vunpack.c.l.b16 %v7279
    %v8398 = vunpack.c.h.b16 %v7279
    %v8399 = vunpack.c.l.b16 %v7280
    %v8400 = vunpack.c.h.b16 %v7280
    %v8401 = vunpack.c.l.b16 %v7281
    %v8402 = vunpack.c.h.b16 %v7281
    %v8403 = vunpack.c.l.b16 %v7282
    %v8404 = vunpack.c.h.b16 %v7282
    %v8405 = vunpack.c.l.b16 %v7283
    %v8406 = vunpack.c.h.b16 %v7283
    %v8407 = vunpack.c.l.b16 %v7284
    %v8408 = vunpack.c.h.b16 %v7284
    %v8409 = vunpack.c.l.b16 %v7285
    %v8410 = vunpack.c.h.b16 %v7285
    %v8411 = vunpack.c.l.b16 %v7286
    %v8412 = vunpack.c.h.b16 %v7286
    %v8413 = vunpack.c.l.b16 %v7287
    %v8414 = vunpack.c.h.b16 %v7287
    %v8415 = vunpack.c.l.b16 %v7288
    %v8416 = vunpack.c.h.b16 %v7288
    %v8417 = vunpack.c.l.b16 %v7289
    %v8418 = vunpack.c.h.b16 %v7289
    %v8419 = vunpack.c.l.b16 %v7290
    %v8420 = vunpack.c.h.b16 %v7290
    %v8421 = vunpack.c.l.b16 %v7291
    %v8422 = vunpack.c.h.b16 %v7291
    %v8423 = vunpack.c.l.b16 %v7292
    %v8424 = vunpack.c.h.b16 %v7292
    %v8425 = vunpack.c.l.b16 %v7293
    %v8426 = vunpack.c.h.b16 %v7293
    %v8427 = vunpack.c.l.b16 %v7294
    %v8428 = vunpack.c.h.b16 %v7294
    %v8429 = vunpack.c.l.b16 %v7295
    %v8430 = vunpack.c.h.b16 %v7295
    %v8431 = vunpack.c.l.b16 %v7296
    %v8432 = vunpack.c.h.b16 %v7296
    %v8433 = vunpack.c.l.b16 %v7297
    %v8434 = vunpack.c.h.b16 %v7297
    %v8435 = vunpack.c.l.b16 %v7298
    %v8436 = vunpack.c.h.b16 %v7298
    %v8437 = vunpack.c.l.b16 %v7299
    %v8438 = vunpack.c.h.b16 %v7299
    %v8439 = vunpack.c.l.b16 %v7300
    %v8440 = vunpack.c.h.b16 %v7300
    %v8441 = vunpack.c.l.b16 %v7301
    %v8442 = vunpack.c.h.b16 %v7301
    %v8443 = vunpack.c.l.b16 %v7302
    %v8444 = vunpack.c.h.b16 %v7302
    %v8445 = vunpack.c.l.b16 %v7303
    %v8446 = vunpack.c.h.b16 %v7303
    %v8447 = vunpack.c.l.b16 %v7304
    %v8448 = vunpack.c.h.b16 %v7304
    %v8449 = vunpack.c.l.b16 %v7305
    %v8450 = vunpack.c.h.b16 %v7305
    %v8451 = vunpack.c.l.b16 %v7306
    %v8452 = vunpack.c.h.b16 %v7306
    %v8453 = vunpack.c.l.b16 %v7307
    %v8454 = vunpack.c.h.b16 %v7307
    %v8455 = vunpack.c.l.b16 %v7308
    %v8456 = vunpack.c.h.b16 %v7308
    %v8457 = vunpack.c.l.b16 %v7309
    %v8458 = vunpack.c.h.b16 %v7309
    %v8459 = vunpack.c.l.b16 %v7310
    %v8460 = vunpack.c.h.b16 %v7310
    %v8461 = vunpack.c.l.b16 %v7311
    %v8462 = vunpack.c.h.b16 %v7311
    %v8463 = vunpack.c.l.b16 %v7312
    %v8464 = vunpack.c.h.b16 %v7312
    %v8465 = vunpack.c.l.b16 %v7313
    %v8466 = vunpack.c.h.b16 %v7313
    %v8467 = vunpack.c.l.b16 %v7314
    %v8468 = vunpack.c.h.b16 %v7314
    %v8469 = vunpack.c.l.b16 %v7315
    %v8470 = vunpack.c.h.b16 %v7315
    %v8471 = vunpack.c.l.b16 %v7316
    %v8472 = vunpack.c.h.b16 %v7316
    %v8473 = vunpack.c.l.b16 %v7317
    %v8474 = vunpack.c.h.b16 %v7317
    %v8475 = vunpack.c.l.b16 %v7318
    %v8476 = vunpack.c.h.b16 %v7318
    %v8477 = vunpack.c.l.b16 %v7319
    %v8478 = vunpack.c.h.b16 %v7319
    %v8479 = vunpack.c.l.b16 %v7320
    %v8480 = vunpack.c.h.b16 %v7320
    %v8481 = vunpack.c.l.b16 %v7321
    %v8482 = vunpack.c.h.b16 %v7321
    %v8483 = vunpack.c.l.b16 %v7322
    %v8484 = vunpack.c.h.b16 %v7322
    %v8485 = vunpack.c.l.b16 %v7323
    %v8486 = vunpack.c.h.b16 %v7323
    %v8487 = vunpack.c.l.b16 %v7324
    %v8488 = vunpack.c.h.b16 %v7324
    %v8489 = vunpack.c.l.b16 %v7325
    %v8490 = vunpack.c.h.b16 %v7325
    %v8491 = vunpack.c.l.b16 %v7326
    %v8492 = vunpack.c.h.b16 %v7326
    %v8493 = vunpack.c.l.b16 %v7327
    %v8494 = vunpack.c.h.b16 %v7327
    %v8495 = vunpack.c.l.b16 %v7328
    %v8496 = vunpack.c.h.b16 %v7328
    %v8497 = vunpack.c.l.b16 %v7329
    %v8498 = vunpack.c.h.b16 %v7329
    %v8499 = vunpack.c.l.b16 %v7330
    %v8500 = vunpack.c.h.b16 %v7330
    %v8501 = vunpack.c.l.b16 %v7331
    %v8502 = vunpack.c.h.b16 %v7331
    %v8503 = vunpack.c.l.b16 %v7332
    %v8504 = vunpack.c.h.b16 %v7332
    %v8505 = vunpack.c.l.b16 %v7333
    %v8506 = vunpack.c.h.b16 %v7333
    %v8507 = vunpack.c.l.b16 %v7334
    %v8508 = vunpack.c.h.b16 %v7334
    %v8509 = vunpack.c.l.b16 %v7335
    %v8510 = vunpack.c.h.b16 %v7335
    %v8511 = vunpack.c.l.b16 %v7336
    %v8512 = vunpack.c.h.b16 %v7336
    %v8513 = vunpack.c.l.b16 %v7337
    %v8514 = vunpack.c.h.b16 %v7337
    %v8515 = vunpack.c.l.b16 %v7338
    %v8516 = vunpack.c.h.b16 %v7338
    %v8517 = vunpack.c.l.b16 %v7339
    %v8518 = vunpack.c.h.b16 %v7339
    %v8519 = vunpack.c.l.b16 %v7340
    %v8520 = vunpack.c.h.b16 %v7340
    %v8521 = vunpack.c.l.b16 %v7341
    %v8522 = vunpack.c.h.b16 %v7341
    %v8523 = vunpack.c.l.b16 %v7342
    %v8524 = vunpack.c.h.b16 %v7342
    %v8525 = vunpack.c.l.b16 %v7343
    %v8526 = vunpack.c.h.b16 %v7343
    %v8527 = vunpack.c.l.b16 %v7344
    %v8528 = vunpack.c.h.b16 %v7344
    %v8529 = vunpack.c.l.b16 %v7345
    %v8530 = vunpack.c.h.b16 %v7345
    %v8531 = vunpack.c.l.b16 %v7346
    %v8532 = vunpack.c.h.b16 %v7346
    %v8533 = vunpack.c.l.b16 %v7347
    %v8534 = vunpack.c.h.b16 %v7347
    %v8535 = vunpack.c.l.b16 %v7348
    %v8536 = vunpack.c.h.b16 %v7348
    %v8537 = vunpack.c.l.b16 %v7349
    %v8538 = vunpack.c.h.b16 %v7349
    %v8539 = vunpack.c.l.b16 %v7350
    %v8540 = vunpack.c.h.b16 %v7350
    %v8541 = vunpack.c.l.b16 %v7351
    %v8542 = vunpack.c.h.b16 %v7351
    %v8543 = vunpack.c.l.b16 %v7352
    %v8544 = vunpack.c.h.b16 %v7352
    %v8545 = vunpack.c.l.b16 %v7353
    %v8546 = vunpack.c.h.b16 %v7353
    %v8547 = vunpack.c.l.b16 %v7354
    %v8548 = vunpack.c.h.b16 %v7354
    %v8549 = vunpack.c.l.b16 %v7355
    %v8550 = vunpack.c.h.b16 %v7355
    %v8551 = vunpack.c.l.b16 %v7356
    %v8552 = vunpack.c.h.b16 %v7356
    %v8553 = vunpack.c.l.b16 %v7357
    %v8554 = vunpack.c.h.b16 %v7357
    %v8555 = vunpack.c.l.b16 %v7358
    %v8556 = vunpack.c.h.b16 %v7358
    %v8557 = vunpack.c.l.b16 %v7359
    %v8558 = vunpack.c.h.b16 %v7359
    %v8559 = vunpack.c.l.b16 %v7360
    %v8560 = vunpack.c.h.b16 %v7360
    %v8561 = vunpack.c.l.b16 %v7361
    %v8562 = vunpack.c.h.b16 %v7361
    %v8563 = vunpack.c.l.b16 %v7362
    %v8564 = vunpack.c.h.b16 %v7362
    %v8565 = vunpack.c.l.b16 %v7363
    %v8566 = vunpack.c.h.b16 %v7363
    %v8567 = vunpack.c.l.b16 %v7364
    %v8568 = vunpack.c.h.b16 %v7364
    %v8569 = vunpack.c.l.b16 %v7365
    %v8570 = vunpack.c.h.b16 %v7365
    %v8571 = vunpack.c.l.b16 %v7366
    %v8572 = vunpack.c.h.b16 %v7366
    %v8573 = vpack.c.b16 %v7829, %v7805
    %v8574 = vpack.c.b16 %v7830, %v7806
    %v8575 = vpack.c.b16 %v7831, %v7807
    %v8576 = vpack.c.b16 %v7832, %v7808
    %v8577 = vpack.c.b16 %v7833, %v7809
    %v8578 = vpack.c.b16 %v7834, %v7810
    %v8579 = vpack.c.b16 %v7835, %v7811
    %v8580 = vpack.c.b16 %v7836, %v7812
    %v8581 = vpack.c.b16 %v7837, %v7813
    %v8582 = vpack.c.b16 %v7838, %v7814
    %v8583 = vpack.c.b16 %v7839, %v7815
    %v8584 = vpack.c.b16 %v7840, %v7816
    %v8585 = vpack.c.b16 %v7841, %v7817
    %v8586 = vpack.c.b16 %v7842, %v7818
    %v8587 = vpack.c.b16 %v7843, %v7819
    %v8588 = vpack.c.b16 %v7844, %v7820
    %v8589 = vpack.c.b16 %v7845, %v7821
    %v8590 = vpack.c.b16 %v7846, %v7822
    %v8591 = vpack.c.b16 %v7847, %v7823
    %v8592 = vpack.c.b16 %v7848, %v7824
    %v8593 = vpack.c.b16 %v7849, %v7825
    %v8594 = vpack.c.b16 %v7850, %v7826
    %v8595 = vpack.c.b16 %v7851, %v7827
    %v8596 = vpack.c.b16 %v7852, %v7828
    %v8597 = vpack.c.b16 %v7877, %v7853
    %v8598 = vpack.c.b16 %v7878, %v7854
    %v8599 = vpack.c.b16 %v7879, %v7855
    %v8600 = vpack.c.b16 %v7880, %v7856
    %v8601 = vpack.c.b16 %v7881, %v7857
    %v8602 = vpack.c.b16 %v7882, %v7858
    %v8603 = vpack.c.b16 %v7883, %v7859
    %v8604 = vpack.c.b16 %v7884, %v7860
    %v8605 = vpack.c.b16 %v7885, %v7861
    %v8606 = vpack.c.b16 %v7886, %v7862
    %v8607 = vpack.c.b16 %v7887, %v7863
    %v8608 = vpack.c.b16 %v7888, %v7864
    %v8609 = vpack.c.b16 %v7889, %v7865
    %v8610 = vpack.c.b16 %v7890, %v7866
    %v8611 = vpack.c.b16 %v7891, %v7867
    %v8612 = vpack.c.b16 %v7892, %v7868
    %v8613 = vpack.c.b16 %v7893, %v7869
    %v8614 = vpack.c.b16 %v7894, %v7870
    %v8615 = vpack.c.b16 %v7895, %v7871
    %v8616 = vpack.c.b16 %v7896, %v7872
    %v8617 = vpack.c.b16 %v7897, %v7873
    %v8618 = vpack.c.b16 %v7898, %v7874
    %v8619 = vpack.c.b16 %v7899, %v7875
    %v8620 = vpack.c.b16 %v7900, %v7876
    %v8621 = vpack.c.b16 %v7925, %v7901
    %v8622 = vpack.c.b16 %v7926, %v7902
    %v8623 = vpack.c.b16 %v7927, %v7903
    %v8624 = vpack.c.b16 %v7928, %v7904
    %v8625 = vpack.c.b16 %v7929, %v7905
    %v8626 = vpack.c.b16 %v7930, %v7906
    %v8627 = vpack.c.b16 %v7931, %v7907
    %v8628 = vpack.c.b16 %v7932, %v7908
    %v8629 = vpack.c.b16 %v7933, %v7909
    %v8630 = vpack.c.b16 %v7934, %v7910
    %v8631 = vpack.c.b16 %v7935, %v7911
    %v8632 = vpack.c.b16 %v7936, %v7912
    %v8633 = vpack.c.b16 %v7937, %v7913
    %v8634 = vpack.c.b16 %v7938, %v7914
    %v8635 = vpack.c.b16 %v7939, %v7915
    %v8636 = vpack.c.b16 %v7940, %v7916
    %v8637 = vpack.c.b16 %v7941, %v7917
    %v8638 = vpack.c.b16 %v7942, %v7918
    %v8639 = vpack.c.b16 %v7943, %v7919
    %v8640 = vpack.c.b16 %v7944, %v7920
    %v8641 = vpack.c.b16 %v7945, %v7921
    %v8642 = vpack.c.b16 %v7946, %v7922
    %v8643 = vpack.c.b16 %v7947, %v7923
    %v8644 = vpack.c.b16 %v7948, %v7924
    %v8645 = vpack.c.b16 %v7973, %v7949
    %v8646 = vpack.c.b16 %v7974, %v7950
    %v8647 = vpack.c.b16 %v7975, %v7951
    %v8648 = vpack.c.b16 %v7976, %v7952
    %v8649 = vpack.c.b16 %v7977, %v7953
    %v8650 = vpack.c.b16 %v7978, %v7954
    %v8651 = vpack.c.b16 %v7979, %v7955
    %v8652 = vpack.c.b16 %v7980, %v7956
    %v8653 = vpack.c.b16 %v7981, %v7957
    %v8654 = vpack.c.b16 %v7982, %v7958
    %v8655 = vpack.c.b16 %v7983, %v7959
    %v8656 = vpack.c.b16 %v7984, %v7960
    %v8657 = vpack.c.b16 %v7985, %v7961
    %v8658 = vpack.c.b16 %v7986, %v7962
    %v8659 = vpack.c.b16 %v7987, %v7963
    %v8660 = vpack.c.b16 %v7988, %v7964
    %v8661 = vpack.c.b16 %v7989, %v7965
    %v8662 = vpack.c.b16 %v7990, %v7966
    %v8663 = vpack.c.b16 %v7991, %v7967
    %v8664 = vpack.c.b16 %v7992, %v7968
    %v8665 = vpack.c.b16 %v7993, %v7969
    %v8666 = vpack.c.b16 %v7994, %v7970
    %v8667 = vpack.c.b16 %v7995, %v7971
    %v8668 = vpack.c.b16 %v7996, %v7972
    %v8669 = vpack.c.b16 %v8021, %v7997
    %v8670 = vpack.c.b16 %v8022, %v7998
    %v8671 = vpack.c.b16 %v8023, %v7999
    %v8672 = vpack.c.b16 %v8024, %v8000
    %v8673 = vpack.c.b16 %v8025, %v8001
    %v8674 = vpack.c.b16 %v8026, %v8002
    %v8675 = vpack.c.b16 %v8027, %v8003
    %v8676 = vpack.c.b16 %v8028, %v8004
    %v8677 = vpack.c.b16 %v8029, %v8005
    %v8678 = vpack.c.b16 %v8030, %v8006
    %v8679 = vpack.c.b16 %v8031, %v8007
    %v8680 = vpack.c.b16 %v8032, %v8008
    %v8681 = vpack.c.b16 %v8033, %v8009
    %v8682 = vpack.c.b16 %v8034, %v8010
    %v8683 = vpack.c.b16 %v8035, %v8011
    %v8684 = vpack.c.b16 %v8036, %v8012
    %v8685 = vpack.c.b16 %v8037, %v8013
    %v8686 = vpack.c.b16 %v8038, %v8014
    %v8687 = vpack.c.b16 %v8039, %v8015
    %v8688 = vpack.c.b16 %v8040, %v8016
    %v8689 = vpack.c.b16 %v8041, %v8017
    %v8690 = vpack.c.b16 %v8042, %v8018
    %v8691 = vpack.c.b16 %v8043, %v8019
    %v8692 = vpack.c.b16 %v8044, %v8020
    %v8693 = vpack.c.b16 %v8069, %v8045
    %v8694 = vpack.c.b16 %v8070, %v8046
    %v8695 = vpack.c.b16 %v8071, %v8047
    %v8696 = vpack.c.b16 %v8072, %v8048
    %v8697 = vpack.c.b16 %v8073, %v8049
    %v8698 = vpack.c.b16 %v8074, %v8050
    %v8699 = vpack.c.b16 %v8075, %v8051
    %v8700 = vpack.c.b16 %v8076, %v8052
    %v8701 = vpack.c.b16 %v8077, %v8053
    %v8702 = vpack.c.b16 %v8078, %v8054
    %v8703 = vpack.c.b16 %v8079, %v8055
    %v8704 = vpack.c.b16 %v8080, %v8056
    %v8705 = vpack.c.b16 %v8081, %v8057
    %v8706 = vpack.c.b16 %v8082, %v8058
    %v8707 = vpack.c.b16 %v8083, %v8059
    %v8708 = vpack.c.b16 %v8084, %v8060
    %v8709 = vpack.c.b16 %v8085, %v8061
    %v8710 = vpack.c.b16 %v8086, %v8062
    %v8711 = vpack.c.b16 %v8087, %v8063
    %v8712 = vpack.c.b16 %v8088, %v8064
    %v8713 = vpack.c.b16 %v8089, %v8065
    %v8714 = vpack.c.b16 %v8090, %v8066
    %v8715 = vpack.c.b16 %v8091, %v8067
    %v8716 = vpack.c.b16 %v8092, %v8068
    %v8717 = vpack.c.b16 %v8117, %v8093
    %v8718 = vpack.c.b16 %v8118, %v8094
    %v8719 = vpack.c.b16 %v8119, %v8095
    %v8720 = vpack.c.b16 %v8120, %v8096
    %v8721 = vpack.c.b16 %v8121, %v8097
    %v8722 = vpack.c.b16 %v8122, %v8098
    %v8723 = vpack.c.b16 %v8123, %v8099
    %v8724 = vpack.c.b16 %v8124, %v8100
    %v8725 = vpack.c.b16 %v8125, %v8101
    %v8726 = vpack.c.b16 %v8126, %v8102
    %v8727 = vpack.c.b16 %v8127, %v8103
    %v8728 = vpack.c.b16 %v8128, %v8104
    %v8729 = vpack.c.b16 %v8129, %v8105
    %v8730 = vpack.c.b16 %v8130, %v8106
    %v8731 = vpack.c.b16 %v8131, %v8107
    %v8732 = vpack.c.b16 %v8132, %v8108
    %v8733 = vpack.c.b16 %v8133, %v8109
    %v8734 = vpack.c.b16 %v8134, %v8110
    %v8735 = vpack.c.b16 %v8135, %v8111
    %v8736 = vpack.c.b16 %v8136, %v8112
    %v8737 = vpack.c.b16 %v8137, %v8113
    %v8738 = vpack.c.b16 %v8138, %v8114
    %v8739 = vpack.c.b16 %v8139, %v8115
    %v8740 = vpack.c.b16 %v8140, %v8116
    %v8741 = vpack.c.b16 %v8165, %v8141
    %v8742 = vpack.c.b16 %v8166, %v8142
    %v8743 = vpack.c.b16 %v8167, %v8143
    %v8744 = vpack.c.b16 %v8168, %v8144
    %v8745 = vpack.c.b16 %v8169, %v8145
    %v8746 = vpack.c.b16 %v8170, %v8146
    %v8747 = vpack.c.b16 %v8171, %v8147
    %v8748 = vpack.c.b16 %v8172, %v8148
    %v8749 = vpack.c.b16 %v8173, %v8149
    %v8750 = vpack.c.b16 %v8174, %v8150
    %v8751 = vpack.c.b16 %v8175, %v8151
    %v8752 = vpack.c.b16 %v8176, %v8152
    %v8753 = vpack.c.b16 %v8177, %v8153
    %v8754 = vpack.c.b16 %v8178, %v8154
    %v8755 = vpack.c.b16 %v8179, %v8155
    %v8756 = vpack.c.b16 %v8180, %v8156
    %v8757 = vpack.c.b16 %v8181, %v8157
    %v8758 = vpack.c.b16 %v8182, %v8158
    %v8759 = vpack.c.b16 %v8183, %v8159
    %v8760 = vpack.c.b16 %v8184, %v8160
    %v8761 = vpack.c.b16 %v8185, %v8161
    %v8762 = vpack.c.b16 %v8186, %v8162
    %v8763 = vpack.c.b16 %v8187, %v8163
    %v8764 = vpack.c.b16 %v8188, %v8164
    %v8765 = vpack.c.b16 %v8213, %v8189
    %v8766 = vpack.c.b16 %v8214, %v8190
    %v8767 = vpack.c.b16 %v8215, %v8191
    %v8768 = vpack.c.b16 %v8216, %v8192
    %v8769 = vpack.c.b16 %v8217, %v8193
    %v8770 = vpack.c.b16 %v8218, %v8194
    %v8771 = vpack.c.b16 %v8219, %v8195
    %v8772 = vpack.c.b16 %v8220, %v8196
    %v8773 = vpack.c.b16 %v8221, %v8197
    %v8774 = vpack.c.b16 %v8222, %v8198
    %v8775 = vpack.c.b16 %v8223, %v8199
    %v8776 = vpack.c.b16 %v8224, %v8200
    %v8777 = vpack.c.b16 %v8225, %v8201
    %v8778 = vpack.c.b16 %v8226, %v8202
    %v8779 = vpack.c.b16 %v8227, %v8203
    %v8780 = vpack.c.b16 %v8228, %v8204
    %v8781 = vpack.c.b16 %v8229, %v8205
    %v8782 = vpack.c.b16 %v8230, %v8206
    %v8783 = vpack.c.b16 %v8231, %v8207
    %v8784 = vpack.c.b16 %v8232, %v8208
    %v8785 = vpack.c.b16 %v8233, %v8209
    %v8786 = vpack.c.b16 %v8234, %v8210
    %v8787 = vpack.c.b16 %v8235, %v8211
    %v8788 = vpack.c.b16 %v8236, %v8212
    %v8789 = vpack.c.b16 %v8261, %v8237
    %v8790 = vpack.c.b16 %v8262, %v8238
    %v8791 = vpack.c.b16 %v8263, %v8239
    %v8792 = vpack.c.b16 %v8264, %v8240
    %v8793 = vpack.c.b16 %v8265, %v8241
    %v8794 = vpack.c.b16 %v8266, %v8242
    %v8795 = vpack.c.b16 %v8267, %v8243
    %v8796 = vpack.c.b16 %v8268, %v8244
    %v8797 = vpack.c.b16 %v8269, %v8245
    %v8798 = vpack.c.b16 %v8270, %v8246
    %v8799 = vpack.c.b16 %v8271, %v8247
    %v8800 = vpack.c.b16 %v8272, %v8248
    %v8801 = vpack.c.b16 %v8273, %v8249
    %v8802 = vpack.c.b16 %v8274, %v8250
    %v8803 = vpack.c.b16 %v8275, %v8251
    %v8804 = vpack.c.b16 %v8276, %v8252
    %v8805 = vpack.c.b16 %v8277, %v8253
    %v8806 = vpack.c.b16 %v8278, %v8254
    %v8807 = vpack.c.b16 %v8279, %v8255
    %v8808 = vpack.c.b16 %v8280, %v8256
    %v8809 = vpack.c.b16 %v8281, %v8257
    %v8810 = vpack.c.b16 %v8282, %v8258
    %v8811 = vpack.c.b16 %v8283, %v8259
    %v8812 = vpack.c.b16 %v8284, %v8260
    %v8813 = vpack.c.b16 %v8309, %v8285
    %v8814 = vpack.c.b16 %v8310, %v8286
    %v8815 = vpack.c.b16 %v8311, %v8287
    %v8816 = vpack.c.b16 %v8312, %v8288
    %v8817 = vpack.c.b16 %v8313, %v8289
    %v8818 = vpack.c.b16 %v8314, %v8290
    %v8819 = vpack.c.b16 %v8315, %v8291
    %v8820 = vpack.c.b16 %v8316, %v8292
    %v8821 = vpack.c.b16 %v8317, %v8293
    %v8822 = vpack.c.b16 %v8318, %v8294
    %v8823 = vpack.c.b16 %v8319, %v8295
    %v8824 = vpack.c.b16 %v8320, %v8296
    %v8825 = vpack.c.b16 %v8321, %v8297
    %v8826 = vpack.c.b16 %v8322, %v8298
    %v8827 = vpack.c.b16 %v8323, %v8299
    %v8828 = vpack.c.b16 %v8324, %v8300
    %v8829 = vpack.c.b16 %v8325, %v8301
    %v8830 = vpack.c.b16 %v8326, %v8302
    %v8831 = vpack.c.b16 %v8327, %v8303
    %v8832 = vpack.c.b16 %v8328, %v8304
    %v8833 = vpack.c.b16 %v8329, %v8305
    %v8834 = vpack.c.b16 %v8330, %v8306
    %v8835 = vpack.c.b16 %v8331, %v8307
    %v8836 = vpack.c.b16 %v8332, %v8308
    %v8837 = vpack.c.b16 %v8357, %v8333
    %v8838 = vpack.c.b16 %v8358, %v8334
    %v8839 = vpack.c.b16 %v8359, %v8335
    %v8840 = vpack.c.b16 %v8360, %v8336
    %v8841 = vpack.c.b16 %v8361, %v8337
    %v8842 = vpack.c.b16 %v8362, %v8338
    %v8843 = vpack.c.b16 %v8363, %v8339
    %v8844 = vpack.c.b16 %v8364, %v8340
    %v8845 = vpack.c.b16 %v8365, %v8341
    %v8846 = vpack.c.b16 %v8366, %v8342
    %v8847 = vpack.c.b16 %v8367, %v8343
    %v8848 = vpack.c.b16 %v8368, %v8344
    %v8849 = vpack.c.b16 %v8369, %v8345
    %v8850 = vpack.c.b16 %v8370, %v8346
    %v8851 = vpack.c.b16 %v8371, %v8347
    %v8852 = vpack.c.b16 %v8372, %v8348
    %v8853 = vpack.c.b16 %v8373, %v8349
    %v8854 = vpack.c.b16 %v8374, %v8350
    %v8855 = vpack.c.b16 %v8375, %v8351
    %v8856 = vpack.c.b16 %v8376, %v8352
    %v8857 = vpack.c.b16 %v8377, %v8353
    %v8858 = vpack.c.b16 %v8378, %v8354
    %v8859 = vpack.c.b16 %v8379, %v8355
    %v8860 = vpack.c.b16 %v8380, %v8356
    %v8861 = vpack.c.b16 %v8405, %v8381
    %v8862 = vpack.c.b16 %v8406, %v8382
    %v8863 = vpack.c.b16 %v8407, %v8383
    %v8864 = vpack.c.b16 %v8408, %v8384
    %v8865 = vpack.c.b16 %v8409, %v8385
    %v8866 = vpack.c.b16 %v8410, %v8386
    %v8867 = vpack.c.b16 %v8411, %v8387
    %v8868 = vpack.c.b16 %v8412, %v8388
    %v8869 = vpack.c.b16 %v8413, %v8389
    %v8870 = vpack.c.b16 %v8414, %v8390
    %v8871 = vpack.c.b16 %v8415, %v8391
    %v8872 = vpack.c.b16 %v8416, %v8392
    %v8873 = vpack.c.b16 %v8417, %v8393
    %v8874 = vpack.c.b16 %v8418, %v8394
    %v8875 = vpack.c.b16 %v8419, %v8395
    %v8876 = vpack.c.b16 %v8420, %v8396
    %v8877 = vpack.c.b16 %v8421, %v8397
    %v8878 = vpack.c.b16 %v8422, %v8398
    %v8879 = vpack.c.b16 %v8423, %v8399
    %v8880 = vpack.c.b16 %v8424, %v8400
    %v8881 = vpack.c.b16 %v8425, %v8401
    %v8882 = vpack.c.b16 %v8426, %v8402
    %v8883 = vpack.c.b16 %v8427, %v8403
    %v8884 = vpack.c.b16 %v8428, %v8404
    %v8885 = vpack.c.b16 %v8453, %v8429
    %v8886 = vpack.c.b16 %v8454, %v8430
    %v8887 = vpack.c.b16 %v8455, %v8431
    %v8888 = vpack.c.b16 %v8456, %v8432
    %v8889 = vpack.c.b16 %v8457, %v8433
    %v8890 = vpack.c.b16 %v8458, %v8434
    %v8891 = vpack.c.b16 %v8459, %v8435
    %v8892 = vpack.c.b16 %v8460, %v8436
    %v8893 = vpack.c.b16 %v8461, %v8437
    %v8894 = vpack.c.b16 %v8462, %v8438
    %v8895 = vpack.c.b16 %v8463, %v8439
    %v8896 = vpack.c.b16 %v8464, %v8440
    %v8897 = vpack.c.b16 %v8465, %v8441
    %v8898 = vpack.c.b16 %v8466, %v8442
    %v8899 = vpack.c.b16 %v8467, %v8443
    %v8900 = vpack.c.b16 %v8468, %v8444
    %v8901 = vpack.c.b16 %v8469, %v8445
    %v8902 = vpack.c.b16 %v8470, %v8446
    %v8903 = vpack.c.b16 %v8471, %v8447
    %v8904 = vpack.c.b16 %v8472, %v8448
    %v8905 = vpack.c.b16 %v8473, %v8449
    %v8906 = vpack.c.b16 %v8474, %v8450
    %v8907 = vpack.c.b16 %v8475, %v8451
    %v8908 = vpack.c.b16 %v8476, %v8452
    %v8909 = vpack.c.b16 %v8501, %v8477
    %v8910 = vpack.c.b16 %v8502, %v8478
    %v8911 = vpack.c.b16 %v8503, %v8479
    %v8912 = vpack.c.b16 %v8504, %v8480
    %v8913 = vpack.c.b16 %v8505, %v8481
    %v8914 = vpack.c.b16 %v8506, %v8482
    %v8915 = vpack.c.b16 %v8507, %v8483
    %v8916 = vpack.c.b16 %v8508, %v8484
    %v8917 = vpack.c.b16 %v8509, %v8485
    %v8918 = vpack.c.b16 %v8510, %v8486
    %v8919 = vpack.c.b16 %v8511, %v8487
    %v8920 = vpack.c.b16 %v8512, %v8488
    %v8921 = vpack.c.b16 %v8513, %v8489
    %v8922 = vpack.c.b16 %v8514, %v8490
    %v8923 = vpack.c.b16 %v8515, %v8491
    %v8924 = vpack.c.b16 %v8516, %v8492
    %v8925 = vpack.c.b16 %v8517, %v8493
    %v8926 = vpack.c.b16 %v8518, %v8494
    %v8927 = vpack.c.b16 %v8519, %v8495
    %v8928 = vpack.c.b16 %v8520, %v8496
    %v8929 = vpack.c.b16 %v8521, %v8497
    %v8930 = vpack.c.b16 %v8522, %v8498
    %v8931 = vpack.c.b16 %v8523, %v8499
    %v8932 = vpack.c.b16 %v8524, %v8500
    %v8933 = vpack.c.b16 %v8549, %v8525
    %v8934 = vpack.c.b16 %v8550, %v8526
    %v8935 = vpack.c.b16 %v8551, %v8527
    %v8936 = vpack.c.b16 %v8552, %v8528
    %v8937 = vpack.c.b16 %v8553, %v8529
    %v8938 = vpack.c.b16 %v8554, %v8530
    %v8939 = vpack.c.b16 %v8555, %v8531
    %v8940 = vpack.c.b16 %v8556, %v8532
    %v8941 = vpack.c.b16 %v8557, %v8533
    %v8942 = vpack.c.b16 %v8558, %v8534
    %v8943 = vpack.c.b16 %v8559, %v8535
    %v8944 = vpack.c.b16 %v8560, %v8536
    %v8945 = vpack.c.b16 %v8561, %v8537
    %v8946 = vpack.c.b16 %v8562, %v8538
    %v8947 = vpack.c.b16 %v8563, %v8539
    %v8948 = vpack.c.b16 %v8564, %v8540
    %v8949 = vpack.c.b16 %v8565, %v8541
    %v8950 = vpack.c.b16 %v8566, %v8542
    %v8951 = vpack.c.b16 %v8567, %v8543
    %v8952 = vpack.c.b16 %v8568, %v8544
    %v8953 = vpack.c.b16 %v8569, %v8545
    %v8954 = vpack.c.b16 %v8570, %v8546
    %v8955 = vpack.c.b16 %v8571, %v8547
    %v8956 = vpack.c.b16 %v8572, %v8548
    %9341 = vmatpush.bf16.msra.mxu0 %v8741
    %9342 = vmatpush.bf16.msra.mxu0 %v8717
    %9343 = vmatpush.bf16.msra.mxu0 %v8693
    %9344 = vmatpush.bf16.msra.mxu0 %v8669
    %9345 = vmatpush.bf16.msra.mxu0 %v8645
    %9346 = vmatpush.bf16.msra.mxu0 %v8621
    %9347 = vmatpush.bf16.msra.mxu0 %v8597
    %9348 = vmatpush.bf16.msra.mxu0 %v8573
    %9349 = vmatmul.bf16.gmra.mxu0 %v6981
    %v9350 = vpop.f32.mrf.mxu0
    %v9351 = vadd.f32 %v7373, %v9350
    %v9352 = vpop.f32.mrf.mxu0
    %9353 = vdwg.mxu0
    %9354 = vmatpush.bf16.msra.mxu0 %v8933
    %9355 = vmatpush.bf16.msra.mxu0 %v8909
    %9356 = vmatpush.bf16.msra.mxu0 %v8885
    %9357 = vmatpush.bf16.msra.mxu0 %v8861
    %9358 = vmatpush.bf16.msra.mxu0 %v8837
    %9359 = vmatpush.bf16.msra.mxu0 %v8813
    %9360 = vmatpush.bf16.msra.mxu0 %v8789
    %9361 = vmatpush.bf16.msra.mxu0 %v8765
    %9362 = vmatmul.bf16.gmra.mxu0 %v6982
    %v9363 = vpop.f32.mrf.mxu0
    %v9364 = vadd.f32 %v9351, %v9363
    %v9365 = vpop.f32.mrf.mxu0
    %9366 = vdwg.mxu0
    %9367 = vmatpush.bf16.msra.mxu0 %v8742
    %9368 = vmatpush.bf16.msra.mxu0 %v8718
    %9369 = vmatpush.bf16.msra.mxu0 %v8694
    %9370 = vmatpush.bf16.msra.mxu0 %v8670
    %9371 = vmatpush.bf16.msra.mxu0 %v8646
    %9372 = vmatpush.bf16.msra.mxu0 %v8622
    %9373 = vmatpush.bf16.msra.mxu0 %v8598
    %9374 = vmatpush.bf16.msra.mxu0 %v8574
    %9375 = vmatmul.bf16.gmra.mxu0 %v6981
    %v9376 = vpop.f32.mrf.mxu0
    %v9377 = vadd.f32 %v7374, %v9376
    %v9378 = vpop.f32.mrf.mxu0
    %9379 = vdwg.mxu0
    %9380 = vmatpush.bf16.msra.mxu0 %v8934
    %9381 = vmatpush.bf16.msra.mxu0 %v8910
    %9382 = vmatpush.bf16.msra.mxu0 %v8886
    %9383 = vmatpush.bf16.msra.mxu0 %v8862
    %9384 = vmatpush.bf16.msra.mxu0 %v8838
    %9385 = vmatpush.bf16.msra.mxu0 %v8814
    %9386 = vmatpush.bf16.msra.mxu0 %v8790
    %9387 = vmatpush.bf16.msra.mxu0 %v8766
    %9388 = vmatmul.bf16.gmra.mxu0 %v6982
    %v9389 = vpop.f32.mrf.mxu0
    %v9390 = vadd.f32 %v9377, %v9389
    %v9391 = vpop.f32.mrf.mxu0
    %9392 = vdwg.mxu0
    %9393 = vmatpush.bf16.msra.mxu0 %v8743
    %9394 = vmatpush.bf16.msra.mxu0 %v8719
    %9395 = vmatpush.bf16.msra.mxu0 %v8695
    %9396 = vmatpush.bf16.msra.mxu0 %v8671
    %9397 = vmatpush.bf16.msra.mxu0 %v8647
    %9398 = vmatpush.bf16.msra.mxu0 %v8623
    %9399 = vmatpush.bf16.msra.mxu0 %v8599
    %9400 = vmatpush.bf16.msra.mxu0 %v8575
    %9401 = vmatmul.bf16.gmra.mxu0 %v6981
    %v9402 = vpop.f32.mrf.mxu0
    %v9403 = vadd.f32 %v7375, %v9402
    %v9404 = vpop.f32.mrf.mxu0
    %9405 = vdwg.mxu0
    %9406 = vmatpush.bf16.msra.mxu0 %v8935
    %9407 = vmatpush.bf16.msra.mxu0 %v8911
    %9408 = vmatpush.bf16.msra.mxu0 %v8887
    %9409 = vmatpush.bf16.msra.mxu0 %v8863
    %9410 = vmatpush.bf16.msra.mxu0 %v8839
    %9411 = vmatpush.bf16.msra.mxu0 %v8815
    %9412 = vmatpush.bf16.msra.mxu0 %v8791
    %9413 = vmatpush.bf16.msra.mxu0 %v8767
    %9414 = vmatmul.bf16.gmra.mxu0 %v6982
    %v9415 = vpop.f32.mrf.mxu0
    %v9416 = vadd.f32 %v9403, %v9415
    %v9417 = vpop.f32.mrf.mxu0
    %9418 = vdwg.mxu0
    %9419 = vmatpush.bf16.msra.mxu0 %v8744
    %9420 = vmatpush.bf16.msra.mxu0 %v8720
    %9421 = vmatpush.bf16.msra.mxu0 %v8696
    %9422 = vmatpush.bf16.msra.mxu0 %v8672
    %9423 = vmatpush.bf16.msra.mxu0 %v8648
    %9424 = vmatpush.bf16.msra.mxu0 %v8624
    %9425 = vmatpush.bf16.msra.mxu0 %v8600
    %9426 = vmatpush.bf16.msra.mxu0 %v8576
    %9427 = vmatmul.bf16.gmra.mxu0 %v6981
    %v9428 = vpop.f32.mrf.mxu0
    %v9429 = vadd.f32 %v7376, %v9428
    %v9430 = vpop.f32.mrf.mxu0
    %9431 = vdwg.mxu0
    %9432 = vmatpush.bf16.msra.mxu0 %v8936
    %9433 = vmatpush.bf16.msra.mxu0 %v8912
    %9434 = vmatpush.bf16.msra.mxu0 %v8888
    %9435 = vmatpush.bf16.msra.mxu0 %v8864
    %9436 = vmatpush.bf16.msra.mxu0 %v8840
    %9437 = vmatpush.bf16.msra.mxu0 %v8816
    %9438 = vmatpush.bf16.msra.mxu0 %v8792
    %9439 = vmatpush.bf16.msra.mxu0 %v8768
    %9440 = vmatmul.bf16.gmra.mxu0 %v6982
    %v9441 = vpop.f32.mrf.mxu0
    %v9442 = vadd.f32 %v9429, %v9441
    %v9443 = vpop.f32.mrf.mxu0
    %9444 = vdwg.mxu0
    %9445 = vmatpush.bf16.msra.mxu0 %v8745
    %9446 = vmatpush.bf16.msra.mxu0 %v8721
    %9447 = vmatpush.bf16.msra.mxu0 %v8697
    %9448 = vmatpush.bf16.msra.mxu0 %v8673
    %9449 = vmatpush.bf16.msra.mxu0 %v8649
    %9450 = vmatpush.bf16.msra.mxu0 %v8625
    %9451 = vmatpush.bf16.msra.mxu0 %v8601
    %9452 = vmatpush.bf16.msra.mxu0 %v8577
    %9453 = vmatmul.bf16.gmra.mxu0 %v6981
    %v9454 = vpop.f32.mrf.mxu0
    %v9455 = vadd.f32 %v7377, %v9454
    %v9456 = vpop.f32.mrf.mxu0
    %9457 = vdwg.mxu0
    %9458 = vmatpush.bf16.msra.mxu0 %v8937
    %9459 = vmatpush.bf16.msra.mxu0 %v8913
    %9460 = vmatpush.bf16.msra.mxu0 %v8889
    %9461 = vmatpush.bf16.msra.mxu0 %v8865
    %9462 = vmatpush.bf16.msra.mxu0 %v8841
    %9463 = vmatpush.bf16.msra.mxu0 %v8817
    %9464 = vmatpush.bf16.msra.mxu0 %v8793
    %9465 = vmatpush.bf16.msra.mxu0 %v8769
    %9466 = vmatmul.bf16.gmra.mxu0 %v6982
    %v9467 = vpop.f32.mrf.mxu0
    %v9468 = vadd.f32 %v9455, %v9467
    %v9469 = vpop.f32.mrf.mxu0
    %9470 = vdwg.mxu0
    %9471 = vmatpush.bf16.msra.mxu0 %v8746
    %9472 = vmatpush.bf16.msra.mxu0 %v8722
    %9473 = vmatpush.bf16.msra.mxu0 %v8698
    %9474 = vmatpush.bf16.msra.mxu0 %v8674
    %9475 = vmatpush.bf16.msra.mxu0 %v8650
    %9476 = vmatpush.bf16.msra.mxu0 %v8626
    %9477 = vmatpush.bf16.msra.mxu0 %v8602
    %9478 = vmatpush.bf16.msra.mxu0 %v8578
    %9479 = vmatmul.bf16.gmra.mxu0 %v6981
    %v9480 = vpop.f32.mrf.mxu0
    %v9481 = vadd.f32 %v7378, %v9480
    %v9482 = vpop.f32.mrf.mxu0
    %9483 = vdwg.mxu0
    %9484 = vmatpush.bf16.msra.mxu0 %v8938
    %9485 = vmatpush.bf16.msra.mxu0 %v8914
    %9486 = vmatpush.bf16.msra.mxu0 %v8890
    %9487 = vmatpush.bf16.msra.mxu0 %v8866
    %9488 = vmatpush.bf16.msra.mxu0 %v8842
    %9489 = vmatpush.bf16.msra.mxu0 %v8818
    %9490 = vmatpush.bf16.msra.mxu0 %v8794
    %9491 = vmatpush.bf16.msra.mxu0 %v8770
    %9492 = vmatmul.bf16.gmra.mxu0 %v6982
    %v9493 = vpop.f32.mrf.mxu0
    %v9494 = vadd.f32 %v9481, %v9493
    %v9495 = vpop.f32.mrf.mxu0
    %9496 = vdwg.mxu0
    %9497 = vmatpush.bf16.msra.mxu0 %v8747
    %9498 = vmatpush.bf16.msra.mxu0 %v8723
    %9499 = vmatpush.bf16.msra.mxu0 %v8699
    %9500 = vmatpush.bf16.msra.mxu0 %v8675
    %9501 = vmatpush.bf16.msra.mxu0 %v8651
    %9502 = vmatpush.bf16.msra.mxu0 %v8627
    %9503 = vmatpush.bf16.msra.mxu0 %v8603
    %9504 = vmatpush.bf16.msra.mxu0 %v8579
    %9505 = vmatmul.bf16.gmra.mxu0 %v6981
    %v9506 = vpop.f32.mrf.mxu0
    %v9507 = vadd.f32 %v7379, %v9506
    %v9508 = vpop.f32.mrf.mxu0
    %9509 = vdwg.mxu0
    %9510 = vmatpush.bf16.msra.mxu0 %v8939
    %9511 = vmatpush.bf16.msra.mxu0 %v8915
    %9512 = vmatpush.bf16.msra.mxu0 %v8891
    %9513 = vmatpush.bf16.msra.mxu0 %v8867
    %9514 = vmatpush.bf16.msra.mxu0 %v8843
    %9515 = vmatpush.bf16.msra.mxu0 %v8819
    %9516 = vmatpush.bf16.msra.mxu0 %v8795
    %9517 = vmatpush.bf16.msra.mxu0 %v8771
    %9518 = vmatmul.bf16.gmra.mxu0 %v6982
    %v9519 = vpop.f32.mrf.mxu0
    %v9520 = vadd.f32 %v9507, %v9519
    %v9521 = vpop.f32.mrf.mxu0
    %9522 = vdwg.mxu0
    %9523 = vmatpush.bf16.msra.mxu0 %v8748
    %9524 = vmatpush.bf16.msra.mxu0 %v8724
    %9525 = vmatpush.bf16.msra.mxu0 %v8700
    %9526 = vmatpush.bf16.msra.mxu0 %v8676
    %9527 = vmatpush.bf16.msra.mxu0 %v8652
    %9528 = vmatpush.bf16.msra.mxu0 %v8628
    %9529 = vmatpush.bf16.msra.mxu0 %v8604
    %9530 = vmatpush.bf16.msra.mxu0 %v8580
    %9531 = vmatmul.bf16.gmra.mxu0 %v6981
    %v9532 = vpop.f32.mrf.mxu0
    %v9533 = vadd.f32 %v7380, %v9532
    %v9534 = vpop.f32.mrf.mxu0
    %9535 = vdwg.mxu0
    %9536 = vmatpush.bf16.msra.mxu0 %v8940
    %9537 = vmatpush.bf16.msra.mxu0 %v8916
    %9538 = vmatpush.bf16.msra.mxu0 %v8892
    %9539 = vmatpush.bf16.msra.mxu0 %v8868
    %9540 = vmatpush.bf16.msra.mxu0 %v8844
    %9541 = vmatpush.bf16.msra.mxu0 %v8820
    %9542 = vmatpush.bf16.msra.mxu0 %v8796
    %9543 = vmatpush.bf16.msra.mxu0 %v8772
    %9544 = vmatmul.bf16.gmra.mxu0 %v6982
    %v9545 = vpop.f32.mrf.mxu0
    %v9546 = vadd.f32 %v9533, %v9545
    %v9547 = vpop.f32.mrf.mxu0
    %9548 = vdwg.mxu0
    %9549 = vmatpush.bf16.msra.mxu0 %v8749
    %9550 = vmatpush.bf16.msra.mxu0 %v8725
    %9551 = vmatpush.bf16.msra.mxu0 %v8701
    %9552 = vmatpush.bf16.msra.mxu0 %v8677
    %9553 = vmatpush.bf16.msra.mxu0 %v8653
    %9554 = vmatpush.bf16.msra.mxu0 %v8629
    %9555 = vmatpush.bf16.msra.mxu0 %v8605
    %9556 = vmatpush.bf16.msra.mxu0 %v8581
    %9557 = vmatmul.bf16.gmra.mxu0 %v6981
    %v9558 = vpop.f32.mrf.mxu0
    %v9559 = vadd.f32 %v7381, %v9558
    %v9560 = vpop.f32.mrf.mxu0
    %9561 = vdwg.mxu0
    %9562 = vmatpush.bf16.msra.mxu0 %v8941
    %9563 = vmatpush.bf16.msra.mxu0 %v8917
    %9564 = vmatpush.bf16.msra.mxu0 %v8893
    %9565 = vmatpush.bf16.msra.mxu0 %v8869
    %9566 = vmatpush.bf16.msra.mxu0 %v8845
    %9567 = vmatpush.bf16.msra.mxu0 %v8821
    %9568 = vmatpush.bf16.msra.mxu0 %v8797
    %9569 = vmatpush.bf16.msra.mxu0 %v8773
    %9570 = vmatmul.bf16.gmra.mxu0 %v6982
    %v9571 = vpop.f32.mrf.mxu0
    %v9572 = vadd.f32 %v9559, %v9571
    %v9573 = vpop.f32.mrf.mxu0
    %9574 = vdwg.mxu0
    %9575 = vmatpush.bf16.msra.mxu0 %v8750
    %9576 = vmatpush.bf16.msra.mxu0 %v8726
    %9577 = vmatpush.bf16.msra.mxu0 %v8702
    %9578 = vmatpush.bf16.msra.mxu0 %v8678
    %9579 = vmatpush.bf16.msra.mxu0 %v8654
    %9580 = vmatpush.bf16.msra.mxu0 %v8630
    %9581 = vmatpush.bf16.msra.mxu0 %v8606
    %9582 = vmatpush.bf16.msra.mxu0 %v8582
    %9583 = vmatmul.bf16.gmra.mxu0 %v6981
    %v9584 = vpop.f32.mrf.mxu0
    %v9585 = vadd.f32 %v7382, %v9584
    %v9586 = vpop.f32.mrf.mxu0
    %9587 = vdwg.mxu0
    %9588 = vmatpush.bf16.msra.mxu0 %v8942
    %9589 = vmatpush.bf16.msra.mxu0 %v8918
    %9590 = vmatpush.bf16.msra.mxu0 %v8894
    %9591 = vmatpush.bf16.msra.mxu0 %v8870
    %9592 = vmatpush.bf16.msra.mxu0 %v8846
    %9593 = vmatpush.bf16.msra.mxu0 %v8822
    %9594 = vmatpush.bf16.msra.mxu0 %v8798
    %9595 = vmatpush.bf16.msra.mxu0 %v8774
    %9596 = vmatmul.bf16.gmra.mxu0 %v6982
    %v9597 = vpop.f32.mrf.mxu0
    %v9598 = vadd.f32 %v9585, %v9597
    %v9599 = vpop.f32.mrf.mxu0
    %9600 = vdwg.mxu0
    %9601 = vmatpush.bf16.msra.mxu0 %v8751
    %9602 = vmatpush.bf16.msra.mxu0 %v8727
    %9603 = vmatpush.bf16.msra.mxu0 %v8703
    %9604 = vmatpush.bf16.msra.mxu0 %v8679
    %9605 = vmatpush.bf16.msra.mxu0 %v8655
    %9606 = vmatpush.bf16.msra.mxu0 %v8631
    %9607 = vmatpush.bf16.msra.mxu0 %v8607
    %9608 = vmatpush.bf16.msra.mxu0 %v8583
    %9609 = vmatmul.bf16.gmra.mxu0 %v6981
    %v9610 = vpop.f32.mrf.mxu0
    %v9611 = vadd.f32 %v7383, %v9610
    %v9612 = vpop.f32.mrf.mxu0
    %9613 = vdwg.mxu0
    %9614 = vmatpush.bf16.msra.mxu0 %v8943
    %9615 = vmatpush.bf16.msra.mxu0 %v8919
    %9616 = vmatpush.bf16.msra.mxu0 %v8895
    %9617 = vmatpush.bf16.msra.mxu0 %v8871
    %9618 = vmatpush.bf16.msra.mxu0 %v8847
    %9619 = vmatpush.bf16.msra.mxu0 %v8823
    %9620 = vmatpush.bf16.msra.mxu0 %v8799
    %9621 = vmatpush.bf16.msra.mxu0 %v8775
    %9622 = vmatmul.bf16.gmra.mxu0 %v6982
    %v9623 = vpop.f32.mrf.mxu0
    %v9624 = vadd.f32 %v9611, %v9623
    %v9625 = vpop.f32.mrf.mxu0
    %9626 = vdwg.mxu0
    %9627 = vmatpush.bf16.msra.mxu0 %v8752
    %9628 = vmatpush.bf16.msra.mxu0 %v8728
    %9629 = vmatpush.bf16.msra.mxu0 %v8704
    %9630 = vmatpush.bf16.msra.mxu0 %v8680
    %9631 = vmatpush.bf16.msra.mxu0 %v8656
    %9632 = vmatpush.bf16.msra.mxu0 %v8632
    %9633 = vmatpush.bf16.msra.mxu0 %v8608
    %9634 = vmatpush.bf16.msra.mxu0 %v8584
    %9635 = vmatmul.bf16.gmra.mxu0 %v6981
    %v9636 = vpop.f32.mrf.mxu0
    %v9637 = vadd.f32 %v7384, %v9636
    %v9638 = vpop.f32.mrf.mxu0
    %9639 = vdwg.mxu0
    %9640 = vmatpush.bf16.msra.mxu0 %v8944
    %9641 = vmatpush.bf16.msra.mxu0 %v8920
    %9642 = vmatpush.bf16.msra.mxu0 %v8896
    %9643 = vmatpush.bf16.msra.mxu0 %v8872
    %9644 = vmatpush.bf16.msra.mxu0 %v8848
    %9645 = vmatpush.bf16.msra.mxu0 %v8824
    %9646 = vmatpush.bf16.msra.mxu0 %v8800
    %9647 = vmatpush.bf16.msra.mxu0 %v8776
    %9648 = vmatmul.bf16.gmra.mxu0 %v6982
    %v9649 = vpop.f32.mrf.mxu0
    %v9650 = vadd.f32 %v9637, %v9649
    %v9651 = vpop.f32.mrf.mxu0
    %9652 = vdwg.mxu0
    %9653 = vmatpush.bf16.msra.mxu0 %v8753
    %9654 = vmatpush.bf16.msra.mxu0 %v8729
    %9655 = vmatpush.bf16.msra.mxu0 %v8705
    %9656 = vmatpush.bf16.msra.mxu0 %v8681
    %9657 = vmatpush.bf16.msra.mxu0 %v8657
    %9658 = vmatpush.bf16.msra.mxu0 %v8633
    %9659 = vmatpush.bf16.msra.mxu0 %v8609
    %9660 = vmatpush.bf16.msra.mxu0 %v8585
    %9661 = vmatmul.bf16.gmra.mxu0 %v6981
    %v9662 = vpop.f32.mrf.mxu0
    %v9663 = vadd.f32 %v7385, %v9662
    %v9664 = vpop.f32.mrf.mxu0
    %9665 = vdwg.mxu0
    %9666 = vmatpush.bf16.msra.mxu0 %v8945
    %9667 = vmatpush.bf16.msra.mxu0 %v8921
    %9668 = vmatpush.bf16.msra.mxu0 %v8897
    %9669 = vmatpush.bf16.msra.mxu0 %v8873
    %9670 = vmatpush.bf16.msra.mxu0 %v8849
    %9671 = vmatpush.bf16.msra.mxu0 %v8825
    %9672 = vmatpush.bf16.msra.mxu0 %v8801
    %9673 = vmatpush.bf16.msra.mxu0 %v8777
    %9674 = vmatmul.bf16.gmra.mxu0 %v6982
    %v9675 = vpop.f32.mrf.mxu0
    %v9676 = vadd.f32 %v9663, %v9675
    %v9677 = vpop.f32.mrf.mxu0
    %9678 = vdwg.mxu0
    %9679 = vmatpush.bf16.msra.mxu0 %v8754
    %9680 = vmatpush.bf16.msra.mxu0 %v8730
    %9681 = vmatpush.bf16.msra.mxu0 %v8706
    %9682 = vmatpush.bf16.msra.mxu0 %v8682
    %9683 = vmatpush.bf16.msra.mxu0 %v8658
    %9684 = vmatpush.bf16.msra.mxu0 %v8634
    %9685 = vmatpush.bf16.msra.mxu0 %v8610
    %9686 = vmatpush.bf16.msra.mxu0 %v8586
    %9687 = vmatmul.bf16.gmra.mxu0 %v6981
    %v9688 = vpop.f32.mrf.mxu0
    %v9689 = vadd.f32 %v7386, %v9688
    %v9690 = vpop.f32.mrf.mxu0
    %9691 = vdwg.mxu0
    %9692 = vmatpush.bf16.msra.mxu0 %v8946
    %9693 = vmatpush.bf16.msra.mxu0 %v8922
    %9694 = vmatpush.bf16.msra.mxu0 %v8898
    %9695 = vmatpush.bf16.msra.mxu0 %v8874
    %9696 = vmatpush.bf16.msra.mxu0 %v8850
    %9697 = vmatpush.bf16.msra.mxu0 %v8826
    %9698 = vmatpush.bf16.msra.mxu0 %v8802
    %9699 = vmatpush.bf16.msra.mxu0 %v8778
    %9700 = vmatmul.bf16.gmra.mxu0 %v6982
    %v9701 = vpop.f32.mrf.mxu0
    %v9702 = vadd.f32 %v9689, %v9701
    %v9703 = vpop.f32.mrf.mxu0
    %9704 = vdwg.mxu0
    %9705 = vmatpush.bf16.msra.mxu0 %v8755
    %9706 = vmatpush.bf16.msra.mxu0 %v8731
    %9707 = vmatpush.bf16.msra.mxu0 %v8707
    %9708 = vmatpush.bf16.msra.mxu0 %v8683
    %9709 = vmatpush.bf16.msra.mxu0 %v8659
    %9710 = vmatpush.bf16.msra.mxu0 %v8635
    %9711 = vmatpush.bf16.msra.mxu0 %v8611
    %9712 = vmatpush.bf16.msra.mxu0 %v8587
    %9713 = vmatmul.bf16.gmra.mxu0 %v6981
    %v9714 = vpop.f32.mrf.mxu0
    %v9715 = vadd.f32 %v7387, %v9714
    %v9716 = vpop.f32.mrf.mxu0
    %9717 = vdwg.mxu0
    %9718 = vmatpush.bf16.msra.mxu0 %v8947
    %9719 = vmatpush.bf16.msra.mxu0 %v8923
    %9720 = vmatpush.bf16.msra.mxu0 %v8899
    %9721 = vmatpush.bf16.msra.mxu0 %v8875
    %9722 = vmatpush.bf16.msra.mxu0 %v8851
    %9723 = vmatpush.bf16.msra.mxu0 %v8827
    %9724 = vmatpush.bf16.msra.mxu0 %v8803
    %9725 = vmatpush.bf16.msra.mxu0 %v8779
    %9726 = vmatmul.bf16.gmra.mxu0 %v6982
    %v9727 = vpop.f32.mrf.mxu0
    %v9728 = vadd.f32 %v9715, %v9727
    %v9729 = vpop.f32.mrf.mxu0
    %9730 = vdwg.mxu0
    %9731 = vmatpush.bf16.msra.mxu0 %v8756
    %9732 = vmatpush.bf16.msra.mxu0 %v8732
    %9733 = vmatpush.bf16.msra.mxu0 %v8708
    %9734 = vmatpush.bf16.msra.mxu0 %v8684
    %9735 = vmatpush.bf16.msra.mxu0 %v8660
    %9736 = vmatpush.bf16.msra.mxu0 %v8636
    %9737 = vmatpush.bf16.msra.mxu0 %v8612
    %9738 = vmatpush.bf16.msra.mxu0 %v8588
    %9739 = vmatmul.bf16.gmra.mxu0 %v6981
    %v9740 = vpop.f32.mrf.mxu0
    %v9741 = vadd.f32 %v7388, %v9740
    %v9742 = vpop.f32.mrf.mxu0
    %9743 = vdwg.mxu0
    %9744 = vmatpush.bf16.msra.mxu0 %v8948
    %9745 = vmatpush.bf16.msra.mxu0 %v8924
    %9746 = vmatpush.bf16.msra.mxu0 %v8900
    %9747 = vmatpush.bf16.msra.mxu0 %v8876
    %9748 = vmatpush.bf16.msra.mxu0 %v8852
    %9749 = vmatpush.bf16.msra.mxu0 %v8828
    %9750 = vmatpush.bf16.msra.mxu0 %v8804
    %9751 = vmatpush.bf16.msra.mxu0 %v8780
    %9752 = vmatmul.bf16.gmra.mxu0 %v6982
    %v9753 = vpop.f32.mrf.mxu0
    %v9754 = vadd.f32 %v9741, %v9753
    %v9755 = vpop.f32.mrf.mxu0
    %9756 = vdwg.mxu0
    %9757 = vmatpush.bf16.msra.mxu0 %v8757
    %9758 = vmatpush.bf16.msra.mxu0 %v8733
    %9759 = vmatpush.bf16.msra.mxu0 %v8709
    %9760 = vmatpush.bf16.msra.mxu0 %v8685
    %9761 = vmatpush.bf16.msra.mxu0 %v8661
    %9762 = vmatpush.bf16.msra.mxu0 %v8637
    %9763 = vmatpush.bf16.msra.mxu0 %v8613
    %9764 = vmatpush.bf16.msra.mxu0 %v8589
    %9765 = vmatmul.bf16.gmra.mxu0 %v6981
    %v9766 = vpop.f32.mrf.mxu0
    %v9767 = vadd.f32 %v7389, %v9766
    %v9768 = vpop.f32.mrf.mxu0
    %9769 = vdwg.mxu0
    %9770 = vmatpush.bf16.msra.mxu0 %v8949
    %9771 = vmatpush.bf16.msra.mxu0 %v8925
    %9772 = vmatpush.bf16.msra.mxu0 %v8901
    %9773 = vmatpush.bf16.msra.mxu0 %v8877
    %9774 = vmatpush.bf16.msra.mxu0 %v8853
    %9775 = vmatpush.bf16.msra.mxu0 %v8829
    %9776 = vmatpush.bf16.msra.mxu0 %v8805
    %9777 = vmatpush.bf16.msra.mxu0 %v8781
    %9778 = vmatmul.bf16.gmra.mxu0 %v6982
    %v9779 = vpop.f32.mrf.mxu0
    %v9780 = vadd.f32 %v9767, %v9779
    %v9781 = vpop.f32.mrf.mxu0
    %9782 = vdwg.mxu0
    %9783 = vmatpush.bf16.msra.mxu0 %v8758
    %9784 = vmatpush.bf16.msra.mxu0 %v8734
    %9785 = vmatpush.bf16.msra.mxu0 %v8710
    %9786 = vmatpush.bf16.msra.mxu0 %v8686
    %9787 = vmatpush.bf16.msra.mxu0 %v8662
    %9788 = vmatpush.bf16.msra.mxu0 %v8638
    %9789 = vmatpush.bf16.msra.mxu0 %v8614
    %9790 = vmatpush.bf16.msra.mxu0 %v8590
    %9791 = vmatmul.bf16.gmra.mxu0 %v6981
    %v9792 = vpop.f32.mrf.mxu0
    %v9793 = vadd.f32 %v7390, %v9792
    %v9794 = vpop.f32.mrf.mxu0
    %9795 = vdwg.mxu0
    %9796 = vmatpush.bf16.msra.mxu0 %v8950
    %9797 = vmatpush.bf16.msra.mxu0 %v8926
    %9798 = vmatpush.bf16.msra.mxu0 %v8902
    %9799 = vmatpush.bf16.msra.mxu0 %v8878
    %9800 = vmatpush.bf16.msra.mxu0 %v8854
    %9801 = vmatpush.bf16.msra.mxu0 %v8830
    %9802 = vmatpush.bf16.msra.mxu0 %v8806
    %9803 = vmatpush.bf16.msra.mxu0 %v8782
    %9804 = vmatmul.bf16.gmra.mxu0 %v6982
    %v9805 = vpop.f32.mrf.mxu0
    %v9806 = vadd.f32 %v9793, %v9805
    %v9807 = vpop.f32.mrf.mxu0
    %9808 = vdwg.mxu0
    %9809 = vmatpush.bf16.msra.mxu0 %v8759
    %9810 = vmatpush.bf16.msra.mxu0 %v8735
    %9811 = vmatpush.bf16.msra.mxu0 %v8711
    %9812 = vmatpush.bf16.msra.mxu0 %v8687
    %9813 = vmatpush.bf16.msra.mxu0 %v8663
    %9814 = vmatpush.bf16.msra.mxu0 %v8639
    %9815 = vmatpush.bf16.msra.mxu0 %v8615
    %9816 = vmatpush.bf16.msra.mxu0 %v8591
    %9817 = vmatmul.bf16.gmra.mxu0 %v6981
    %v9818 = vpop.f32.mrf.mxu0
    %v9819 = vadd.f32 %v7391, %v9818
    %v9820 = vpop.f32.mrf.mxu0
    %9821 = vdwg.mxu0
    %9822 = vmatpush.bf16.msra.mxu0 %v8951
    %9823 = vmatpush.bf16.msra.mxu0 %v8927
    %9824 = vmatpush.bf16.msra.mxu0 %v8903
    %9825 = vmatpush.bf16.msra.mxu0 %v8879
    %9826 = vmatpush.bf16.msra.mxu0 %v8855
    %9827 = vmatpush.bf16.msra.mxu0 %v8831
    %9828 = vmatpush.bf16.msra.mxu0 %v8807
    %9829 = vmatpush.bf16.msra.mxu0 %v8783
    %9830 = vmatmul.bf16.gmra.mxu0 %v6982
    %v9831 = vpop.f32.mrf.mxu0
    %v9832 = vadd.f32 %v9819, %v9831
    %v9833 = vpop.f32.mrf.mxu0
    %9834 = vdwg.mxu0
    %9835 = vmatpush.bf16.msra.mxu0 %v8760
    %9836 = vmatpush.bf16.msra.mxu0 %v8736
    %9837 = vmatpush.bf16.msra.mxu0 %v8712
    %9838 = vmatpush.bf16.msra.mxu0 %v8688
    %9839 = vmatpush.bf16.msra.mxu0 %v8664
    %9840 = vmatpush.bf16.msra.mxu0 %v8640
    %9841 = vmatpush.bf16.msra.mxu0 %v8616
    %9842 = vmatpush.bf16.msra.mxu0 %v8592
    %9843 = vmatmul.bf16.gmra.mxu0 %v6981
    %v9844 = vpop.f32.mrf.mxu0
    %v9845 = vadd.f32 %v7392, %v9844
    %v9846 = vpop.f32.mrf.mxu0
    %9847 = vdwg.mxu0
    %9848 = vmatpush.bf16.msra.mxu0 %v8952
    %9849 = vmatpush.bf16.msra.mxu0 %v8928
    %9850 = vmatpush.bf16.msra.mxu0 %v8904
    %9851 = vmatpush.bf16.msra.mxu0 %v8880
    %9852 = vmatpush.bf16.msra.mxu0 %v8856
    %9853 = vmatpush.bf16.msra.mxu0 %v8832
    %9854 = vmatpush.bf16.msra.mxu0 %v8808
    %9855 = vmatpush.bf16.msra.mxu0 %v8784
    %9856 = vmatmul.bf16.gmra.mxu0 %v6982
    %v9857 = vpop.f32.mrf.mxu0
    %v9858 = vadd.f32 %v9845, %v9857
    %v9859 = vpop.f32.mrf.mxu0
    %9860 = vdwg.mxu0
    %9861 = vmatpush.bf16.msra.mxu0 %v8761
    %9862 = vmatpush.bf16.msra.mxu0 %v8737
    %9863 = vmatpush.bf16.msra.mxu0 %v8713
    %9864 = vmatpush.bf16.msra.mxu0 %v8689
    %9865 = vmatpush.bf16.msra.mxu0 %v8665
    %9866 = vmatpush.bf16.msra.mxu0 %v8641
    %9867 = vmatpush.bf16.msra.mxu0 %v8617
    %9868 = vmatpush.bf16.msra.mxu0 %v8593
    %9869 = vmatmul.bf16.gmra.mxu0 %v6981
    %v9870 = vpop.f32.mrf.mxu0
    %v9871 = vadd.f32 %v7393, %v9870
    %v9872 = vpop.f32.mrf.mxu0
    %9873 = vdwg.mxu0
    %9874 = vmatpush.bf16.msra.mxu0 %v8953
    %9875 = vmatpush.bf16.msra.mxu0 %v8929
    %9876 = vmatpush.bf16.msra.mxu0 %v8905
    %9877 = vmatpush.bf16.msra.mxu0 %v8881
    %9878 = vmatpush.bf16.msra.mxu0 %v8857
    %9879 = vmatpush.bf16.msra.mxu0 %v8833
    %9880 = vmatpush.bf16.msra.mxu0 %v8809
    %9881 = vmatpush.bf16.msra.mxu0 %v8785
    %9882 = vmatmul.bf16.gmra.mxu0 %v6982
    %v9883 = vpop.f32.mrf.mxu0
    %v9884 = vadd.f32 %v9871, %v9883
    %v9885 = vpop.f32.mrf.mxu0
    %9886 = vdwg.mxu0
    %9887 = vmatpush.bf16.msra.mxu0 %v8762
    %9888 = vmatpush.bf16.msra.mxu0 %v8738
    %9889 = vmatpush.bf16.msra.mxu0 %v8714
    %9890 = vmatpush.bf16.msra.mxu0 %v8690
    %9891 = vmatpush.bf16.msra.mxu0 %v8666
    %9892 = vmatpush.bf16.msra.mxu0 %v8642
    %9893 = vmatpush.bf16.msra.mxu0 %v8618
    %9894 = vmatpush.bf16.msra.mxu0 %v8594
    %9895 = vmatmul.bf16.gmra.mxu0 %v6981
    %v9896 = vpop.f32.mrf.mxu0
    %v9897 = vadd.f32 %v7394, %v9896
    %v9898 = vpop.f32.mrf.mxu0
    %9899 = vdwg.mxu0
    %9900 = vmatpush.bf16.msra.mxu0 %v8954
    %9901 = vmatpush.bf16.msra.mxu0 %v8930
    %9902 = vmatpush.bf16.msra.mxu0 %v8906
    %9903 = vmatpush.bf16.msra.mxu0 %v8882
    %9904 = vmatpush.bf16.msra.mxu0 %v8858
    %9905 = vmatpush.bf16.msra.mxu0 %v8834
    %9906 = vmatpush.bf16.msra.mxu0 %v8810
    %9907 = vmatpush.bf16.msra.mxu0 %v8786
    %9908 = vmatmul.bf16.gmra.mxu0 %v6982
    %v9909 = vpop.f32.mrf.mxu0
    %v9910 = vadd.f32 %v9897, %v9909
    %v9911 = vpop.f32.mrf.mxu0
    %9912 = vdwg.mxu0
    %9913 = vmatpush.bf16.msra.mxu0 %v8763
    %9914 = vmatpush.bf16.msra.mxu0 %v8739
    %9915 = vmatpush.bf16.msra.mxu0 %v8715
    %9916 = vmatpush.bf16.msra.mxu0 %v8691
    %9917 = vmatpush.bf16.msra.mxu0 %v8667
    %9918 = vmatpush.bf16.msra.mxu0 %v8643
    %9919 = vmatpush.bf16.msra.mxu0 %v8619
    %9920 = vmatpush.bf16.msra.mxu0 %v8595
    %9921 = vmatmul.bf16.gmra.mxu0 %v6981
    %v9922 = vpop.f32.mrf.mxu0
    %v9923 = vadd.f32 %v7395, %v9922
    %v9924 = vpop.f32.mrf.mxu0
    %9925 = vdwg.mxu0
    %9926 = vmatpush.bf16.msra.mxu0 %v8955
    %9927 = vmatpush.bf16.msra.mxu0 %v8931
    %9928 = vmatpush.bf16.msra.mxu0 %v8907
    %9929 = vmatpush.bf16.msra.mxu0 %v8883
    %9930 = vmatpush.bf16.msra.mxu0 %v8859
    %9931 = vmatpush.bf16.msra.mxu0 %v8835
    %9932 = vmatpush.bf16.msra.mxu0 %v8811
    %9933 = vmatpush.bf16.msra.mxu0 %v8787
    %9934 = vmatmul.bf16.gmra.mxu0 %v6982
    %v9935 = vpop.f32.mrf.mxu0
    %v9936 = vadd.f32 %v9923, %v9935
    %v9937 = vpop.f32.mrf.mxu0
    %9938 = vdwg.mxu0
    %9939 = vmatpush.bf16.msra.mxu0 %v8764
    %9940 = vmatpush.bf16.msra.mxu0 %v8740
    %9941 = vmatpush.bf16.msra.mxu0 %v8716
    %9942 = vmatpush.bf16.msra.mxu0 %v8692
    %9943 = vmatpush.bf16.msra.mxu0 %v8668
    %9944 = vmatpush.bf16.msra.mxu0 %v8644
    %9945 = vmatpush.bf16.msra.mxu0 %v8620
    %9946 = vmatpush.bf16.msra.mxu0 %v8596
    %9947 = vmatmul.bf16.gmra.mxu0 %v6981
    %v9948 = vpop.f32.mrf.mxu0
    %v9949 = vadd.f32 %v7396, %v9948
    %v9950 = vpop.f32.mrf.mxu0
    %9951 = vdwg.mxu0
    %9952 = vmatpush.bf16.msra.mxu0 %v8956
    %9953 = vmatpush.bf16.msra.mxu0 %v8932
    %9954 = vmatpush.bf16.msra.mxu0 %v8908
    %9955 = vmatpush.bf16.msra.mxu0 %v8884
    %9956 = vmatpush.bf16.msra.mxu0 %v8860
    %9957 = vmatpush.bf16.msra.mxu0 %v8836
    %9958 = vmatpush.bf16.msra.mxu0 %v8812
    %9959 = vmatpush.bf16.msra.mxu0 %v8788
    %9960 = vmatmul.bf16.gmra.mxu0 %v6982
    %v9961 = vpop.f32.mrf.mxu0
    %v9962 = vadd.f32 %v9949, %v9961
    %v9963 = vpop.f32.mrf.mxu0
    %9964 = vdwg.mxu0
    %v9965 = vpack.c.bf16 %v9390, %v9364
    %v9966 = vpack.c.bf16 %v9442, %v9416
    %v9967 = vpack.c.bf16 %v9494, %v9468
    %v9968 = vpack.c.bf16 %v9546, %v9520
    %v9969 = vpack.c.bf16 %v9598, %v9572
    %v9970 = vpack.c.bf16 %v9650, %v9624
    %v9971 = vpack.c.bf16 %v9702, %v9676
    %v9972 = vpack.c.bf16 %v9754, %v9728
    %v9973 = vpack.c.bf16 %v9806, %v9780
    %v9974 = vpack.c.bf16 %v9858, %v9832
    %v9975 = vpack.c.bf16 %v9910, %v9884
    %v9976 = vpack.c.bf16 %v9962, %v9936
    %9977 = vst [vmem:[%s12] sm:$0xff] %v9965
    %9978 = vst [vmem:[%s12 + $0x8] sm:$0xff] %v9966
    %9979 = vst [vmem:[%s12 + $0x10] sm:$0xff] %v9967
    %9980 = vst [vmem:[%s12 + $0x18] sm:$0xff] %v9968
    %9981 = vst [vmem:[%s12 + $0x20] sm:$0xff] %v9969
    %9982 = vst [vmem:[%s12 + $0x28] sm:$0xff] %v9970
    %9983 = vst [vmem:[%s12 + $0x30] sm:$0xff] %v9971
    %9984 = vst [vmem:[%s12 + $0x38] sm:$0xff] %v9972
    %9985 = vst [vmem:[%s12 + $0x40] sm:$0xff] %v9973
    %9986 = vst [vmem:[%s12 + $0x48] sm:$0xff] %v9974
    %9987 = vst [vmem:[%s12 + $0x50] sm:$0xff] %v9975
    %9988 = vst [vmem:[%s12 + $0x58] sm:$0xff] %v9976
    %9989 = vst [vmem:[%s13] sm:$0xff] %v6815
    %9990 = vst [vmem:[%s14] sm:$0xff] %v6841
    // Predicated region
    $region86: #{vae_forward.1} parent=1 // pred_check
      _
    $region87: #{vae_forward.1} parent=1 // pred_check_branch
      %9992 = sbr.rel (0) target = $region89
    $region88: #{vae_forward.1} parent=1 // pred_region
      _
    $region89: #{vae_forward.1} parent=1 // pred_fallthru
      _
    // Predicated region
    $region90: #{vae_forward.1} parent=1 // pred_check
      _
    $region91: #{vae_forward.1} parent=1 // pred_check_branch
      %9994 = sbr.rel (0) target = $region93
    $region92: #{vae_forward.1} parent=1 // pred_region
      _
    $region93: #{vae_forward.1} parent=1 // pred_fallthru
      _
    // Predicated region
    $region94: #{vae_forward.1} parent=1 // pred_check
      _
    $region95: #{vae_forward.1} parent=1 // pred_check_branch
      %9996 = sbr.rel (0) target = $region97
    $region96: #{vae_forward.1} parent=1 // pred_region
      _
    $region97: #{vae_forward.1} parent=1 // pred_fallthru
      _
    // Predicated region
    $region98: #{vae_forward.1} parent=1 // pred_check
      _
    $region99: #{vae_forward.1} parent=1 // pred_check_branch
      %9998 = sbr.rel (0) target = $region101
    $region100: #{vae_forward.1} parent=1 // pred_region
      _
    $region101: #{vae_forward.1} parent=1 // pred_fallthru
      _
    // Predicated region
    $region102: #{vae_forward.1} parent=1 // pred_check
      _
    $region103: #{vae_forward.1} parent=1 // pred_check_branch
      %10000 = sbr.rel (0) target = $region105
    $region104: #{vae_forward.1} parent=1 // pred_region
      _
    $region105: #{vae_forward.1} parent=1 // pred_fallthru
      _
    // Predicated region
    $region106: #{vae_forward.1} parent=1 // pred_check
      _
    $region107: #{vae_forward.1} parent=1 // pred_check_branch
      %10002 = sbr.rel (0) target = $region109
    $region108: #{vae_forward.1} parent=1 // pred_region
      _
    $region109: #{vae_forward.1} parent=1 // pred_fallthru
      _
    %10003 = vsyncpa [#allocation3], 1
    %10004 = vsyncpa [#allocation5], 1
    %10005 = vsyncpa [#allocation8], 1
    %10006 = vsyncpa [#allocation11], 1
    %10007 = vsyncpa [#allocation14], 1

</llo_original>
